<compile_context>
chip_gen: v6e
topology: v6e:2x2x1
jax: 0.10.0
libtpu: 0.0.40
codegen_flags: <defaults>
</compile_context>

<pallas_src>
import functools

import jax
import jax.numpy as jnp
from jax.experimental import pallas as pl
from jax.experimental.pallas import tpu as pltpu


# ----------------------------------------------------------------------------
# generation-dependent defaults (guarded: falls back to conservative v7x-safe)
# ----------------------------------------------------------------------------
def _tpu_config():
    vmem_cap = None
    try:
        info = pltpu.get_tpu_info()
        vmem_cap = getattr(info, "vmem_capacity_bytes", None)
    except Exception:
        vmem_cap = None
    if vmem_cap is not None and vmem_cap >= 100 * 1024 * 1024:
        # v5e / v6e: 128 MiB VMEM -> bigger tiles, fewer grid steps
        return 96 * 1024 * 1024, 2048, 2048
    # v7x (64 MiB VMEM) or unknown: conservative
    return 48 * 1024 * 1024, 1024, 1024


_VMEM_LIMIT, _TM_TARGET, _TK_TARGET = _tpu_config()


# ----------------------------------------------------------------------------
# small helpers
# ----------------------------------------------------------------------------
def _round_up(v, m):
    return ((v + m - 1) // m) * m


def _pick_row_tile(M, target):
    """Largest row tile <= target dividing M, preferring multiples of 256,
    then 16 (bf16 sublane packing), then 8.  Returns M if M <= target, 0 if
    no divisor is found."""
    if M <= target:
        return M
    for step in (256, 16, 8):
        t = (target // step) * step
        while t >= step:
            if M % t == 0:
                return t
            t -= step
    return 0


def _row_target(M):
    # aim for >= 2 blocks on the parallel M axis (v7x: 2 TensorCores/chip)
    return min(_TM_TARGET, max(256, M // 2))


# ----------------------------------------------------------------------------
# Pallas matmul kernel: bias (+ optional tanh) epilogue, optional fused BN
# statistics (per-column sum / sum-of-squares partials)
# ----------------------------------------------------------------------------
def _mm_kernel(a_ref, b_ref, bias_ref, *refs, out_act, with_stats, multi_k):
    if multi_k:
        acc_ref = refs[-1]
        refs = refs[:-1]
    if with_stats:
        o_ref, st_ref = refs
    else:
        (o_ref,) = refs

    def epilogue(acc):
        r = acc + bias_ref[...]
        if out_act == "tanh":                       # nn.Tanh fused (EUP)
            r = jnp.tanh(r)
        o_ref[...] = r.astype(o_ref.dtype)          # bf16 inter-layer tensor
        if with_stats:                              # fused BN statistics
            st_ref[0:1, 0:1, :] = jnp.sum(r, axis=0, keepdims=True)[None]
            st_ref[0:1, 1:2, :] = jnp.sum(r * r, axis=0, keepdims=True)[None]

    if multi_k:
        k = pl.program_id(1)

        @pl.when(k == 0)
        def _():
            acc_ref[...] = jnp.zeros_like(acc_ref)

        acc_ref[...] += jnp.dot(a_ref[...], b_ref[...],
                                preferred_element_type=jnp.float32)

        @pl.when(k == pl.num_programs(1) - 1)
        def _():
            epilogue(acc_ref[...])
    else:
        epilogue(jnp.dot(a_ref[...], b_ref[...],
                         preferred_element_type=jnp.float32))


def matmul_fused(a, w, bias, *, out_act=None, with_stats=False):
    """(M, K)bf16 @ (K, N)bf16 + bias -> (M, N)bf16  [+ (2, N)f32 stats]."""
    M, K = a.shape
    N = w.shape[1]

    # tiny deep-layer matmuls (M = 2..128 rows): plain XLA, pallas overhead
    # would dominate.
    if M < 256:
        r = jnp.dot(a, w, preferred_element_type=jnp.float32) + bias[None, :]
        if out_act == "tanh":
            r = jnp.tanh(r)
        out = r.astype(jnp.bfloat16)
        if with_stats:
            return out, jnp.stack([jnp.sum(r, 0), jnp.sum(r * r, 0)], axis=0)
        return out, None

    # lane padding only if N > 128 and not a multiple of 128 (rare); small N
    # stays exact (masked stores write only valid bytes -> less HBM traffic).
    Np = N
    if N > 128 and N % 128:
        Np = _round_up(N, 128)
        w = jnp.pad(w, ((0, 0), (0, Np - N)))
        bias = jnp.pad(bias, ((0, Np - N),))
    bias2 = bias.reshape(1, Np).astype(jnp.float32)

    # M tiling: prefer an exact divisor (avoids pad + slice copies).
    tm = _pick_row_tile(M, _row_target(M))
    if tm == 0:
        tm = min(_row_target(M), M)
        Mp = _round_up(M, tm)
        a = jnp.pad(a, ((0, Mp - M), (0, 0)))
    else:
        Mp = M
    nm = Mp // tm

    # K tiling (reduction axis, 'arbitrary', accumulated in VMEM scratch).
    if K % 128 == 0 and K > _TK_TARGET:
        tk = _TK_TARGET
        while K % tk:
            tk //= 2
    else:
        tk = K
    nk = K // tk
    multi_k = nk > 1

    if with_stats:
        out_shape = (jax.ShapeDtypeStruct((Mp, Np), jnp.bfloat16),
                     jax.ShapeDtypeStruct((nm, 2, Np), jnp.float32))
        out_specs = (pl.BlockSpec((tm, Np), lambda i, k: (i, 0)),
                     pl.BlockSpec((1, 2, Np), lambda i, k: (i, 0, 0)))
    else:
        out_shape = jax.ShapeDtypeStruct((Mp, Np), jnp.bfloat16)
        out_specs = pl.BlockSpec((tm, Np), lambda i, k: (i, 0))
    scratch = [pltpu.VMEM((tm, Np), jnp.float32)] if multi_k else []

    res = pl.pallas_call(
        functools.partial(_mm_kernel, out_act=out_act,
                          with_stats=with_stats, multi_k=multi_k),
        out_shape=out_shape,
        grid=(nm, nk),
        in_specs=[
            pl.BlockSpec((tm, tk), lambda i, k: (i, k)),
            pl.BlockSpec((tk, Np), lambda i, k: (k, 0)),
            pl.BlockSpec((1, Np), lambda i, k: (0, 0)),
        ],
        out_specs=out_specs,
        scratch_shapes=scratch,
        compiler_params=pltpu.CompilerParams(
            dimension_semantics=("parallel", "arbitrary"),
            vmem_limit_bytes=_VMEM_LIMIT),
    )(a, w, bias2)

    if with_stats:
        out, st_t = res
        st = jnp.sum(st_t, axis=0)                                  # (2, Np)
        if Mp != M:   # padded rows each produced exactly `bias`; remove them
            rpad = bias2[0]
            if out_act == "tanh":
                rpad = jnp.tanh(rpad)
            st = st - (Mp - M) * jnp.stack([rpad, rpad * rpad], axis=0)
    else:
        out, st = res, None

    if Mp != M:
        out = out[:M]
    if Np != N:
        out = out[:, :N]
        if st is not None:
            st = st[:, :N]
    return out, st


# ----------------------------------------------------------------------------
# BatchNorm2d (training mode): stats come fused from the matmul epilogue;
# this is only the lane-folded affine apply.
# ----------------------------------------------------------------------------
def _bn_apply_kernel(x_ref, ss_ref, o_ref):
    x = x_ref[...].astype(jnp.float32)
    o_ref[...] = (x * ss_ref[0:1, :] + ss_ref[1:2, :]).astype(o_ref.dtype)


def bn_apply(x, stats, gamma, beta):
    """x: NHWC bf16; stats: (2, C) f32 = [sum; sumsq] over all N*H*W values."""
    N, H, W, C = x.shape
    M = N * H * W
    cnt = float(M)
    mean = stats[0] / cnt
    var = jnp.maximum(stats[1] / cnt - mean * mean, 0.0)  # biased batch var
    scale = gamma * jax.lax.rsqrt(var + 1e-5)
    shift = beta - mean * scale
    # TODO(synk): running_mean/running_var buffer updates are omitted (they do
    # not affect the forward output in training mode).

    if M < 256:   # tiny deep layers: XLA elementwise
        return (x.astype(jnp.float32) * scale + shift).astype(jnp.bfloat16)

    # lane folding: pack g spatial rows into lanes so tiles are lane dense.
    g = 1
    if C < 128 and 128 % C == 0:
        g = 128 // C
        while g > 1 and M % g:
            g //= 2
    Mg, Cg = M // g, g * C
    x2 = x.reshape(Mg, Cg)
    ss = jnp.stack([jnp.tile(scale, g), jnp.tile(shift, g)], axis=0)  # (2, Cg)

    tm = _pick_row_tile(Mg, _row_target(Mg))
    if tm == 0:
        tm = Mg

    y = pl.pallas_call(
        _bn_apply_kernel,
        out_shape=jax.ShapeDtypeStruct((Mg, Cg), jnp.bfloat16),
        grid=(Mg // tm,),
        in_specs=[
            pl.BlockSpec((tm, Cg), lambda i: (i, 0)),
            pl.BlockSpec((2, Cg), lambda i: (0, 0)),
        ],
        out_specs=pl.BlockSpec((tm, Cg), lambda i: (i, 0)),
        compiler_params=pltpu.CompilerParams(
            dimension_semantics=("parallel",),
            vmem_limit_bytes=_VMEM_LIMIT),
    )(x2, ss)
    return y.reshape(N, H, W, C)


# ----------------------------------------------------------------------------
# Conv glue: activation fused into the pad (1x input, XLA-fused), bf16 im2col
# ----------------------------------------------------------------------------
def conv_down(x, w_mat, bias, *, act=None, with_stats=False):
    """Conv2d(kernel=4, stride=2, padding=1).  x: NHWC bf16,
    w_mat: (16*Cin, Cout) bf16 pre-packed."""
    N, H, W, Cin = x.shape
    Cout = w_mat.shape[1]
    Ho, Wo = H // 2, W // 2
    if act == "leaky_relu":                      # nn.LeakyReLU(0.2) (producer)
        x = jnp.where(x >= 0, x, 0.2 * x)
    elif act == "relu":
        x = jnp.maximum(x, 0.0)
    # TODO(synk): im2col is still materialized in HBM (bf16); building the
    # patch tile in-kernel from a VMEM window of xp would cut the A stream ~4x.
    xp = jnp.pad(x, ((0, 0), (1, 1), (1, 1), (0, 0)))
    patches = [xp[:, kh:kh + 2 * Ho:2, kw:kw + 2 * Wo:2, :]
               for kh in range(4) for kw in range(4)]
    a = jnp.stack(patches, axis=3).reshape(N * Ho * Wo, 16 * Cin)
    y, st = matmul_fused(a, w_mat, bias, with_stats=with_stats)
    return y.reshape(N, Ho, Wo, Cout), st


# For output parity p (even/odd row or col), (offset in the 1-padded input,
# kernel index) taps of ConvTranspose2d(4, 2, 1):
_CT_TAPS = {0: ((0, 3), (1, 1)), 1: ((1, 2), (2, 0))}


def conv_transpose_up(x, w_big, bias4, *, act=None, out_act=None,
                      with_stats=False):
    """ConvTranspose2d(kernel=4, stride=2, padding=1), all four output
    parities batched into ONE matmul over the 9 distinct input taps.
    x: NHWC bf16, w_big: (9*Cin, 4*Cout) bf16, bias4: (4*Cout,) f32."""
    N, H, W, Cin = x.shape
    Cout = w_big.shape[1] // 4
    if act == "relu":                            # nn.ReLU fused at the producer
        x = jnp.maximum(x, 0.0)
    elif act == "leaky_relu":
        x = jnp.where(x >= 0, x, 0.2 * x)
    xp = jnp.pad(x, ((0, 0), (1, 1), (1, 1), (0, 0)))
    taps = [xp[:, oy:oy + H, ox:ox + W, :]
            for oy in range(3) for ox in range(3)]
    a = jnp.stack(taps, axis=3).reshape(N * H * W, 9 * Cin)
    y, st = matmul_fused(a, w_big, bias4, out_act=out_act,
                         with_stats=with_stats)
    # interleave the 4 parities back into (N, 2H, 2W, Cout) -- bf16
    y = y.reshape(N, H, W, 2, 2, Cout)
    y = jnp.transpose(y, (0, 1, 3, 2, 4, 5)).reshape(N, 2 * H, 2 * W, Cout)
    if with_stats:
        st = st.reshape(2, 4, Cout).sum(axis=1)          # reduce over parity
    return y, st


# ----------------------------------------------------------------------------
# weight packing (done once at init)
# ----------------------------------------------------------------------------
def _pack_down_w(w):            # w: (Cout, Cin, 4, 4) torch Conv2d layout
    Cout, Cin = w.shape[0], w.shape[1]
    return jnp.transpose(w, (2, 3, 1, 0)).reshape(16 * Cin, Cout).astype(
        jnp.bfloat16)


def _pack_up_w(w):              # w: (Cin, Cout, 4, 4) torch ConvTranspose layout
    Cin, Cout = w.shape[0], w.shape[1]
    wb = jnp.zeros((3, 3, Cin, 2, 2, Cout), jnp.float32)
    for py in (0, 1):
        for px in (0, 1):
            for oy, ky in _CT_TAPS[py]:
                for ox, kx in _CT_TAPS[px]:
                    wb = wb.at[oy, ox, :, py, px, :].set(w[:, :, ky, kx])
    return wb.reshape(9 * Cin, 4 * Cout).astype(jnp.bfloat16)


# ----------------------------------------------------------------------------
# UnetSkipConnectionBlock / UnetGenerator (deterministic synthetic params)
# ----------------------------------------------------------------------------
def make_block(key, outer_nc, inner_nc, input_nc=None, sub=None,
               outermost=False, innermost=False):
    # norm_layer == BatchNorm2d  =>  use_bias = False for down / inner upconvs.
    if input_nc is None:
        input_nc = outer_nc
    k0, k1, k2 = jax.random.split(key, 3)
    std = 0.02
    up_in = inner_nc if innermost else inner_nc * 2
    down_w = std * jax.random.normal(k0, (inner_nc, input_nc, 4, 4), jnp.float32)
    up_w = std * jax.random.normal(k1, (up_in, outer_nc, 4, 4), jnp.float32)
    up_b = (std * jax.random.normal(k2, (outer_nc,), jnp.float32)
            if outermost else None)                       # only outermost bias
    blk = dict(
        outermost=outermost, innermost=innermost, sub=sub,
        down_w=_pack_down_w(down_w),                      # packed at init
        down_b=jnp.zeros((inner_nc,), jnp.float32),       # bias=use_bias=False
        up_w=_pack_up_w(up_w),
        up_b=(jnp.tile(up_b, 4) if up_b is not None
              else jnp.zeros((4 * outer_nc,), jnp.float32)),
    )
    if (not outermost) and (not innermost):
        blk["dn_gamma"] = jnp.ones((inner_nc,), jnp.float32)
        blk["dn_beta"] = jnp.zeros((inner_nc,), jnp.float32)
    if not outermost:
        blk["up_gamma"] = jnp.ones((outer_nc,), jnp.float32)
        blk["up_beta"] = jnp.zeros((outer_nc,), jnp.float32)
    return blk


def block_forward(blk, x):
    outermost, innermost = blk["outermost"], blk["innermost"]
    # downrelu / uprelu are applied at the producer side of the im2col glue;
    # bias + Tanh + BN statistics are fused into the matmul epilogue.
    dn_act = None if outermost else "leaky_relu"
    dn_stats = (not outermost) and (not innermost)
    h, dn_st = conv_down(x, blk["down_w"], blk["down_b"],
                         act=dn_act, with_stats=dn_stats)          # downconv
    if dn_stats:
        h = bn_apply(h, dn_st, blk["dn_gamma"], blk["dn_beta"])    # downnorm
    if blk["sub"] is not None:
        h = block_forward(blk["sub"], h)                           # submodule
    h, up_st = conv_transpose_up(h, blk["up_w"], blk["up_b"], act="relu",
                                 out_act=("tanh" if outermost else None),
                                 with_stats=not outermost)         # upconv
    if outermost:
        return h                                                   # Tanh fused
    h = bn_apply(h, up_st, blk["up_gamma"], blk["up_beta"])        # upnorm
    return jnp.concatenate([x, h], axis=-1)                        # skip


def init_unet(key, input_nc, output_nc, num_downs=6, ngf=64):
    keys = iter(jax.random.split(key, num_downs))
    blk = make_block(next(keys), ngf * 8, ngf * 8, innermost=True)
    for _ in range(num_downs - 5):
        blk = make_block(next(keys), ngf * 8, ngf * 8, sub=blk)
    blk = make_block(next(keys), ngf * 4, ngf * 8, sub=blk)
    blk = make_block(next(keys), ngf * 2, ngf * 4, sub=blk)
    blk = make_block(next(keys), ngf, ngf * 2, sub=blk)
    blk = make_block(next(keys), output_nc, ngf, input_nc=input_nc,
                     sub=blk, outermost=True)
    return blk


def unet_forward(net, x_nchw):
    # layout: accept NCHW (PyTorch), compute in NHWC bf16, return NCHW f32.
    x = jnp.transpose(x_nchw, (0, 2, 3, 1)).astype(jnp.bfloat16)
    y = block_forward(net, x)
    return jnp.transpose(y, (0, 3, 1, 2)).astype(jnp.float32)


# ----------------------------------------------------------------------------
if __name__ == "__main__":
    key = jax.random.PRNGKey(0)
    k_params, k_x = jax.random.split(key)

    # Small config: num_downs=6 needs 64x64 spatial (1x1 bottleneck); ngf small.
    input_nc, output_nc, num_downs, ngf = 3, 3, 6, 8
    net = init_unet(k_params, input_nc, output_nc, num_downs=num_downs, ngf=ngf)

    x = jax.random.normal(k_x, (2, input_nc, 64, 64), jnp.float32)  # NCHW
    fwd = jax.jit(lambda inp: unet_forward(net, inp))
    y = fwd(x)
    jax.block_until_ready(y)

    assert y.shape == (2, output_nc, 64, 64), y.shape
    assert bool(jnp.all(jnp.isfinite(y)))
    # tanh output range check
    assert float(jnp.max(jnp.abs(y))) <= 1.0 + 1e-6
    print("KERNEL_OK")
</pallas_src>

<mosaic_0001>
module attributes {stable_mosaic.version = 11 : i64} {
  func.func @_mm_kernel(%arg0: i32, %arg1: i32, %arg2: memref<1024x48xbf16, #tpu.memory_space<vmem>>, %arg3: memref<48x8xbf16, #tpu.memory_space<vmem>>, %arg4: memref<1x8xf32, #tpu.memory_space<vmem>>, %arg5: memref<1024x8xbf16, #tpu.memory_space<vmem>>) attributes {dimension_semantics = [#tpu.dimension_semantics<parallel>, #tpu.dimension_semantics<arbitrary>], iteration_bounds = array<i64: 2, 1>, scalar_prefetch = 0 : i64, scratch_operands = 0 : i64, tpu.core_type = #tpu.core_type<tc>, window_params = [{transform_indices = @transform_0, window_bounds = array<i64: 1024, 48>}, {transform_indices = @transform_1, window_bounds = array<i64: 48, 8>}, {pipeline_mode = #tpu.pipeline_mode<synchronous>, transform_indices = @transform_2, window_bounds = array<i64: 1, 8>}, {transform_indices = @transform_3, window_bounds = array<i64: 1024, 8>}]} {
    %c0 = arith.constant 0 : index
    %c0_0 = arith.constant 0 : index
    %0 = vector.load %arg2[%c0, %c0_0] : memref<1024x48xbf16, #tpu.memory_space<vmem>>, vector<1024x48xbf16>
    %c0_1 = arith.constant 0 : index
    %c0_2 = arith.constant 0 : index
    %1 = vector.load %arg3[%c0_1, %c0_2] : memref<48x8xbf16, #tpu.memory_space<vmem>>, vector<48x8xbf16>
    %cst = arith.constant dense<0.000000e+00> : vector<1024x8xf32>
    %2 = tpu.matmul %0, %1, %cst {dimension_numbers = #tpu.dot_dimension_numbers<[1], [0], [0], [1], [0, 0, 1, 1], [], []>} : vector<1024x48xbf16>, vector<48x8xbf16>, vector<1024x8xf32> -> vector<1024x8xf32>
    %c0_3 = arith.constant 0 : index
    %c0_4 = arith.constant 0 : index
    %3 = vector.load %arg4[%c0_3, %c0_4] : memref<1x8xf32, #tpu.memory_space<vmem>>, vector<1x8xf32>
    %4 = vector.broadcast %3 : vector<1x8xf32> to vector<1024x8xf32>
    %5 = arith.addf %2, %4 : vector<1024x8xf32>
    %6 = arith.truncf %5 : vector<1024x8xf32> to vector<1024x8xbf16>
    %c0_5 = arith.constant 0 : index
    %c0_6 = arith.constant 0 : index
    %7 = vector.load %arg5[%c0_5, %c0_6] : memref<1024x8xbf16, #tpu.memory_space<vmem>>, vector<1024x8xbf16>
    tpu.vector_store %arg5[%c0_5, %c0_6], %6 {strides = array<i32>} : memref<1024x8xbf16, #tpu.memory_space<vmem>>, vector<1024x8xbf16>,
    return
  }
  func.func @transform_0(%arg0: i32, %arg1: i32) -> (i32, i32) {
    %c0_i32 = arith.constant 0 : i32
    return %arg0, %arg1 : i32, i32
  }
  func.func @transform_1(%arg0: i32, %arg1: i32) -> (i32, i32) {
    %c0_i32 = arith.constant 0 : i32
    %c0_i32_0 = arith.constant 0 : i32
    return %arg1, %c0_i32 : i32, i32
  }
  func.func @transform_2(%arg0: i32, %arg1: i32) -> (i32, i32) {
    %c0_i32 = arith.constant 0 : i32
    %c0_i32_0 = arith.constant 0 : i32
    %c0_i32_1 = arith.constant 0 : i32
    return %c0_i32, %c0_i32_0 : i32, i32
  }
  func.func @transform_3(%arg0: i32, %arg1: i32) -> (i32, i32) {
    %c0_i32 = arith.constant 0 : i32
    %c0_i32_0 = arith.constant 0 : i32
    return %arg0, %c0_i32 : i32, i32
  }
}

module attributes {stable_mosaic.version = 11 : i64} {
  func.func @_mm_kernel(%arg0: i32, %arg1: i32, %arg2: memref<256x128xbf16, #tpu.memory_space<vmem>>, %arg3: memref<128x16xbf16, #tpu.memory_space<vmem>>, %arg4: memref<1x16xf32, #tpu.memory_space<vmem>>, %arg5: memref<256x16xbf16, #tpu.memory_space<vmem>>, %arg6: memref<1x2x16xf32, #tpu.memory_space<vmem>>) attributes {dimension_semantics = [#tpu.dimension_semantics<parallel>, #tpu.dimension_semantics<arbitrary>], iteration_bounds = array<i64: 2, 1>, scalar_prefetch = 0 : i64, scratch_operands = 0 : i64, tpu.core_type = #tpu.core_type<tc>, window_params = [{transform_indices = @transform_0, window_bounds = array<i64: 256, 128>}, {transform_indices = @transform_1, window_bounds = array<i64: 128, 16>}, {pipeline_mode = #tpu.pipeline_mode<synchronous>, transform_indices = @transform_2, window_bounds = array<i64: 1, 16>}, {transform_indices = @transform_3, window_bounds = array<i64: 256, 16>}, {transform_indices = @transform_4, window_bounds = array<i64: 1, 2, 16>}]} {
    %c0 = arith.constant 0 : index
    %c0_0 = arith.constant 0 : index
    %0 = vector.load %arg2[%c0, %c0_0] : memref<256x128xbf16, #tpu.memory_space<vmem>>, vector<256x128xbf16>
    %c0_1 = arith.constant 0 : index
    %c0_2 = arith.constant 0 : index
    %1 = vector.load %arg3[%c0_1, %c0_2] : memref<128x16xbf16, #tpu.memory_space<vmem>>, vector<128x16xbf16>
    %cst = arith.constant dense<0.000000e+00> : vector<256x16xf32>
    %2 = tpu.matmul %0, %1, %cst {dimension_numbers = #tpu.dot_dimension_numbers<[1], [0], [0], [1], [0, 0, 1, 1], [], []>} : vector<256x128xbf16>, vector<128x16xbf16>, vector<256x16xf32> -> vector<256x16xf32>
    %c0_3 = arith.constant 0 : index
    %c0_4 = arith.constant 0 : index
    %3 = vector.load %arg4[%c0_3, %c0_4] : memref<1x16xf32, #tpu.memory_space<vmem>>, vector<1x16xf32>
    %4 = vector.broadcast %3 : vector<1x16xf32> to vector<256x16xf32>
    %5 = arith.addf %2, %4 : vector<256x16xf32>
    %6 = arith.truncf %5 : vector<256x16xf32> to vector<256x16xbf16>
    %c0_5 = arith.constant 0 : index
    %c0_6 = arith.constant 0 : index
    %7 = vector.load %arg5[%c0_5, %c0_6] : memref<256x16xbf16, #tpu.memory_space<vmem>>, vector<256x16xbf16>
    tpu.vector_store %arg5[%c0_5, %c0_6], %6 {strides = array<i32>} : memref<256x16xbf16, #tpu.memory_space<vmem>>, vector<256x16xbf16>,
    %cst_7 = arith.constant dense<0.000000e+00> : vector<16xf32>
    %8 = vector.multi_reduction <add>, %5, %cst_7 [0] : vector<256x16xf32> to vector<16xf32>
    %9 = vector.shape_cast %8 : vector<16xf32> to vector<1x16xf32>
    %10 = vector.shape_cast %9 : vector<1x16xf32> to vector<1x1x16xf32>
    %c0_8 = arith.constant 0 : index
    %c0_9 = arith.constant 0 : index
    %c0_10 = arith.constant 0 : index
    %11 = vector.load %arg6[%c0_8, %c0_9, %c0_10] : memref<1x2x16xf32, #tpu.memory_space<vmem>>, vector<1x1x16xf32>
    tpu.vector_store %arg6[%c0_8, %c0_9, %c0_10], %10 {strides = array<i32>} : memref<1x2x16xf32, #tpu.memory_space<vmem>>, vector<1x1x16xf32>,
    %12 = arith.mulf %5, %5 : vector<256x16xf32>
    %cst_11 = arith.constant dense<0.000000e+00> : vector<16xf32>
    %13 = vector.multi_reduction <add>, %12, %cst_11 [0] : vector<256x16xf32> to vector<16xf32>
    %14 = vector.shape_cast %13 : vector<16xf32> to vector<1x16xf32>
    %15 = vector.shape_cast %14 : vector<1x16xf32> to vector<1x1x16xf32>
    %c0_12 = arith.constant 0 : index
    %c1 = arith.constant 1 : index
    %c0_13 = arith.constant 0 : index
    %16 = vector.load %arg6[%c0_12, %c1, %c0_13] : memref<1x2x16xf32, #tpu.memory_space<vmem>>, vector<1x1x16xf32>
    tpu.vector_store %arg6[%c0_12, %c1, %c0_13], %15 {strides = array<i32>} : memref<1x2x16xf32, #tpu.memory_space<vmem>>, vector<1x1x16xf32>,
    return
  }
  func.func @transform_0(%arg0: i32, %arg1: i32) -> (i32, i32) {
    %c0_i32 = arith.constant 0 : i32
    return %arg0, %arg1 : i32, i32
  }
  func.func @transform_1(%arg0: i32, %arg1: i32) -> (i32, i32) {
    %c0_i32 = arith.constant 0 : i32
    %c0_i32_0 = arith.constant 0 : i32
    return %arg1, %c0_i32 : i32, i32
  }
  func.func @transform_2(%arg0: i32, %arg1: i32) -> (i32, i32) {
    %c0_i32 = arith.constant 0 : i32
    %c0_i32_0 = arith.constant 0 : i32
    %c0_i32_1 = arith.constant 0 : i32
    return %c0_i32, %c0_i32_0 : i32, i32
  }
  func.func @transform_3(%arg0: i32, %arg1: i32) -> (i32, i32) {
    %c0_i32 = arith.constant 0 : i32
    %c0_i32_0 = arith.constant 0 : i32
    return %arg0, %c0_i32 : i32, i32
  }
  func.func @transform_4(%arg0: i32, %arg1: i32) -> (i32, i32, i32) {
    %c0_i32 = arith.constant 0 : i32
    %c0_i32_0 = arith.constant 0 : i32
    %c0_i32_1 = arith.constant 0 : i32
    return %arg0, %c0_i32, %c0_i32_0 : i32, i32, i32
  }
}

module attributes {stable_mosaic.version = 11 : i64} {
  func.func @_bn_apply_kernel(%arg0: i32, %arg1: memref<64x128xbf16, #tpu.memory_space<vmem>>, %arg2: memref<2x128xf32, #tpu.memory_space<vmem>>, %arg3: memref<64x128xbf16, #tpu.memory_space<vmem>>) attributes {dimension_semantics = [#tpu.dimension_semantics<parallel>], iteration_bounds = array<i64: 1>, scalar_prefetch = 0 : i64, scratch_operands = 0 : i64, tpu.core_type = #tpu.core_type<tc>, window_params = [{transform_indices = @transform_0, window_bounds = array<i64: 64, 128>}, {pipeline_mode = #tpu.pipeline_mode<synchronous>, transform_indices = @transform_1, window_bounds = array<i64: 2, 128>}, {transform_indices = @transform_2, window_bounds = array<i64: 64, 128>}]} {
    %c0 = arith.constant 0 : index
    %c0_0 = arith.constant 0 : index
    %0 = vector.load %arg1[%c0, %c0_0] : memref<64x128xbf16, #tpu.memory_space<vmem>>, vector<64x128xbf16>
    %1 = arith.extf %0 : vector<64x128xbf16> to vector<64x128xf32>
    %c0_1 = arith.constant 0 : index
    %c0_2 = arith.constant 0 : index
    %2 = vector.load %arg2[%c0_1, %c0_2] : memref<2x128xf32, #tpu.memory_space<vmem>>, vector<1x128xf32>
    %3 = vector.broadcast %2 : vector<1x128xf32> to vector<64x128xf32>
    %4 = arith.mulf %1, %3 : vector<64x128xf32>
    %c1 = arith.constant 1 : index
    %c0_3 = arith.constant 0 : index
    %5 = vector.load %arg2[%c1, %c0_3] : memref<2x128xf32, #tpu.memory_space<vmem>>, vector<1x128xf32>
    %6 = vector.broadcast %5 : vector<1x128xf32> to vector<64x128xf32>
    %7 = arith.addf %4, %6 : vector<64x128xf32>
    %8 = arith.truncf %7 : vector<64x128xf32> to vector<64x128xbf16>
    %c0_4 = arith.constant 0 : index
    %c0_5 = arith.constant 0 : index
    %9 = vector.load %arg3[%c0_4, %c0_5] : memref<64x128xbf16, #tpu.memory_space<vmem>>, vector<64x128xbf16>
    tpu.vector_store %arg3[%c0_4, %c0_5], %8 {strides = array<i32>} : memref<64x128xbf16, #tpu.memory_space<vmem>>, vector<64x128xbf16>,
    return
  }
  func.func @transform_0(%arg0: i32) -> (i32, i32) {
    %c0_i32 = arith.constant 0 : i32
    %c0_i32_0 = arith.constant 0 : i32
    return %arg0, %c0_i32 : i32, i32
  }
  func.func @transform_1(%arg0: i32) -> (i32, i32) {
    %c0_i32 = arith.constant 0 : i32
    %c0_i32_0 = arith.constant 0 : i32
    %c0_i32_1 = arith.constant 0 : i32
    return %c0_i32, %c0_i32_0 : i32, i32
  }
  func.func @transform_2(%arg0: i32) -> (i32, i32) {
    %c0_i32 = arith.constant 0 : i32
    %c0_i32_0 = arith.constant 0 : i32
    return %arg0, %c0_i32 : i32, i32
  }
}

module attributes {stable_mosaic.version = 11 : i64} {
  func.func @_mm_kernel(%arg0: i32, %arg1: i32, %arg2: memref<256x288xbf16, #tpu.memory_space<vmem>>, %arg3: memref<288x32xbf16, #tpu.memory_space<vmem>>, %arg4: memref<1x32xf32, #tpu.memory_space<vmem>>, %arg5: memref<256x32xbf16, #tpu.memory_space<vmem>>, %arg6: memref<1x2x32xf32, #tpu.memory_space<vmem>>) attributes {dimension_semantics = [#tpu.dimension_semantics<parallel>, #tpu.dimension_semantics<arbitrary>], iteration_bounds = array<i64: 2, 1>, scalar_prefetch = 0 : i64, scratch_operands = 0 : i64, tpu.core_type = #tpu.core_type<tc>, window_params = [{transform_indices = @transform_0, window_bounds = array<i64: 256, 288>}, {transform_indices = @transform_1, window_bounds = array<i64: 288, 32>}, {pipeline_mode = #tpu.pipeline_mode<synchronous>, transform_indices = @transform_2, window_bounds = array<i64: 1, 32>}, {transform_indices = @transform_3, window_bounds = array<i64: 256, 32>}, {transform_indices = @transform_4, window_bounds = array<i64: 1, 2, 32>}]} {
    %c0 = arith.constant 0 : index
    %c0_0 = arith.constant 0 : index
    %0 = vector.load %arg2[%c0, %c0_0] : memref<256x288xbf16, #tpu.memory_space<vmem>>, vector<256x288xbf16>
    %c0_1 = arith.constant 0 : index
    %c0_2 = arith.constant 0 : index
    %1 = vector.load %arg3[%c0_1, %c0_2] : memref<288x32xbf16, #tpu.memory_space<vmem>>, vector<288x32xbf16>
    %cst = arith.constant dense<0.000000e+00> : vector<256x32xf32>
    %2 = tpu.matmul %0, %1, %cst {dimension_numbers = #tpu.dot_dimension_numbers<[1], [0], [0], [1], [0, 0, 1, 1], [], []>} : vector<256x288xbf16>, vector<288x32xbf16>, vector<256x32xf32> -> vector<256x32xf32>
    %c0_3 = arith.constant 0 : index
    %c0_4 = arith.constant 0 : index
    %3 = vector.load %arg4[%c0_3, %c0_4] : memref<1x32xf32, #tpu.memory_space<vmem>>, vector<1x32xf32>
    %4 = vector.broadcast %3 : vector<1x32xf32> to vector<256x32xf32>
    %5 = arith.addf %2, %4 : vector<256x32xf32>
    %6 = arith.truncf %5 : vector<256x32xf32> to vector<256x32xbf16>
    %c0_5 = arith.constant 0 : index
    %c0_6 = arith.constant 0 : index
    %7 = vector.load %arg5[%c0_5, %c0_6] : memref<256x32xbf16, #tpu.memory_space<vmem>>, vector<256x32xbf16>
    tpu.vector_store %arg5[%c0_5, %c0_6], %6 {strides = array<i32>} : memref<256x32xbf16, #tpu.memory_space<vmem>>, vector<256x32xbf16>,
    %cst_7 = arith.constant dense<0.000000e+00> : vector<32xf32>
    %8 = vector.multi_reduction <add>, %5, %cst_7 [0] : vector<256x32xf32> to vector<32xf32>
    %9 = vector.shape_cast %8 : vector<32xf32> to vector<1x32xf32>
    %10 = vector.shape_cast %9 : vector<1x32xf32> to vector<1x1x32xf32>
    %c0_8 = arith.constant 0 : index
    %c0_9 = arith.constant 0 : index
    %c0_10 = arith.constant 0 : index
    %11 = vector.load %arg6[%c0_8, %c0_9, %c0_10] : memref<1x2x32xf32, #tpu.memory_space<vmem>>, vector<1x1x32xf32>
    tpu.vector_store %arg6[%c0_8, %c0_9, %c0_10], %10 {strides = array<i32>} : memref<1x2x32xf32, #tpu.memory_space<vmem>>, vector<1x1x32xf32>,
    %12 = arith.mulf %5, %5 : vector<256x32xf32>
    %cst_11 = arith.constant dense<0.000000e+00> : vector<32xf32>
    %13 = vector.multi_reduction <add>, %12, %cst_11 [0] : vector<256x32xf32> to vector<32xf32>
    %14 = vector.shape_cast %13 : vector<32xf32> to vector<1x32xf32>
    %15 = vector.shape_cast %14 : vector<1x32xf32> to vector<1x1x32xf32>
    %c0_12 = arith.constant 0 : index
    %c1 = arith.constant 1 : index
    %c0_13 = arith.constant 0 : index
    %16 = vector.load %arg6[%c0_12, %c1, %c0_13] : memref<1x2x32xf32, #tpu.memory_space<vmem>>, vector<1x1x32xf32>
    tpu.vector_store %arg6[%c0_12, %c1, %c0_13], %15 {strides = array<i32>} : memref<1x2x32xf32, #tpu.memory_space<vmem>>, vector<1x1x32xf32>,
    return
  }
  func.func @transform_0(%arg0: i32, %arg1: i32) -> (i32, i32) {
    %c0_i32 = arith.constant 0 : i32
    return %arg0, %arg1 : i32, i32
  }
  func.func @transform_1(%arg0: i32, %arg1: i32) -> (i32, i32) {
    %c0_i32 = arith.constant 0 : i32
    %c0_i32_0 = arith.constant 0 : i32
    return %arg1, %c0_i32 : i32, i32
  }
  func.func @transform_2(%arg0: i32, %arg1: i32) -> (i32, i32) {
    %c0_i32 = arith.constant 0 : i32
    %c0_i32_0 = arith.constant 0 : i32
    %c0_i32_1 = arith.constant 0 : i32
    return %c0_i32, %c0_i32_0 : i32, i32
  }
  func.func @transform_3(%arg0: i32, %arg1: i32) -> (i32, i32) {
    %c0_i32 = arith.constant 0 : i32
    %c0_i32_0 = arith.constant 0 : i32
    return %arg0, %c0_i32 : i32, i32
  }
  func.func @transform_4(%arg0: i32, %arg1: i32) -> (i32, i32, i32) {
    %c0_i32 = arith.constant 0 : i32
    %c0_i32_0 = arith.constant 0 : i32
    %c0_i32_1 = arith.constant 0 : i32
    return %arg0, %c0_i32, %c0_i32_0 : i32, i32, i32
  }
}

module attributes {stable_mosaic.version = 11 : i64} {
  func.func @_bn_apply_kernel(%arg0: i32, %arg1: memref<128x128xbf16, #tpu.memory_space<vmem>>, %arg2: memref<2x128xf32, #tpu.memory_space<vmem>>, %arg3: memref<128x128xbf16, #tpu.memory_space<vmem>>) attributes {dimension_semantics = [#tpu.dimension_semantics<parallel>], iteration_bounds = array<i64: 1>, scalar_prefetch = 0 : i64, scratch_operands = 0 : i64, tpu.core_type = #tpu.core_type<tc>, window_params = [{transform_indices = @transform_0, window_bounds = array<i64: 128, 128>}, {pipeline_mode = #tpu.pipeline_mode<synchronous>, transform_indices = @transform_1, window_bounds = array<i64: 2, 128>}, {transform_indices = @transform_2, window_bounds = array<i64: 128, 128>}]} {
    %c0 = arith.constant 0 : index
    %c0_0 = arith.constant 0 : index
    %0 = vector.load %arg1[%c0, %c0_0] : memref<128x128xbf16, #tpu.memory_space<vmem>>, vector<128x128xbf16>
    %1 = arith.extf %0 : vector<128x128xbf16> to vector<128x128xf32>
    %c0_1 = arith.constant 0 : index
    %c0_2 = arith.constant 0 : index
    %2 = vector.load %arg2[%c0_1, %c0_2] : memref<2x128xf32, #tpu.memory_space<vmem>>, vector<1x128xf32>
    %3 = vector.broadcast %2 : vector<1x128xf32> to vector<128x128xf32>
    %4 = arith.mulf %1, %3 : vector<128x128xf32>
    %c1 = arith.constant 1 : index
    %c0_3 = arith.constant 0 : index
    %5 = vector.load %arg2[%c1, %c0_3] : memref<2x128xf32, #tpu.memory_space<vmem>>, vector<1x128xf32>
    %6 = vector.broadcast %5 : vector<1x128xf32> to vector<128x128xf32>
    %7 = arith.addf %4, %6 : vector<128x128xf32>
    %8 = arith.truncf %7 : vector<128x128xf32> to vector<128x128xbf16>
    %c0_4 = arith.constant 0 : index
    %c0_5 = arith.constant 0 : index
    %9 = vector.load %arg3[%c0_4, %c0_5] : memref<128x128xbf16, #tpu.memory_space<vmem>>, vector<128x128xbf16>
    tpu.vector_store %arg3[%c0_4, %c0_5], %8 {strides = array<i32>} : memref<128x128xbf16, #tpu.memory_space<vmem>>, vector<128x128xbf16>,
    return
  }
  func.func @transform_0(%arg0: i32) -> (i32, i32) {
    %c0_i32 = arith.constant 0 : i32
    %c0_i32_0 = arith.constant 0 : i32
    return %arg0, %c0_i32 : i32, i32
  }
  func.func @transform_1(%arg0: i32) -> (i32, i32) {
    %c0_i32 = arith.constant 0 : i32
    %c0_i32_0 = arith.constant 0 : i32
    %c0_i32_1 = arith.constant 0 : i32
    return %c0_i32, %c0_i32_0 : i32, i32
  }
  func.func @transform_2(%arg0: i32) -> (i32, i32) {
    %c0_i32 = arith.constant 0 : i32
    %c0_i32_0 = arith.constant 0 : i32
    return %arg0, %c0_i32 : i32, i32
  }
}

module attributes {stable_mosaic.version = 11 : i64} {
  func.func @_mm_kernel(%arg0: i32, %arg1: i32, %arg2: memref<1024x144xbf16, #tpu.memory_space<vmem>>, %arg3: memref<144x12xbf16, #tpu.memory_space<vmem>>, %arg4: memref<1x12xf32, #tpu.memory_space<vmem>>, %arg5: memref<1024x12xbf16, #tpu.memory_space<vmem>>) attributes {dimension_semantics = [#tpu.dimension_semantics<parallel>, #tpu.dimension_semantics<arbitrary>], iteration_bounds = array<i64: 2, 1>, scalar_prefetch = 0 : i64, scratch_operands = 0 : i64, tpu.core_type = #tpu.core_type<tc>, window_params = [{transform_indices = @transform_0, window_bounds = array<i64: 1024, 144>}, {transform_indices = @transform_1, window_bounds = array<i64: 144, 12>}, {pipeline_mode = #tpu.pipeline_mode<synchronous>, transform_indices = @transform_2, window_bounds = array<i64: 1, 12>}, {transform_indices = @transform_3, window_bounds = array<i64: 1024, 12>}]} {
    %c0 = arith.constant 0 : index
    %c0_0 = arith.constant 0 : index
    %0 = vector.load %arg2[%c0, %c0_0] : memref<1024x144xbf16, #tpu.memory_space<vmem>>, vector<1024x144xbf16>
    %c0_1 = arith.constant 0 : index
    %c0_2 = arith.constant 0 : index
    %1 = vector.load %arg3[%c0_1, %c0_2] : memref<144x12xbf16, #tpu.memory_space<vmem>>, vector<144x12xbf16>
    %cst = arith.constant dense<0.000000e+00> : vector<1024x12xf32>
    %2 = tpu.matmul %0, %1, %cst {dimension_numbers = #tpu.dot_dimension_numbers<[1], [0], [0], [1], [0, 0, 1, 1], [], []>} : vector<1024x144xbf16>, vector<144x12xbf16>, vector<1024x12xf32> -> vector<1024x12xf32>
    %c0_3 = arith.constant 0 : index
    %c0_4 = arith.constant 0 : index
    %3 = vector.load %arg4[%c0_3, %c0_4] : memref<1x12xf32, #tpu.memory_space<vmem>>, vector<1x12xf32>
    %4 = vector.broadcast %3 : vector<1x12xf32> to vector<1024x12xf32>
    %5 = arith.addf %2, %4 : vector<1024x12xf32>
    %6 = math.tanh %5 : vector<1024x12xf32>
    %7 = arith.truncf %6 : vector<1024x12xf32> to vector<1024x12xbf16>
    %c0_5 = arith.constant 0 : index
    %c0_6 = arith.constant 0 : index
    %8 = vector.load %arg5[%c0_5, %c0_6] : memref<1024x12xbf16, #tpu.memory_space<vmem>>, vector<1024x12xbf16>
    tpu.vector_store %arg5[%c0_5, %c0_6], %7 {strides = array<i32>} : memref<1024x12xbf16, #tpu.memory_space<vmem>>, vector<1024x12xbf16>,
    return
  }
  func.func @transform_0(%arg0: i32, %arg1: i32) -> (i32, i32) {
    %c0_i32 = arith.constant 0 : i32
    return %arg0, %arg1 : i32, i32
  }
  func.func @transform_1(%arg0: i32, %arg1: i32) -> (i32, i32) {
    %c0_i32 = arith.constant 0 : i32
    %c0_i32_0 = arith.constant 0 : i32
    return %arg1, %c0_i32 : i32, i32
  }
  func.func @transform_2(%arg0: i32, %arg1: i32) -> (i32, i32) {
    %c0_i32 = arith.constant 0 : i32
    %c0_i32_0 = arith.constant 0 : i32
    %c0_i32_1 = arith.constant 0 : i32
    return %c0_i32, %c0_i32_0 : i32, i32
  }
  func.func @transform_3(%arg0: i32, %arg1: i32) -> (i32, i32) {
    %c0_i32 = arith.constant 0 : i32
    %c0_i32_0 = arith.constant 0 : i32
    return %arg0, %c0_i32 : i32, i32
  }
}

</mosaic_0001>

<llo_original>
// kernel: _lambda_.7
$region0: #{_lambda_.7}
  #allocation0 [shape = 'u32[]', space=smem, size = 0x4, offset = 0x4, fixed_abs, tag = 'smem constant byte address 0x4 - core index']
  #allocation1 [shape = 'u32[144,128]{1,0:T(1,128)}', space=vmem, size = 0x12000, scoped, tag = 'internal scratch']
  %s0 = inlined_call_operand.vmem [shape: bf16[2048,48], index: 0, kind: input, shape index: {}]
  %s1 = inlined_call_operand.vmem [shape: bf16[48,8], index: 1, kind: input, shape index: {}]
  %s2 = inlined_call_operand.vmem [shape: f32[1,8], index: 2, kind: input, shape index: {}]
  %s3 = inlined_call_operand.vmem [shape: bf16[2048,8], index: 3, kind: output, shape index: {}]
  %s4 = sld [smem:[#allocation0]]
  $region45: #{_lambda_.7} parent=0
    _
  %s6 = ssub.s32 1, %s4
  %s7 = scalar_select 0, %s6, %s4
  loop: start=0, step=1, limit=4
  $region2: #{_lambda_.7} parent=0 // loop_pre_header
    _
  $region3: #{_lambda_.7} parent=0 // loop_header
    %s9 = sphi 0, %s13
    %p10 = scmp.ge.s32.totalorder %s9, 4
    %s16 = sphi 0, %s28
    %s17 = sphi 0, %s24
    %s18 = sphi 0, %s16
    %s19 = sphi 0, %s17
    %s20 = sphi 0, %s18
    %s21 = sphi 0, %s19
    %s33 = sphi 0, %s35
    %s36 = sphi 0, %s33
    %s37 = sphi 0, %s36
    %s53 = sphi 0, %s37
    %s59 = sphi 0, %s61
    %s62 = sphi 0, %s59
    %s63 = sphi 0, %s62
    %s79 = sphi 0, %s63
    %s83 = sphi 0, %s83
    %s85 = sphi 0, %s83
    %s86 = sphi 0, %s85
    %s100 = sphi 0, %s86
    %s106 = sphi 0, %s108
    %s109 = sphi 0, %s106
    %s110 = sphi 0, %s109
    %s126 = sphi 0, %s110
  $region4: #{_lambda_.7} parent=0 // loop_header_branch
    %12 = sbr.rel (%p10) target = $region8
  $region5: #{_lambda_.7} parent=0 // loop_body
    %s14 = ssub.s32 %s9, 1
    %s15 = ssub.s32 %s9, 2
    %s22 = sadd.s32 1, %s17
    %p23 = scmp.ge.s32.totalorder %s22, 1
    %s24 = scalar_select %p23, 0, %s22
    %s25 = sadd.s32 1, %s16
    %s26 = scalar_select %p23, %s25, %s16
    %p27 = scmp.ge.s32.totalorder %s26, 2
    %s28 = scalar_select %p27, 0, %s26
    %s29 = ssub.s32 %s16, %s28
    %s30 = ssub.s32 %s17, %s24
    %s31 = sor.u32 %s29, %s30
    %p32 = scmp.eq.s32.totalorder %s31, 0
    %s34 = sadd.s32 %s33, 1
    %s35 = scalar_select %p32, %s33, %s34
    %p38 = pneg %p32
    %p39 = scmp.eq.s32.totalorder %s9, 1
    %p40 = por %p38, %p39
    %p41 = scmp.ne.s32.totalorder %s33, %s36
    %p42 = scmp.eq.s32.totalorder %s9, 0
    %p43 = por %p41, %p42
    %p44 = scmp.ne.s32.totalorder %s33, %s36
    %p45 = scmp.eq.s32.totalorder %s14, 1
    %p46 = por %p44, %p45
    %p47 = scmp.ne.s32.totalorder %s36, %s37
    %p48 = scmp.eq.s32.totalorder %s14, 0
    %p49 = por %p47, %p48
    %p50 = scmp.ne.s32.totalorder %s36, %s37
    %p51 = scmp.eq.s32.totalorder %s15, 1
    %p52 = por %p50, %p51
    %p54 = scmp.ne.s32.totalorder %s37, %s53
    %p55 = scmp.eq.s32.totalorder %s15, 0
    %p56 = por %p54, %p55
    %s57 = ssub.s32 %s17, %s24
    %p58 = scmp.eq.s32.totalorder %s57, 0
    %s60 = sadd.s32 %s59, 1
    %s61 = scalar_select %p58, %s59, %s60
    %p64 = pneg %p58
    %p65 = scmp.eq.s32.totalorder %s9, 1
    %p66 = por %p64, %p65
    %p67 = scmp.ne.s32.totalorder %s59, %s62
    %p68 = scmp.eq.s32.totalorder %s9, 0
    %p69 = por %p67, %p68
    %p70 = scmp.ne.s32.totalorder %s59, %s62
    %p71 = scmp.eq.s32.totalorder %s14, 1
    %p72 = por %p70, %p71
    %p73 = scmp.ne.s32.totalorder %s62, %s63
    %p74 = scmp.eq.s32.totalorder %s14, 0
    %p75 = por %p73, %p74
    %p76 = scmp.ne.s32.totalorder %s62, %s63
    %p77 = scmp.eq.s32.totalorder %s15, 1
    %p78 = por %p76, %p77
    %p80 = scmp.ne.s32.totalorder %s63, %s79
    %p81 = scmp.eq.s32.totalorder %s15, 0
    %p82 = por %p80, %p81
    %s84 = sadd.s32 %s83, 1
    %p87 = scmp.eq.s32.totalorder %s9, 1
    %p88 = scmp.ne.s32.totalorder %s83, %s85
    %p89 = scmp.eq.s32.totalorder %s9, 0
    %p90 = por %p88, %p89
    %p91 = scmp.ne.s32.totalorder %s83, %s85
    %p92 = scmp.eq.s32.totalorder %s14, 1
    %p93 = por %p91, %p92
    %p94 = scmp.ne.s32.totalorder %s85, %s86
    %p95 = scmp.eq.s32.totalorder %s14, 0
    %p96 = por %p94, %p95
    %p97 = scmp.ne.s32.totalorder %s85, %s86
    %p98 = scmp.eq.s32.totalorder %s15, 1
    %p99 = por %p97, %p98
    %p101 = scmp.ne.s32.totalorder %s86, %s100
    %p102 = scmp.eq.s32.totalorder %s15, 0
    %p103 = por %p101, %p102
    %s104 = ssub.s32 %s16, %s28
    %p105 = scmp.eq.s32.totalorder %s104, 0
    %s107 = sadd.s32 %s106, 1
    %s108 = scalar_select %p105, %s106, %s107
    %p111 = pneg %p105
    %p112 = scmp.eq.s32.totalorder %s9, 1
    %p113 = por %p111, %p112
    %p114 = scmp.ne.s32.totalorder %s106, %s109
    %p115 = scmp.eq.s32.totalorder %s9, 0
    %p116 = por %p114, %p115
    %p117 = scmp.ne.s32.totalorder %s106, %s109
    %p118 = scmp.eq.s32.totalorder %s14, 1
    %p119 = por %p117, %p118
    %p120 = scmp.ne.s32.totalorder %s109, %s110
    %p121 = scmp.eq.s32.totalorder %s14, 0
    %p122 = por %p120, %p121
    %p123 = scmp.ne.s32.totalorder %s109, %s110
    %p124 = scmp.eq.s32.totalorder %s15, 1
    %p125 = por %p123, %p124
    %p127 = scmp.ne.s32.totalorder %s110, %s126
    %p128 = scmp.eq.s32.totalorder %s15, 0
    %p129 = por %p127, %p128
    %p130 = scmp.le.s32.totalorder 1, %s9
    %p131 = scmp.lt.s32.totalorder %s9, 3
    %p132 = pnand %p130, %p131
    %p133 = pneg %p132
    // Predicated region
    $region9: #{_lambda_.7} parent=5 // pred_check
      _
    $region10: #{_lambda_.7} parent=5 // pred_check_branch
      %135 = sbr.rel (%p132) target = $region12
    $region11: #{_lambda_.7} parent=5 // pred_region
      %s136 = ssub.s32 %s9, 1
      // Predicated region
      $region13: #{_lambda_.7} parent=11 // pred_check
        %p137 = pneg %p75
      $region14: #{_lambda_.7} parent=11 // pred_check_branch
        %139 = sbr.rel (%p137) target = $region16
      $region15: #{_lambda_.7} parent=11 // pred_region
        %s140 = smul.u32 6, %s19
        %p141 = scmp.lt.s32.totalorder %s140, 5
        %s142 = scalar_select %p141, %s140, 5
        %s143 = smul.addr %s142, 4
        %s144 = scalar_lea.vmem %s1, %s143
        %s145 = smul.u32 6, %s19
      $region16: #{_lambda_.7} parent=11 // pred_fallthru
        _
      // Predicated region
      $region17: #{_lambda_.7} parent=11 // pred_check
        %p146 = pneg %p96
      $region18: #{_lambda_.7} parent=11 // pred_check_branch
        %148 = sbr.rel (%p146) target = $region20
      $region19: #{_lambda_.7} parent=11 // pred_region
        _
      $region20: #{_lambda_.7} parent=11 // pred_fallthru
        _
    $region12: #{_lambda_.7} parent=5 // pred_fallthru
      _
    %p149 = scmp.lt.s32.totalorder %s9, 2
    // Predicated region
    $region21: #{_lambda_.7} parent=5 // pred_check
      %p150 = pneg %p149
    $region22: #{_lambda_.7} parent=5 // pred_check_branch
      %152 = sbr.rel (%p150) target = $region24
    $region23: #{_lambda_.7} parent=5 // pred_region
      // Predicated region
      $region25: #{_lambda_.7} parent=23 // pred_check
        %p153 = pneg %p43
      $region26: #{_lambda_.7} parent=23 // pred_check_branch
        %155 = sbr.rel (%p153) target = $region28
      $region27: #{_lambda_.7} parent=23 // pred_region
        %s156 = smul.u32 128, %s16
        %p157 = scmp.lt.s32.totalorder %s156, 255
        %s158 = scalar_select %p157, %s156, 255
        %p159 = scmp.lt.s32.totalorder %s17, 0
        %s160 = scalar_select %p159, %s17, 0
        %s161 = sadd.s32 %s160, %s158
        %s162 = smul.addr %s161, 4
        %s163 = scalar_lea.vmem %s0, %s162
        %s164 = smul.u32 128, %s16
      $region28: #{_lambda_.7} parent=23 // pred_fallthru
        _
    $region24: #{_lambda_.7} parent=5 // pred_fallthru
      _
    %p165 = scmp.le.s32.totalorder 1, %s9
    %p166 = scmp.lt.s32.totalorder %s9, 3
    %p167 = pnand %p165, %p166
    %p168 = pneg %p167
    // Predicated region
    $region29: #{_lambda_.7} parent=5 // pred_check
      _
    $region30: #{_lambda_.7} parent=5 // pred_check_branch
      %170 = sbr.rel (%p167) target = $region32
    $region31: #{_lambda_.7} parent=5 // pred_region
      %s171 = ssub.s32 %s9, 1
      %s172 = smul.u32 128, %s18
      %p173 = scmp.lt.s32.totalorder %s172, 255
      %s174 = scalar_select %p173, %s172, 255
      %p175 = scmp.lt.s32.totalorder %s19, 0
      %s176 = scalar_select %p175, %s19, 0
      %s177 = sadd.s32 %s176, %s174
      %s178 = smul.addr %s177, 4
      %s179 = scalar_lea.vmem %s0, %s178
      %p180 = pneg %p49
      %p181 = pneg %p46
      %s182 = smul.u32 6, %s19
      %p183 = scmp.lt.s32.totalorder %s182, 5
      %s184 = scalar_select %p183, %s182, 5
      %s185 = smul.addr %s184, 4
      %s186 = scalar_lea.vmem %s1, %s185
      %p187 = pneg %p75
      %p188 = pneg %p72
      %p189 = pneg %p96
      %p190 = pneg %p93
      %p191 = pneg %p122
      %p192 = pneg %p119
      %s193 = smul.u32 128, %s18
      %p194 = scmp.lt.s32.totalorder %s193, 255
      %s195 = scalar_select %p194, %s193, 255
      %s196 = smul.addr %s195, 4
      %s197 = scalar_lea.vmem %s3, %s196
      %s198 = smul.u32 128, %s18
      %p199 = scmp.lt.s32.totalorder %s198, 255
      %s200 = scalar_select %p199, %s198, 255
      %p201 = scmp.lt.s32.totalorder %s19, 0
      %s202 = scalar_select %p201, %s19, 0
      %s203 = sadd.s32 %s202, %s200
      %s204 = smul.addr %s203, 4
      %s205 = scalar_lea.vmem %s0, %s204
      %s206 = smul.u32 128, %s18
      %s207 = smul.u32 6, %s19
      %p208 = scmp.lt.s32.totalorder %s207, 5
      %s209 = scalar_select %p208, %s207, 5
      %s210 = smul.addr %s209, 4
      %s211 = scalar_lea.vmem %s1, %s210
      %s212 = smul.u32 6, %s19
      %s213 = smul.u32 128, %s18
      %p214 = scmp.lt.s32.totalorder %s213, 255
      %s215 = scalar_select %p214, %s213, 255
      %s216 = smul.addr %s215, 4
      %s217 = scalar_lea.vmem %s3, %s216
      %s218 = smul.u32 128, %s18
      %v220 = vld [vmem:[%s205] sm:$0xf]
      %v221 = vld [vmem:[%s205 + $0x4] sm:$0xf]
      %v222 = vld [vmem:[%s205 + $0x8] sm:$0xf]
      %v223 = vld [vmem:[%s205 + $0xc] sm:$0xf]
      %v224 = vld [vmem:[%s205 + $0x10] sm:$0xf]
      %v225 = vld [vmem:[%s205 + $0x14] sm:$0xf]
      %v226 = vld [vmem:[%s205 + $0x18] sm:$0xf]
      %v227 = vld [vmem:[%s205 + $0x1c] sm:$0xf]
      %v228 = vld [vmem:[%s205 + $0x20] sm:$0xf]
      %v229 = vld [vmem:[%s205 + $0x24] sm:$0xf]
      %v230 = vld [vmem:[%s205 + $0x28] sm:$0xf]
      %v231 = vld [vmem:[%s205 + $0x2c] sm:$0xf]
      %v232 = vld [vmem:[%s205 + $0x30] sm:$0xf]
      %v233 = vld [vmem:[%s205 + $0x34] sm:$0xf]
      %v234 = vld [vmem:[%s205 + $0x38] sm:$0xf]
      %v235 = vld [vmem:[%s205 + $0x3c] sm:$0xf]
      %v236 = vld [vmem:[%s205 + $0x40] sm:$0xf]
      %v237 = vld [vmem:[%s205 + $0x44] sm:$0xf]
      %v238 = vld [vmem:[%s205 + $0x48] sm:$0xf]
      %v239 = vld [vmem:[%s205 + $0x4c] sm:$0xf]
      %v240 = vld [vmem:[%s205 + $0x50] sm:$0xf]
      %v241 = vld [vmem:[%s205 + $0x54] sm:$0xf]
      %v242 = vld [vmem:[%s205 + $0x58] sm:$0xf]
      %v243 = vld [vmem:[%s205 + $0x5c] sm:$0xf]
      %v244 = vld [vmem:[%s205 + $0x60] sm:$0xf]
      %v245 = vld [vmem:[%s205 + $0x64] sm:$0xf]
      %v246 = vld [vmem:[%s205 + $0x68] sm:$0xf]
      %v247 = vld [vmem:[%s205 + $0x6c] sm:$0xf]
      %v248 = vld [vmem:[%s205 + $0x70] sm:$0xf]
      %v249 = vld [vmem:[%s205 + $0x74] sm:$0xf]
      %v250 = vld [vmem:[%s205 + $0x78] sm:$0xf]
      %v251 = vld [vmem:[%s205 + $0x7c] sm:$0xf]
      %v252 = vld [vmem:[%s205 + $0x80] sm:$0xf]
      %v253 = vld [vmem:[%s205 + $0x84] sm:$0xf]
      %v254 = vld [vmem:[%s205 + $0x88] sm:$0xf]
      %v255 = vld [vmem:[%s205 + $0x8c] sm:$0xf]
      %v256 = vld [vmem:[%s205 + $0x90] sm:$0xf]
      %v257 = vld [vmem:[%s205 + $0x94] sm:$0xf]
      %v258 = vld [vmem:[%s205 + $0x98] sm:$0xf]
      %v259 = vld [vmem:[%s205 + $0x9c] sm:$0xf]
      %v260 = vld [vmem:[%s205 + $0xa0] sm:$0xf]
      %v261 = vld [vmem:[%s205 + $0xa4] sm:$0xf]
      %v262 = vld [vmem:[%s205 + $0xa8] sm:$0xf]
      %v263 = vld [vmem:[%s205 + $0xac] sm:$0xf]
      %v264 = vld [vmem:[%s205 + $0xb0] sm:$0xf]
      %v265 = vld [vmem:[%s205 + $0xb4] sm:$0xf]
      %v266 = vld [vmem:[%s205 + $0xb8] sm:$0xf]
      %v267 = vld [vmem:[%s205 + $0xbc] sm:$0xf]
      %v268 = vld [vmem:[%s205 + $0xc0] sm:$0xf]
      %v269 = vld [vmem:[%s205 + $0xc4] sm:$0xf]
      %v270 = vld [vmem:[%s205 + $0xc8] sm:$0xf]
      %v271 = vld [vmem:[%s205 + $0xcc] sm:$0xf]
      %v272 = vld [vmem:[%s205 + $0xd0] sm:$0xf]
      %v273 = vld [vmem:[%s205 + $0xd4] sm:$0xf]
      %v274 = vld [vmem:[%s205 + $0xd8] sm:$0xf]
      %v275 = vld [vmem:[%s205 + $0xdc] sm:$0xf]
      %v276 = vld [vmem:[%s205 + $0xe0] sm:$0xf]
      %v277 = vld [vmem:[%s205 + $0xe4] sm:$0xf]
      %v278 = vld [vmem:[%s205 + $0xe8] sm:$0xf]
      %v279 = vld [vmem:[%s205 + $0xec] sm:$0xf]
      %v280 = vld [vmem:[%s205 + $0xf0] sm:$0xf]
      %v281 = vld [vmem:[%s205 + $0xf4] sm:$0xf]
      %v282 = vld [vmem:[%s205 + $0xf8] sm:$0xf]
      %v283 = vld [vmem:[%s205 + $0xfc] sm:$0xf]
      %v284 = vld [vmem:[%s205 + $0x100] sm:$0xf]
      %v285 = vld [vmem:[%s205 + $0x104] sm:$0xf]
      %v286 = vld [vmem:[%s205 + $0x108] sm:$0xf]
      %v287 = vld [vmem:[%s205 + $0x10c] sm:$0xf]
      %v288 = vld [vmem:[%s205 + $0x110] sm:$0xf]
      %v289 = vld [vmem:[%s205 + $0x114] sm:$0xf]
      %v290 = vld [vmem:[%s205 + $0x118] sm:$0xf]
      %v291 = vld [vmem:[%s205 + $0x11c] sm:$0xf]
      %v292 = vld [vmem:[%s205 + $0x120] sm:$0xf]
      %v293 = vld [vmem:[%s205 + $0x124] sm:$0xf]
      %v294 = vld [vmem:[%s205 + $0x128] sm:$0xf]
      %v295 = vld [vmem:[%s205 + $0x12c] sm:$0xf]
      %v296 = vld [vmem:[%s205 + $0x130] sm:$0xf]
      %v297 = vld [vmem:[%s205 + $0x134] sm:$0xf]
      %v298 = vld [vmem:[%s205 + $0x138] sm:$0xf]
      %v299 = vld [vmem:[%s205 + $0x13c] sm:$0xf]
      %v300 = vld [vmem:[%s205 + $0x140] sm:$0xf]
      %v301 = vld [vmem:[%s205 + $0x144] sm:$0xf]
      %v302 = vld [vmem:[%s205 + $0x148] sm:$0xf]
      %v303 = vld [vmem:[%s205 + $0x14c] sm:$0xf]
      %v304 = vld [vmem:[%s205 + $0x150] sm:$0xf]
      %v305 = vld [vmem:[%s205 + $0x154] sm:$0xf]
      %v306 = vld [vmem:[%s205 + $0x158] sm:$0xf]
      %v307 = vld [vmem:[%s205 + $0x15c] sm:$0xf]
      %v308 = vld [vmem:[%s205 + $0x160] sm:$0xf]
      %v309 = vld [vmem:[%s205 + $0x164] sm:$0xf]
      %v310 = vld [vmem:[%s205 + $0x168] sm:$0xf]
      %v311 = vld [vmem:[%s205 + $0x16c] sm:$0xf]
      %v312 = vld [vmem:[%s205 + $0x170] sm:$0xf]
      %v313 = vld [vmem:[%s205 + $0x174] sm:$0xf]
      %v314 = vld [vmem:[%s205 + $0x178] sm:$0xf]
      %v315 = vld [vmem:[%s205 + $0x17c] sm:$0xf]
      %v316 = vld [vmem:[%s205 + $0x180] sm:$0xf]
      %v317 = vld [vmem:[%s205 + $0x184] sm:$0xf]
      %v318 = vld [vmem:[%s205 + $0x188] sm:$0xf]
      %v319 = vld [vmem:[%s205 + $0x18c] sm:$0xf]
      %v320 = vld [vmem:[%s205 + $0x190] sm:$0xf]
      %v321 = vld [vmem:[%s205 + $0x194] sm:$0xf]
      %v322 = vld [vmem:[%s205 + $0x198] sm:$0xf]
      %v323 = vld [vmem:[%s205 + $0x19c] sm:$0xf]
      %v324 = vld [vmem:[%s205 + $0x1a0] sm:$0xf]
      %v325 = vld [vmem:[%s205 + $0x1a4] sm:$0xf]
      %v326 = vld [vmem:[%s205 + $0x1a8] sm:$0xf]
      %v327 = vld [vmem:[%s205 + $0x1ac] sm:$0xf]
      %v328 = vld [vmem:[%s205 + $0x1b0] sm:$0xf]
      %v329 = vld [vmem:[%s205 + $0x1b4] sm:$0xf]
      %v330 = vld [vmem:[%s205 + $0x1b8] sm:$0xf]
      %v331 = vld [vmem:[%s205 + $0x1bc] sm:$0xf]
      %v332 = vld [vmem:[%s205 + $0x1c0] sm:$0xf]
      %v333 = vld [vmem:[%s205 + $0x1c4] sm:$0xf]
      %v334 = vld [vmem:[%s205 + $0x1c8] sm:$0xf]
      %v335 = vld [vmem:[%s205 + $0x1cc] sm:$0xf]
      %v336 = vld [vmem:[%s205 + $0x1d0] sm:$0xf]
      %v337 = vld [vmem:[%s205 + $0x1d4] sm:$0xf]
      %v338 = vld [vmem:[%s205 + $0x1d8] sm:$0xf]
      %v339 = vld [vmem:[%s205 + $0x1dc] sm:$0xf]
      %v340 = vld [vmem:[%s205 + $0x1e0] sm:$0xf]
      %v341 = vld [vmem:[%s205 + $0x1e4] sm:$0xf]
      %v342 = vld [vmem:[%s205 + $0x1e8] sm:$0xf]
      %v343 = vld [vmem:[%s205 + $0x1ec] sm:$0xf]
      %v344 = vld [vmem:[%s205 + $0x1f0] sm:$0xf]
      %v345 = vld [vmem:[%s205 + $0x1f4] sm:$0xf]
      %v346 = vld [vmem:[%s205 + $0x1f8] sm:$0xf]
      %v347 = vld [vmem:[%s205 + $0x1fc] sm:$0xf]
      %v348 = vld [vmem:[%s211] sm:$0xf]
      %v349 = vld [vmem:[%s211 + $0x4] sm:$0xf]
      %v350 = vld [vmem:[%s211 + $0x8] sm:$0xf]
      %v351 = vld [vmem:[%s211 + $0xc] sm:$0xf]
      %v352 = vld [vmem:[%s211 + $0x10] sm:$0xf]
      %v353 = vld [vmem:[%s211 + $0x14] sm:$0xf]
      %v354 = vld [vmem:[%s2] sm:$0x1]
      %v356 = vlaneseq
      %v357 = vshrl.u32 %v356, 7
      %v358 = vsub.s32 0, %v357
      %v359 = vrot.slane %v354, %v358
      %v489 = vunpack.c.l.b16 %v220
      %v490 = vunpack.c.l.b16 %v221
      %v491 = vunpack.c.l.b16 %v222
      %v492 = vunpack.c.l.b16 %v223
      %v493 = vunpack.c.l.b16 %v224
      %v494 = vunpack.c.l.b16 %v225
      %v495 = vunpack.c.l.b16 %v226
      %v496 = vunpack.c.l.b16 %v227
      %v497 = vunpack.c.l.b16 %v228
      %v498 = vunpack.c.l.b16 %v229
      %v499 = vunpack.c.l.b16 %v230
      %v500 = vunpack.c.l.b16 %v231
      %v501 = vunpack.c.l.b16 %v232
      %v502 = vunpack.c.l.b16 %v233
      %v503 = vunpack.c.l.b16 %v234
      %v504 = vunpack.c.l.b16 %v235
      %v505 = vunpack.c.l.b16 %v236
      %v506 = vunpack.c.l.b16 %v237
      %v507 = vunpack.c.l.b16 %v238
      %v508 = vunpack.c.l.b16 %v239
      %v509 = vunpack.c.l.b16 %v240
      %v510 = vunpack.c.l.b16 %v241
      %v511 = vunpack.c.l.b16 %v242
      %v512 = vunpack.c.l.b16 %v243
      %v513 = vunpack.c.l.b16 %v244
      %v514 = vunpack.c.l.b16 %v245
      %v515 = vunpack.c.l.b16 %v246
      %v516 = vunpack.c.l.b16 %v247
      %v517 = vunpack.c.l.b16 %v248
      %v518 = vunpack.c.l.b16 %v249
      %v519 = vunpack.c.l.b16 %v250
      %v520 = vunpack.c.l.b16 %v251
      %v521 = vunpack.c.l.b16 %v252
      %v522 = vunpack.c.l.b16 %v253
      %v523 = vunpack.c.l.b16 %v254
      %v524 = vunpack.c.l.b16 %v255
      %v525 = vunpack.c.l.b16 %v256
      %v526 = vunpack.c.l.b16 %v257
      %v527 = vunpack.c.l.b16 %v258
      %v528 = vunpack.c.l.b16 %v259
      %v529 = vunpack.c.l.b16 %v260
      %v530 = vunpack.c.l.b16 %v261
      %v531 = vunpack.c.l.b16 %v262
      %v532 = vunpack.c.l.b16 %v263
      %v533 = vunpack.c.l.b16 %v264
      %v534 = vunpack.c.l.b16 %v265
      %v535 = vunpack.c.l.b16 %v266
      %v536 = vunpack.c.l.b16 %v267
      %v537 = vunpack.c.l.b16 %v268
      %v538 = vunpack.c.l.b16 %v269
      %v539 = vunpack.c.l.b16 %v270
      %v540 = vunpack.c.l.b16 %v271
      %v541 = vunpack.c.l.b16 %v272
      %v542 = vunpack.c.l.b16 %v273
      %v543 = vunpack.c.l.b16 %v274
      %v544 = vunpack.c.l.b16 %v275
      %v545 = vunpack.c.l.b16 %v276
      %v546 = vunpack.c.l.b16 %v277
      %v547 = vunpack.c.l.b16 %v278
      %v548 = vunpack.c.l.b16 %v279
      %v549 = vunpack.c.l.b16 %v280
      %v550 = vunpack.c.l.b16 %v281
      %v551 = vunpack.c.l.b16 %v282
      %v552 = vunpack.c.l.b16 %v283
      %v553 = vunpack.c.l.b16 %v284
      %v554 = vunpack.c.l.b16 %v285
      %v555 = vunpack.c.l.b16 %v286
      %v556 = vunpack.c.l.b16 %v287
      %v557 = vunpack.c.l.b16 %v288
      %v558 = vunpack.c.l.b16 %v289
      %v559 = vunpack.c.l.b16 %v290
      %v560 = vunpack.c.l.b16 %v291
      %v561 = vunpack.c.l.b16 %v292
      %v562 = vunpack.c.l.b16 %v293
      %v563 = vunpack.c.l.b16 %v294
      %v564 = vunpack.c.l.b16 %v295
      %v565 = vunpack.c.l.b16 %v296
      %v566 = vunpack.c.l.b16 %v297
      %v567 = vunpack.c.l.b16 %v298
      %v568 = vunpack.c.l.b16 %v299
      %v569 = vunpack.c.l.b16 %v300
      %v570 = vunpack.c.l.b16 %v301
      %v571 = vunpack.c.l.b16 %v302
      %v572 = vunpack.c.l.b16 %v303
      %v573 = vunpack.c.l.b16 %v304
      %v574 = vunpack.c.l.b16 %v305
      %v575 = vunpack.c.l.b16 %v306
      %v576 = vunpack.c.l.b16 %v307
      %v577 = vunpack.c.l.b16 %v308
      %v578 = vunpack.c.l.b16 %v309
      %v579 = vunpack.c.l.b16 %v310
      %v580 = vunpack.c.l.b16 %v311
      %v581 = vunpack.c.l.b16 %v312
      %v582 = vunpack.c.l.b16 %v313
      %v583 = vunpack.c.l.b16 %v314
      %v584 = vunpack.c.l.b16 %v315
      %v585 = vunpack.c.l.b16 %v316
      %v586 = vunpack.c.l.b16 %v317
      %v587 = vunpack.c.l.b16 %v318
      %v588 = vunpack.c.l.b16 %v319
      %v589 = vunpack.c.l.b16 %v320
      %v590 = vunpack.c.l.b16 %v321
      %v591 = vunpack.c.l.b16 %v322
      %v592 = vunpack.c.l.b16 %v323
      %v593 = vunpack.c.l.b16 %v324
      %v594 = vunpack.c.l.b16 %v325
      %v595 = vunpack.c.l.b16 %v326
      %v596 = vunpack.c.l.b16 %v327
      %v597 = vunpack.c.l.b16 %v328
      %v598 = vunpack.c.l.b16 %v329
      %v599 = vunpack.c.l.b16 %v330
      %v600 = vunpack.c.l.b16 %v331
      %v601 = vunpack.c.l.b16 %v332
      %v602 = vunpack.c.l.b16 %v333
      %v603 = vunpack.c.l.b16 %v334
      %v604 = vunpack.c.l.b16 %v335
      %v605 = vunpack.c.l.b16 %v336
      %v606 = vunpack.c.l.b16 %v337
      %v607 = vunpack.c.l.b16 %v338
      %v608 = vunpack.c.l.b16 %v339
      %v609 = vunpack.c.l.b16 %v340
      %v610 = vunpack.c.l.b16 %v341
      %v611 = vunpack.c.l.b16 %v342
      %v612 = vunpack.c.l.b16 %v343
      %v613 = vunpack.c.l.b16 %v344
      %v614 = vunpack.c.l.b16 %v345
      %v615 = vunpack.c.l.b16 %v346
      %v616 = vunpack.c.l.b16 %v347
      %v617 = vpack.c.b16 %v490, %v489
      %v618 = vpack.c.b16 %v492, %v491
      %v619 = vpack.c.b16 %v494, %v493
      %v620 = vpack.c.b16 %v496, %v495
      %v621 = vpack.c.b16 %v498, %v497
      %v622 = vpack.c.b16 %v500, %v499
      %v623 = vpack.c.b16 %v502, %v501
      %v624 = vpack.c.b16 %v504, %v503
      %v625 = vpack.c.b16 %v506, %v505
      %v626 = vpack.c.b16 %v508, %v507
      %v627 = vpack.c.b16 %v510, %v509
      %v628 = vpack.c.b16 %v512, %v511
      %v629 = vpack.c.b16 %v514, %v513
      %v630 = vpack.c.b16 %v516, %v515
      %v631 = vpack.c.b16 %v518, %v517
      %v632 = vpack.c.b16 %v520, %v519
      %v633 = vpack.c.b16 %v522, %v521
      %v634 = vpack.c.b16 %v524, %v523
      %v635 = vpack.c.b16 %v526, %v525
      %v636 = vpack.c.b16 %v528, %v527
      %v637 = vpack.c.b16 %v530, %v529
      %v638 = vpack.c.b16 %v532, %v531
      %v639 = vpack.c.b16 %v534, %v533
      %v640 = vpack.c.b16 %v536, %v535
      %v641 = vpack.c.b16 %v538, %v537
      %v642 = vpack.c.b16 %v540, %v539
      %v643 = vpack.c.b16 %v542, %v541
      %v644 = vpack.c.b16 %v544, %v543
      %v645 = vpack.c.b16 %v546, %v545
      %v646 = vpack.c.b16 %v548, %v547
      %v647 = vpack.c.b16 %v550, %v549
      %v648 = vpack.c.b16 %v552, %v551
      %v649 = vpack.c.b16 %v554, %v553
      %v650 = vpack.c.b16 %v556, %v555
      %v651 = vpack.c.b16 %v558, %v557
      %v652 = vpack.c.b16 %v560, %v559
      %v653 = vpack.c.b16 %v562, %v561
      %v654 = vpack.c.b16 %v564, %v563
      %v655 = vpack.c.b16 %v566, %v565
      %v656 = vpack.c.b16 %v568, %v567
      %v657 = vpack.c.b16 %v570, %v569
      %v658 = vpack.c.b16 %v572, %v571
      %v659 = vpack.c.b16 %v574, %v573
      %v660 = vpack.c.b16 %v576, %v575
      %v661 = vpack.c.b16 %v578, %v577
      %v662 = vpack.c.b16 %v580, %v579
      %v663 = vpack.c.b16 %v582, %v581
      %v664 = vpack.c.b16 %v584, %v583
      %v665 = vpack.c.b16 %v586, %v585
      %v666 = vpack.c.b16 %v588, %v587
      %v667 = vpack.c.b16 %v590, %v589
      %v668 = vpack.c.b16 %v592, %v591
      %v669 = vpack.c.b16 %v594, %v593
      %v670 = vpack.c.b16 %v596, %v595
      %v671 = vpack.c.b16 %v598, %v597
      %v672 = vpack.c.b16 %v600, %v599
      %v673 = vpack.c.b16 %v602, %v601
      %v674 = vpack.c.b16 %v604, %v603
      %v675 = vpack.c.b16 %v606, %v605
      %v676 = vpack.c.b16 %v608, %v607
      %v677 = vpack.c.b16 %v610, %v609
      %v678 = vpack.c.b16 %v612, %v611
      %v679 = vpack.c.b16 %v614, %v613
      %v680 = vpack.c.b16 %v616, %v615
      %v687 = vunpack.c.l.b16 %v348
      %v688 = vunpack.c.l.b16 %v349
      %v689 = vunpack.c.l.b16 %v350
      %v690 = vunpack.c.l.b16 %v351
      %v691 = vunpack.c.l.b16 %v352
      %v692 = vunpack.c.l.b16 %v353
      %v693 = vpack.c.b16 %v688, %v687
      %v694 = vpack.c.b16 %v690, %v689
      %v695 = vpack.c.b16 %v692, %v691
      %vm699 = vcmask 392192
      %v701 = vsel %vm699, %v617, 0
      %v704 = vsel %vm699, %v618, 0
      %v707 = vsel %vm699, %v619, 0
      %v710 = vsel %vm699, %v620, 0
      %v713 = vsel %vm699, %v621, 0
      %v716 = vsel %vm699, %v622, 0
      %v719 = vsel %vm699, %v623, 0
      %v722 = vsel %vm699, %v624, 0
      %v725 = vsel %vm699, %v625, 0
      %v728 = vsel %vm699, %v626, 0
      %v731 = vsel %vm699, %v627, 0
      %v734 = vsel %vm699, %v628, 0
      %v737 = vsel %vm699, %v629, 0
      %v740 = vsel %vm699, %v630, 0
      %v743 = vsel %vm699, %v631, 0
      %v746 = vsel %vm699, %v632, 0
      %v749 = vsel %vm699, %v633, 0
      %v752 = vsel %vm699, %v634, 0
      %v755 = vsel %vm699, %v635, 0
      %v758 = vsel %vm699, %v636, 0
      %v761 = vsel %vm699, %v637, 0
      %v764 = vsel %vm699, %v638, 0
      %v767 = vsel %vm699, %v639, 0
      %v770 = vsel %vm699, %v640, 0
      %v773 = vsel %vm699, %v641, 0
      %v776 = vsel %vm699, %v642, 0
      %v779 = vsel %vm699, %v643, 0
      %v782 = vsel %vm699, %v644, 0
      %v785 = vsel %vm699, %v645, 0
      %v788 = vsel %vm699, %v646, 0
      %v791 = vsel %vm699, %v647, 0
      %v794 = vsel %vm699, %v648, 0
      %v797 = vsel %vm699, %v649, 0
      %v800 = vsel %vm699, %v650, 0
      %v803 = vsel %vm699, %v651, 0
      %v806 = vsel %vm699, %v652, 0
      %v809 = vsel %vm699, %v653, 0
      %v812 = vsel %vm699, %v654, 0
      %v815 = vsel %vm699, %v655, 0
      %v818 = vsel %vm699, %v656, 0
      %v821 = vsel %vm699, %v657, 0
      %v824 = vsel %vm699, %v658, 0
      %v827 = vsel %vm699, %v659, 0
      %v830 = vsel %vm699, %v660, 0
      %v833 = vsel %vm699, %v661, 0
      %v836 = vsel %vm699, %v662, 0
      %v839 = vsel %vm699, %v663, 0
      %v842 = vsel %vm699, %v664, 0
      %v845 = vsel %vm699, %v665, 0
      %v848 = vsel %vm699, %v666, 0
      %v851 = vsel %vm699, %v667, 0
      %v854 = vsel %vm699, %v668, 0
      %v857 = vsel %vm699, %v669, 0
      %v860 = vsel %vm699, %v670, 0
      %v863 = vsel %vm699, %v671, 0
      %v866 = vsel %vm699, %v672, 0
      %v869 = vsel %vm699, %v673, 0
      %v872 = vsel %vm699, %v674, 0
      %v875 = vsel %vm699, %v675, 0
      %v878 = vsel %vm699, %v676, 0
      %v881 = vsel %vm699, %v677, 0
      %v884 = vsel %vm699, %v678, 0
      %v887 = vsel %vm699, %v679, 0
      %v890 = vsel %vm699, %v680, 0
      %892 = vmatprep.subr.bf16.mxu0 0
      %893 = vmatpush1.bf16.msra.mxu0 0
      %894 = vmatprep.subr.bf16.mxu0 0
      %895 = vmatpush1.bf16.msra.mxu0 0
      %896 = vmatprep.subr.bf16.mxu0 0
      %897 = vmatpush1.bf16.msra.mxu0 0
      %898 = vmatprep.subr.bf16.mxu0 0
      %899 = vmatpush1.bf16.msra.mxu0 0
      %900 = vmatprep.subr.bf16.mxu0 0
      %901 = vmatpush1.bf16.msra.mxu0 0
      %902 = vmatprep.subr.bf16.mxu0 0
      %903 = vmatpush1.bf16.msra.mxu0 %v695
      %904 = vmatprep.subr.bf16.mxu0 0
      %905 = vmatpush1.bf16.msra.mxu0 %v694
      %906 = vmatprep.subr.bf16.mxu0 0
      %907 = vmatpush1.bf16.msra.mxu0 %v693
      %908 = vmatprep.subr.bf16.mxu0 0
      %909 = vmatpush2.bf16.msra.mxu0 0
      %910 = vmatprep.subr.bf16.mxu0 0
      %911 = vmatpush2.bf16.msra.mxu0 0
      %912 = vmatprep.subr.bf16.mxu0 0
      %913 = vmatpush2.bf16.msra.mxu0 0
      %914 = vmatprep.subr.bf16.mxu0 0
      %915 = vmatpush2.bf16.msra.mxu0 0
      %916 = vmatprep.subr.bf16.mxu0 0
      %917 = vmatpush2.bf16.msra.mxu0 0
      %918 = vmatprep.subr.bf16.mxu0 0
      %919 = vmatpush2.bf16.msra.mxu0 0
      %920 = vmatprep.subr.bf16.mxu0 0
      %921 = vmatpush2.bf16.msra.mxu0 0
      %922 = vmatprep.subr.bf16.mxu0 0
      %923 = vmatpush2.bf16.msra.mxu0 0
      %924 = vmatprep.mubr.bf16.mxu0 0
      %925 = vmatmul.mubr.bf16.gmra.mxu0 %v701
      %v926 = vpop.f32.mrf.mxu0
      %v927 = vadd.f32 %v359, %v926
      %v928 = vpop.f32.mrf.mxu0
      %v929 = vpop.f32.mrf.mxu0
      %v930 = vadd.f32 %v359, %v929
      %v931 = vpop.f32.mrf.mxu0
      %932 = vmatprep.mubr.bf16.mxu0 0
      %933 = vmatmul.mubr.bf16.gmra.mxu0 %v704
      %v934 = vpop.f32.mrf.mxu0
      %v935 = vadd.f32 %v359, %v934
      %v936 = vpop.f32.mrf.mxu0
      %v937 = vpop.f32.mrf.mxu0
      %v938 = vadd.f32 %v359, %v937
      %v939 = vpop.f32.mrf.mxu0
      %940 = vmatprep.mubr.bf16.mxu0 0
      %941 = vmatmul.mubr.bf16.gmra.mxu0 %v707
      %v942 = vpop.f32.mrf.mxu0
      %v943 = vadd.f32 %v359, %v942
      %v944 = vpop.f32.mrf.mxu0
      %v945 = vpop.f32.mrf.mxu0
      %v946 = vadd.f32 %v359, %v945
      %v947 = vpop.f32.mrf.mxu0
      %948 = vmatprep.mubr.bf16.mxu0 0
      %949 = vmatmul.mubr.bf16.gmra.mxu0 %v710
      %v950 = vpop.f32.mrf.mxu0
      %v951 = vadd.f32 %v359, %v950
      %v952 = vpop.f32.mrf.mxu0
      %v953 = vpop.f32.mrf.mxu0
      %v954 = vadd.f32 %v359, %v953
      %v955 = vpop.f32.mrf.mxu0
      %956 = vmatprep.mubr.bf16.mxu0 0
      %957 = vmatmul.mubr.bf16.gmra.mxu0 %v713
      %v958 = vpop.f32.mrf.mxu0
      %v959 = vadd.f32 %v359, %v958
      %v960 = vpop.f32.mrf.mxu0
      %v961 = vpop.f32.mrf.mxu0
      %v962 = vadd.f32 %v359, %v961
      %v963 = vpop.f32.mrf.mxu0
      %964 = vmatprep.mubr.bf16.mxu0 0
      %965 = vmatmul.mubr.bf16.gmra.mxu0 %v716
      %v966 = vpop.f32.mrf.mxu0
      %v967 = vadd.f32 %v359, %v966
      %v968 = vpop.f32.mrf.mxu0
      %v969 = vpop.f32.mrf.mxu0
      %v970 = vadd.f32 %v359, %v969
      %v971 = vpop.f32.mrf.mxu0
      %972 = vmatprep.mubr.bf16.mxu0 0
      %973 = vmatmul.mubr.bf16.gmra.mxu0 %v719
      %v974 = vpop.f32.mrf.mxu0
      %v975 = vadd.f32 %v359, %v974
      %v976 = vpop.f32.mrf.mxu0
      %v977 = vpop.f32.mrf.mxu0
      %v978 = vadd.f32 %v359, %v977
      %v979 = vpop.f32.mrf.mxu0
      %980 = vmatprep.mubr.bf16.mxu0 0
      %981 = vmatmul.mubr.bf16.gmra.mxu0 %v722
      %v982 = vpop.f32.mrf.mxu0
      %v983 = vadd.f32 %v359, %v982
      %v984 = vpop.f32.mrf.mxu0
      %v985 = vpop.f32.mrf.mxu0
      %v986 = vadd.f32 %v359, %v985
      %v987 = vpop.f32.mrf.mxu0
      %988 = vmatprep.mubr.bf16.mxu0 0
      %989 = vmatmul.mubr.bf16.gmra.mxu0 %v725
      %v990 = vpop.f32.mrf.mxu0
      %v991 = vadd.f32 %v359, %v990
      %v992 = vpop.f32.mrf.mxu0
      %v993 = vpop.f32.mrf.mxu0
      %v994 = vadd.f32 %v359, %v993
      %v995 = vpop.f32.mrf.mxu0
      %996 = vmatprep.mubr.bf16.mxu0 0
      %997 = vmatmul.mubr.bf16.gmra.mxu0 %v728
      %v998 = vpop.f32.mrf.mxu0
      %v999 = vadd.f32 %v359, %v998
      %v1000 = vpop.f32.mrf.mxu0
      %v1001 = vpop.f32.mrf.mxu0
      %v1002 = vadd.f32 %v359, %v1001
      %v1003 = vpop.f32.mrf.mxu0
      %1004 = vmatprep.mubr.bf16.mxu0 0
      %1005 = vmatmul.mubr.bf16.gmra.mxu0 %v731
      %v1006 = vpop.f32.mrf.mxu0
      %v1007 = vadd.f32 %v359, %v1006
      %v1008 = vpop.f32.mrf.mxu0
      %v1009 = vpop.f32.mrf.mxu0
      %v1010 = vadd.f32 %v359, %v1009
      %v1011 = vpop.f32.mrf.mxu0
      %1012 = vmatprep.mubr.bf16.mxu0 0
      %1013 = vmatmul.mubr.bf16.gmra.mxu0 %v734
      %v1014 = vpop.f32.mrf.mxu0
      %v1015 = vadd.f32 %v359, %v1014
      %v1016 = vpop.f32.mrf.mxu0
      %v1017 = vpop.f32.mrf.mxu0
      %v1018 = vadd.f32 %v359, %v1017
      %v1019 = vpop.f32.mrf.mxu0
      %1020 = vmatprep.mubr.bf16.mxu0 0
      %1021 = vmatmul.mubr.bf16.gmra.mxu0 %v737
      %v1022 = vpop.f32.mrf.mxu0
      %v1023 = vadd.f32 %v359, %v1022
      %v1024 = vpop.f32.mrf.mxu0
      %v1025 = vpop.f32.mrf.mxu0
      %v1026 = vadd.f32 %v359, %v1025
      %v1027 = vpop.f32.mrf.mxu0
      %1028 = vmatprep.mubr.bf16.mxu0 0
      %1029 = vmatmul.mubr.bf16.gmra.mxu0 %v740
      %v1030 = vpop.f32.mrf.mxu0
      %v1031 = vadd.f32 %v359, %v1030
      %v1032 = vpop.f32.mrf.mxu0
      %v1033 = vpop.f32.mrf.mxu0
      %v1034 = vadd.f32 %v359, %v1033
      %v1035 = vpop.f32.mrf.mxu0
      %1036 = vmatprep.mubr.bf16.mxu0 0
      %1037 = vmatmul.mubr.bf16.gmra.mxu0 %v743
      %v1038 = vpop.f32.mrf.mxu0
      %v1039 = vadd.f32 %v359, %v1038
      %v1040 = vpop.f32.mrf.mxu0
      %v1041 = vpop.f32.mrf.mxu0
      %v1042 = vadd.f32 %v359, %v1041
      %v1043 = vpop.f32.mrf.mxu0
      %1044 = vmatprep.mubr.bf16.mxu0 0
      %1045 = vmatmul.mubr.bf16.gmra.mxu0 %v746
      %v1046 = vpop.f32.mrf.mxu0
      %v1047 = vadd.f32 %v359, %v1046
      %v1048 = vpop.f32.mrf.mxu0
      %v1049 = vpop.f32.mrf.mxu0
      %v1050 = vadd.f32 %v359, %v1049
      %v1051 = vpop.f32.mrf.mxu0
      %1052 = vmatprep.mubr.bf16.mxu0 0
      %1053 = vmatmul.mubr.bf16.gmra.mxu0 %v749
      %v1054 = vpop.f32.mrf.mxu0
      %v1055 = vadd.f32 %v359, %v1054
      %v1056 = vpop.f32.mrf.mxu0
      %v1057 = vpop.f32.mrf.mxu0
      %v1058 = vadd.f32 %v359, %v1057
      %v1059 = vpop.f32.mrf.mxu0
      %1060 = vmatprep.mubr.bf16.mxu0 0
      %1061 = vmatmul.mubr.bf16.gmra.mxu0 %v752
      %v1062 = vpop.f32.mrf.mxu0
      %v1063 = vadd.f32 %v359, %v1062
      %v1064 = vpop.f32.mrf.mxu0
      %v1065 = vpop.f32.mrf.mxu0
      %v1066 = vadd.f32 %v359, %v1065
      %v1067 = vpop.f32.mrf.mxu0
      %1068 = vmatprep.mubr.bf16.mxu0 0
      %1069 = vmatmul.mubr.bf16.gmra.mxu0 %v755
      %v1070 = vpop.f32.mrf.mxu0
      %v1071 = vadd.f32 %v359, %v1070
      %v1072 = vpop.f32.mrf.mxu0
      %v1073 = vpop.f32.mrf.mxu0
      %v1074 = vadd.f32 %v359, %v1073
      %v1075 = vpop.f32.mrf.mxu0
      %1076 = vmatprep.mubr.bf16.mxu0 0
      %1077 = vmatmul.mubr.bf16.gmra.mxu0 %v758
      %v1078 = vpop.f32.mrf.mxu0
      %v1079 = vadd.f32 %v359, %v1078
      %v1080 = vpop.f32.mrf.mxu0
      %v1081 = vpop.f32.mrf.mxu0
      %v1082 = vadd.f32 %v359, %v1081
      %v1083 = vpop.f32.mrf.mxu0
      %1084 = vmatprep.mubr.bf16.mxu0 0
      %1085 = vmatmul.mubr.bf16.gmra.mxu0 %v761
      %v1086 = vpop.f32.mrf.mxu0
      %v1087 = vadd.f32 %v359, %v1086
      %v1088 = vpop.f32.mrf.mxu0
      %v1089 = vpop.f32.mrf.mxu0
      %v1090 = vadd.f32 %v359, %v1089
      %v1091 = vpop.f32.mrf.mxu0
      %1092 = vmatprep.mubr.bf16.mxu0 0
      %1093 = vmatmul.mubr.bf16.gmra.mxu0 %v764
      %v1094 = vpop.f32.mrf.mxu0
      %v1095 = vadd.f32 %v359, %v1094
      %v1096 = vpop.f32.mrf.mxu0
      %v1097 = vpop.f32.mrf.mxu0
      %v1098 = vadd.f32 %v359, %v1097
      %v1099 = vpop.f32.mrf.mxu0
      %1100 = vmatprep.mubr.bf16.mxu0 0
      %1101 = vmatmul.mubr.bf16.gmra.mxu0 %v767
      %v1102 = vpop.f32.mrf.mxu0
      %v1103 = vadd.f32 %v359, %v1102
      %v1104 = vpop.f32.mrf.mxu0
      %v1105 = vpop.f32.mrf.mxu0
      %v1106 = vadd.f32 %v359, %v1105
      %v1107 = vpop.f32.mrf.mxu0
      %1108 = vmatprep.mubr.bf16.mxu0 0
      %1109 = vmatmul.mubr.bf16.gmra.mxu0 %v770
      %v1110 = vpop.f32.mrf.mxu0
      %v1111 = vadd.f32 %v359, %v1110
      %v1112 = vpop.f32.mrf.mxu0
      %v1113 = vpop.f32.mrf.mxu0
      %v1114 = vadd.f32 %v359, %v1113
      %v1115 = vpop.f32.mrf.mxu0
      %1116 = vmatprep.mubr.bf16.mxu0 0
      %1117 = vmatmul.mubr.bf16.gmra.mxu0 %v773
      %v1118 = vpop.f32.mrf.mxu0
      %v1119 = vadd.f32 %v359, %v1118
      %v1120 = vpop.f32.mrf.mxu0
      %v1121 = vpop.f32.mrf.mxu0
      %v1122 = vadd.f32 %v359, %v1121
      %v1123 = vpop.f32.mrf.mxu0
      %1124 = vmatprep.mubr.bf16.mxu0 0
      %1125 = vmatmul.mubr.bf16.gmra.mxu0 %v776
      %v1126 = vpop.f32.mrf.mxu0
      %v1127 = vadd.f32 %v359, %v1126
      %v1128 = vpop.f32.mrf.mxu0
      %v1129 = vpop.f32.mrf.mxu0
      %v1130 = vadd.f32 %v359, %v1129
      %v1131 = vpop.f32.mrf.mxu0
      %1132 = vmatprep.mubr.bf16.mxu0 0
      %1133 = vmatmul.mubr.bf16.gmra.mxu0 %v779
      %v1134 = vpop.f32.mrf.mxu0
      %v1135 = vadd.f32 %v359, %v1134
      %v1136 = vpop.f32.mrf.mxu0
      %v1137 = vpop.f32.mrf.mxu0
      %v1138 = vadd.f32 %v359, %v1137
      %v1139 = vpop.f32.mrf.mxu0
      %1140 = vmatprep.mubr.bf16.mxu0 0
      %1141 = vmatmul.mubr.bf16.gmra.mxu0 %v782
      %v1142 = vpop.f32.mrf.mxu0
      %v1143 = vadd.f32 %v359, %v1142
      %v1144 = vpop.f32.mrf.mxu0
      %v1145 = vpop.f32.mrf.mxu0
      %v1146 = vadd.f32 %v359, %v1145
      %v1147 = vpop.f32.mrf.mxu0
      %1148 = vmatprep.mubr.bf16.mxu0 0
      %1149 = vmatmul.mubr.bf16.gmra.mxu0 %v785
      %v1150 = vpop.f32.mrf.mxu0
      %v1151 = vadd.f32 %v359, %v1150
      %v1152 = vpop.f32.mrf.mxu0
      %v1153 = vpop.f32.mrf.mxu0
      %v1154 = vadd.f32 %v359, %v1153
      %v1155 = vpop.f32.mrf.mxu0
      %1156 = vmatprep.mubr.bf16.mxu0 0
      %1157 = vmatmul.mubr.bf16.gmra.mxu0 %v788
      %v1158 = vpop.f32.mrf.mxu0
      %v1159 = vadd.f32 %v359, %v1158
      %v1160 = vpop.f32.mrf.mxu0
      %v1161 = vpop.f32.mrf.mxu0
      %v1162 = vadd.f32 %v359, %v1161
      %v1163 = vpop.f32.mrf.mxu0
      %1164 = vmatprep.mubr.bf16.mxu0 0
      %1165 = vmatmul.mubr.bf16.gmra.mxu0 %v791
      %v1166 = vpop.f32.mrf.mxu0
      %v1167 = vadd.f32 %v359, %v1166
      %v1168 = vpop.f32.mrf.mxu0
      %v1169 = vpop.f32.mrf.mxu0
      %v1170 = vadd.f32 %v359, %v1169
      %v1171 = vpop.f32.mrf.mxu0
      %1172 = vmatprep.mubr.bf16.mxu0 0
      %1173 = vmatmul.mubr.bf16.gmra.mxu0 %v794
      %v1174 = vpop.f32.mrf.mxu0
      %v1175 = vadd.f32 %v359, %v1174
      %v1176 = vpop.f32.mrf.mxu0
      %v1177 = vpop.f32.mrf.mxu0
      %v1178 = vadd.f32 %v359, %v1177
      %v1179 = vpop.f32.mrf.mxu0
      %1180 = vmatprep.mubr.bf16.mxu0 0
      %1181 = vmatmul.mubr.bf16.gmra.mxu0 %v797
      %v1182 = vpop.f32.mrf.mxu0
      %v1183 = vadd.f32 %v359, %v1182
      %v1184 = vpop.f32.mrf.mxu0
      %v1185 = vpop.f32.mrf.mxu0
      %v1186 = vadd.f32 %v359, %v1185
      %v1187 = vpop.f32.mrf.mxu0
      %1188 = vmatprep.mubr.bf16.mxu0 0
      %1189 = vmatmul.mubr.bf16.gmra.mxu0 %v800
      %v1190 = vpop.f32.mrf.mxu0
      %v1191 = vadd.f32 %v359, %v1190
      %v1192 = vpop.f32.mrf.mxu0
      %v1193 = vpop.f32.mrf.mxu0
      %v1194 = vadd.f32 %v359, %v1193
      %v1195 = vpop.f32.mrf.mxu0
      %1196 = vmatprep.mubr.bf16.mxu0 0
      %1197 = vmatmul.mubr.bf16.gmra.mxu0 %v803
      %v1198 = vpop.f32.mrf.mxu0
      %v1199 = vadd.f32 %v359, %v1198
      %v1200 = vpop.f32.mrf.mxu0
      %v1201 = vpop.f32.mrf.mxu0
      %v1202 = vadd.f32 %v359, %v1201
      %v1203 = vpop.f32.mrf.mxu0
      %1204 = vmatprep.mubr.bf16.mxu0 0
      %1205 = vmatmul.mubr.bf16.gmra.mxu0 %v806
      %v1206 = vpop.f32.mrf.mxu0
      %v1207 = vadd.f32 %v359, %v1206
      %v1208 = vpop.f32.mrf.mxu0
      %v1209 = vpop.f32.mrf.mxu0
      %v1210 = vadd.f32 %v359, %v1209
      %v1211 = vpop.f32.mrf.mxu0
      %1212 = vmatprep.mubr.bf16.mxu0 0
      %1213 = vmatmul.mubr.bf16.gmra.mxu0 %v809
      %v1214 = vpop.f32.mrf.mxu0
      %v1215 = vadd.f32 %v359, %v1214
      %v1216 = vpop.f32.mrf.mxu0
      %v1217 = vpop.f32.mrf.mxu0
      %v1218 = vadd.f32 %v359, %v1217
      %v1219 = vpop.f32.mrf.mxu0
      %1220 = vmatprep.mubr.bf16.mxu0 0
      %1221 = vmatmul.mubr.bf16.gmra.mxu0 %v812
      %v1222 = vpop.f32.mrf.mxu0
      %v1223 = vadd.f32 %v359, %v1222
      %v1224 = vpop.f32.mrf.mxu0
      %v1225 = vpop.f32.mrf.mxu0
      %v1226 = vadd.f32 %v359, %v1225
      %v1227 = vpop.f32.mrf.mxu0
      %1228 = vmatprep.mubr.bf16.mxu0 0
      %1229 = vmatmul.mubr.bf16.gmra.mxu0 %v815
      %v1230 = vpop.f32.mrf.mxu0
      %v1231 = vadd.f32 %v359, %v1230
      %v1232 = vpop.f32.mrf.mxu0
      %v1233 = vpop.f32.mrf.mxu0
      %v1234 = vadd.f32 %v359, %v1233
      %v1235 = vpop.f32.mrf.mxu0
      %1236 = vmatprep.mubr.bf16.mxu0 0
      %1237 = vmatmul.mubr.bf16.gmra.mxu0 %v818
      %v1238 = vpop.f32.mrf.mxu0
      %v1239 = vadd.f32 %v359, %v1238
      %v1240 = vpop.f32.mrf.mxu0
      %v1241 = vpop.f32.mrf.mxu0
      %v1242 = vadd.f32 %v359, %v1241
      %v1243 = vpop.f32.mrf.mxu0
      %1244 = vmatprep.mubr.bf16.mxu0 0
      %1245 = vmatmul.mubr.bf16.gmra.mxu0 %v821
      %v1246 = vpop.f32.mrf.mxu0
      %v1247 = vadd.f32 %v359, %v1246
      %v1248 = vpop.f32.mrf.mxu0
      %v1249 = vpop.f32.mrf.mxu0
      %v1250 = vadd.f32 %v359, %v1249
      %v1251 = vpop.f32.mrf.mxu0
      %1252 = vmatprep.mubr.bf16.mxu0 0
      %1253 = vmatmul.mubr.bf16.gmra.mxu0 %v824
      %v1254 = vpop.f32.mrf.mxu0
      %v1255 = vadd.f32 %v359, %v1254
      %v1256 = vpop.f32.mrf.mxu0
      %v1257 = vpop.f32.mrf.mxu0
      %v1258 = vadd.f32 %v359, %v1257
      %v1259 = vpop.f32.mrf.mxu0
      %1260 = vmatprep.mubr.bf16.mxu0 0
      %1261 = vmatmul.mubr.bf16.gmra.mxu0 %v827
      %v1262 = vpop.f32.mrf.mxu0
      %v1263 = vadd.f32 %v359, %v1262
      %v1264 = vpop.f32.mrf.mxu0
      %v1265 = vpop.f32.mrf.mxu0
      %v1266 = vadd.f32 %v359, %v1265
      %v1267 = vpop.f32.mrf.mxu0
      %1268 = vmatprep.mubr.bf16.mxu0 0
      %1269 = vmatmul.mubr.bf16.gmra.mxu0 %v830
      %v1270 = vpop.f32.mrf.mxu0
      %v1271 = vadd.f32 %v359, %v1270
      %v1272 = vpop.f32.mrf.mxu0
      %v1273 = vpop.f32.mrf.mxu0
      %v1274 = vadd.f32 %v359, %v1273
      %v1275 = vpop.f32.mrf.mxu0
      %1276 = vmatprep.mubr.bf16.mxu0 0
      %1277 = vmatmul.mubr.bf16.gmra.mxu0 %v833
      %v1278 = vpop.f32.mrf.mxu0
      %v1279 = vadd.f32 %v359, %v1278
      %v1280 = vpop.f32.mrf.mxu0
      %v1281 = vpop.f32.mrf.mxu0
      %v1282 = vadd.f32 %v359, %v1281
      %v1283 = vpop.f32.mrf.mxu0
      %1284 = vmatprep.mubr.bf16.mxu0 0
      %1285 = vmatmul.mubr.bf16.gmra.mxu0 %v836
      %v1286 = vpop.f32.mrf.mxu0
      %v1287 = vadd.f32 %v359, %v1286
      %v1288 = vpop.f32.mrf.mxu0
      %v1289 = vpop.f32.mrf.mxu0
      %v1290 = vadd.f32 %v359, %v1289
      %v1291 = vpop.f32.mrf.mxu0
      %1292 = vmatprep.mubr.bf16.mxu0 0
      %1293 = vmatmul.mubr.bf16.gmra.mxu0 %v839
      %v1294 = vpop.f32.mrf.mxu0
      %v1295 = vadd.f32 %v359, %v1294
      %v1296 = vpop.f32.mrf.mxu0
      %v1297 = vpop.f32.mrf.mxu0
      %v1298 = vadd.f32 %v359, %v1297
      %v1299 = vpop.f32.mrf.mxu0
      %1300 = vmatprep.mubr.bf16.mxu0 0
      %1301 = vmatmul.mubr.bf16.gmra.mxu0 %v842
      %v1302 = vpop.f32.mrf.mxu0
      %v1303 = vadd.f32 %v359, %v1302
      %v1304 = vpop.f32.mrf.mxu0
      %v1305 = vpop.f32.mrf.mxu0
      %v1306 = vadd.f32 %v359, %v1305
      %v1307 = vpop.f32.mrf.mxu0
      %1308 = vmatprep.mubr.bf16.mxu0 0
      %1309 = vmatmul.mubr.bf16.gmra.mxu0 %v845
      %v1310 = vpop.f32.mrf.mxu0
      %v1311 = vadd.f32 %v359, %v1310
      %v1312 = vpop.f32.mrf.mxu0
      %v1313 = vpop.f32.mrf.mxu0
      %v1314 = vadd.f32 %v359, %v1313
      %v1315 = vpop.f32.mrf.mxu0
      %1316 = vmatprep.mubr.bf16.mxu0 0
      %1317 = vmatmul.mubr.bf16.gmra.mxu0 %v848
      %v1318 = vpop.f32.mrf.mxu0
      %v1319 = vadd.f32 %v359, %v1318
      %v1320 = vpop.f32.mrf.mxu0
      %v1321 = vpop.f32.mrf.mxu0
      %v1322 = vadd.f32 %v359, %v1321
      %v1323 = vpop.f32.mrf.mxu0
      %1324 = vmatprep.mubr.bf16.mxu0 0
      %1325 = vmatmul.mubr.bf16.gmra.mxu0 %v851
      %v1326 = vpop.f32.mrf.mxu0
      %v1327 = vadd.f32 %v359, %v1326
      %v1328 = vpop.f32.mrf.mxu0
      %v1329 = vpop.f32.mrf.mxu0
      %v1330 = vadd.f32 %v359, %v1329
      %v1331 = vpop.f32.mrf.mxu0
      %1332 = vmatprep.mubr.bf16.mxu0 0
      %1333 = vmatmul.mubr.bf16.gmra.mxu0 %v854
      %v1334 = vpop.f32.mrf.mxu0
      %v1335 = vadd.f32 %v359, %v1334
      %v1336 = vpop.f32.mrf.mxu0
      %v1337 = vpop.f32.mrf.mxu0
      %v1338 = vadd.f32 %v359, %v1337
      %v1339 = vpop.f32.mrf.mxu0
      %1340 = vmatprep.mubr.bf16.mxu0 0
      %1341 = vmatmul.mubr.bf16.gmra.mxu0 %v857
      %v1342 = vpop.f32.mrf.mxu0
      %v1343 = vadd.f32 %v359, %v1342
      %v1344 = vpop.f32.mrf.mxu0
      %v1345 = vpop.f32.mrf.mxu0
      %v1346 = vadd.f32 %v359, %v1345
      %v1347 = vpop.f32.mrf.mxu0
      %1348 = vmatprep.mubr.bf16.mxu0 0
      %1349 = vmatmul.mubr.bf16.gmra.mxu0 %v860
      %v1350 = vpop.f32.mrf.mxu0
      %v1351 = vadd.f32 %v359, %v1350
      %v1352 = vpop.f32.mrf.mxu0
      %v1353 = vpop.f32.mrf.mxu0
      %v1354 = vadd.f32 %v359, %v1353
      %v1355 = vpop.f32.mrf.mxu0
      %1356 = vmatprep.mubr.bf16.mxu0 0
      %1357 = vmatmul.mubr.bf16.gmra.mxu0 %v863
      %v1358 = vpop.f32.mrf.mxu0
      %v1359 = vadd.f32 %v359, %v1358
      %v1360 = vpop.f32.mrf.mxu0
      %v1361 = vpop.f32.mrf.mxu0
      %v1362 = vadd.f32 %v359, %v1361
      %v1363 = vpop.f32.mrf.mxu0
      %1364 = vmatprep.mubr.bf16.mxu0 0
      %1365 = vmatmul.mubr.bf16.gmra.mxu0 %v866
      %v1366 = vpop.f32.mrf.mxu0
      %v1367 = vadd.f32 %v359, %v1366
      %v1368 = vpop.f32.mrf.mxu0
      %v1369 = vpop.f32.mrf.mxu0
      %v1370 = vadd.f32 %v359, %v1369
      %v1371 = vpop.f32.mrf.mxu0
      %1372 = vmatprep.mubr.bf16.mxu0 0
      %1373 = vmatmul.mubr.bf16.gmra.mxu0 %v869
      %v1374 = vpop.f32.mrf.mxu0
      %v1375 = vadd.f32 %v359, %v1374
      %v1376 = vpop.f32.mrf.mxu0
      %v1377 = vpop.f32.mrf.mxu0
      %v1378 = vadd.f32 %v359, %v1377
      %v1379 = vpop.f32.mrf.mxu0
      %1380 = vmatprep.mubr.bf16.mxu0 0
      %1381 = vmatmul.mubr.bf16.gmra.mxu0 %v872
      %v1382 = vpop.f32.mrf.mxu0
      %v1383 = vadd.f32 %v359, %v1382
      %v1384 = vpop.f32.mrf.mxu0
      %v1385 = vpop.f32.mrf.mxu0
      %v1386 = vadd.f32 %v359, %v1385
      %v1387 = vpop.f32.mrf.mxu0
      %1388 = vmatprep.mubr.bf16.mxu0 0
      %1389 = vmatmul.mubr.bf16.gmra.mxu0 %v875
      %v1390 = vpop.f32.mrf.mxu0
      %v1391 = vadd.f32 %v359, %v1390
      %v1392 = vpop.f32.mrf.mxu0
      %v1393 = vpop.f32.mrf.mxu0
      %v1394 = vadd.f32 %v359, %v1393
      %v1395 = vpop.f32.mrf.mxu0
      %1396 = vmatprep.mubr.bf16.mxu0 0
      %1397 = vmatmul.mubr.bf16.gmra.mxu0 %v878
      %v1398 = vpop.f32.mrf.mxu0
      %v1399 = vadd.f32 %v359, %v1398
      %v1400 = vpop.f32.mrf.mxu0
      %v1401 = vpop.f32.mrf.mxu0
      %v1402 = vadd.f32 %v359, %v1401
      %v1403 = vpop.f32.mrf.mxu0
      %1404 = vmatprep.mubr.bf16.mxu0 0
      %1405 = vmatmul.mubr.bf16.gmra.mxu0 %v881
      %v1406 = vpop.f32.mrf.mxu0
      %v1407 = vadd.f32 %v359, %v1406
      %v1408 = vpop.f32.mrf.mxu0
      %v1409 = vpop.f32.mrf.mxu0
      %v1410 = vadd.f32 %v359, %v1409
      %v1411 = vpop.f32.mrf.mxu0
      %1412 = vmatprep.mubr.bf16.mxu0 0
      %1413 = vmatmul.mubr.bf16.gmra.mxu0 %v884
      %v1414 = vpop.f32.mrf.mxu0
      %v1415 = vadd.f32 %v359, %v1414
      %v1416 = vpop.f32.mrf.mxu0
      %v1417 = vpop.f32.mrf.mxu0
      %v1418 = vadd.f32 %v359, %v1417
      %v1419 = vpop.f32.mrf.mxu0
      %1420 = vmatprep.mubr.bf16.mxu0 0
      %1421 = vmatmul.mubr.bf16.gmra.mxu0 %v887
      %v1422 = vpop.f32.mrf.mxu0
      %v1423 = vadd.f32 %v359, %v1422
      %v1424 = vpop.f32.mrf.mxu0
      %v1425 = vpop.f32.mrf.mxu0
      %v1426 = vadd.f32 %v359, %v1425
      %v1427 = vpop.f32.mrf.mxu0
      %1428 = vmatprep.mubr.bf16.mxu0 0
      %1429 = vmatmul.mubr.bf16.gmra.mxu0 %v890
      %v1430 = vpop.f32.mrf.mxu0
      %v1431 = vadd.f32 %v359, %v1430
      %v1432 = vpop.f32.mrf.mxu0
      %v1433 = vpop.f32.mrf.mxu0
      %v1434 = vadd.f32 %v359, %v1433
      %v1435 = vpop.f32.mrf.mxu0
      %1436 = vdwg.mxu0
      %v1437 = vpack.c.bf16 %v930, %v927
      %v1438 = vpack.c.bf16 %v938, %v935
      %v1439 = vpack.c.bf16 %v946, %v943
      %v1440 = vpack.c.bf16 %v954, %v951
      %v1441 = vpack.c.bf16 %v962, %v959
      %v1442 = vpack.c.bf16 %v970, %v967
      %v1443 = vpack.c.bf16 %v978, %v975
      %v1444 = vpack.c.bf16 %v986, %v983
      %v1445 = vpack.c.bf16 %v994, %v991
      %v1446 = vpack.c.bf16 %v1002, %v999
      %v1447 = vpack.c.bf16 %v1010, %v1007
      %v1448 = vpack.c.bf16 %v1018, %v1015
      %v1449 = vpack.c.bf16 %v1026, %v1023
      %v1450 = vpack.c.bf16 %v1034, %v1031
      %v1451 = vpack.c.bf16 %v1042, %v1039
      %v1452 = vpack.c.bf16 %v1050, %v1047
      %v1453 = vpack.c.bf16 %v1058, %v1055
      %v1454 = vpack.c.bf16 %v1066, %v1063
      %v1455 = vpack.c.bf16 %v1074, %v1071
      %v1456 = vpack.c.bf16 %v1082, %v1079
      %v1457 = vpack.c.bf16 %v1090, %v1087
      %v1458 = vpack.c.bf16 %v1098, %v1095
      %v1459 = vpack.c.bf16 %v1106, %v1103
      %v1460 = vpack.c.bf16 %v1114, %v1111
      %v1461 = vpack.c.bf16 %v1122, %v1119
      %v1462 = vpack.c.bf16 %v1130, %v1127
      %v1463 = vpack.c.bf16 %v1138, %v1135
      %v1464 = vpack.c.bf16 %v1146, %v1143
      %v1465 = vpack.c.bf16 %v1154, %v1151
      %v1466 = vpack.c.bf16 %v1162, %v1159
      %v1467 = vpack.c.bf16 %v1170, %v1167
      %v1468 = vpack.c.bf16 %v1178, %v1175
      %v1469 = vpack.c.bf16 %v1186, %v1183
      %v1470 = vpack.c.bf16 %v1194, %v1191
      %v1471 = vpack.c.bf16 %v1202, %v1199
      %v1472 = vpack.c.bf16 %v1210, %v1207
      %v1473 = vpack.c.bf16 %v1218, %v1215
      %v1474 = vpack.c.bf16 %v1226, %v1223
      %v1475 = vpack.c.bf16 %v1234, %v1231
      %v1476 = vpack.c.bf16 %v1242, %v1239
      %v1477 = vpack.c.bf16 %v1250, %v1247
      %v1478 = vpack.c.bf16 %v1258, %v1255
      %v1479 = vpack.c.bf16 %v1266, %v1263
      %v1480 = vpack.c.bf16 %v1274, %v1271
      %v1481 = vpack.c.bf16 %v1282, %v1279
      %v1482 = vpack.c.bf16 %v1290, %v1287
      %v1483 = vpack.c.bf16 %v1298, %v1295
      %v1484 = vpack.c.bf16 %v1306, %v1303
      %v1485 = vpack.c.bf16 %v1314, %v1311
      %v1486 = vpack.c.bf16 %v1322, %v1319
      %v1487 = vpack.c.bf16 %v1330, %v1327
      %v1488 = vpack.c.bf16 %v1338, %v1335
      %v1489 = vpack.c.bf16 %v1346, %v1343
      %v1490 = vpack.c.bf16 %v1354, %v1351
      %v1491 = vpack.c.bf16 %v1362, %v1359
      %v1492 = vpack.c.bf16 %v1370, %v1367
      %v1493 = vpack.c.bf16 %v1378, %v1375
      %v1494 = vpack.c.bf16 %v1386, %v1383
      %v1495 = vpack.c.bf16 %v1394, %v1391
      %v1496 = vpack.c.bf16 %v1402, %v1399
      %v1497 = vpack.c.bf16 %v1410, %v1407
      %v1498 = vpack.c.bf16 %v1418, %v1415
      %v1499 = vpack.c.bf16 %v1426, %v1423
      %v1500 = vpack.c.bf16 %v1434, %v1431
      %v1565 = vunpack.c.l.b16 %v1437
      %v1566 = vunpack.c.h.b16 %v1437
      %v1567 = vunpack.c.l.b16 %v1438
      %v1568 = vunpack.c.h.b16 %v1438
      %v1569 = vunpack.c.l.b16 %v1439
      %v1570 = vunpack.c.h.b16 %v1439
      %v1571 = vunpack.c.l.b16 %v1440
      %v1572 = vunpack.c.h.b16 %v1440
      %v1573 = vunpack.c.l.b16 %v1441
      %v1574 = vunpack.c.h.b16 %v1441
      %v1575 = vunpack.c.l.b16 %v1442
      %v1576 = vunpack.c.h.b16 %v1442
      %v1577 = vunpack.c.l.b16 %v1443
      %v1578 = vunpack.c.h.b16 %v1443
      %v1579 = vunpack.c.l.b16 %v1444
      %v1580 = vunpack.c.h.b16 %v1444
      %v1581 = vunpack.c.l.b16 %v1445
      %v1582 = vunpack.c.h.b16 %v1445
      %v1583 = vunpack.c.l.b16 %v1446
      %v1584 = vunpack.c.h.b16 %v1446
      %v1585 = vunpack.c.l.b16 %v1447
      %v1586 = vunpack.c.h.b16 %v1447
      %v1587 = vunpack.c.l.b16 %v1448
      %v1588 = vunpack.c.h.b16 %v1448
      %v1589 = vunpack.c.l.b16 %v1449
      %v1590 = vunpack.c.h.b16 %v1449
      %v1591 = vunpack.c.l.b16 %v1450
      %v1592 = vunpack.c.h.b16 %v1450
      %v1593 = vunpack.c.l.b16 %v1451
      %v1594 = vunpack.c.h.b16 %v1451
      %v1595 = vunpack.c.l.b16 %v1452
      %v1596 = vunpack.c.h.b16 %v1452
      %v1597 = vunpack.c.l.b16 %v1453
      %v1598 = vunpack.c.h.b16 %v1453
      %v1599 = vunpack.c.l.b16 %v1454
      %v1600 = vunpack.c.h.b16 %v1454
      %v1601 = vunpack.c.l.b16 %v1455
      %v1602 = vunpack.c.h.b16 %v1455
      %v1603 = vunpack.c.l.b16 %v1456
      %v1604 = vunpack.c.h.b16 %v1456
      %v1605 = vunpack.c.l.b16 %v1457
      %v1606 = vunpack.c.h.b16 %v1457
      %v1607 = vunpack.c.l.b16 %v1458
      %v1608 = vunpack.c.h.b16 %v1458
      %v1609 = vunpack.c.l.b16 %v1459
      %v1610 = vunpack.c.h.b16 %v1459
      %v1611 = vunpack.c.l.b16 %v1460
      %v1612 = vunpack.c.h.b16 %v1460
      %v1613 = vunpack.c.l.b16 %v1461
      %v1614 = vunpack.c.h.b16 %v1461
      %v1615 = vunpack.c.l.b16 %v1462
      %v1616 = vunpack.c.h.b16 %v1462
      %v1617 = vunpack.c.l.b16 %v1463
      %v1618 = vunpack.c.h.b16 %v1463
      %v1619 = vunpack.c.l.b16 %v1464
      %v1620 = vunpack.c.h.b16 %v1464
      %v1621 = vunpack.c.l.b16 %v1465
      %v1622 = vunpack.c.h.b16 %v1465
      %v1623 = vunpack.c.l.b16 %v1466
      %v1624 = vunpack.c.h.b16 %v1466
      %v1625 = vunpack.c.l.b16 %v1467
      %v1626 = vunpack.c.h.b16 %v1467
      %v1627 = vunpack.c.l.b16 %v1468
      %v1628 = vunpack.c.h.b16 %v1468
      %v1629 = vunpack.c.l.b16 %v1469
      %v1630 = vunpack.c.h.b16 %v1469
      %v1631 = vunpack.c.l.b16 %v1470
      %v1632 = vunpack.c.h.b16 %v1470
      %v1633 = vunpack.c.l.b16 %v1471
      %v1634 = vunpack.c.h.b16 %v1471
      %v1635 = vunpack.c.l.b16 %v1472
      %v1636 = vunpack.c.h.b16 %v1472
      %v1637 = vunpack.c.l.b16 %v1473
      %v1638 = vunpack.c.h.b16 %v1473
      %v1639 = vunpack.c.l.b16 %v1474
      %v1640 = vunpack.c.h.b16 %v1474
      %v1641 = vunpack.c.l.b16 %v1475
      %v1642 = vunpack.c.h.b16 %v1475
      %v1643 = vunpack.c.l.b16 %v1476
      %v1644 = vunpack.c.h.b16 %v1476
      %v1645 = vunpack.c.l.b16 %v1477
      %v1646 = vunpack.c.h.b16 %v1477
      %v1647 = vunpack.c.l.b16 %v1478
      %v1648 = vunpack.c.h.b16 %v1478
      %v1649 = vunpack.c.l.b16 %v1479
      %v1650 = vunpack.c.h.b16 %v1479
      %v1651 = vunpack.c.l.b16 %v1480
      %v1652 = vunpack.c.h.b16 %v1480
      %v1653 = vunpack.c.l.b16 %v1481
      %v1654 = vunpack.c.h.b16 %v1481
      %v1655 = vunpack.c.l.b16 %v1482
      %v1656 = vunpack.c.h.b16 %v1482
      %v1657 = vunpack.c.l.b16 %v1483
      %v1658 = vunpack.c.h.b16 %v1483
      %v1659 = vunpack.c.l.b16 %v1484
      %v1660 = vunpack.c.h.b16 %v1484
      %v1661 = vunpack.c.l.b16 %v1485
      %v1662 = vunpack.c.h.b16 %v1485
      %v1663 = vunpack.c.l.b16 %v1486
      %v1664 = vunpack.c.h.b16 %v1486
      %v1665 = vunpack.c.l.b16 %v1487
      %v1666 = vunpack.c.h.b16 %v1487
      %v1667 = vunpack.c.l.b16 %v1488
      %v1668 = vunpack.c.h.b16 %v1488
      %v1669 = vunpack.c.l.b16 %v1489
      %v1670 = vunpack.c.h.b16 %v1489
      %v1671 = vunpack.c.l.b16 %v1490
      %v1672 = vunpack.c.h.b16 %v1490
      %v1673 = vunpack.c.l.b16 %v1491
      %v1674 = vunpack.c.h.b16 %v1491
      %v1675 = vunpack.c.l.b16 %v1492
      %v1676 = vunpack.c.h.b16 %v1492
      %v1677 = vunpack.c.l.b16 %v1493
      %v1678 = vunpack.c.h.b16 %v1493
      %v1679 = vunpack.c.l.b16 %v1494
      %v1680 = vunpack.c.h.b16 %v1494
      %v1681 = vunpack.c.l.b16 %v1495
      %v1682 = vunpack.c.h.b16 %v1495
      %v1683 = vunpack.c.l.b16 %v1496
      %v1684 = vunpack.c.h.b16 %v1496
      %v1685 = vunpack.c.l.b16 %v1497
      %v1686 = vunpack.c.h.b16 %v1497
      %v1687 = vunpack.c.l.b16 %v1498
      %v1688 = vunpack.c.h.b16 %v1498
      %v1689 = vunpack.c.l.b16 %v1499
      %v1690 = vunpack.c.h.b16 %v1499
      %v1691 = vunpack.c.l.b16 %v1500
      %v1692 = vunpack.c.h.b16 %v1500
      %v1693 = vpack.c.b16 %v1565, %v1565
      %v1694 = vpack.c.b16 %v1566, %v1566
      %v1695 = vpack.c.b16 %v1567, %v1567
      %v1696 = vpack.c.b16 %v1568, %v1568
      %v1697 = vpack.c.b16 %v1569, %v1569
      %v1698 = vpack.c.b16 %v1570, %v1570
      %v1699 = vpack.c.b16 %v1571, %v1571
      %v1700 = vpack.c.b16 %v1572, %v1572
      %v1701 = vpack.c.b16 %v1573, %v1573
      %v1702 = vpack.c.b16 %v1574, %v1574
      %v1703 = vpack.c.b16 %v1575, %v1575
      %v1704 = vpack.c.b16 %v1576, %v1576
      %v1705 = vpack.c.b16 %v1577, %v1577
      %v1706 = vpack.c.b16 %v1578, %v1578
      %v1707 = vpack.c.b16 %v1579, %v1579
      %v1708 = vpack.c.b16 %v1580, %v1580
      %v1709 = vpack.c.b16 %v1581, %v1581
      %v1710 = vpack.c.b16 %v1582, %v1582
      %v1711 = vpack.c.b16 %v1583, %v1583
      %v1712 = vpack.c.b16 %v1584, %v1584
      %v1713 = vpack.c.b16 %v1585, %v1585
      %v1714 = vpack.c.b16 %v1586, %v1586
      %v1715 = vpack.c.b16 %v1587, %v1587
      %v1716 = vpack.c.b16 %v1588, %v1588
      %v1717 = vpack.c.b16 %v1589, %v1589
      %v1718 = vpack.c.b16 %v1590, %v1590
      %v1719 = vpack.c.b16 %v1591, %v1591
      %v1720 = vpack.c.b16 %v1592, %v1592
      %v1721 = vpack.c.b16 %v1593, %v1593
      %v1722 = vpack.c.b16 %v1594, %v1594
      %v1723 = vpack.c.b16 %v1595, %v1595
      %v1724 = vpack.c.b16 %v1596, %v1596
      %v1725 = vpack.c.b16 %v1597, %v1597
      %v1726 = vpack.c.b16 %v1598, %v1598
      %v1727 = vpack.c.b16 %v1599, %v1599
      %v1728 = vpack.c.b16 %v1600, %v1600
      %v1729 = vpack.c.b16 %v1601, %v1601
      %v1730 = vpack.c.b16 %v1602, %v1602
      %v1731 = vpack.c.b16 %v1603, %v1603
      %v1732 = vpack.c.b16 %v1604, %v1604
      %v1733 = vpack.c.b16 %v1605, %v1605
      %v1734 = vpack.c.b16 %v1606, %v1606
      %v1735 = vpack.c.b16 %v1607, %v1607
      %v1736 = vpack.c.b16 %v1608, %v1608
      %v1737 = vpack.c.b16 %v1609, %v1609
      %v1738 = vpack.c.b16 %v1610, %v1610
      %v1739 = vpack.c.b16 %v1611, %v1611
      %v1740 = vpack.c.b16 %v1612, %v1612
      %v1741 = vpack.c.b16 %v1613, %v1613
      %v1742 = vpack.c.b16 %v1614, %v1614
      %v1743 = vpack.c.b16 %v1615, %v1615
      %v1744 = vpack.c.b16 %v1616, %v1616
      %v1745 = vpack.c.b16 %v1617, %v1617
      %v1746 = vpack.c.b16 %v1618, %v1618
      %v1747 = vpack.c.b16 %v1619, %v1619
      %v1748 = vpack.c.b16 %v1620, %v1620
      %v1749 = vpack.c.b16 %v1621, %v1621
      %v1750 = vpack.c.b16 %v1622, %v1622
      %v1751 = vpack.c.b16 %v1623, %v1623
      %v1752 = vpack.c.b16 %v1624, %v1624
      %v1753 = vpack.c.b16 %v1625, %v1625
      %v1754 = vpack.c.b16 %v1626, %v1626
      %v1755 = vpack.c.b16 %v1627, %v1627
      %v1756 = vpack.c.b16 %v1628, %v1628
      %v1757 = vpack.c.b16 %v1629, %v1629
      %v1758 = vpack.c.b16 %v1630, %v1630
      %v1759 = vpack.c.b16 %v1631, %v1631
      %v1760 = vpack.c.b16 %v1632, %v1632
      %v1761 = vpack.c.b16 %v1633, %v1633
      %v1762 = vpack.c.b16 %v1634, %v1634
      %v1763 = vpack.c.b16 %v1635, %v1635
      %v1764 = vpack.c.b16 %v1636, %v1636
      %v1765 = vpack.c.b16 %v1637, %v1637
      %v1766 = vpack.c.b16 %v1638, %v1638
      %v1767 = vpack.c.b16 %v1639, %v1639
      %v1768 = vpack.c.b16 %v1640, %v1640
      %v1769 = vpack.c.b16 %v1641, %v1641
      %v1770 = vpack.c.b16 %v1642, %v1642
      %v1771 = vpack.c.b16 %v1643, %v1643
      %v1772 = vpack.c.b16 %v1644, %v1644
      %v1773 = vpack.c.b16 %v1645, %v1645
      %v1774 = vpack.c.b16 %v1646, %v1646
      %v1775 = vpack.c.b16 %v1647, %v1647
      %v1776 = vpack.c.b16 %v1648, %v1648
      %v1777 = vpack.c.b16 %v1649, %v1649
      %v1778 = vpack.c.b16 %v1650, %v1650
      %v1779 = vpack.c.b16 %v1651, %v1651
      %v1780 = vpack.c.b16 %v1652, %v1652
      %v1781 = vpack.c.b16 %v1653, %v1653
      %v1782 = vpack.c.b16 %v1654, %v1654
      %v1783 = vpack.c.b16 %v1655, %v1655
      %v1784 = vpack.c.b16 %v1656, %v1656
      %v1785 = vpack.c.b16 %v1657, %v1657
      %v1786 = vpack.c.b16 %v1658, %v1658
      %v1787 = vpack.c.b16 %v1659, %v1659
      %v1788 = vpack.c.b16 %v1660, %v1660
      %v1789 = vpack.c.b16 %v1661, %v1661
      %v1790 = vpack.c.b16 %v1662, %v1662
      %v1791 = vpack.c.b16 %v1663, %v1663
      %v1792 = vpack.c.b16 %v1664, %v1664
      %v1793 = vpack.c.b16 %v1665, %v1665
      %v1794 = vpack.c.b16 %v1666, %v1666
      %v1795 = vpack.c.b16 %v1667, %v1667
      %v1796 = vpack.c.b16 %v1668, %v1668
      %v1797 = vpack.c.b16 %v1669, %v1669
      %v1798 = vpack.c.b16 %v1670, %v1670
      %v1799 = vpack.c.b16 %v1671, %v1671
      %v1800 = vpack.c.b16 %v1672, %v1672
      %v1801 = vpack.c.b16 %v1673, %v1673
      %v1802 = vpack.c.b16 %v1674, %v1674
      %v1803 = vpack.c.b16 %v1675, %v1675
      %v1804 = vpack.c.b16 %v1676, %v1676
      %v1805 = vpack.c.b16 %v1677, %v1677
      %v1806 = vpack.c.b16 %v1678, %v1678
      %v1807 = vpack.c.b16 %v1679, %v1679
      %v1808 = vpack.c.b16 %v1680, %v1680
      %v1809 = vpack.c.b16 %v1681, %v1681
      %v1810 = vpack.c.b16 %v1682, %v1682
      %v1811 = vpack.c.b16 %v1683, %v1683
      %v1812 = vpack.c.b16 %v1684, %v1684
      %v1813 = vpack.c.b16 %v1685, %v1685
      %v1814 = vpack.c.b16 %v1686, %v1686
      %v1815 = vpack.c.b16 %v1687, %v1687
      %v1816 = vpack.c.b16 %v1688, %v1688
      %v1817 = vpack.c.b16 %v1689, %v1689
      %v1818 = vpack.c.b16 %v1690, %v1690
      %v1819 = vpack.c.b16 %v1691, %v1691
      %v1820 = vpack.c.b16 %v1692, %v1692
      %vm1949 = vcmask 60416
      %1950 = vst.msk [vmem:[%s217] sm:$0xf] %vm1949, %v1693
      %1951 = vst.msk [vmem:[%s217 + $0x4] sm:$0xf] %vm1949, %v1694
      %1952 = vst.msk [vmem:[%s217 + $0x8] sm:$0xf] %vm1949, %v1695
      %1953 = vst.msk [vmem:[%s217 + $0xc] sm:$0xf] %vm1949, %v1696
      %1954 = vst.msk [vmem:[%s217 + $0x10] sm:$0xf] %vm1949, %v1697
      %1955 = vst.msk [vmem:[%s217 + $0x14] sm:$0xf] %vm1949, %v1698
      %1956 = vst.msk [vmem:[%s217 + $0x18] sm:$0xf] %vm1949, %v1699
      %1957 = vst.msk [vmem:[%s217 + $0x1c] sm:$0xf] %vm1949, %v1700
      %1958 = vst.msk [vmem:[%s217 + $0x20] sm:$0xf] %vm1949, %v1701
      %1959 = vst.msk [vmem:[%s217 + $0x24] sm:$0xf] %vm1949, %v1702
      %1960 = vst.msk [vmem:[%s217 + $0x28] sm:$0xf] %vm1949, %v1703
      %1961 = vst.msk [vmem:[%s217 + $0x2c] sm:$0xf] %vm1949, %v1704
      %1962 = vst.msk [vmem:[%s217 + $0x30] sm:$0xf] %vm1949, %v1705
      %1963 = vst.msk [vmem:[%s217 + $0x34] sm:$0xf] %vm1949, %v1706
      %1964 = vst.msk [vmem:[%s217 + $0x38] sm:$0xf] %vm1949, %v1707
      %1965 = vst.msk [vmem:[%s217 + $0x3c] sm:$0xf] %vm1949, %v1708
      %1966 = vst.msk [vmem:[%s217 + $0x40] sm:$0xf] %vm1949, %v1709
      %1967 = vst.msk [vmem:[%s217 + $0x44] sm:$0xf] %vm1949, %v1710
      %1968 = vst.msk [vmem:[%s217 + $0x48] sm:$0xf] %vm1949, %v1711
      %1969 = vst.msk [vmem:[%s217 + $0x4c] sm:$0xf] %vm1949, %v1712
      %1970 = vst.msk [vmem:[%s217 + $0x50] sm:$0xf] %vm1949, %v1713
      %1971 = vst.msk [vmem:[%s217 + $0x54] sm:$0xf] %vm1949, %v1714
      %1972 = vst.msk [vmem:[%s217 + $0x58] sm:$0xf] %vm1949, %v1715
      %1973 = vst.msk [vmem:[%s217 + $0x5c] sm:$0xf] %vm1949, %v1716
      %1974 = vst.msk [vmem:[%s217 + $0x60] sm:$0xf] %vm1949, %v1717
      %1975 = vst.msk [vmem:[%s217 + $0x64] sm:$0xf] %vm1949, %v1718
      %1976 = vst.msk [vmem:[%s217 + $0x68] sm:$0xf] %vm1949, %v1719
      %1977 = vst.msk [vmem:[%s217 + $0x6c] sm:$0xf] %vm1949, %v1720
      %1978 = vst.msk [vmem:[%s217 + $0x70] sm:$0xf] %vm1949, %v1721
      %1979 = vst.msk [vmem:[%s217 + $0x74] sm:$0xf] %vm1949, %v1722
      %1980 = vst.msk [vmem:[%s217 + $0x78] sm:$0xf] %vm1949, %v1723
      %1981 = vst.msk [vmem:[%s217 + $0x7c] sm:$0xf] %vm1949, %v1724
      %1982 = vst.msk [vmem:[%s217 + $0x80] sm:$0xf] %vm1949, %v1725
      %1983 = vst.msk [vmem:[%s217 + $0x84] sm:$0xf] %vm1949, %v1726
      %1984 = vst.msk [vmem:[%s217 + $0x88] sm:$0xf] %vm1949, %v1727
      %1985 = vst.msk [vmem:[%s217 + $0x8c] sm:$0xf] %vm1949, %v1728
      %1986 = vst.msk [vmem:[%s217 + $0x90] sm:$0xf] %vm1949, %v1729
      %1987 = vst.msk [vmem:[%s217 + $0x94] sm:$0xf] %vm1949, %v1730
      %1988 = vst.msk [vmem:[%s217 + $0x98] sm:$0xf] %vm1949, %v1731
      %1989 = vst.msk [vmem:[%s217 + $0x9c] sm:$0xf] %vm1949, %v1732
      %1990 = vst.msk [vmem:[%s217 + $0xa0] sm:$0xf] %vm1949, %v1733
      %1991 = vst.msk [vmem:[%s217 + $0xa4] sm:$0xf] %vm1949, %v1734
      %1992 = vst.msk [vmem:[%s217 + $0xa8] sm:$0xf] %vm1949, %v1735
      %1993 = vst.msk [vmem:[%s217 + $0xac] sm:$0xf] %vm1949, %v1736
      %1994 = vst.msk [vmem:[%s217 + $0xb0] sm:$0xf] %vm1949, %v1737
      %1995 = vst.msk [vmem:[%s217 + $0xb4] sm:$0xf] %vm1949, %v1738
      %1996 = vst.msk [vmem:[%s217 + $0xb8] sm:$0xf] %vm1949, %v1739
      %1997 = vst.msk [vmem:[%s217 + $0xbc] sm:$0xf] %vm1949, %v1740
      %1998 = vst.msk [vmem:[%s217 + $0xc0] sm:$0xf] %vm1949, %v1741
      %1999 = vst.msk [vmem:[%s217 + $0xc4] sm:$0xf] %vm1949, %v1742
      %2000 = vst.msk [vmem:[%s217 + $0xc8] sm:$0xf] %vm1949, %v1743
      %2001 = vst.msk [vmem:[%s217 + $0xcc] sm:$0xf] %vm1949, %v1744
      %2002 = vst.msk [vmem:[%s217 + $0xd0] sm:$0xf] %vm1949, %v1745
      %2003 = vst.msk [vmem:[%s217 + $0xd4] sm:$0xf] %vm1949, %v1746
      %2004 = vst.msk [vmem:[%s217 + $0xd8] sm:$0xf] %vm1949, %v1747
      %2005 = vst.msk [vmem:[%s217 + $0xdc] sm:$0xf] %vm1949, %v1748
      %2006 = vst.msk [vmem:[%s217 + $0xe0] sm:$0xf] %vm1949, %v1749
      %2007 = vst.msk [vmem:[%s217 + $0xe4] sm:$0xf] %vm1949, %v1750
      %2008 = vst.msk [vmem:[%s217 + $0xe8] sm:$0xf] %vm1949, %v1751
      %2009 = vst.msk [vmem:[%s217 + $0xec] sm:$0xf] %vm1949, %v1752
      %2010 = vst.msk [vmem:[%s217 + $0xf0] sm:$0xf] %vm1949, %v1753
      %2011 = vst.msk [vmem:[%s217 + $0xf4] sm:$0xf] %vm1949, %v1754
      %2012 = vst.msk [vmem:[%s217 + $0xf8] sm:$0xf] %vm1949, %v1755
      %2013 = vst.msk [vmem:[%s217 + $0xfc] sm:$0xf] %vm1949, %v1756
      %2014 = vst.msk [vmem:[%s217 + $0x100] sm:$0xf] %vm1949, %v1757
      %2015 = vst.msk [vmem:[%s217 + $0x104] sm:$0xf] %vm1949, %v1758
      %2016 = vst.msk [vmem:[%s217 + $0x108] sm:$0xf] %vm1949, %v1759
      %2017 = vst.msk [vmem:[%s217 + $0x10c] sm:$0xf] %vm1949, %v1760
      %2018 = vst.msk [vmem:[%s217 + $0x110] sm:$0xf] %vm1949, %v1761
      %2019 = vst.msk [vmem:[%s217 + $0x114] sm:$0xf] %vm1949, %v1762
      %2020 = vst.msk [vmem:[%s217 + $0x118] sm:$0xf] %vm1949, %v1763
      %2021 = vst.msk [vmem:[%s217 + $0x11c] sm:$0xf] %vm1949, %v1764
      %2022 = vst.msk [vmem:[%s217 + $0x120] sm:$0xf] %vm1949, %v1765
      %2023 = vst.msk [vmem:[%s217 + $0x124] sm:$0xf] %vm1949, %v1766
      %2024 = vst.msk [vmem:[%s217 + $0x128] sm:$0xf] %vm1949, %v1767
      %2025 = vst.msk [vmem:[%s217 + $0x12c] sm:$0xf] %vm1949, %v1768
      %2026 = vst.msk [vmem:[%s217 + $0x130] sm:$0xf] %vm1949, %v1769
      %2027 = vst.msk [vmem:[%s217 + $0x134] sm:$0xf] %vm1949, %v1770
      %2028 = vst.msk [vmem:[%s217 + $0x138] sm:$0xf] %vm1949, %v1771
      %2029 = vst.msk [vmem:[%s217 + $0x13c] sm:$0xf] %vm1949, %v1772
      %2030 = vst.msk [vmem:[%s217 + $0x140] sm:$0xf] %vm1949, %v1773
      %2031 = vst.msk [vmem:[%s217 + $0x144] sm:$0xf] %vm1949, %v1774
      %2032 = vst.msk [vmem:[%s217 + $0x148] sm:$0xf] %vm1949, %v1775
      %2033 = vst.msk [vmem:[%s217 + $0x14c] sm:$0xf] %vm1949, %v1776
      %2034 = vst.msk [vmem:[%s217 + $0x150] sm:$0xf] %vm1949, %v1777
      %2035 = vst.msk [vmem:[%s217 + $0x154] sm:$0xf] %vm1949, %v1778
      %2036 = vst.msk [vmem:[%s217 + $0x158] sm:$0xf] %vm1949, %v1779
      %2037 = vst.msk [vmem:[%s217 + $0x15c] sm:$0xf] %vm1949, %v1780
      %2038 = vst.msk [vmem:[%s217 + $0x160] sm:$0xf] %vm1949, %v1781
      %2039 = vst.msk [vmem:[%s217 + $0x164] sm:$0xf] %vm1949, %v1782
      %2040 = vst.msk [vmem:[%s217 + $0x168] sm:$0xf] %vm1949, %v1783
      %2041 = vst.msk [vmem:[%s217 + $0x16c] sm:$0xf] %vm1949, %v1784
      %2042 = vst.msk [vmem:[%s217 + $0x170] sm:$0xf] %vm1949, %v1785
      %2043 = vst.msk [vmem:[%s217 + $0x174] sm:$0xf] %vm1949, %v1786
      %2044 = vst.msk [vmem:[%s217 + $0x178] sm:$0xf] %vm1949, %v1787
      %2045 = vst.msk [vmem:[%s217 + $0x17c] sm:$0xf] %vm1949, %v1788
      %2046 = vst.msk [vmem:[%s217 + $0x180] sm:$0xf] %vm1949, %v1789
      %2047 = vst.msk [vmem:[%s217 + $0x184] sm:$0xf] %vm1949, %v1790
      %2048 = vst.msk [vmem:[%s217 + $0x188] sm:$0xf] %vm1949, %v1791
      %2049 = vst.msk [vmem:[%s217 + $0x18c] sm:$0xf] %vm1949, %v1792
      %2050 = vst.msk [vmem:[%s217 + $0x190] sm:$0xf] %vm1949, %v1793
      %2051 = vst.msk [vmem:[%s217 + $0x194] sm:$0xf] %vm1949, %v1794
      %2052 = vst.msk [vmem:[%s217 + $0x198] sm:$0xf] %vm1949, %v1795
      %2053 = vst.msk [vmem:[%s217 + $0x19c] sm:$0xf] %vm1949, %v1796
      %2054 = vst.msk [vmem:[%s217 + $0x1a0] sm:$0xf] %vm1949, %v1797
      %2055 = vst.msk [vmem:[%s217 + $0x1a4] sm:$0xf] %vm1949, %v1798
      %2056 = vst.msk [vmem:[%s217 + $0x1a8] sm:$0xf] %vm1949, %v1799
      %2057 = vst.msk [vmem:[%s217 + $0x1ac] sm:$0xf] %vm1949, %v1800
      %2058 = vst.msk [vmem:[%s217 + $0x1b0] sm:$0xf] %vm1949, %v1801
      %2059 = vst.msk [vmem:[%s217 + $0x1b4] sm:$0xf] %vm1949, %v1802
      %2060 = vst.msk [vmem:[%s217 + $0x1b8] sm:$0xf] %vm1949, %v1803
      %2061 = vst.msk [vmem:[%s217 + $0x1bc] sm:$0xf] %vm1949, %v1804
      %2062 = vst.msk [vmem:[%s217 + $0x1c0] sm:$0xf] %vm1949, %v1805
      %2063 = vst.msk [vmem:[%s217 + $0x1c4] sm:$0xf] %vm1949, %v1806
      %2064 = vst.msk [vmem:[%s217 + $0x1c8] sm:$0xf] %vm1949, %v1807
      %2065 = vst.msk [vmem:[%s217 + $0x1cc] sm:$0xf] %vm1949, %v1808
      %2066 = vst.msk [vmem:[%s217 + $0x1d0] sm:$0xf] %vm1949, %v1809
      %2067 = vst.msk [vmem:[%s217 + $0x1d4] sm:$0xf] %vm1949, %v1810
      %2068 = vst.msk [vmem:[%s217 + $0x1d8] sm:$0xf] %vm1949, %v1811
      %2069 = vst.msk [vmem:[%s217 + $0x1dc] sm:$0xf] %vm1949, %v1812
      %2070 = vst.msk [vmem:[%s217 + $0x1e0] sm:$0xf] %vm1949, %v1813
      %2071 = vst.msk [vmem:[%s217 + $0x1e4] sm:$0xf] %vm1949, %v1814
      %2072 = vst.msk [vmem:[%s217 + $0x1e8] sm:$0xf] %vm1949, %v1815
      %2073 = vst.msk [vmem:[%s217 + $0x1ec] sm:$0xf] %vm1949, %v1816
      %2074 = vst.msk [vmem:[%s217 + $0x1f0] sm:$0xf] %vm1949, %v1817
      %2075 = vst.msk [vmem:[%s217 + $0x1f4] sm:$0xf] %vm1949, %v1818
      %2076 = vst.msk [vmem:[%s217 + $0x1f8] sm:$0xf] %vm1949, %v1819
      %2077 = vst.msk [vmem:[%s217 + $0x1fc] sm:$0xf] %vm1949, %v1820
      %s2078 = smul.u32 128, %s18
      %p2079 = scmp.lt.s32.totalorder %s2078, 255
      %s2080 = scalar_select %p2079, %s2078, 255
      %s2081 = smul.addr %s2080, 4
      %s2082 = scalar_lea.vmem %s3, %s2081
      // Predicated region
      $region33: #{_lambda_.7} parent=31 // pred_check
        %p2083 = pneg %p119
      $region34: #{_lambda_.7} parent=31 // pred_check_branch
        %2085 = sbr.rel (%p2083) target = $region36
      $region35: #{_lambda_.7} parent=31 // pred_region
        %s2086 = smul.u32 128, %s18
      $region36: #{_lambda_.7} parent=31 // pred_fallthru
        _
    $region32: #{_lambda_.7} parent=5 // pred_fallthru
      _
    %p2087 = scmp.le.s32.totalorder 2, %s9
    // Predicated region
    $region37: #{_lambda_.7} parent=5 // pred_check
      %p2088 = pneg %p2087
    $region38: #{_lambda_.7} parent=5 // pred_check_branch
      %2090 = sbr.rel (%p2088) target = $region40
    $region39: #{_lambda_.7} parent=5 // pred_region
      %s2091 = ssub.s32 %s9, 2
      // Predicated region
      $region41: #{_lambda_.7} parent=39 // pred_check
        %p2092 = pneg %p125
      $region42: #{_lambda_.7} parent=39 // pred_check_branch
        %2094 = sbr.rel (%p2092) target = $region44
      $region43: #{_lambda_.7} parent=39 // pred_region
        %s2095 = smul.u32 128, %s20
        %p2096 = scmp.lt.s32.totalorder %s2095, 255
        %s2097 = scalar_select %p2096, %s2095, 255
        %s2098 = smul.addr %s2097, 4
        %s2099 = scalar_lea.vmem %s3, %s2098
      $region44: #{_lambda_.7} parent=39 // pred_fallthru
        _
    $region40: #{_lambda_.7} parent=5 // pred_fallthru
      _
  $region6: #{_lambda_.7} parent=0 // loop_footer
    %s13 = sadd.s32 1, %s9
  $region7: #{_lambda_.7} parent=0 // loop_footer_branch
    %8 = sbr.rel target = $region3
  $region8: #{_lambda_.7} parent=0 // loop_exit
    _

// kernel: _lambda_.8
$region0: #{_lambda_.8}
  #allocation0 [shape = 'u32[]', space=smem, size = 0x4, offset = 0x4, fixed_abs, tag = 'smem constant byte address 0x4 - core index']
  #allocation1 [shape = 'u32[144,128]{1,0:T(1,128)}', space=vmem, size = 0x12000, scoped, tag = 'internal scratch']
  %s0 = inlined_call_operand.vmem [shape: bf16[512,128], index: 0, kind: input, shape index: {}]
  %s1 = inlined_call_operand.vmem [shape: bf16[128,16], index: 1, kind: input, shape index: {}]
  %s2 = inlined_call_operand.vmem [shape: f32[1,16], index: 2, kind: input, shape index: {}]
  %s3 = inlined_call_operand.vmem [shape: bf16[512,16], index: 3, kind: output, shape index: {0}]
  %s4 = inlined_call_operand.vmem [shape: f32[2,2,16], index: 4, kind: output, shape index: {1}]
  %5 = xla_tuple %s3, %s4
  %s6 = sld [smem:[#allocation0]]
  $region53: #{_lambda_.8} parent=0
    _
  %s8 = ssub.s32 1, %s6
  %s9 = scalar_select 0, %s8, %s6
  loop: start=0, step=1, limit=4
  $region2: #{_lambda_.8} parent=0 // loop_pre_header
    _
  $region3: #{_lambda_.8} parent=0 // loop_header
    %s11 = sphi 0, %s15
    %p12 = scmp.ge.s32.totalorder %s11, 4
    %s18 = sphi 0, %s30
    %s19 = sphi 0, %s26
    %s20 = sphi 0, %s18
    %s21 = sphi 0, %s19
    %s22 = sphi 0, %s20
    %s23 = sphi 0, %s21
    %s35 = sphi 0, %s37
    %s38 = sphi 0, %s35
    %s39 = sphi 0, %s38
    %s55 = sphi 0, %s39
    %s61 = sphi 0, %s63
    %s64 = sphi 0, %s61
    %s65 = sphi 0, %s64
    %s81 = sphi 0, %s65
    %s85 = sphi 0, %s85
    %s87 = sphi 0, %s85
    %s88 = sphi 0, %s87
    %s102 = sphi 0, %s88
    %s108 = sphi 0, %s110
    %s111 = sphi 0, %s108
    %s112 = sphi 0, %s111
    %s128 = sphi 0, %s112
    %s134 = sphi 0, %s136
    %s137 = sphi 0, %s134
    %s138 = sphi 0, %s137
    %s154 = sphi 0, %s138
  $region4: #{_lambda_.8} parent=0 // loop_header_branch
    %14 = sbr.rel (%p12) target = $region8
  $region5: #{_lambda_.8} parent=0 // loop_body
    %s16 = ssub.s32 %s11, 1
    %s17 = ssub.s32 %s11, 2
    %s24 = sadd.s32 1, %s19
    %p25 = scmp.ge.s32.totalorder %s24, 1
    %s26 = scalar_select %p25, 0, %s24
    %s27 = sadd.s32 1, %s18
    %s28 = scalar_select %p25, %s27, %s18
    %p29 = scmp.ge.s32.totalorder %s28, 2
    %s30 = scalar_select %p29, 0, %s28
    %s31 = ssub.s32 %s18, %s30
    %s32 = ssub.s32 %s19, %s26
    %s33 = sor.u32 %s31, %s32
    %p34 = scmp.eq.s32.totalorder %s33, 0
    %s36 = sadd.s32 %s35, 1
    %s37 = scalar_select %p34, %s35, %s36
    %p40 = pneg %p34
    %p41 = scmp.eq.s32.totalorder %s11, 1
    %p42 = por %p40, %p41
    %p43 = scmp.ne.s32.totalorder %s35, %s38
    %p44 = scmp.eq.s32.totalorder %s11, 0
    %p45 = por %p43, %p44
    %p46 = scmp.ne.s32.totalorder %s35, %s38
    %p47 = scmp.eq.s32.totalorder %s16, 1
    %p48 = por %p46, %p47
    %p49 = scmp.ne.s32.totalorder %s38, %s39
    %p50 = scmp.eq.s32.totalorder %s16, 0
    %p51 = por %p49, %p50
    %p52 = scmp.ne.s32.totalorder %s38, %s39
    %p53 = scmp.eq.s32.totalorder %s17, 1
    %p54 = por %p52, %p53
    %p56 = scmp.ne.s32.totalorder %s39, %s55
    %p57 = scmp.eq.s32.totalorder %s17, 0
    %p58 = por %p56, %p57
    %s59 = ssub.s32 %s19, %s26
    %p60 = scmp.eq.s32.totalorder %s59, 0
    %s62 = sadd.s32 %s61, 1
    %s63 = scalar_select %p60, %s61, %s62
    %p66 = pneg %p60
    %p67 = scmp.eq.s32.totalorder %s11, 1
    %p68 = por %p66, %p67
    %p69 = scmp.ne.s32.totalorder %s61, %s64
    %p70 = scmp.eq.s32.totalorder %s11, 0
    %p71 = por %p69, %p70
    %p72 = scmp.ne.s32.totalorder %s61, %s64
    %p73 = scmp.eq.s32.totalorder %s16, 1
    %p74 = por %p72, %p73
    %p75 = scmp.ne.s32.totalorder %s64, %s65
    %p76 = scmp.eq.s32.totalorder %s16, 0
    %p77 = por %p75, %p76
    %p78 = scmp.ne.s32.totalorder %s64, %s65
    %p79 = scmp.eq.s32.totalorder %s17, 1
    %p80 = por %p78, %p79
    %p82 = scmp.ne.s32.totalorder %s65, %s81
    %p83 = scmp.eq.s32.totalorder %s17, 0
    %p84 = por %p82, %p83
    %s86 = sadd.s32 %s85, 1
    %p89 = scmp.eq.s32.totalorder %s11, 1
    %p90 = scmp.ne.s32.totalorder %s85, %s87
    %p91 = scmp.eq.s32.totalorder %s11, 0
    %p92 = por %p90, %p91
    %p93 = scmp.ne.s32.totalorder %s85, %s87
    %p94 = scmp.eq.s32.totalorder %s16, 1
    %p95 = por %p93, %p94
    %p96 = scmp.ne.s32.totalorder %s87, %s88
    %p97 = scmp.eq.s32.totalorder %s16, 0
    %p98 = por %p96, %p97
    %p99 = scmp.ne.s32.totalorder %s87, %s88
    %p100 = scmp.eq.s32.totalorder %s17, 1
    %p101 = por %p99, %p100
    %p103 = scmp.ne.s32.totalorder %s88, %s102
    %p104 = scmp.eq.s32.totalorder %s17, 0
    %p105 = por %p103, %p104
    %s106 = ssub.s32 %s18, %s30
    %p107 = scmp.eq.s32.totalorder %s106, 0
    %s109 = sadd.s32 %s108, 1
    %s110 = scalar_select %p107, %s108, %s109
    %p113 = pneg %p107
    %p114 = scmp.eq.s32.totalorder %s11, 1
    %p115 = por %p113, %p114
    %p116 = scmp.ne.s32.totalorder %s108, %s111
    %p117 = scmp.eq.s32.totalorder %s11, 0
    %p118 = por %p116, %p117
    %p119 = scmp.ne.s32.totalorder %s108, %s111
    %p120 = scmp.eq.s32.totalorder %s16, 1
    %p121 = por %p119, %p120
    %p122 = scmp.ne.s32.totalorder %s111, %s112
    %p123 = scmp.eq.s32.totalorder %s16, 0
    %p124 = por %p122, %p123
    %p125 = scmp.ne.s32.totalorder %s111, %s112
    %p126 = scmp.eq.s32.totalorder %s17, 1
    %p127 = por %p125, %p126
    %p129 = scmp.ne.s32.totalorder %s112, %s128
    %p130 = scmp.eq.s32.totalorder %s17, 0
    %p131 = por %p129, %p130
    %s132 = ssub.s32 %s18, %s30
    %p133 = scmp.eq.s32.totalorder %s132, 0
    %s135 = sadd.s32 %s134, 1
    %s136 = scalar_select %p133, %s134, %s135
    %p139 = pneg %p133
    %p140 = scmp.eq.s32.totalorder %s11, 1
    %p141 = por %p139, %p140
    %p142 = scmp.ne.s32.totalorder %s134, %s137
    %p143 = scmp.eq.s32.totalorder %s11, 0
    %p144 = por %p142, %p143
    %p145 = scmp.ne.s32.totalorder %s134, %s137
    %p146 = scmp.eq.s32.totalorder %s16, 1
    %p147 = por %p145, %p146
    %p148 = scmp.ne.s32.totalorder %s137, %s138
    %p149 = scmp.eq.s32.totalorder %s16, 0
    %p150 = por %p148, %p149
    %p151 = scmp.ne.s32.totalorder %s137, %s138
    %p152 = scmp.eq.s32.totalorder %s17, 1
    %p153 = por %p151, %p152
    %p155 = scmp.ne.s32.totalorder %s138, %s154
    %p156 = scmp.eq.s32.totalorder %s17, 0
    %p157 = por %p155, %p156
    %p158 = scmp.le.s32.totalorder 1, %s11
    %p159 = scmp.lt.s32.totalorder %s11, 3
    %p160 = pnand %p158, %p159
    %p161 = pneg %p160
    // Predicated region
    $region9: #{_lambda_.8} parent=5 // pred_check
      _
    $region10: #{_lambda_.8} parent=5 // pred_check_branch
      %163 = sbr.rel (%p160) target = $region12
    $region11: #{_lambda_.8} parent=5 // pred_region
      %s164 = ssub.s32 %s11, 1
      // Predicated region
      $region13: #{_lambda_.8} parent=11 // pred_check
        %p165 = pneg %p77
      $region14: #{_lambda_.8} parent=11 // pred_check_branch
        %167 = sbr.rel (%p165) target = $region16
      $region15: #{_lambda_.8} parent=11 // pred_region
        %s168 = smul.u32 16, %s21
        %p169 = scmp.lt.s32.totalorder %s168, 15
        %s170 = scalar_select %p169, %s168, 15
        %s171 = smul.addr %s170, 4
        %s172 = scalar_lea.vmem %s1, %s171
        %s173 = smul.u32 16, %s21
      $region16: #{_lambda_.8} parent=11 // pred_fallthru
        _
      // Predicated region
      $region17: #{_lambda_.8} parent=11 // pred_check
        %p174 = pneg %p98
      $region18: #{_lambda_.8} parent=11 // pred_check_branch
        %176 = sbr.rel (%p174) target = $region20
      $region19: #{_lambda_.8} parent=11 // pred_region
        _
      $region20: #{_lambda_.8} parent=11 // pred_fallthru
        _
    $region12: #{_lambda_.8} parent=5 // pred_fallthru
      _
    %p177 = scmp.lt.s32.totalorder %s11, 2
    // Predicated region
    $region21: #{_lambda_.8} parent=5 // pred_check
      %p178 = pneg %p177
    $region22: #{_lambda_.8} parent=5 // pred_check_branch
      %180 = sbr.rel (%p178) target = $region24
    $region23: #{_lambda_.8} parent=5 // pred_region
      // Predicated region
      $region25: #{_lambda_.8} parent=23 // pred_check
        %p181 = pneg %p45
      $region26: #{_lambda_.8} parent=23 // pred_check_branch
        %183 = sbr.rel (%p181) target = $region28
      $region27: #{_lambda_.8} parent=23 // pred_region
        %s184 = smul.u32 32, %s18
        %p185 = scmp.lt.s32.totalorder %s184, 63
        %s186 = scalar_select %p185, %s184, 63
        %p187 = scmp.lt.s32.totalorder %s19, 0
        %s188 = scalar_select %p187, %s19, 0
        %s189 = sadd.s32 %s188, %s186
        %s190 = smul.addr %s189, 4
        %s191 = scalar_lea.vmem %s0, %s190
        %s192 = smul.u32 32, %s18
      $region28: #{_lambda_.8} parent=23 // pred_fallthru
        _
    $region24: #{_lambda_.8} parent=5 // pred_fallthru
      _
    %p193 = scmp.le.s32.totalorder 1, %s11
    %p194 = scmp.lt.s32.totalorder %s11, 3
    %p195 = pnand %p193, %p194
    %p196 = pneg %p195
    // Predicated region
    $region29: #{_lambda_.8} parent=5 // pred_check
      _
    $region30: #{_lambda_.8} parent=5 // pred_check_branch
      %198 = sbr.rel (%p195) target = $region32
    $region31: #{_lambda_.8} parent=5 // pred_region
      %s199 = ssub.s32 %s11, 1
      %s200 = smul.u32 32, %s20
      %p201 = scmp.lt.s32.totalorder %s200, 63
      %s202 = scalar_select %p201, %s200, 63
      %p203 = scmp.lt.s32.totalorder %s21, 0
      %s204 = scalar_select %p203, %s21, 0
      %s205 = sadd.s32 %s204, %s202
      %s206 = smul.addr %s205, 4
      %s207 = scalar_lea.vmem %s0, %s206
      %p208 = pneg %p51
      %p209 = pneg %p48
      %s210 = smul.u32 16, %s21
      %p211 = scmp.lt.s32.totalorder %s210, 15
      %s212 = scalar_select %p211, %s210, 15
      %s213 = smul.addr %s212, 4
      %s214 = scalar_lea.vmem %s1, %s213
      %p215 = pneg %p77
      %p216 = pneg %p74
      %p217 = pneg %p98
      %p218 = pneg %p95
      %p219 = pneg %p124
      %p220 = pneg %p121
      %s221 = smul.u32 32, %s20
      %p222 = scmp.lt.s32.totalorder %s221, 63
      %s223 = scalar_select %p222, %s221, 63
      %s224 = smul.addr %s223, 4
      %s225 = scalar_lea.vmem %s3, %s224
      %p226 = pneg %p150
      %p227 = pneg %p147
      %p228 = scmp.lt.s32.totalorder %s20, 1
      %s229 = scalar_select %p228, %s20, 1
      %s230 = smul.addr %s229, 2
      %s231 = scalar_lea.vmem %s4, %s230
      %s232 = smul.u32 32, %s20
      %p233 = scmp.lt.s32.totalorder %s232, 63
      %s234 = scalar_select %p233, %s232, 63
      %p235 = scmp.lt.s32.totalorder %s21, 0
      %s236 = scalar_select %p235, %s21, 0
      %s237 = sadd.s32 %s236, %s234
      %s238 = smul.addr %s237, 4
      %s239 = scalar_lea.vmem %s0, %s238
      %s240 = smul.u32 32, %s20
      %s241 = smul.u32 16, %s21
      %p242 = scmp.lt.s32.totalorder %s241, 15
      %s243 = scalar_select %p242, %s241, 15
      %s244 = smul.addr %s243, 4
      %s245 = scalar_lea.vmem %s1, %s244
      %s246 = smul.u32 16, %s21
      %s247 = smul.u32 32, %s20
      %p248 = scmp.lt.s32.totalorder %s247, 63
      %s249 = scalar_select %p248, %s247, 63
      %s250 = smul.addr %s249, 4
      %s251 = scalar_lea.vmem %s3, %s250
      %s252 = smul.u32 32, %s20
      %p253 = scmp.lt.s32.totalorder %s20, 1
      %s254 = scalar_select %p253, %s20, 1
      %s255 = smul.addr %s254, 2
      %s256 = scalar_lea.vmem %s4, %s255
      %v258 = vld [vmem:[%s239] sm:$0xf]
      %v259 = vld [vmem:[%s239 + $0x4] sm:$0xf]
      %v260 = vld [vmem:[%s239 + $0x8] sm:$0xf]
      %v261 = vld [vmem:[%s239 + $0xc] sm:$0xf]
      %v262 = vld [vmem:[%s239 + $0x10] sm:$0xf]
      %v263 = vld [vmem:[%s239 + $0x14] sm:$0xf]
      %v264 = vld [vmem:[%s239 + $0x18] sm:$0xf]
      %v265 = vld [vmem:[%s239 + $0x1c] sm:$0xf]
      %v266 = vld [vmem:[%s239 + $0x20] sm:$0xf]
      %v267 = vld [vmem:[%s239 + $0x24] sm:$0xf]
      %v268 = vld [vmem:[%s239 + $0x28] sm:$0xf]
      %v269 = vld [vmem:[%s239 + $0x2c] sm:$0xf]
      %v270 = vld [vmem:[%s239 + $0x30] sm:$0xf]
      %v271 = vld [vmem:[%s239 + $0x34] sm:$0xf]
      %v272 = vld [vmem:[%s239 + $0x38] sm:$0xf]
      %v273 = vld [vmem:[%s239 + $0x3c] sm:$0xf]
      %v274 = vld [vmem:[%s239 + $0x40] sm:$0xf]
      %v275 = vld [vmem:[%s239 + $0x44] sm:$0xf]
      %v276 = vld [vmem:[%s239 + $0x48] sm:$0xf]
      %v277 = vld [vmem:[%s239 + $0x4c] sm:$0xf]
      %v278 = vld [vmem:[%s239 + $0x50] sm:$0xf]
      %v279 = vld [vmem:[%s239 + $0x54] sm:$0xf]
      %v280 = vld [vmem:[%s239 + $0x58] sm:$0xf]
      %v281 = vld [vmem:[%s239 + $0x5c] sm:$0xf]
      %v282 = vld [vmem:[%s239 + $0x60] sm:$0xf]
      %v283 = vld [vmem:[%s239 + $0x64] sm:$0xf]
      %v284 = vld [vmem:[%s239 + $0x68] sm:$0xf]
      %v285 = vld [vmem:[%s239 + $0x6c] sm:$0xf]
      %v286 = vld [vmem:[%s239 + $0x70] sm:$0xf]
      %v287 = vld [vmem:[%s239 + $0x74] sm:$0xf]
      %v288 = vld [vmem:[%s239 + $0x78] sm:$0xf]
      %v289 = vld [vmem:[%s239 + $0x7c] sm:$0xf]
      %v290 = vld [vmem:[%s245] sm:$0xf]
      %v291 = vld [vmem:[%s245 + $0x4] sm:$0xf]
      %v292 = vld [vmem:[%s245 + $0x8] sm:$0xf]
      %v293 = vld [vmem:[%s245 + $0xc] sm:$0xf]
      %v294 = vld [vmem:[%s245 + $0x10] sm:$0xf]
      %v295 = vld [vmem:[%s245 + $0x14] sm:$0xf]
      %v296 = vld [vmem:[%s245 + $0x18] sm:$0xf]
      %v297 = vld [vmem:[%s245 + $0x1c] sm:$0xf]
      %v298 = vld [vmem:[%s245 + $0x20] sm:$0xf]
      %v299 = vld [vmem:[%s245 + $0x24] sm:$0xf]
      %v300 = vld [vmem:[%s245 + $0x28] sm:$0xf]
      %v301 = vld [vmem:[%s245 + $0x2c] sm:$0xf]
      %v302 = vld [vmem:[%s245 + $0x30] sm:$0xf]
      %v303 = vld [vmem:[%s245 + $0x34] sm:$0xf]
      %v304 = vld [vmem:[%s245 + $0x38] sm:$0xf]
      %v305 = vld [vmem:[%s245 + $0x3c] sm:$0xf]
      %v306 = vld [vmem:[%s2] sm:$0x1]
      %v308 = vlaneseq
      %v309 = vshrl.u32 %v308, 7
      %v310 = vsub.s32 0, %v309
      %v311 = vrot.slane %v306, %v310
      %v345 = vunpack.c.l.b16 %v258
      %v346 = vunpack.c.l.b16 %v259
      %v347 = vunpack.c.l.b16 %v260
      %v348 = vunpack.c.l.b16 %v261
      %v349 = vunpack.c.l.b16 %v262
      %v350 = vunpack.c.l.b16 %v263
      %v351 = vunpack.c.l.b16 %v264
      %v352 = vunpack.c.l.b16 %v265
      %v353 = vunpack.c.l.b16 %v266
      %v354 = vunpack.c.l.b16 %v267
      %v355 = vunpack.c.l.b16 %v268
      %v356 = vunpack.c.l.b16 %v269
      %v357 = vunpack.c.l.b16 %v270
      %v358 = vunpack.c.l.b16 %v271
      %v359 = vunpack.c.l.b16 %v272
      %v360 = vunpack.c.l.b16 %v273
      %v361 = vunpack.c.l.b16 %v274
      %v362 = vunpack.c.l.b16 %v275
      %v363 = vunpack.c.l.b16 %v276
      %v364 = vunpack.c.l.b16 %v277
      %v365 = vunpack.c.l.b16 %v278
      %v366 = vunpack.c.l.b16 %v279
      %v367 = vunpack.c.l.b16 %v280
      %v368 = vunpack.c.l.b16 %v281
      %v369 = vunpack.c.l.b16 %v282
      %v370 = vunpack.c.l.b16 %v283
      %v371 = vunpack.c.l.b16 %v284
      %v372 = vunpack.c.l.b16 %v285
      %v373 = vunpack.c.l.b16 %v286
      %v374 = vunpack.c.l.b16 %v287
      %v375 = vunpack.c.l.b16 %v288
      %v376 = vunpack.c.l.b16 %v289
      %v377 = vpack.c.b16 %v346, %v345
      %v378 = vpack.c.b16 %v348, %v347
      %v379 = vpack.c.b16 %v350, %v349
      %v380 = vpack.c.b16 %v352, %v351
      %v381 = vpack.c.b16 %v354, %v353
      %v382 = vpack.c.b16 %v356, %v355
      %v383 = vpack.c.b16 %v358, %v357
      %v384 = vpack.c.b16 %v360, %v359
      %v385 = vpack.c.b16 %v362, %v361
      %v386 = vpack.c.b16 %v364, %v363
      %v387 = vpack.c.b16 %v366, %v365
      %v388 = vpack.c.b16 %v368, %v367
      %v389 = vpack.c.b16 %v370, %v369
      %v390 = vpack.c.b16 %v372, %v371
      %v391 = vpack.c.b16 %v374, %v373
      %v392 = vpack.c.b16 %v376, %v375
      %v425 = vunpack.c.l.b16 %v290
      %v426 = vunpack.c.l.b16 %v291
      %v427 = vunpack.c.l.b16 %v292
      %v428 = vunpack.c.l.b16 %v293
      %v429 = vunpack.c.l.b16 %v294
      %v430 = vunpack.c.l.b16 %v295
      %v431 = vunpack.c.l.b16 %v296
      %v432 = vunpack.c.l.b16 %v297
      %v433 = vunpack.c.l.b16 %v298
      %v434 = vunpack.c.l.b16 %v299
      %v435 = vunpack.c.l.b16 %v300
      %v436 = vunpack.c.l.b16 %v301
      %v437 = vunpack.c.l.b16 %v302
      %v438 = vunpack.c.l.b16 %v303
      %v439 = vunpack.c.l.b16 %v304
      %v440 = vunpack.c.l.b16 %v305
      %v441 = vpack.c.b16 %v426, %v425
      %v442 = vpack.c.b16 %v428, %v427
      %v443 = vpack.c.b16 %v430, %v429
      %v444 = vpack.c.b16 %v432, %v431
      %v445 = vpack.c.b16 %v434, %v433
      %v446 = vpack.c.b16 %v436, %v435
      %v447 = vpack.c.b16 %v438, %v437
      %v448 = vpack.c.b16 %v440, %v439
      %457 = vmatprep.subr.bf16.mxu0 0
      %458 = vmatpush1.bf16.msra.mxu0 %v448
      %459 = vmatprep.subr.bf16.mxu0 0
      %460 = vmatpush1.bf16.msra.mxu0 %v447
      %461 = vmatprep.subr.bf16.mxu0 0
      %462 = vmatpush1.bf16.msra.mxu0 %v446
      %463 = vmatprep.subr.bf16.mxu0 0
      %464 = vmatpush1.bf16.msra.mxu0 %v445
      %465 = vmatprep.subr.bf16.mxu0 0
      %466 = vmatpush1.bf16.msra.mxu0 %v444
      %467 = vmatprep.subr.bf16.mxu0 0
      %468 = vmatpush1.bf16.msra.mxu0 %v443
      %469 = vmatprep.subr.bf16.mxu0 0
      %470 = vmatpush1.bf16.msra.mxu0 %v442
      %471 = vmatprep.subr.bf16.mxu0 0
      %472 = vmatpush1.bf16.msra.mxu0 %v441
      %473 = vmatprep.subr.bf16.mxu0 0
      %474 = vmatpush2.bf16.msra.mxu0 0
      %475 = vmatprep.subr.bf16.mxu0 0
      %476 = vmatpush2.bf16.msra.mxu0 0
      %477 = vmatprep.subr.bf16.mxu0 0
      %478 = vmatpush2.bf16.msra.mxu0 0
      %479 = vmatprep.subr.bf16.mxu0 0
      %480 = vmatpush2.bf16.msra.mxu0 0
      %481 = vmatprep.subr.bf16.mxu0 0
      %482 = vmatpush2.bf16.msra.mxu0 0
      %483 = vmatprep.subr.bf16.mxu0 0
      %484 = vmatpush2.bf16.msra.mxu0 0
      %485 = vmatprep.subr.bf16.mxu0 0
      %486 = vmatpush2.bf16.msra.mxu0 0
      %487 = vmatprep.subr.bf16.mxu0 0
      %488 = vmatpush2.bf16.msra.mxu0 0
      %489 = vmatprep.mubr.bf16.mxu0 0
      %490 = vmatmul.mubr.bf16.gmra.mxu0 %v377
      %v491 = vpop.f32.mrf.mxu0
      %v492 = vadd.f32 %v311, %v491
      %v493 = vpop.f32.mrf.mxu0
      %v494 = vpop.f32.mrf.mxu0
      %v495 = vadd.f32 %v311, %v494
      %v496 = vpop.f32.mrf.mxu0
      %497 = vmatprep.mubr.bf16.mxu0 0
      %498 = vmatmul.mubr.bf16.gmra.mxu0 %v378
      %v499 = vpop.f32.mrf.mxu0
      %v500 = vadd.f32 %v311, %v499
      %v501 = vpop.f32.mrf.mxu0
      %v502 = vpop.f32.mrf.mxu0
      %v503 = vadd.f32 %v311, %v502
      %v504 = vpop.f32.mrf.mxu0
      %505 = vmatprep.mubr.bf16.mxu0 0
      %506 = vmatmul.mubr.bf16.gmra.mxu0 %v379
      %v507 = vpop.f32.mrf.mxu0
      %v508 = vadd.f32 %v311, %v507
      %v509 = vpop.f32.mrf.mxu0
      %v510 = vpop.f32.mrf.mxu0
      %v511 = vadd.f32 %v311, %v510
      %v512 = vpop.f32.mrf.mxu0
      %513 = vmatprep.mubr.bf16.mxu0 0
      %514 = vmatmul.mubr.bf16.gmra.mxu0 %v380
      %v515 = vpop.f32.mrf.mxu0
      %v516 = vadd.f32 %v311, %v515
      %v517 = vpop.f32.mrf.mxu0
      %v518 = vpop.f32.mrf.mxu0
      %v519 = vadd.f32 %v311, %v518
      %v520 = vpop.f32.mrf.mxu0
      %521 = vmatprep.mubr.bf16.mxu0 0
      %522 = vmatmul.mubr.bf16.gmra.mxu0 %v381
      %v523 = vpop.f32.mrf.mxu0
      %v524 = vadd.f32 %v311, %v523
      %v525 = vpop.f32.mrf.mxu0
      %v526 = vpop.f32.mrf.mxu0
      %v527 = vadd.f32 %v311, %v526
      %v528 = vpop.f32.mrf.mxu0
      %529 = vmatprep.mubr.bf16.mxu0 0
      %530 = vmatmul.mubr.bf16.gmra.mxu0 %v382
      %v531 = vpop.f32.mrf.mxu0
      %v532 = vadd.f32 %v311, %v531
      %v533 = vpop.f32.mrf.mxu0
      %v534 = vpop.f32.mrf.mxu0
      %v535 = vadd.f32 %v311, %v534
      %v536 = vpop.f32.mrf.mxu0
      %537 = vmatprep.mubr.bf16.mxu0 0
      %538 = vmatmul.mubr.bf16.gmra.mxu0 %v383
      %v539 = vpop.f32.mrf.mxu0
      %v540 = vadd.f32 %v311, %v539
      %v541 = vpop.f32.mrf.mxu0
      %v542 = vpop.f32.mrf.mxu0
      %v543 = vadd.f32 %v311, %v542
      %v544 = vpop.f32.mrf.mxu0
      %545 = vmatprep.mubr.bf16.mxu0 0
      %546 = vmatmul.mubr.bf16.gmra.mxu0 %v384
      %v547 = vpop.f32.mrf.mxu0
      %v548 = vadd.f32 %v311, %v547
      %v549 = vpop.f32.mrf.mxu0
      %v550 = vpop.f32.mrf.mxu0
      %v551 = vadd.f32 %v311, %v550
      %v552 = vpop.f32.mrf.mxu0
      %553 = vmatprep.mubr.bf16.mxu0 0
      %554 = vmatmul.mubr.bf16.gmra.mxu0 %v385
      %v555 = vpop.f32.mrf.mxu0
      %v556 = vadd.f32 %v311, %v555
      %v557 = vpop.f32.mrf.mxu0
      %v558 = vpop.f32.mrf.mxu0
      %v559 = vadd.f32 %v311, %v558
      %v560 = vpop.f32.mrf.mxu0
      %561 = vmatprep.mubr.bf16.mxu0 0
      %562 = vmatmul.mubr.bf16.gmra.mxu0 %v386
      %v563 = vpop.f32.mrf.mxu0
      %v564 = vadd.f32 %v311, %v563
      %v565 = vpop.f32.mrf.mxu0
      %v566 = vpop.f32.mrf.mxu0
      %v567 = vadd.f32 %v311, %v566
      %v568 = vpop.f32.mrf.mxu0
      %569 = vmatprep.mubr.bf16.mxu0 0
      %570 = vmatmul.mubr.bf16.gmra.mxu0 %v387
      %v571 = vpop.f32.mrf.mxu0
      %v572 = vadd.f32 %v311, %v571
      %v573 = vpop.f32.mrf.mxu0
      %v574 = vpop.f32.mrf.mxu0
      %v575 = vadd.f32 %v311, %v574
      %v576 = vpop.f32.mrf.mxu0
      %577 = vmatprep.mubr.bf16.mxu0 0
      %578 = vmatmul.mubr.bf16.gmra.mxu0 %v388
      %v579 = vpop.f32.mrf.mxu0
      %v580 = vadd.f32 %v311, %v579
      %v581 = vpop.f32.mrf.mxu0
      %v582 = vpop.f32.mrf.mxu0
      %v583 = vadd.f32 %v311, %v582
      %v584 = vpop.f32.mrf.mxu0
      %585 = vmatprep.mubr.bf16.mxu0 0
      %586 = vmatmul.mubr.bf16.gmra.mxu0 %v389
      %v587 = vpop.f32.mrf.mxu0
      %v588 = vadd.f32 %v311, %v587
      %v589 = vpop.f32.mrf.mxu0
      %v590 = vpop.f32.mrf.mxu0
      %v591 = vadd.f32 %v311, %v590
      %v592 = vpop.f32.mrf.mxu0
      %593 = vmatprep.mubr.bf16.mxu0 0
      %594 = vmatmul.mubr.bf16.gmra.mxu0 %v390
      %v595 = vpop.f32.mrf.mxu0
      %v596 = vadd.f32 %v311, %v595
      %v597 = vpop.f32.mrf.mxu0
      %v598 = vpop.f32.mrf.mxu0
      %v599 = vadd.f32 %v311, %v598
      %v600 = vpop.f32.mrf.mxu0
      %601 = vmatprep.mubr.bf16.mxu0 0
      %602 = vmatmul.mubr.bf16.gmra.mxu0 %v391
      %v603 = vpop.f32.mrf.mxu0
      %v604 = vadd.f32 %v311, %v603
      %v605 = vpop.f32.mrf.mxu0
      %v606 = vpop.f32.mrf.mxu0
      %v607 = vadd.f32 %v311, %v606
      %v608 = vpop.f32.mrf.mxu0
      %609 = vmatprep.mubr.bf16.mxu0 0
      %610 = vmatmul.mubr.bf16.gmra.mxu0 %v392
      %v611 = vpop.f32.mrf.mxu0
      %v612 = vadd.f32 %v311, %v611
      %v613 = vpop.f32.mrf.mxu0
      %v614 = vpop.f32.mrf.mxu0
      %v615 = vadd.f32 %v311, %v614
      %v616 = vpop.f32.mrf.mxu0
      %617 = vdwg.mxu0
      %v618 = vpack.c.bf16 %v495, %v492
      %v619 = vpack.c.bf16 %v503, %v500
      %v620 = vpack.c.bf16 %v511, %v508
      %v621 = vpack.c.bf16 %v519, %v516
      %v622 = vpack.c.bf16 %v527, %v524
      %v623 = vpack.c.bf16 %v535, %v532
      %v624 = vpack.c.bf16 %v543, %v540
      %v625 = vpack.c.bf16 %v551, %v548
      %v626 = vpack.c.bf16 %v559, %v556
      %v627 = vpack.c.bf16 %v567, %v564
      %v628 = vpack.c.bf16 %v575, %v572
      %v629 = vpack.c.bf16 %v583, %v580
      %v630 = vpack.c.bf16 %v591, %v588
      %v631 = vpack.c.bf16 %v599, %v596
      %v632 = vpack.c.bf16 %v607, %v604
      %v633 = vpack.c.bf16 %v615, %v612
      %v650 = vunpack.c.l.b16 %v618
      %v651 = vunpack.c.h.b16 %v618
      %v652 = vunpack.c.l.b16 %v619
      %v653 = vunpack.c.h.b16 %v619
      %v654 = vunpack.c.l.b16 %v620
      %v655 = vunpack.c.h.b16 %v620
      %v656 = vunpack.c.l.b16 %v621
      %v657 = vunpack.c.h.b16 %v621
      %v658 = vunpack.c.l.b16 %v622
      %v659 = vunpack.c.h.b16 %v622
      %v660 = vunpack.c.l.b16 %v623
      %v661 = vunpack.c.h.b16 %v623
      %v662 = vunpack.c.l.b16 %v624
      %v663 = vunpack.c.h.b16 %v624
      %v664 = vunpack.c.l.b16 %v625
      %v665 = vunpack.c.h.b16 %v625
      %v666 = vunpack.c.l.b16 %v626
      %v667 = vunpack.c.h.b16 %v626
      %v668 = vunpack.c.l.b16 %v627
      %v669 = vunpack.c.h.b16 %v627
      %v670 = vunpack.c.l.b16 %v628
      %v671 = vunpack.c.h.b16 %v628
      %v672 = vunpack.c.l.b16 %v629
      %v673 = vunpack.c.h.b16 %v629
      %v674 = vunpack.c.l.b16 %v630
      %v675 = vunpack.c.h.b16 %v630
      %v676 = vunpack.c.l.b16 %v631
      %v677 = vunpack.c.h.b16 %v631
      %v678 = vunpack.c.l.b16 %v632
      %v679 = vunpack.c.h.b16 %v632
      %v680 = vunpack.c.l.b16 %v633
      %v681 = vunpack.c.h.b16 %v633
      %v682 = vpack.c.b16 %v650, %v650
      %v683 = vpack.c.b16 %v651, %v651
      %v684 = vpack.c.b16 %v652, %v652
      %v685 = vpack.c.b16 %v653, %v653
      %v686 = vpack.c.b16 %v654, %v654
      %v687 = vpack.c.b16 %v655, %v655
      %v688 = vpack.c.b16 %v656, %v656
      %v689 = vpack.c.b16 %v657, %v657
      %v690 = vpack.c.b16 %v658, %v658
      %v691 = vpack.c.b16 %v659, %v659
      %v692 = vpack.c.b16 %v660, %v660
      %v693 = vpack.c.b16 %v661, %v661
      %v694 = vpack.c.b16 %v662, %v662
      %v695 = vpack.c.b16 %v663, %v663
      %v696 = vpack.c.b16 %v664, %v664
      %v697 = vpack.c.b16 %v665, %v665
      %v698 = vpack.c.b16 %v666, %v666
      %v699 = vpack.c.b16 %v667, %v667
      %v700 = vpack.c.b16 %v668, %v668
      %v701 = vpack.c.b16 %v669, %v669
      %v702 = vpack.c.b16 %v670, %v670
      %v703 = vpack.c.b16 %v671, %v671
      %v704 = vpack.c.b16 %v672, %v672
      %v705 = vpack.c.b16 %v673, %v673
      %v706 = vpack.c.b16 %v674, %v674
      %v707 = vpack.c.b16 %v675, %v675
      %v708 = vpack.c.b16 %v676, %v676
      %v709 = vpack.c.b16 %v677, %v677
      %v710 = vpack.c.b16 %v678, %v678
      %v711 = vpack.c.b16 %v679, %v679
      %v712 = vpack.c.b16 %v680, %v680
      %v713 = vpack.c.b16 %v681, %v681
      %vm746 = vcmask 125952
      %747 = vst.msk [vmem:[%s251] sm:$0xf] %vm746, %v682
      %748 = vst.msk [vmem:[%s251 + $0x4] sm:$0xf] %vm746, %v683
      %749 = vst.msk [vmem:[%s251 + $0x8] sm:$0xf] %vm746, %v684
      %750 = vst.msk [vmem:[%s251 + $0xc] sm:$0xf] %vm746, %v685
      %751 = vst.msk [vmem:[%s251 + $0x10] sm:$0xf] %vm746, %v686
      %752 = vst.msk [vmem:[%s251 + $0x14] sm:$0xf] %vm746, %v687
      %753 = vst.msk [vmem:[%s251 + $0x18] sm:$0xf] %vm746, %v688
      %754 = vst.msk [vmem:[%s251 + $0x1c] sm:$0xf] %vm746, %v689
      %755 = vst.msk [vmem:[%s251 + $0x20] sm:$0xf] %vm746, %v690
      %756 = vst.msk [vmem:[%s251 + $0x24] sm:$0xf] %vm746, %v691
      %757 = vst.msk [vmem:[%s251 + $0x28] sm:$0xf] %vm746, %v692
      %758 = vst.msk [vmem:[%s251 + $0x2c] sm:$0xf] %vm746, %v693
      %759 = vst.msk [vmem:[%s251 + $0x30] sm:$0xf] %vm746, %v694
      %760 = vst.msk [vmem:[%s251 + $0x34] sm:$0xf] %vm746, %v695
      %761 = vst.msk [vmem:[%s251 + $0x38] sm:$0xf] %vm746, %v696
      %762 = vst.msk [vmem:[%s251 + $0x3c] sm:$0xf] %vm746, %v697
      %763 = vst.msk [vmem:[%s251 + $0x40] sm:$0xf] %vm746, %v698
      %764 = vst.msk [vmem:[%s251 + $0x44] sm:$0xf] %vm746, %v699
      %765 = vst.msk [vmem:[%s251 + $0x48] sm:$0xf] %vm746, %v700
      %766 = vst.msk [vmem:[%s251 + $0x4c] sm:$0xf] %vm746, %v701
      %767 = vst.msk [vmem:[%s251 + $0x50] sm:$0xf] %vm746, %v702
      %768 = vst.msk [vmem:[%s251 + $0x54] sm:$0xf] %vm746, %v703
      %769 = vst.msk [vmem:[%s251 + $0x58] sm:$0xf] %vm746, %v704
      %770 = vst.msk [vmem:[%s251 + $0x5c] sm:$0xf] %vm746, %v705
      %771 = vst.msk [vmem:[%s251 + $0x60] sm:$0xf] %vm746, %v706
      %772 = vst.msk [vmem:[%s251 + $0x64] sm:$0xf] %vm746, %v707
      %773 = vst.msk [vmem:[%s251 + $0x68] sm:$0xf] %vm746, %v708
      %774 = vst.msk [vmem:[%s251 + $0x6c] sm:$0xf] %vm746, %v709
      %775 = vst.msk [vmem:[%s251 + $0x70] sm:$0xf] %vm746, %v710
      %776 = vst.msk [vmem:[%s251 + $0x74] sm:$0xf] %vm746, %v711
      %777 = vst.msk [vmem:[%s251 + $0x78] sm:$0xf] %vm746, %v712
      %778 = vst.msk [vmem:[%s251 + $0x7c] sm:$0xf] %vm746, %v713
      %vm779 = vcmask 130048
      %v780 = vsel %vm779, %v492, 0.0
      %v781 = vsel %vm779, %v495, 0.0
      %v782 = vadd.f32 %v780, %v781
      %v783 = vsel %vm779, %v500, 0.0
      %v784 = vadd.f32 %v782, %v783
      %v785 = vsel %vm779, %v503, 0.0
      %v786 = vadd.f32 %v784, %v785
      %v787 = vsel %vm779, %v508, 0.0
      %v788 = vadd.f32 %v786, %v787
      %v789 = vsel %vm779, %v511, 0.0
      %v790 = vadd.f32 %v788, %v789
      %v791 = vsel %vm779, %v516, 0.0
      %v792 = vadd.f32 %v790, %v791
      %v793 = vsel %vm779, %v519, 0.0
      %v794 = vadd.f32 %v792, %v793
      %v795 = vsel %vm779, %v524, 0.0
      %v796 = vadd.f32 %v794, %v795
      %v797 = vsel %vm779, %v527, 0.0
      %v798 = vadd.f32 %v796, %v797
      %v799 = vsel %vm779, %v532, 0.0
      %v800 = vadd.f32 %v798, %v799
      %v801 = vsel %vm779, %v535, 0.0
      %v802 = vadd.f32 %v800, %v801
      %v803 = vsel %vm779, %v540, 0.0
      %v804 = vadd.f32 %v802, %v803
      %v805 = vsel %vm779, %v543, 0.0
      %v806 = vadd.f32 %v804, %v805
      %v807 = vsel %vm779, %v548, 0.0
      %v808 = vadd.f32 %v806, %v807
      %v809 = vsel %vm779, %v551, 0.0
      %v810 = vadd.f32 %v808, %v809
      %v811 = vsel %vm779, %v556, 0.0
      %v812 = vadd.f32 %v810, %v811
      %v813 = vsel %vm779, %v559, 0.0
      %v814 = vadd.f32 %v812, %v813
      %v815 = vsel %vm779, %v564, 0.0
      %v816 = vadd.f32 %v814, %v815
      %v817 = vsel %vm779, %v567, 0.0
      %v818 = vadd.f32 %v816, %v817
      %v819 = vsel %vm779, %v572, 0.0
      %v820 = vadd.f32 %v818, %v819
      %v821 = vsel %vm779, %v575, 0.0
      %v822 = vadd.f32 %v820, %v821
      %v823 = vsel %vm779, %v580, 0.0
      %v824 = vadd.f32 %v822, %v823
      %v825 = vsel %vm779, %v583, 0.0
      %v826 = vadd.f32 %v824, %v825
      %v827 = vsel %vm779, %v588, 0.0
      %v828 = vadd.f32 %v826, %v827
      %v829 = vsel %vm779, %v591, 0.0
      %v830 = vadd.f32 %v828, %v829
      %v831 = vsel %vm779, %v596, 0.0
      %v832 = vadd.f32 %v830, %v831
      %v833 = vsel %vm779, %v599, 0.0
      %v834 = vadd.f32 %v832, %v833
      %v835 = vsel %vm779, %v604, 0.0
      %v836 = vadd.f32 %v834, %v835
      %v837 = vsel %vm779, %v607, 0.0
      %v838 = vadd.f32 %v836, %v837
      %v839 = vsel %vm779, %v612, 0.0
      %v840 = vadd.f32 %v838, %v839
      %v841 = vsel %vm779, %v615, 0.0
      %v842 = vadd.f32 %v840, %v841
      %v843 = vrot.slane %v842, 4
      %v844 = vadd.f32 %v842, %v843
      %v845 = vrot.slane %v844, 2
      %v846 = vadd.f32 %v844, %v845
      %v847 = vrot.slane %v846, 1
      %v848 = vadd.f32 %v846, %v847
      %vm849 = vcmask 122880
      %850 = vst.msk [vmem:[%s256] sm:$0x1] %vm849, %v848
      %v851 = vmul.f32 %v492, %v492
      %v852 = vmul.f32 %v495, %v495
      %v853 = vmul.f32 %v500, %v500
      %v854 = vmul.f32 %v503, %v503
      %v855 = vmul.f32 %v508, %v508
      %v856 = vmul.f32 %v511, %v511
      %v857 = vmul.f32 %v516, %v516
      %v858 = vmul.f32 %v519, %v519
      %v859 = vmul.f32 %v524, %v524
      %v860 = vmul.f32 %v527, %v527
      %v861 = vmul.f32 %v532, %v532
      %v862 = vmul.f32 %v535, %v535
      %v863 = vmul.f32 %v540, %v540
      %v864 = vmul.f32 %v543, %v543
      %v865 = vmul.f32 %v548, %v548
      %v866 = vmul.f32 %v551, %v551
      %v867 = vmul.f32 %v556, %v556
      %v868 = vmul.f32 %v559, %v559
      %v869 = vmul.f32 %v564, %v564
      %v870 = vmul.f32 %v567, %v567
      %v871 = vmul.f32 %v572, %v572
      %v872 = vmul.f32 %v575, %v575
      %v873 = vmul.f32 %v580, %v580
      %v874 = vmul.f32 %v583, %v583
      %v875 = vmul.f32 %v588, %v588
      %v876 = vmul.f32 %v591, %v591
      %v877 = vmul.f32 %v596, %v596
      %v878 = vmul.f32 %v599, %v599
      %v879 = vmul.f32 %v604, %v604
      %v880 = vmul.f32 %v607, %v607
      %v881 = vmul.f32 %v612, %v612
      %v882 = vmul.f32 %v615, %v615
      %v883 = vsel %vm779, %v851, 0.0
      %v884 = vsel %vm779, %v852, 0.0
      %v885 = vadd.f32 %v883, %v884
      %v886 = vsel %vm779, %v853, 0.0
      %v887 = vadd.f32 %v885, %v886
      %v888 = vsel %vm779, %v854, 0.0
      %v889 = vadd.f32 %v887, %v888
      %v890 = vsel %vm779, %v855, 0.0
      %v891 = vadd.f32 %v889, %v890
      %v892 = vsel %vm779, %v856, 0.0
      %v893 = vadd.f32 %v891, %v892
      %v894 = vsel %vm779, %v857, 0.0
      %v895 = vadd.f32 %v893, %v894
      %v896 = vsel %vm779, %v858, 0.0
      %v897 = vadd.f32 %v895, %v896
      %v898 = vsel %vm779, %v859, 0.0
      %v899 = vadd.f32 %v897, %v898
      %v900 = vsel %vm779, %v860, 0.0
      %v901 = vadd.f32 %v899, %v900
      %v902 = vsel %vm779, %v861, 0.0
      %v903 = vadd.f32 %v901, %v902
      %v904 = vsel %vm779, %v862, 0.0
      %v905 = vadd.f32 %v903, %v904
      %v906 = vsel %vm779, %v863, 0.0
      %v907 = vadd.f32 %v905, %v906
      %v908 = vsel %vm779, %v864, 0.0
      %v909 = vadd.f32 %v907, %v908
      %v910 = vsel %vm779, %v865, 0.0
      %v911 = vadd.f32 %v909, %v910
      %v912 = vsel %vm779, %v866, 0.0
      %v913 = vadd.f32 %v911, %v912
      %v914 = vsel %vm779, %v867, 0.0
      %v915 = vadd.f32 %v913, %v914
      %v916 = vsel %vm779, %v868, 0.0
      %v917 = vadd.f32 %v915, %v916
      %v918 = vsel %vm779, %v869, 0.0
      %v919 = vadd.f32 %v917, %v918
      %v920 = vsel %vm779, %v870, 0.0
      %v921 = vadd.f32 %v919, %v920
      %v922 = vsel %vm779, %v871, 0.0
      %v923 = vadd.f32 %v921, %v922
      %v924 = vsel %vm779, %v872, 0.0
      %v925 = vadd.f32 %v923, %v924
      %v926 = vsel %vm779, %v873, 0.0
      %v927 = vadd.f32 %v925, %v926
      %v928 = vsel %vm779, %v874, 0.0
      %v929 = vadd.f32 %v927, %v928
      %v930 = vsel %vm779, %v875, 0.0
      %v931 = vadd.f32 %v929, %v930
      %v932 = vsel %vm779, %v876, 0.0
      %v933 = vadd.f32 %v931, %v932
      %v934 = vsel %vm779, %v877, 0.0
      %v935 = vadd.f32 %v933, %v934
      %v936 = vsel %vm779, %v878, 0.0
      %v937 = vadd.f32 %v935, %v936
      %v938 = vsel %vm779, %v879, 0.0
      %v939 = vadd.f32 %v937, %v938
      %v940 = vsel %vm779, %v880, 0.0
      %v941 = vadd.f32 %v939, %v940
      %v942 = vsel %vm779, %v881, 0.0
      %v943 = vadd.f32 %v941, %v942
      %v944 = vsel %vm779, %v882, 0.0
      %v945 = vadd.f32 %v943, %v944
      %v946 = vrot.slane %v945, 4
      %v947 = vadd.f32 %v945, %v946
      %v948 = vrot.slane %v947, 2
      %v949 = vadd.f32 %v947, %v948
      %v950 = vrot.slane %v949, 1
      %v951 = vadd.f32 %v949, %v950
      %952 = vst.msk [vmem:[%s256 + $0x1] sm:$0x1] %vm849, %v951
      %s953 = smul.u32 32, %s20
      %p954 = scmp.lt.s32.totalorder %s953, 63
      %s955 = scalar_select %p954, %s953, 63
      %s956 = smul.addr %s955, 4
      %s957 = scalar_lea.vmem %s3, %s956
      %p958 = scmp.lt.s32.totalorder %s20, 1
      %s959 = scalar_select %p958, %s20, 1
      %s960 = smul.addr %s959, 2
      %s961 = scalar_lea.vmem %s4, %s960
      // Predicated region
      $region33: #{_lambda_.8} parent=31 // pred_check
        %p962 = pneg %p121
      $region34: #{_lambda_.8} parent=31 // pred_check_branch
        %964 = sbr.rel (%p962) target = $region36
      $region35: #{_lambda_.8} parent=31 // pred_region
        %s965 = smul.u32 32, %s20
      $region36: #{_lambda_.8} parent=31 // pred_fallthru
        _
      // Predicated region
      $region37: #{_lambda_.8} parent=31 // pred_check
        %p966 = pneg %p147
      $region38: #{_lambda_.8} parent=31 // pred_check_branch
        %968 = sbr.rel (%p966) target = $region40
      $region39: #{_lambda_.8} parent=31 // pred_region
        _
      $region40: #{_lambda_.8} parent=31 // pred_fallthru
        _
    $region32: #{_lambda_.8} parent=5 // pred_fallthru
      _
    %p969 = scmp.le.s32.totalorder 2, %s11
    // Predicated region
    $region41: #{_lambda_.8} parent=5 // pred_check
      %p970 = pneg %p969
    $region42: #{_lambda_.8} parent=5 // pred_check_branch
      %972 = sbr.rel (%p970) target = $region44
    $region43: #{_lambda_.8} parent=5 // pred_region
      %s973 = ssub.s32 %s11, 2
      // Predicated region
      $region45: #{_lambda_.8} parent=43 // pred_check
        %p974 = pneg %p127
      $region46: #{_lambda_.8} parent=43 // pred_check_branch
        %976 = sbr.rel (%p974) target = $region48
      $region47: #{_lambda_.8} parent=43 // pred_region
        %s977 = smul.u32 32, %s22
        %p978 = scmp.lt.s32.totalorder %s977, 63
        %s979 = scalar_select %p978, %s977, 63
        %s980 = smul.addr %s979, 4
        %s981 = scalar_lea.vmem %s3, %s980
      $region48: #{_lambda_.8} parent=43 // pred_fallthru
        _
      // Predicated region
      $region49: #{_lambda_.8} parent=43 // pred_check
        %p982 = pneg %p153
      $region50: #{_lambda_.8} parent=43 // pred_check_branch
        %984 = sbr.rel (%p982) target = $region52
      $region51: #{_lambda_.8} parent=43 // pred_region
        %p985 = scmp.lt.s32.totalorder %s22, 1
        %s986 = scalar_select %p985, %s22, 1
        %s987 = smul.addr %s986, 2
        %s988 = scalar_lea.vmem %s4, %s987
      $region52: #{_lambda_.8} parent=43 // pred_fallthru
        _
    $region44: #{_lambda_.8} parent=5 // pred_fallthru
      _
  $region6: #{_lambda_.8} parent=0 // loop_footer
    %s15 = sadd.s32 1, %s11
  $region7: #{_lambda_.8} parent=0 // loop_footer_branch
    %10 = sbr.rel target = $region3
  $region8: #{_lambda_.8} parent=0 // loop_exit
    _

// kernel: tile.33
$region0: #{tile.33}
  #allocation0 [shape = 's32[1]{0}', space=sflag, size = 0x4, scoped, tag = 'scoped memory for tile.33']
  %s0 = inlined_call_operand.vmem [shape: f32[16], index: 0, kind: input, shape index: {}]
  %s1 = inlined_call_operand.vmem [shape: f32[8,16], index: 1, kind: output, shape index: {}]
  // Predicated region
  $region2: #{tile.33} parent=0 // pred_check
    _
  $region3: #{tile.33} parent=0 // pred_check_branch
    %3 = sbr.rel (0) target = $region5
  $region4: #{tile.33} parent=0 // pred_region
    _
  $region5: #{tile.33} parent=0 // pred_fallthru
    _
  %v4 = vld [vmem:[%s0] ss:$0 sm:$0xff]
  %5 = vst [vmem:[%s1] sm:$0xff] %v4

// kernel: tile.38
$region0: #{tile.38}
  %s0 = inlined_call_operand.vmem [shape: f32[8,16], index: 0, kind: input, shape index: {}]
  %s1 = inlined_call_operand.vmem [shape: f32[1,128], index: 1, kind: output, shape index: {}]
  $region1: #{tile.38} parent=0
    #allocation0 [shape = 'u8[4096]{0}', space=vmem, size = 0x1000, scoped, tag = 'scoped mem for output reshape']
    %v2 = vld [vmem:[%s0] sm:$0x1]
    %vm3 = vcmask 130048
    %4 = vst.msk [vmem:[#allocation0] sm:$0x1] %vm3, %v2
    %s5 = scalar_lea.vmem %s0, 7
    %v6 = vld [vmem:[%s5] sm:$0x1]
    %7 = vrot.lane.b32.xlu0 %v6, 112
    %v8 = vpop.permute.xlu0 %7
    %vm9 = vcmask 1048448
    %10 = vst.msk [vmem:[#allocation0] sm:$0x1] %vm9, %v8
    %s11 = scalar_lea.vmem %s0, 6
    %v12 = vld [vmem:[%s11] sm:$0x1]
    %13 = vrot.lane.b32.xlu0 %v12, 96
    %v14 = vpop.permute.xlu0 %13
    %vm15 = vcmask 917248
    %16 = vst.msk [vmem:[#allocation0] sm:$0x1] %vm15, %v14
    %s17 = scalar_lea.vmem %s0, 5
    %v18 = vld [vmem:[%s17] sm:$0x1]
    %19 = vrot.lane.b32.xlu0 %v18, 80
    %v20 = vpop.permute.xlu0 %19
    %vm21 = vcmask 786048
    %22 = vst.msk [vmem:[#allocation0] sm:$0x1] %vm21, %v20
    %s23 = scalar_lea.vmem %s0, 4
    %v24 = vld [vmem:[%s23] sm:$0x1]
    %25 = vrot.lane.b32.xlu0 %v24, 64
    %v26 = vpop.permute.xlu0 %25
    %vm27 = vcmask 654848
    %28 = vst.msk [vmem:[#allocation0] sm:$0x1] %vm27, %v26
    %s29 = scalar_lea.vmem %s0, 3
    %v30 = vld [vmem:[%s29] sm:$0x1]
    %31 = vrot.lane.b32.xlu0 %v30, 48
    %v32 = vpop.permute.xlu0 %31
    %vm33 = vcmask 523648
    %34 = vst.msk [vmem:[#allocation0] sm:$0x1] %vm33, %v32
    %s35 = scalar_lea.vmem %s0, 2
    %v36 = vld [vmem:[%s35] sm:$0x1]
    %37 = vrot.lane.b32.xlu0 %v36, 32
    %v38 = vpop.permute.xlu0 %37
    %vm39 = vcmask 392448
    %40 = vst.msk [vmem:[#allocation0] sm:$0x1] %vm39, %v38
    %s41 = scalar_lea.vmem %s0, 1
    %v42 = vld [vmem:[%s41] sm:$0x1]
    %43 = vrot.lane.b32.xlu0 %v42, 16
    %v44 = vpop.permute.xlu0 %43
    %vm45 = vcmask 261248
    %46 = vst.msk [vmem:[#allocation0] sm:$0x1] %vm45, %v44
    %s48 = sshll.u32 1, 1
    %s49 = ssub.s32 %s48, 1
    %v51 = vld [vmem:[#allocation0] sm:%s49]
    %s52 = sshll.u32 1, 1
    %s53 = ssub.s32 %s52, 1
    %54 = vst [vmem:[%s1] sm:%s53] %v51

// kernel: _lambda_.9
$region0: #{_lambda_.9}
  #allocation0 [shape = 'u32[]', space=smem, size = 0x4, offset = 0x4, fixed_abs, tag = 'smem constant byte address 0x4 - core index']
  #allocation1 [shape = 'u32[144,128]{1,0:T(1,128)}', space=vmem, size = 0x12000, scoped, tag = 'internal scratch']
  %s0 = inlined_call_operand.vmem [shape: bf16[64,128], index: 0, kind: input, shape index: {}]
  %s1 = inlined_call_operand.vmem [shape: f32[2,128], index: 1, kind: input, shape index: {}]
  %s2 = inlined_call_operand.vmem [shape: bf16[64,128], index: 2, kind: output, shape index: {}]
  %s3 = sld [smem:[#allocation0]]
  $region18: #{_lambda_.9} parent=0
    _
  %s5 = ssub.s32 1, %s3
  %s6 = scalar_select 0, %s5, %s3
  // Predicated region
  $region2: #{_lambda_.9} parent=0 // pred_check
    _
  $region3: #{_lambda_.9} parent=0 // pred_check_branch
    %8 = sbr.rel (0) target = $region5
  $region4: #{_lambda_.9} parent=0 // pred_region
    _
  $region5: #{_lambda_.9} parent=0 // pred_fallthru
    _
  // Predicated region
  $region6: #{_lambda_.9} parent=0 // pred_check
    _
  $region7: #{_lambda_.9} parent=0 // pred_check_branch
    %10 = sbr.rel (0) target = $region9
  $region8: #{_lambda_.9} parent=0 // pred_region
    _
  $region9: #{_lambda_.9} parent=0 // pred_fallthru
    _
  %v11 = vld [vmem:[%s0] sm:$0xf]
  %v12 = vld [vmem:[%s0 + $0x4] sm:$0xf]
  %v13 = vld [vmem:[%s0 + $0x8] sm:$0xf]
  %v14 = vld [vmem:[%s0 + $0xc] sm:$0xf]
  %v15 = vld [vmem:[%s0 + $0x10] sm:$0xf]
  %v16 = vld [vmem:[%s0 + $0x14] sm:$0xf]
  %v17 = vld [vmem:[%s0 + $0x18] sm:$0xf]
  %v18 = vld [vmem:[%s0 + $0x1c] sm:$0xf]
  %v19 = vunpack.c.l.bf16 %v11
  %v20 = vunpack.c.l.bf16 %v12
  %v21 = vunpack.c.l.bf16 %v13
  %v22 = vunpack.c.l.bf16 %v14
  %v23 = vunpack.c.l.bf16 %v15
  %v24 = vunpack.c.l.bf16 %v16
  %v25 = vunpack.c.l.bf16 %v17
  %v26 = vunpack.c.l.bf16 %v18
  %v27 = vld [vmem:[%s1] sm:$0x1]
  %v28 = vlaneseq
  %v29 = vshrl.u32 %v28, 7
  %v30 = vsub.s32 0, %v29
  %v31 = vrot.slane %v27, %v30
  %v32 = vmul.f32 %v19, %v31
  %v33 = vmul.f32 %v20, %v31
  %v34 = vmul.f32 %v21, %v31
  %v35 = vmul.f32 %v22, %v31
  %v36 = vmul.f32 %v23, %v31
  %v37 = vmul.f32 %v24, %v31
  %v38 = vmul.f32 %v25, %v31
  %v39 = vmul.f32 %v26, %v31
  %v40 = vld [vmem:[%s1 + $0x1] sm:$0x1]
  %v41 = vlaneseq
  %v42 = vshrl.u32 %v41, 7
  %v43 = vsub.s32 0, %v42
  %v44 = vrot.slane %v40, %v43
  %v45 = vadd.f32 %v32, %v44
  %v46 = vadd.f32 %v33, %v44
  %v47 = vadd.f32 %v34, %v44
  %v48 = vadd.f32 %v35, %v44
  %v49 = vadd.f32 %v36, %v44
  %v50 = vadd.f32 %v37, %v44
  %v51 = vadd.f32 %v38, %v44
  %v52 = vadd.f32 %v39, %v44
  %v53 = vpack.c.bf16 %v46, %v45
  %v54 = vpack.c.bf16 %v48, %v47
  %v55 = vpack.c.bf16 %v50, %v49
  %v56 = vpack.c.bf16 %v52, %v51
  %v61 = vunpack.c.l.b16 %v53
  %v62 = vunpack.c.h.b16 %v53
  %v63 = vunpack.c.l.b16 %v54
  %v64 = vunpack.c.h.b16 %v54
  %v65 = vunpack.c.l.b16 %v55
  %v66 = vunpack.c.h.b16 %v55
  %v67 = vunpack.c.l.b16 %v56
  %v68 = vunpack.c.h.b16 %v56
  %v69 = vpack.c.b16 %v61, %v61
  %v70 = vpack.c.b16 %v62, %v62
  %v71 = vpack.c.b16 %v63, %v63
  %v72 = vpack.c.b16 %v64, %v64
  %v73 = vpack.c.b16 %v65, %v65
  %v74 = vpack.c.b16 %v66, %v66
  %v75 = vpack.c.b16 %v67, %v67
  %v76 = vpack.c.b16 %v68, %v68
  %85 = vst [vmem:[%s2] sm:$0xf] %v69
  %86 = vst [vmem:[%s2 + $0x4] sm:$0xf] %v70
  %87 = vst [vmem:[%s2 + $0x8] sm:$0xf] %v71
  %88 = vst [vmem:[%s2 + $0xc] sm:$0xf] %v72
  %89 = vst [vmem:[%s2 + $0x10] sm:$0xf] %v73
  %90 = vst [vmem:[%s2 + $0x14] sm:$0xf] %v74
  %91 = vst [vmem:[%s2 + $0x18] sm:$0xf] %v75
  %92 = vst [vmem:[%s2 + $0x1c] sm:$0xf] %v76
  // Predicated region
  $region10: #{_lambda_.9} parent=0 // pred_check
    _
  $region11: #{_lambda_.9} parent=0 // pred_check_branch
    %94 = sbr.rel (0) target = $region13
  $region12: #{_lambda_.9} parent=0 // pred_region
    _
  $region13: #{_lambda_.9} parent=0 // pred_fallthru
    _
  // Predicated region
  $region14: #{_lambda_.9} parent=0 // pred_check
    _
  $region15: #{_lambda_.9} parent=0 // pred_check_branch
    %96 = sbr.rel (0) target = $region17
  $region16: #{_lambda_.9} parent=0 // pred_region
    _
  $region17: #{_lambda_.9} parent=0 // pred_fallthru
    _

// kernel: tile.53
$region0: #{tile.53}
  #allocation0 [shape = 's32[1]{0}', space=sflag, size = 0x4, scoped, tag = 'scoped memory for tile.53']
  %s0 = inlined_call_operand.vmem [shape: f32[8], index: 0, kind: input, shape index: {}]
  %s1 = inlined_call_operand.vmem [shape: f32[16,8], index: 1, kind: output, shape index: {}]
  // Predicated region
  $region2: #{tile.53} parent=0 // pred_check
    _
  $region3: #{tile.53} parent=0 // pred_check_branch
    %3 = sbr.rel (0) target = $region5
  $region4: #{tile.53} parent=0 // pred_region
    _
  $region5: #{tile.53} parent=0 // pred_fallthru
    _
  %v4 = vld [vmem:[%s0] ss:$0 sm:$0xff]
  %5 = vst [vmem:[%s1] sm:$0xff] %v4
  %s6 = scalar_lea.vmem %s1, 8
  %7 = vst [vmem:[%s6] sm:$0xff] %v4

// kernel: tile.58
$region0: #{tile.58}
  %s0 = inlined_call_operand.vmem [shape: f32[16,8], index: 0, kind: input, shape index: {}]
  %s1 = inlined_call_operand.vmem [shape: f32[1,128], index: 1, kind: output, shape index: {}]
  $region1: #{tile.58} parent=0
    #allocation0 [shape = 'u8[4096]{0}', space=vmem, size = 0x1000, scoped, tag = 'scoped mem for output reshape']
    %v2 = vld [vmem:[%s0] sm:$0x1]
    %vm3 = vcmask 64512
    %4 = vst.msk [vmem:[#allocation0] sm:$0x1] %vm3, %v2
    %s5 = scalar_lea.vmem %s0, 15
    %v6 = vld [vmem:[%s5] sm:$0x1]
    %7 = vrot.lane.b32.xlu0 %v6, 120
    %v8 = vpop.permute.xlu0 %7
    %vm9 = vcmask 1048512
    %10 = vst.msk [vmem:[#allocation0] sm:$0x1] %vm9, %v8
    %s11 = scalar_lea.vmem %s0, 14
    %v12 = vld [vmem:[%s11] sm:$0x1]
    %13 = vrot.lane.b32.xlu0 %v12, 112
    %v14 = vpop.permute.xlu0 %13
    %vm15 = vcmask 982912
    %16 = vst.msk [vmem:[#allocation0] sm:$0x1] %vm15, %v14
    %s17 = scalar_lea.vmem %s0, 13
    %v18 = vld [vmem:[%s17] sm:$0x1]
    %19 = vrot.lane.b32.xlu0 %v18, 104
    %v20 = vpop.permute.xlu0 %19
    %vm21 = vcmask 917312
    %22 = vst.msk [vmem:[#allocation0] sm:$0x1] %vm21, %v20
    %s23 = scalar_lea.vmem %s0, 12
    %v24 = vld [vmem:[%s23] sm:$0x1]
    %25 = vrot.lane.b32.xlu0 %v24, 96
    %v26 = vpop.permute.xlu0 %25
    %vm27 = vcmask 851712
    %28 = vst.msk [vmem:[#allocation0] sm:$0x1] %vm27, %v26
    %s29 = scalar_lea.vmem %s0, 11
    %v30 = vld [vmem:[%s29] sm:$0x1]
    %31 = vrot.lane.b32.xlu0 %v30, 88
    %v32 = vpop.permute.xlu0 %31
    %vm33 = vcmask 786112
    %34 = vst.msk [vmem:[#allocation0] sm:$0x1] %vm33, %v32
    %s35 = scalar_lea.vmem %s0, 10
    %v36 = vld [vmem:[%s35] sm:$0x1]
    %37 = vrot.lane.b32.xlu0 %v36, 80
    %v38 = vpop.permute.xlu0 %37
    %vm39 = vcmask 720512
    %40 = vst.msk [vmem:[#allocation0] sm:$0x1] %vm39, %v38
    %s41 = scalar_lea.vmem %s0, 9
    %v42 = vld [vmem:[%s41] sm:$0x1]
    %43 = vrot.lane.b32.xlu0 %v42, 72
    %v44 = vpop.permute.xlu0 %43
    %vm45 = vcmask 654912
    %46 = vst.msk [vmem:[#allocation0] sm:$0x1] %vm45, %v44
    %s47 = scalar_lea.vmem %s0, 8
    %v48 = vld [vmem:[%s47] sm:$0x1]
    %49 = vrot.lane.b32.xlu0 %v48, 64
    %v50 = vpop.permute.xlu0 %49
    %vm51 = vcmask 589312
    %52 = vst.msk [vmem:[#allocation0] sm:$0x1] %vm51, %v50
    %s53 = scalar_lea.vmem %s0, 7
    %v54 = vld [vmem:[%s53] sm:$0x1]
    %55 = vrot.lane.b32.xlu0 %v54, 56
    %v56 = vpop.permute.xlu0 %55
    %vm57 = vcmask 523712
    %58 = vst.msk [vmem:[#allocation0] sm:$0x1] %vm57, %v56
    %s59 = scalar_lea.vmem %s0, 6
    %v60 = vld [vmem:[%s59] sm:$0x1]
    %61 = vrot.lane.b32.xlu0 %v60, 48
    %v62 = vpop.permute.xlu0 %61
    %vm63 = vcmask 458112
    %64 = vst.msk [vmem:[#allocation0] sm:$0x1] %vm63, %v62
    %s65 = scalar_lea.vmem %s0, 5
    %v66 = vld [vmem:[%s65] sm:$0x1]
    %67 = vrot.lane.b32.xlu0 %v66, 40
    %v68 = vpop.permute.xlu0 %67
    %vm69 = vcmask 392512
    %70 = vst.msk [vmem:[#allocation0] sm:$0x1] %vm69, %v68
    %s71 = scalar_lea.vmem %s0, 4
    %v72 = vld [vmem:[%s71] sm:$0x1]
    %73 = vrot.lane.b32.xlu0 %v72, 32
    %v74 = vpop.permute.xlu0 %73
    %vm75 = vcmask 326912
    %76 = vst.msk [vmem:[#allocation0] sm:$0x1] %vm75, %v74
    %s77 = scalar_lea.vmem %s0, 3
    %v78 = vld [vmem:[%s77] sm:$0x1]
    %79 = vrot.lane.b32.xlu0 %v78, 24
    %v80 = vpop.permute.xlu0 %79
    %vm81 = vcmask 261312
    %82 = vst.msk [vmem:[#allocation0] sm:$0x1] %vm81, %v80
    %s83 = scalar_lea.vmem %s0, 2
    %v84 = vld [vmem:[%s83] sm:$0x1]
    %85 = vrot.lane.b32.xlu0 %v84, 16
    %v86 = vpop.permute.xlu0 %85
    %vm87 = vcmask 195712
    %88 = vst.msk [vmem:[#allocation0] sm:$0x1] %vm87, %v86
    %s89 = scalar_lea.vmem %s0, 1
    %v90 = vld [vmem:[%s89] sm:$0x1]
    %91 = vrot.lane.b32.xlu0 %v90, 8
    %v92 = vpop.permute.xlu0 %91
    %vm93 = vcmask 130112
    %94 = vst.msk [vmem:[#allocation0] sm:$0x1] %vm93, %v92
    %s96 = sshll.u32 1, 1
    %s97 = ssub.s32 %s96, 1
    %v99 = vld [vmem:[#allocation0] sm:%s97]
    %s100 = sshll.u32 1, 1
    %s101 = ssub.s32 %s100, 1
    %102 = vst [vmem:[%s1] sm:%s101] %v99

// kernel: _lambda_.11
$region0: #{_lambda_.11}
  #allocation0 [shape = 'u32[]', space=smem, size = 0x4, offset = 0x4, fixed_abs, tag = 'smem constant byte address 0x4 - core index']
  #allocation1 [shape = 'u32[144,128]{1,0:T(1,128)}', space=vmem, size = 0x12000, scoped, tag = 'internal scratch']
  %s0 = inlined_call_operand.vmem [shape: bf16[512,288], index: 0, kind: input, shape index: {}]
  %s1 = inlined_call_operand.vmem [shape: bf16[288,32], index: 1, kind: input, shape index: {}]
  %s2 = inlined_call_operand.vmem [shape: f32[1,32], index: 2, kind: input, shape index: {}]
  %s3 = inlined_call_operand.vmem [shape: bf16[512,32], index: 3, kind: output, shape index: {0}]
  %s4 = inlined_call_operand.vmem [shape: f32[2,2,32], index: 4, kind: output, shape index: {1}]
  %5 = xla_tuple %s3, %s4
  %s6 = sld [smem:[#allocation0]]
  $region53: #{_lambda_.11} parent=0
    _
  %s8 = ssub.s32 1, %s6
  %s9 = scalar_select 0, %s8, %s6
  loop: start=0, step=1, limit=4
  $region2: #{_lambda_.11} parent=0 // loop_pre_header
    _
  $region3: #{_lambda_.11} parent=0 // loop_header
    %s11 = sphi 0, %s15
    %p12 = scmp.ge.s32.totalorder %s11, 4
    %s18 = sphi 0, %s30
    %s19 = sphi 0, %s26
    %s20 = sphi 0, %s18
    %s21 = sphi 0, %s19
    %s22 = sphi 0, %s20
    %s23 = sphi 0, %s21
    %s35 = sphi 0, %s37
    %s38 = sphi 0, %s35
    %s39 = sphi 0, %s38
    %s55 = sphi 0, %s39
    %s61 = sphi 0, %s63
    %s64 = sphi 0, %s61
    %s65 = sphi 0, %s64
    %s81 = sphi 0, %s65
    %s85 = sphi 0, %s85
    %s87 = sphi 0, %s85
    %s88 = sphi 0, %s87
    %s102 = sphi 0, %s88
    %s108 = sphi 0, %s110
    %s111 = sphi 0, %s108
    %s112 = sphi 0, %s111
    %s128 = sphi 0, %s112
    %s134 = sphi 0, %s136
    %s137 = sphi 0, %s134
    %s138 = sphi 0, %s137
    %s154 = sphi 0, %s138
  $region4: #{_lambda_.11} parent=0 // loop_header_branch
    %14 = sbr.rel (%p12) target = $region8
  $region5: #{_lambda_.11} parent=0 // loop_body
    %s16 = ssub.s32 %s11, 1
    %s17 = ssub.s32 %s11, 2
    %s24 = sadd.s32 1, %s19
    %p25 = scmp.ge.s32.totalorder %s24, 1
    %s26 = scalar_select %p25, 0, %s24
    %s27 = sadd.s32 1, %s18
    %s28 = scalar_select %p25, %s27, %s18
    %p29 = scmp.ge.s32.totalorder %s28, 2
    %s30 = scalar_select %p29, 0, %s28
    %s31 = ssub.s32 %s18, %s30
    %s32 = ssub.s32 %s19, %s26
    %s33 = sor.u32 %s31, %s32
    %p34 = scmp.eq.s32.totalorder %s33, 0
    %s36 = sadd.s32 %s35, 1
    %s37 = scalar_select %p34, %s35, %s36
    %p40 = pneg %p34
    %p41 = scmp.eq.s32.totalorder %s11, 1
    %p42 = por %p40, %p41
    %p43 = scmp.ne.s32.totalorder %s35, %s38
    %p44 = scmp.eq.s32.totalorder %s11, 0
    %p45 = por %p43, %p44
    %p46 = scmp.ne.s32.totalorder %s35, %s38
    %p47 = scmp.eq.s32.totalorder %s16, 1
    %p48 = por %p46, %p47
    %p49 = scmp.ne.s32.totalorder %s38, %s39
    %p50 = scmp.eq.s32.totalorder %s16, 0
    %p51 = por %p49, %p50
    %p52 = scmp.ne.s32.totalorder %s38, %s39
    %p53 = scmp.eq.s32.totalorder %s17, 1
    %p54 = por %p52, %p53
    %p56 = scmp.ne.s32.totalorder %s39, %s55
    %p57 = scmp.eq.s32.totalorder %s17, 0
    %p58 = por %p56, %p57
    %s59 = ssub.s32 %s19, %s26
    %p60 = scmp.eq.s32.totalorder %s59, 0
    %s62 = sadd.s32 %s61, 1
    %s63 = scalar_select %p60, %s61, %s62
    %p66 = pneg %p60
    %p67 = scmp.eq.s32.totalorder %s11, 1
    %p68 = por %p66, %p67
    %p69 = scmp.ne.s32.totalorder %s61, %s64
    %p70 = scmp.eq.s32.totalorder %s11, 0
    %p71 = por %p69, %p70
    %p72 = scmp.ne.s32.totalorder %s61, %s64
    %p73 = scmp.eq.s32.totalorder %s16, 1
    %p74 = por %p72, %p73
    %p75 = scmp.ne.s32.totalorder %s64, %s65
    %p76 = scmp.eq.s32.totalorder %s16, 0
    %p77 = por %p75, %p76
    %p78 = scmp.ne.s32.totalorder %s64, %s65
    %p79 = scmp.eq.s32.totalorder %s17, 1
    %p80 = por %p78, %p79
    %p82 = scmp.ne.s32.totalorder %s65, %s81
    %p83 = scmp.eq.s32.totalorder %s17, 0
    %p84 = por %p82, %p83
    %s86 = sadd.s32 %s85, 1
    %p89 = scmp.eq.s32.totalorder %s11, 1
    %p90 = scmp.ne.s32.totalorder %s85, %s87
    %p91 = scmp.eq.s32.totalorder %s11, 0
    %p92 = por %p90, %p91
    %p93 = scmp.ne.s32.totalorder %s85, %s87
    %p94 = scmp.eq.s32.totalorder %s16, 1
    %p95 = por %p93, %p94
    %p96 = scmp.ne.s32.totalorder %s87, %s88
    %p97 = scmp.eq.s32.totalorder %s16, 0
    %p98 = por %p96, %p97
    %p99 = scmp.ne.s32.totalorder %s87, %s88
    %p100 = scmp.eq.s32.totalorder %s17, 1
    %p101 = por %p99, %p100
    %p103 = scmp.ne.s32.totalorder %s88, %s102
    %p104 = scmp.eq.s32.totalorder %s17, 0
    %p105 = por %p103, %p104
    %s106 = ssub.s32 %s18, %s30
    %p107 = scmp.eq.s32.totalorder %s106, 0
    %s109 = sadd.s32 %s108, 1
    %s110 = scalar_select %p107, %s108, %s109
    %p113 = pneg %p107
    %p114 = scmp.eq.s32.totalorder %s11, 1
    %p115 = por %p113, %p114
    %p116 = scmp.ne.s32.totalorder %s108, %s111
    %p117 = scmp.eq.s32.totalorder %s11, 0
    %p118 = por %p116, %p117
    %p119 = scmp.ne.s32.totalorder %s108, %s111
    %p120 = scmp.eq.s32.totalorder %s16, 1
    %p121 = por %p119, %p120
    %p122 = scmp.ne.s32.totalorder %s111, %s112
    %p123 = scmp.eq.s32.totalorder %s16, 0
    %p124 = por %p122, %p123
    %p125 = scmp.ne.s32.totalorder %s111, %s112
    %p126 = scmp.eq.s32.totalorder %s17, 1
    %p127 = por %p125, %p126
    %p129 = scmp.ne.s32.totalorder %s112, %s128
    %p130 = scmp.eq.s32.totalorder %s17, 0
    %p131 = por %p129, %p130
    %s132 = ssub.s32 %s18, %s30
    %p133 = scmp.eq.s32.totalorder %s132, 0
    %s135 = sadd.s32 %s134, 1
    %s136 = scalar_select %p133, %s134, %s135
    %p139 = pneg %p133
    %p140 = scmp.eq.s32.totalorder %s11, 1
    %p141 = por %p139, %p140
    %p142 = scmp.ne.s32.totalorder %s134, %s137
    %p143 = scmp.eq.s32.totalorder %s11, 0
    %p144 = por %p142, %p143
    %p145 = scmp.ne.s32.totalorder %s134, %s137
    %p146 = scmp.eq.s32.totalorder %s16, 1
    %p147 = por %p145, %p146
    %p148 = scmp.ne.s32.totalorder %s137, %s138
    %p149 = scmp.eq.s32.totalorder %s16, 0
    %p150 = por %p148, %p149
    %p151 = scmp.ne.s32.totalorder %s137, %s138
    %p152 = scmp.eq.s32.totalorder %s17, 1
    %p153 = por %p151, %p152
    %p155 = scmp.ne.s32.totalorder %s138, %s154
    %p156 = scmp.eq.s32.totalorder %s17, 0
    %p157 = por %p155, %p156
    %p158 = scmp.le.s32.totalorder 1, %s11
    %p159 = scmp.lt.s32.totalorder %s11, 3
    %p160 = pnand %p158, %p159
    %p161 = pneg %p160
    // Predicated region
    $region9: #{_lambda_.11} parent=5 // pred_check
      _
    $region10: #{_lambda_.11} parent=5 // pred_check_branch
      %163 = sbr.rel (%p160) target = $region12
    $region11: #{_lambda_.11} parent=5 // pred_region
      %s164 = ssub.s32 %s11, 1
      // Predicated region
      $region13: #{_lambda_.11} parent=11 // pred_check
        %p165 = pneg %p77
      $region14: #{_lambda_.11} parent=11 // pred_check_branch
        %167 = sbr.rel (%p165) target = $region16
      $region15: #{_lambda_.11} parent=11 // pred_region
        %s168 = smul.u32 36, %s21
        %p169 = scmp.lt.s32.totalorder %s168, 35
        %s170 = scalar_select %p169, %s168, 35
        %s171 = smul.addr %s170, 4
        %s172 = scalar_lea.vmem %s1, %s171
        %s173 = smul.u32 36, %s21
      $region16: #{_lambda_.11} parent=11 // pred_fallthru
        _
      // Predicated region
      $region17: #{_lambda_.11} parent=11 // pred_check
        %p174 = pneg %p98
      $region18: #{_lambda_.11} parent=11 // pred_check_branch
        %176 = sbr.rel (%p174) target = $region20
      $region19: #{_lambda_.11} parent=11 // pred_region
        _
      $region20: #{_lambda_.11} parent=11 // pred_fallthru
        _
    $region12: #{_lambda_.11} parent=5 // pred_fallthru
      _
    %p177 = scmp.lt.s32.totalorder %s11, 2
    // Predicated region
    $region21: #{_lambda_.11} parent=5 // pred_check
      %p178 = pneg %p177
    $region22: #{_lambda_.11} parent=5 // pred_check_branch
      %180 = sbr.rel (%p178) target = $region24
    $region23: #{_lambda_.11} parent=5 // pred_region
      // Predicated region
      $region25: #{_lambda_.11} parent=23 // pred_check
        %p181 = pneg %p45
      $region26: #{_lambda_.11} parent=23 // pred_check_branch
        %183 = sbr.rel (%p181) target = $region28
      $region27: #{_lambda_.11} parent=23 // pred_region
        %s184 = smul.u32 32, %s18
        %s185 = smul.u32 3, %s19
        %p186 = scmp.lt.s32.totalorder %s184, 63
        %s187 = scalar_select %p186, %s184, 63
        %p188 = scmp.lt.s32.totalorder %s185, 2
        %s189 = scalar_select %p188, %s185, 2
        %s190 = smul.addr %s187, 3
        %s191 = sadd.s32 %s189, %s190
        %s192 = smul.addr %s191, 4
        %s193 = scalar_lea.vmem %s0, %s192
        %s194 = smul.u32 32, %s18
        %s195 = smul.u32 3, %s19
      $region28: #{_lambda_.11} parent=23 // pred_fallthru
        _
    $region24: #{_lambda_.11} parent=5 // pred_fallthru
      _
    %p196 = scmp.le.s32.totalorder 1, %s11
    %p197 = scmp.lt.s32.totalorder %s11, 3
    %p198 = pnand %p196, %p197
    %p199 = pneg %p198
    // Predicated region
    $region29: #{_lambda_.11} parent=5 // pred_check
      _
    $region30: #{_lambda_.11} parent=5 // pred_check_branch
      %201 = sbr.rel (%p198) target = $region32
    $region31: #{_lambda_.11} parent=5 // pred_region
      %s202 = ssub.s32 %s11, 1
      %s203 = smul.u32 32, %s20
      %s204 = smul.u32 3, %s21
      %p205 = scmp.lt.s32.totalorder %s203, 63
      %s206 = scalar_select %p205, %s203, 63
      %p207 = scmp.lt.s32.totalorder %s204, 2
      %s208 = scalar_select %p207, %s204, 2
      %s209 = smul.addr %s206, 3
      %s210 = sadd.s32 %s208, %s209
      %s211 = smul.addr %s210, 4
      %s212 = scalar_lea.vmem %s0, %s211
      %p213 = pneg %p51
      %p214 = pneg %p48
      %s215 = smul.u32 36, %s21
      %p216 = scmp.lt.s32.totalorder %s215, 35
      %s217 = scalar_select %p216, %s215, 35
      %s218 = smul.addr %s217, 4
      %s219 = scalar_lea.vmem %s1, %s218
      %p220 = pneg %p77
      %p221 = pneg %p74
      %p222 = pneg %p98
      %p223 = pneg %p95
      %p224 = pneg %p124
      %p225 = pneg %p121
      %s226 = smul.u32 32, %s20
      %p227 = scmp.lt.s32.totalorder %s226, 63
      %s228 = scalar_select %p227, %s226, 63
      %s229 = smul.addr %s228, 4
      %s230 = scalar_lea.vmem %s3, %s229
      %p231 = pneg %p150
      %p232 = pneg %p147
      %p233 = scmp.lt.s32.totalorder %s20, 1
      %s234 = scalar_select %p233, %s20, 1
      %s235 = smul.addr %s234, 2
      %s236 = scalar_lea.vmem %s4, %s235
      %s237 = smul.u32 32, %s20
      %s238 = smul.u32 3, %s21
      %p239 = scmp.lt.s32.totalorder %s237, 63
      %s240 = scalar_select %p239, %s237, 63
      %p241 = scmp.lt.s32.totalorder %s238, 2
      %s242 = scalar_select %p241, %s238, 2
      %s243 = smul.addr %s240, 3
      %s244 = sadd.s32 %s242, %s243
      %s245 = smul.addr %s244, 4
      %s246 = scalar_lea.vmem %s0, %s245
      %s247 = smul.u32 32, %s20
      %s248 = smul.u32 3, %s21
      %s249 = smul.u32 36, %s21
      %p250 = scmp.lt.s32.totalorder %s249, 35
      %s251 = scalar_select %p250, %s249, 35
      %s252 = smul.addr %s251, 4
      %s253 = scalar_lea.vmem %s1, %s252
      %s254 = smul.u32 36, %s21
      %s255 = smul.u32 32, %s20
      %p256 = scmp.lt.s32.totalorder %s255, 63
      %s257 = scalar_select %p256, %s255, 63
      %s258 = smul.addr %s257, 4
      %s259 = scalar_lea.vmem %s3, %s258
      %s260 = smul.u32 32, %s20
      %p261 = scmp.lt.s32.totalorder %s20, 1
      %s262 = scalar_select %p261, %s20, 1
      %s263 = smul.addr %s262, 2
      %s264 = scalar_lea.vmem %s4, %s263
      %v266 = vld [vmem:[%s246] sm:$0xff]
      %v267 = vld [vmem:[%s246 + $0x8] sm:$0xf]
      %v268 = vld [vmem:[%s246 + $0xc] sm:$0xff]
      %v269 = vld [vmem:[%s246 + $0x14] sm:$0xf]
      %v270 = vld [vmem:[%s246 + $0x18] sm:$0xff]
      %v271 = vld [vmem:[%s246 + $0x20] sm:$0xf]
      %v272 = vld [vmem:[%s246 + $0x24] sm:$0xff]
      %v273 = vld [vmem:[%s246 + $0x2c] sm:$0xf]
      %v274 = vld [vmem:[%s246 + $0x30] sm:$0xff]
      %v275 = vld [vmem:[%s246 + $0x38] sm:$0xf]
      %v276 = vld [vmem:[%s246 + $0x3c] sm:$0xff]
      %v277 = vld [vmem:[%s246 + $0x44] sm:$0xf]
      %v278 = vld [vmem:[%s246 + $0x48] sm:$0xff]
      %v279 = vld [vmem:[%s246 + $0x50] sm:$0xf]
      %v280 = vld [vmem:[%s246 + $0x54] sm:$0xff]
      %v281 = vld [vmem:[%s246 + $0x5c] sm:$0xf]
      %v282 = vld [vmem:[%s246 + $0x60] sm:$0xff]
      %v283 = vld [vmem:[%s246 + $0x68] sm:$0xf]
      %v284 = vld [vmem:[%s246 + $0x6c] sm:$0xff]
      %v285 = vld [vmem:[%s246 + $0x74] sm:$0xf]
      %v286 = vld [vmem:[%s246 + $0x78] sm:$0xff]
      %v287 = vld [vmem:[%s246 + $0x80] sm:$0xf]
      %v288 = vld [vmem:[%s246 + $0x84] sm:$0xff]
      %v289 = vld [vmem:[%s246 + $0x8c] sm:$0xf]
      %v290 = vld [vmem:[%s246 + $0x90] sm:$0xff]
      %v291 = vld [vmem:[%s246 + $0x98] sm:$0xf]
      %v292 = vld [vmem:[%s246 + $0x9c] sm:$0xff]
      %v293 = vld [vmem:[%s246 + $0xa4] sm:$0xf]
      %v294 = vld [vmem:[%s246 + $0xa8] sm:$0xff]
      %v295 = vld [vmem:[%s246 + $0xb0] sm:$0xf]
      %v296 = vld [vmem:[%s246 + $0xb4] sm:$0xff]
      %v297 = vld [vmem:[%s246 + $0xbc] sm:$0xf]
      %v298 = vld [vmem:[%s246 + $0xc0] sm:$0xff]
      %v299 = vld [vmem:[%s246 + $0xc8] sm:$0xf]
      %v300 = vld [vmem:[%s246 + $0xcc] sm:$0xff]
      %v301 = vld [vmem:[%s246 + $0xd4] sm:$0xf]
      %v302 = vld [vmem:[%s246 + $0xd8] sm:$0xff]
      %v303 = vld [vmem:[%s246 + $0xe0] sm:$0xf]
      %v304 = vld [vmem:[%s246 + $0xe4] sm:$0xff]
      %v305 = vld [vmem:[%s246 + $0xec] sm:$0xf]
      %v306 = vld [vmem:[%s246 + $0xf0] sm:$0xff]
      %v307 = vld [vmem:[%s246 + $0xf8] sm:$0xf]
      %v308 = vld [vmem:[%s246 + $0xfc] sm:$0xff]
      %v309 = vld [vmem:[%s246 + $0x104] sm:$0xf]
      %v310 = vld [vmem:[%s246 + $0x108] sm:$0xff]
      %v311 = vld [vmem:[%s246 + $0x110] sm:$0xf]
      %v312 = vld [vmem:[%s246 + $0x114] sm:$0xff]
      %v313 = vld [vmem:[%s246 + $0x11c] sm:$0xf]
      %v314 = vld [vmem:[%s246 + $0x120] sm:$0xff]
      %v315 = vld [vmem:[%s246 + $0x128] sm:$0xf]
      %v316 = vld [vmem:[%s246 + $0x12c] sm:$0xff]
      %v317 = vld [vmem:[%s246 + $0x134] sm:$0xf]
      %v318 = vld [vmem:[%s246 + $0x138] sm:$0xff]
      %v319 = vld [vmem:[%s246 + $0x140] sm:$0xf]
      %v320 = vld [vmem:[%s246 + $0x144] sm:$0xff]
      %v321 = vld [vmem:[%s246 + $0x14c] sm:$0xf]
      %v322 = vld [vmem:[%s246 + $0x150] sm:$0xff]
      %v323 = vld [vmem:[%s246 + $0x158] sm:$0xf]
      %v324 = vld [vmem:[%s246 + $0x15c] sm:$0xff]
      %v325 = vld [vmem:[%s246 + $0x164] sm:$0xf]
      %v326 = vld [vmem:[%s246 + $0x168] sm:$0xff]
      %v327 = vld [vmem:[%s246 + $0x170] sm:$0xf]
      %v328 = vld [vmem:[%s246 + $0x174] sm:$0xff]
      %v329 = vld [vmem:[%s246 + $0x17c] sm:$0xf]
      %v330 = vld [vmem:[%s253] sm:$0xf]
      %v331 = vld [vmem:[%s253 + $0x4] sm:$0xf]
      %v332 = vld [vmem:[%s253 + $0x8] sm:$0xf]
      %v333 = vld [vmem:[%s253 + $0xc] sm:$0xf]
      %v334 = vld [vmem:[%s253 + $0x10] sm:$0xf]
      %v335 = vld [vmem:[%s253 + $0x14] sm:$0xf]
      %v336 = vld [vmem:[%s253 + $0x18] sm:$0xf]
      %v337 = vld [vmem:[%s253 + $0x1c] sm:$0xf]
      %v338 = vld [vmem:[%s253 + $0x20] sm:$0xf]
      %v339 = vld [vmem:[%s253 + $0x24] sm:$0xf]
      %v340 = vld [vmem:[%s253 + $0x28] sm:$0xf]
      %v341 = vld [vmem:[%s253 + $0x2c] sm:$0xf]
      %v342 = vld [vmem:[%s253 + $0x30] sm:$0xf]
      %v343 = vld [vmem:[%s253 + $0x34] sm:$0xf]
      %v344 = vld [vmem:[%s253 + $0x38] sm:$0xf]
      %v345 = vld [vmem:[%s253 + $0x3c] sm:$0xf]
      %v346 = vld [vmem:[%s253 + $0x40] sm:$0xf]
      %v347 = vld [vmem:[%s253 + $0x44] sm:$0xf]
      %v348 = vld [vmem:[%s253 + $0x48] sm:$0xf]
      %v349 = vld [vmem:[%s253 + $0x4c] sm:$0xf]
      %v350 = vld [vmem:[%s253 + $0x50] sm:$0xf]
      %v351 = vld [vmem:[%s253 + $0x54] sm:$0xf]
      %v352 = vld [vmem:[%s253 + $0x58] sm:$0xf]
      %v353 = vld [vmem:[%s253 + $0x5c] sm:$0xf]
      %v354 = vld [vmem:[%s253 + $0x60] sm:$0xf]
      %v355 = vld [vmem:[%s253 + $0x64] sm:$0xf]
      %v356 = vld [vmem:[%s253 + $0x68] sm:$0xf]
      %v357 = vld [vmem:[%s253 + $0x6c] sm:$0xf]
      %v358 = vld [vmem:[%s253 + $0x70] sm:$0xf]
      %v359 = vld [vmem:[%s253 + $0x74] sm:$0xf]
      %v360 = vld [vmem:[%s253 + $0x78] sm:$0xf]
      %v361 = vld [vmem:[%s253 + $0x7c] sm:$0xf]
      %v362 = vld [vmem:[%s253 + $0x80] sm:$0xf]
      %v363 = vld [vmem:[%s253 + $0x84] sm:$0xf]
      %v364 = vld [vmem:[%s253 + $0x88] sm:$0xf]
      %v365 = vld [vmem:[%s253 + $0x8c] sm:$0xf]
      %v366 = vld [vmem:[%s2] sm:$0x1]
      %v368 = vlaneseq
      %v369 = vshrl.u32 %v368, 7
      %v370 = vsub.s32 0, %v369
      %v371 = vrot.slane %v366, %v370
      %v437 = vunpack.c.l.b16 %v266
      %v438 = vunpack.c.h.b16 %v266
      %v439 = vunpack.c.l.b16 %v267
      %v440 = vunpack.c.l.b16 %v268
      %v441 = vunpack.c.h.b16 %v268
      %v442 = vunpack.c.l.b16 %v269
      %v443 = vunpack.c.l.b16 %v270
      %v444 = vunpack.c.h.b16 %v270
      %v445 = vunpack.c.l.b16 %v271
      %v446 = vunpack.c.l.b16 %v272
      %v447 = vunpack.c.h.b16 %v272
      %v448 = vunpack.c.l.b16 %v273
      %v449 = vunpack.c.l.b16 %v274
      %v450 = vunpack.c.h.b16 %v274
      %v451 = vunpack.c.l.b16 %v275
      %v452 = vunpack.c.l.b16 %v276
      %v453 = vunpack.c.h.b16 %v276
      %v454 = vunpack.c.l.b16 %v277
      %v455 = vunpack.c.l.b16 %v278
      %v456 = vunpack.c.h.b16 %v278
      %v457 = vunpack.c.l.b16 %v279
      %v458 = vunpack.c.l.b16 %v280
      %v459 = vunpack.c.h.b16 %v280
      %v460 = vunpack.c.l.b16 %v281
      %v461 = vunpack.c.l.b16 %v282
      %v462 = vunpack.c.h.b16 %v282
      %v463 = vunpack.c.l.b16 %v283
      %v464 = vunpack.c.l.b16 %v284
      %v465 = vunpack.c.h.b16 %v284
      %v466 = vunpack.c.l.b16 %v285
      %v467 = vunpack.c.l.b16 %v286
      %v468 = vunpack.c.h.b16 %v286
      %v469 = vunpack.c.l.b16 %v287
      %v470 = vunpack.c.l.b16 %v288
      %v471 = vunpack.c.h.b16 %v288
      %v472 = vunpack.c.l.b16 %v289
      %v473 = vunpack.c.l.b16 %v290
      %v474 = vunpack.c.h.b16 %v290
      %v475 = vunpack.c.l.b16 %v291
      %v476 = vunpack.c.l.b16 %v292
      %v477 = vunpack.c.h.b16 %v292
      %v478 = vunpack.c.l.b16 %v293
      %v479 = vunpack.c.l.b16 %v294
      %v480 = vunpack.c.h.b16 %v294
      %v481 = vunpack.c.l.b16 %v295
      %v482 = vunpack.c.l.b16 %v296
      %v483 = vunpack.c.h.b16 %v296
      %v484 = vunpack.c.l.b16 %v297
      %v485 = vunpack.c.l.b16 %v298
      %v486 = vunpack.c.h.b16 %v298
      %v487 = vunpack.c.l.b16 %v299
      %v488 = vunpack.c.l.b16 %v300
      %v489 = vunpack.c.h.b16 %v300
      %v490 = vunpack.c.l.b16 %v301
      %v491 = vunpack.c.l.b16 %v302
      %v492 = vunpack.c.h.b16 %v302
      %v493 = vunpack.c.l.b16 %v303
      %v494 = vunpack.c.l.b16 %v304
      %v495 = vunpack.c.h.b16 %v304
      %v496 = vunpack.c.l.b16 %v305
      %v497 = vunpack.c.l.b16 %v306
      %v498 = vunpack.c.h.b16 %v306
      %v499 = vunpack.c.l.b16 %v307
      %v500 = vunpack.c.l.b16 %v308
      %v501 = vunpack.c.h.b16 %v308
      %v502 = vunpack.c.l.b16 %v309
      %v503 = vunpack.c.l.b16 %v310
      %v504 = vunpack.c.h.b16 %v310
      %v505 = vunpack.c.l.b16 %v311
      %v506 = vunpack.c.l.b16 %v312
      %v507 = vunpack.c.h.b16 %v312
      %v508 = vunpack.c.l.b16 %v313
      %v509 = vunpack.c.l.b16 %v314
      %v510 = vunpack.c.h.b16 %v314
      %v511 = vunpack.c.l.b16 %v315
      %v512 = vunpack.c.l.b16 %v316
      %v513 = vunpack.c.h.b16 %v316
      %v514 = vunpack.c.l.b16 %v317
      %v515 = vunpack.c.l.b16 %v318
      %v516 = vunpack.c.h.b16 %v318
      %v517 = vunpack.c.l.b16 %v319
      %v518 = vunpack.c.l.b16 %v320
      %v519 = vunpack.c.h.b16 %v320
      %v520 = vunpack.c.l.b16 %v321
      %v521 = vunpack.c.l.b16 %v322
      %v522 = vunpack.c.h.b16 %v322
      %v523 = vunpack.c.l.b16 %v323
      %v524 = vunpack.c.l.b16 %v324
      %v525 = vunpack.c.h.b16 %v324
      %v526 = vunpack.c.l.b16 %v325
      %v527 = vunpack.c.l.b16 %v326
      %v528 = vunpack.c.h.b16 %v326
      %v529 = vunpack.c.l.b16 %v327
      %v530 = vunpack.c.l.b16 %v328
      %v531 = vunpack.c.h.b16 %v328
      %v532 = vunpack.c.l.b16 %v329
      %v533 = vpack.c.b16 %v440, %v437
      %v534 = vpack.c.b16 %v441, %v438
      %v535 = vpack.c.b16 %v442, %v439
      %v536 = vpack.c.b16 %v446, %v443
      %v537 = vpack.c.b16 %v447, %v444
      %v538 = vpack.c.b16 %v448, %v445
      %v539 = vpack.c.b16 %v452, %v449
      %v540 = vpack.c.b16 %v453, %v450
      %v541 = vpack.c.b16 %v454, %v451
      %v542 = vpack.c.b16 %v458, %v455
      %v543 = vpack.c.b16 %v459, %v456
      %v544 = vpack.c.b16 %v460, %v457
      %v545 = vpack.c.b16 %v464, %v461
      %v546 = vpack.c.b16 %v465, %v462
      %v547 = vpack.c.b16 %v466, %v463
      %v548 = vpack.c.b16 %v470, %v467
      %v549 = vpack.c.b16 %v471, %v468
      %v550 = vpack.c.b16 %v472, %v469
      %v551 = vpack.c.b16 %v476, %v473
      %v552 = vpack.c.b16 %v477, %v474
      %v553 = vpack.c.b16 %v478, %v475
      %v554 = vpack.c.b16 %v482, %v479
      %v555 = vpack.c.b16 %v483, %v480
      %v556 = vpack.c.b16 %v484, %v481
      %v557 = vpack.c.b16 %v488, %v485
      %v558 = vpack.c.b16 %v489, %v486
      %v559 = vpack.c.b16 %v490, %v487
      %v560 = vpack.c.b16 %v494, %v491
      %v561 = vpack.c.b16 %v495, %v492
      %v562 = vpack.c.b16 %v496, %v493
      %v563 = vpack.c.b16 %v500, %v497
      %v564 = vpack.c.b16 %v501, %v498
      %v565 = vpack.c.b16 %v502, %v499
      %v566 = vpack.c.b16 %v506, %v503
      %v567 = vpack.c.b16 %v507, %v504
      %v568 = vpack.c.b16 %v508, %v505
      %v569 = vpack.c.b16 %v512, %v509
      %v570 = vpack.c.b16 %v513, %v510
      %v571 = vpack.c.b16 %v514, %v511
      %v572 = vpack.c.b16 %v518, %v515
      %v573 = vpack.c.b16 %v519, %v516
      %v574 = vpack.c.b16 %v520, %v517
      %v575 = vpack.c.b16 %v524, %v521
      %v576 = vpack.c.b16 %v525, %v522
      %v577 = vpack.c.b16 %v526, %v523
      %v578 = vpack.c.b16 %v530, %v527
      %v579 = vpack.c.b16 %v531, %v528
      %v580 = vpack.c.b16 %v532, %v529
      %v649 = vunpack.c.l.b16 %v330
      %v650 = vunpack.c.l.b16 %v331
      %v651 = vunpack.c.l.b16 %v332
      %v652 = vunpack.c.l.b16 %v333
      %v653 = vunpack.c.l.b16 %v334
      %v654 = vunpack.c.l.b16 %v335
      %v655 = vunpack.c.l.b16 %v336
      %v656 = vunpack.c.l.b16 %v337
      %v657 = vunpack.c.l.b16 %v338
      %v658 = vunpack.c.l.b16 %v339
      %v659 = vunpack.c.l.b16 %v340
      %v660 = vunpack.c.l.b16 %v341
      %v661 = vunpack.c.l.b16 %v342
      %v662 = vunpack.c.l.b16 %v343
      %v663 = vunpack.c.l.b16 %v344
      %v664 = vunpack.c.l.b16 %v345
      %v665 = vunpack.c.l.b16 %v346
      %v666 = vunpack.c.l.b16 %v347
      %v667 = vunpack.c.l.b16 %v348
      %v668 = vunpack.c.l.b16 %v349
      %v669 = vunpack.c.l.b16 %v350
      %v670 = vunpack.c.l.b16 %v351
      %v671 = vunpack.c.l.b16 %v352
      %v672 = vunpack.c.l.b16 %v353
      %v673 = vunpack.c.l.b16 %v354
      %v674 = vunpack.c.l.b16 %v355
      %v675 = vunpack.c.l.b16 %v356
      %v676 = vunpack.c.l.b16 %v357
      %v677 = vunpack.c.l.b16 %v358
      %v678 = vunpack.c.l.b16 %v359
      %v679 = vunpack.c.l.b16 %v360
      %v680 = vunpack.c.l.b16 %v361
      %v681 = vunpack.c.l.b16 %v362
      %v682 = vunpack.c.l.b16 %v363
      %v683 = vunpack.c.l.b16 %v364
      %v684 = vunpack.c.l.b16 %v365
      %v685 = vpack.c.b16 %v650, %v649
      %v686 = vpack.c.b16 %v652, %v651
      %v687 = vpack.c.b16 %v654, %v653
      %v688 = vpack.c.b16 %v656, %v655
      %v689 = vpack.c.b16 %v658, %v657
      %v690 = vpack.c.b16 %v660, %v659
      %v691 = vpack.c.b16 %v662, %v661
      %v692 = vpack.c.b16 %v664, %v663
      %v693 = vpack.c.b16 %v666, %v665
      %v694 = vpack.c.b16 %v668, %v667
      %v695 = vpack.c.b16 %v670, %v669
      %v696 = vpack.c.b16 %v672, %v671
      %v697 = vpack.c.b16 %v674, %v673
      %v698 = vpack.c.b16 %v676, %v675
      %v699 = vpack.c.b16 %v678, %v677
      %v700 = vpack.c.b16 %v680, %v679
      %v701 = vpack.c.b16 %v682, %v681
      %v702 = vpack.c.b16 %v684, %v683
      %vm721 = vcmask 261120
      %v723 = vsel %vm721, %v535, 0
      %v726 = vsel %vm721, %v538, 0
      %v729 = vsel %vm721, %v541, 0
      %v732 = vsel %vm721, %v544, 0
      %v735 = vsel %vm721, %v547, 0
      %v738 = vsel %vm721, %v550, 0
      %v741 = vsel %vm721, %v553, 0
      %v744 = vsel %vm721, %v556, 0
      %v747 = vsel %vm721, %v559, 0
      %v750 = vsel %vm721, %v562, 0
      %v753 = vsel %vm721, %v565, 0
      %v756 = vsel %vm721, %v568, 0
      %v759 = vsel %vm721, %v571, 0
      %v762 = vsel %vm721, %v574, 0
      %v765 = vsel %vm721, %v577, 0
      %v768 = vsel %vm721, %v580, 0
      %770 = vmatprep.subr.bf16.mxu0 0
      %771 = vmatpush1.bf16.msra.mxu0 %v692
      %772 = vmatprep.subr.bf16.mxu0 0
      %773 = vmatpush1.bf16.msra.mxu0 %v691
      %774 = vmatprep.subr.bf16.mxu0 0
      %775 = vmatpush1.bf16.msra.mxu0 %v690
      %776 = vmatprep.subr.bf16.mxu0 0
      %777 = vmatpush1.bf16.msra.mxu0 %v689
      %778 = vmatprep.subr.bf16.mxu0 0
      %779 = vmatpush1.bf16.msra.mxu0 %v688
      %780 = vmatprep.subr.bf16.mxu0 0
      %781 = vmatpush1.bf16.msra.mxu0 %v687
      %782 = vmatprep.subr.bf16.mxu0 0
      %783 = vmatpush1.bf16.msra.mxu0 %v686
      %784 = vmatprep.subr.bf16.mxu0 0
      %785 = vmatpush1.bf16.msra.mxu0 %v685
      %786 = vmatprep.subr.bf16.mxu0 0
      %787 = vmatpush2.bf16.msra.mxu0 %v700
      %788 = vmatprep.subr.bf16.mxu0 0
      %789 = vmatpush2.bf16.msra.mxu0 %v699
      %790 = vmatprep.subr.bf16.mxu0 0
      %791 = vmatpush2.bf16.msra.mxu0 %v698
      %792 = vmatprep.subr.bf16.mxu0 0
      %793 = vmatpush2.bf16.msra.mxu0 %v697
      %794 = vmatprep.subr.bf16.mxu0 0
      %795 = vmatpush2.bf16.msra.mxu0 %v696
      %796 = vmatprep.subr.bf16.mxu0 0
      %797 = vmatpush2.bf16.msra.mxu0 %v695
      %798 = vmatprep.subr.bf16.mxu0 0
      %799 = vmatpush2.bf16.msra.mxu0 %v694
      %800 = vmatprep.subr.bf16.mxu0 0
      %801 = vmatpush2.bf16.msra.mxu0 %v693
      %802 = vmatprep.mubr.bf16.mxu0 %v534
      %803 = vmatmul.mubr.bf16.gmra.mxu0 %v533
      %v804 = vpop.f32.mrf.mxu0
      %v805 = vadd.f32 %v371, %v804
      %v806 = vpop.f32.mrf.mxu0
      %v807 = vpop.f32.mrf.mxu0
      %v808 = vadd.f32 %v371, %v807
      %v809 = vpop.f32.mrf.mxu0
      %810 = vmatprep.mubr.bf16.mxu0 %v537
      %811 = vmatmul.mubr.bf16.gmra.mxu0 %v536
      %v812 = vpop.f32.mrf.mxu0
      %v813 = vadd.f32 %v371, %v812
      %v814 = vpop.f32.mrf.mxu0
      %v815 = vpop.f32.mrf.mxu0
      %v816 = vadd.f32 %v371, %v815
      %v817 = vpop.f32.mrf.mxu0
      %818 = vmatprep.mubr.bf16.mxu0 %v540
      %819 = vmatmul.mubr.bf16.gmra.mxu0 %v539
      %v820 = vpop.f32.mrf.mxu0
      %v821 = vadd.f32 %v371, %v820
      %v822 = vpop.f32.mrf.mxu0
      %v823 = vpop.f32.mrf.mxu0
      %v824 = vadd.f32 %v371, %v823
      %v825 = vpop.f32.mrf.mxu0
      %826 = vmatprep.mubr.bf16.mxu0 %v543
      %827 = vmatmul.mubr.bf16.gmra.mxu0 %v542
      %v828 = vpop.f32.mrf.mxu0
      %v829 = vadd.f32 %v371, %v828
      %v830 = vpop.f32.mrf.mxu0
      %v831 = vpop.f32.mrf.mxu0
      %v832 = vadd.f32 %v371, %v831
      %v833 = vpop.f32.mrf.mxu0
      %834 = vmatprep.mubr.bf16.mxu0 %v546
      %835 = vmatmul.mubr.bf16.gmra.mxu0 %v545
      %v836 = vpop.f32.mrf.mxu0
      %v837 = vadd.f32 %v371, %v836
      %v838 = vpop.f32.mrf.mxu0
      %v839 = vpop.f32.mrf.mxu0
      %v840 = vadd.f32 %v371, %v839
      %v841 = vpop.f32.mrf.mxu0
      %842 = vmatprep.mubr.bf16.mxu0 %v549
      %843 = vmatmul.mubr.bf16.gmra.mxu0 %v548
      %v844 = vpop.f32.mrf.mxu0
      %v845 = vadd.f32 %v371, %v844
      %v846 = vpop.f32.mrf.mxu0
      %v847 = vpop.f32.mrf.mxu0
      %v848 = vadd.f32 %v371, %v847
      %v849 = vpop.f32.mrf.mxu0
      %850 = vmatprep.mubr.bf16.mxu0 %v552
      %851 = vmatmul.mubr.bf16.gmra.mxu0 %v551
      %v852 = vpop.f32.mrf.mxu0
      %v853 = vadd.f32 %v371, %v852
      %v854 = vpop.f32.mrf.mxu0
      %v855 = vpop.f32.mrf.mxu0
      %v856 = vadd.f32 %v371, %v855
      %v857 = vpop.f32.mrf.mxu0
      %858 = vmatprep.mubr.bf16.mxu0 %v555
      %859 = vmatmul.mubr.bf16.gmra.mxu0 %v554
      %v860 = vpop.f32.mrf.mxu0
      %v861 = vadd.f32 %v371, %v860
      %v862 = vpop.f32.mrf.mxu0
      %v863 = vpop.f32.mrf.mxu0
      %v864 = vadd.f32 %v371, %v863
      %v865 = vpop.f32.mrf.mxu0
      %866 = vmatprep.mubr.bf16.mxu0 %v558
      %867 = vmatmul.mubr.bf16.gmra.mxu0 %v557
      %v868 = vpop.f32.mrf.mxu0
      %v869 = vadd.f32 %v371, %v868
      %v870 = vpop.f32.mrf.mxu0
      %v871 = vpop.f32.mrf.mxu0
      %v872 = vadd.f32 %v371, %v871
      %v873 = vpop.f32.mrf.mxu0
      %874 = vmatprep.mubr.bf16.mxu0 %v561
      %875 = vmatmul.mubr.bf16.gmra.mxu0 %v560
      %v876 = vpop.f32.mrf.mxu0
      %v877 = vadd.f32 %v371, %v876
      %v878 = vpop.f32.mrf.mxu0
      %v879 = vpop.f32.mrf.mxu0
      %v880 = vadd.f32 %v371, %v879
      %v881 = vpop.f32.mrf.mxu0
      %882 = vmatprep.mubr.bf16.mxu0 %v564
      %883 = vmatmul.mubr.bf16.gmra.mxu0 %v563
      %v884 = vpop.f32.mrf.mxu0
      %v885 = vadd.f32 %v371, %v884
      %v886 = vpop.f32.mrf.mxu0
      %v887 = vpop.f32.mrf.mxu0
      %v888 = vadd.f32 %v371, %v887
      %v889 = vpop.f32.mrf.mxu0
      %890 = vmatprep.mubr.bf16.mxu0 %v567
      %891 = vmatmul.mubr.bf16.gmra.mxu0 %v566
      %v892 = vpop.f32.mrf.mxu0
      %v893 = vadd.f32 %v371, %v892
      %v894 = vpop.f32.mrf.mxu0
      %v895 = vpop.f32.mrf.mxu0
      %v896 = vadd.f32 %v371, %v895
      %v897 = vpop.f32.mrf.mxu0
      %898 = vmatprep.mubr.bf16.mxu0 %v570
      %899 = vmatmul.mubr.bf16.gmra.mxu0 %v569
      %v900 = vpop.f32.mrf.mxu0
      %v901 = vadd.f32 %v371, %v900
      %v902 = vpop.f32.mrf.mxu0
      %v903 = vpop.f32.mrf.mxu0
      %v904 = vadd.f32 %v371, %v903
      %v905 = vpop.f32.mrf.mxu0
      %906 = vmatprep.mubr.bf16.mxu0 %v573
      %907 = vmatmul.mubr.bf16.gmra.mxu0 %v572
      %v908 = vpop.f32.mrf.mxu0
      %v909 = vadd.f32 %v371, %v908
      %v910 = vpop.f32.mrf.mxu0
      %v911 = vpop.f32.mrf.mxu0
      %v912 = vadd.f32 %v371, %v911
      %v913 = vpop.f32.mrf.mxu0
      %914 = vmatprep.mubr.bf16.mxu0 %v576
      %915 = vmatmul.mubr.bf16.gmra.mxu0 %v575
      %v916 = vpop.f32.mrf.mxu0
      %v917 = vadd.f32 %v371, %v916
      %v918 = vpop.f32.mrf.mxu0
      %v919 = vpop.f32.mrf.mxu0
      %v920 = vadd.f32 %v371, %v919
      %v921 = vpop.f32.mrf.mxu0
      %922 = vmatprep.mubr.bf16.mxu0 %v579
      %923 = vmatmul.mubr.bf16.gmra.mxu0 %v578
      %v924 = vpop.f32.mrf.mxu0
      %v925 = vadd.f32 %v371, %v924
      %v926 = vpop.f32.mrf.mxu0
      %v927 = vpop.f32.mrf.mxu0
      %v928 = vadd.f32 %v371, %v927
      %v929 = vpop.f32.mrf.mxu0
      %930 = vdwg.mxu0
      %931 = vmatprep.subr.bf16.mxu0 0
      %932 = vmatpush1.bf16.msra.mxu0 0
      %933 = vmatprep.subr.bf16.mxu0 0
      %934 = vmatpush1.bf16.msra.mxu0 0
      %935 = vmatprep.subr.bf16.mxu0 0
      %936 = vmatpush1.bf16.msra.mxu0 0
      %937 = vmatprep.subr.bf16.mxu0 0
      %938 = vmatpush1.bf16.msra.mxu0 0
      %939 = vmatprep.subr.bf16.mxu0 0
      %940 = vmatpush1.bf16.msra.mxu0 0
      %941 = vmatprep.subr.bf16.mxu0 0
      %942 = vmatpush1.bf16.msra.mxu0 0
      %943 = vmatprep.subr.bf16.mxu0 0
      %944 = vmatpush1.bf16.msra.mxu0 %v702
      %945 = vmatprep.subr.bf16.mxu0 0
      %946 = vmatpush1.bf16.msra.mxu0 %v701
      %947 = vmatprep.subr.bf16.mxu0 0
      %948 = vmatpush2.bf16.msra.mxu0 0
      %949 = vmatprep.subr.bf16.mxu0 0
      %950 = vmatpush2.bf16.msra.mxu0 0
      %951 = vmatprep.subr.bf16.mxu0 0
      %952 = vmatpush2.bf16.msra.mxu0 0
      %953 = vmatprep.subr.bf16.mxu0 0
      %954 = vmatpush2.bf16.msra.mxu0 0
      %955 = vmatprep.subr.bf16.mxu0 0
      %956 = vmatpush2.bf16.msra.mxu0 0
      %957 = vmatprep.subr.bf16.mxu0 0
      %958 = vmatpush2.bf16.msra.mxu0 0
      %959 = vmatprep.subr.bf16.mxu0 0
      %960 = vmatpush2.bf16.msra.mxu0 0
      %961 = vmatprep.subr.bf16.mxu0 0
      %962 = vmatpush2.bf16.msra.mxu0 0
      %963 = vmatprep.mubr.bf16.mxu0 0
      %964 = vmatmul.mubr.bf16.gmra.mxu0 %v723
      %v965 = vpop.f32.mrf.mxu0
      %v966 = vadd.f32 %v805, %v965
      %v967 = vpop.f32.mrf.mxu0
      %v968 = vpop.f32.mrf.mxu0
      %v969 = vadd.f32 %v808, %v968
      %v970 = vpop.f32.mrf.mxu0
      %971 = vmatprep.mubr.bf16.mxu0 0
      %972 = vmatmul.mubr.bf16.gmra.mxu0 %v726
      %v973 = vpop.f32.mrf.mxu0
      %v974 = vadd.f32 %v813, %v973
      %v975 = vpop.f32.mrf.mxu0
      %v976 = vpop.f32.mrf.mxu0
      %v977 = vadd.f32 %v816, %v976
      %v978 = vpop.f32.mrf.mxu0
      %979 = vmatprep.mubr.bf16.mxu0 0
      %980 = vmatmul.mubr.bf16.gmra.mxu0 %v729
      %v981 = vpop.f32.mrf.mxu0
      %v982 = vadd.f32 %v821, %v981
      %v983 = vpop.f32.mrf.mxu0
      %v984 = vpop.f32.mrf.mxu0
      %v985 = vadd.f32 %v824, %v984
      %v986 = vpop.f32.mrf.mxu0
      %987 = vmatprep.mubr.bf16.mxu0 0
      %988 = vmatmul.mubr.bf16.gmra.mxu0 %v732
      %v989 = vpop.f32.mrf.mxu0
      %v990 = vadd.f32 %v829, %v989
      %v991 = vpop.f32.mrf.mxu0
      %v992 = vpop.f32.mrf.mxu0
      %v993 = vadd.f32 %v832, %v992
      %v994 = vpop.f32.mrf.mxu0
      %995 = vmatprep.mubr.bf16.mxu0 0
      %996 = vmatmul.mubr.bf16.gmra.mxu0 %v735
      %v997 = vpop.f32.mrf.mxu0
      %v998 = vadd.f32 %v837, %v997
      %v999 = vpop.f32.mrf.mxu0
      %v1000 = vpop.f32.mrf.mxu0
      %v1001 = vadd.f32 %v840, %v1000
      %v1002 = vpop.f32.mrf.mxu0
      %1003 = vmatprep.mubr.bf16.mxu0 0
      %1004 = vmatmul.mubr.bf16.gmra.mxu0 %v738
      %v1005 = vpop.f32.mrf.mxu0
      %v1006 = vadd.f32 %v845, %v1005
      %v1007 = vpop.f32.mrf.mxu0
      %v1008 = vpop.f32.mrf.mxu0
      %v1009 = vadd.f32 %v848, %v1008
      %v1010 = vpop.f32.mrf.mxu0
      %1011 = vmatprep.mubr.bf16.mxu0 0
      %1012 = vmatmul.mubr.bf16.gmra.mxu0 %v741
      %v1013 = vpop.f32.mrf.mxu0
      %v1014 = vadd.f32 %v853, %v1013
      %v1015 = vpop.f32.mrf.mxu0
      %v1016 = vpop.f32.mrf.mxu0
      %v1017 = vadd.f32 %v856, %v1016
      %v1018 = vpop.f32.mrf.mxu0
      %1019 = vmatprep.mubr.bf16.mxu0 0
      %1020 = vmatmul.mubr.bf16.gmra.mxu0 %v744
      %v1021 = vpop.f32.mrf.mxu0
      %v1022 = vadd.f32 %v861, %v1021
      %v1023 = vpop.f32.mrf.mxu0
      %v1024 = vpop.f32.mrf.mxu0
      %v1025 = vadd.f32 %v864, %v1024
      %v1026 = vpop.f32.mrf.mxu0
      %1027 = vmatprep.mubr.bf16.mxu0 0
      %1028 = vmatmul.mubr.bf16.gmra.mxu0 %v747
      %v1029 = vpop.f32.mrf.mxu0
      %v1030 = vadd.f32 %v869, %v1029
      %v1031 = vpop.f32.mrf.mxu0
      %v1032 = vpop.f32.mrf.mxu0
      %v1033 = vadd.f32 %v872, %v1032
      %v1034 = vpop.f32.mrf.mxu0
      %1035 = vmatprep.mubr.bf16.mxu0 0
      %1036 = vmatmul.mubr.bf16.gmra.mxu0 %v750
      %v1037 = vpop.f32.mrf.mxu0
      %v1038 = vadd.f32 %v877, %v1037
      %v1039 = vpop.f32.mrf.mxu0
      %v1040 = vpop.f32.mrf.mxu0
      %v1041 = vadd.f32 %v880, %v1040
      %v1042 = vpop.f32.mrf.mxu0
      %1043 = vmatprep.mubr.bf16.mxu0 0
      %1044 = vmatmul.mubr.bf16.gmra.mxu0 %v753
      %v1045 = vpop.f32.mrf.mxu0
      %v1046 = vadd.f32 %v885, %v1045
      %v1047 = vpop.f32.mrf.mxu0
      %v1048 = vpop.f32.mrf.mxu0
      %v1049 = vadd.f32 %v888, %v1048
      %v1050 = vpop.f32.mrf.mxu0
      %1051 = vmatprep.mubr.bf16.mxu0 0
      %1052 = vmatmul.mubr.bf16.gmra.mxu0 %v756
      %v1053 = vpop.f32.mrf.mxu0
      %v1054 = vadd.f32 %v893, %v1053
      %v1055 = vpop.f32.mrf.mxu0
      %v1056 = vpop.f32.mrf.mxu0
      %v1057 = vadd.f32 %v896, %v1056
      %v1058 = vpop.f32.mrf.mxu0
      %1059 = vmatprep.mubr.bf16.mxu0 0
      %1060 = vmatmul.mubr.bf16.gmra.mxu0 %v759
      %v1061 = vpop.f32.mrf.mxu0
      %v1062 = vadd.f32 %v901, %v1061
      %v1063 = vpop.f32.mrf.mxu0
      %v1064 = vpop.f32.mrf.mxu0
      %v1065 = vadd.f32 %v904, %v1064
      %v1066 = vpop.f32.mrf.mxu0
      %1067 = vmatprep.mubr.bf16.mxu0 0
      %1068 = vmatmul.mubr.bf16.gmra.mxu0 %v762
      %v1069 = vpop.f32.mrf.mxu0
      %v1070 = vadd.f32 %v909, %v1069
      %v1071 = vpop.f32.mrf.mxu0
      %v1072 = vpop.f32.mrf.mxu0
      %v1073 = vadd.f32 %v912, %v1072
      %v1074 = vpop.f32.mrf.mxu0
      %1075 = vmatprep.mubr.bf16.mxu0 0
      %1076 = vmatmul.mubr.bf16.gmra.mxu0 %v765
      %v1077 = vpop.f32.mrf.mxu0
      %v1078 = vadd.f32 %v917, %v1077
      %v1079 = vpop.f32.mrf.mxu0
      %v1080 = vpop.f32.mrf.mxu0
      %v1081 = vadd.f32 %v920, %v1080
      %v1082 = vpop.f32.mrf.mxu0
      %1083 = vmatprep.mubr.bf16.mxu0 0
      %1084 = vmatmul.mubr.bf16.gmra.mxu0 %v768
      %v1085 = vpop.f32.mrf.mxu0
      %v1086 = vadd.f32 %v925, %v1085
      %v1087 = vpop.f32.mrf.mxu0
      %v1088 = vpop.f32.mrf.mxu0
      %v1089 = vadd.f32 %v928, %v1088
      %v1090 = vpop.f32.mrf.mxu0
      %1091 = vdwg.mxu0
      %v1092 = vpack.c.bf16 %v969, %v966
      %v1093 = vpack.c.bf16 %v977, %v974
      %v1094 = vpack.c.bf16 %v985, %v982
      %v1095 = vpack.c.bf16 %v993, %v990
      %v1096 = vpack.c.bf16 %v1001, %v998
      %v1097 = vpack.c.bf16 %v1009, %v1006
      %v1098 = vpack.c.bf16 %v1017, %v1014
      %v1099 = vpack.c.bf16 %v1025, %v1022
      %v1100 = vpack.c.bf16 %v1033, %v1030
      %v1101 = vpack.c.bf16 %v1041, %v1038
      %v1102 = vpack.c.bf16 %v1049, %v1046
      %v1103 = vpack.c.bf16 %v1057, %v1054
      %v1104 = vpack.c.bf16 %v1065, %v1062
      %v1105 = vpack.c.bf16 %v1073, %v1070
      %v1106 = vpack.c.bf16 %v1081, %v1078
      %v1107 = vpack.c.bf16 %v1089, %v1086
      %v1124 = vunpack.c.l.b16 %v1092
      %v1125 = vunpack.c.h.b16 %v1092
      %v1126 = vunpack.c.l.b16 %v1093
      %v1127 = vunpack.c.h.b16 %v1093
      %v1128 = vunpack.c.l.b16 %v1094
      %v1129 = vunpack.c.h.b16 %v1094
      %v1130 = vunpack.c.l.b16 %v1095
      %v1131 = vunpack.c.h.b16 %v1095
      %v1132 = vunpack.c.l.b16 %v1096
      %v1133 = vunpack.c.h.b16 %v1096
      %v1134 = vunpack.c.l.b16 %v1097
      %v1135 = vunpack.c.h.b16 %v1097
      %v1136 = vunpack.c.l.b16 %v1098
      %v1137 = vunpack.c.h.b16 %v1098
      %v1138 = vunpack.c.l.b16 %v1099
      %v1139 = vunpack.c.h.b16 %v1099
      %v1140 = vunpack.c.l.b16 %v1100
      %v1141 = vunpack.c.h.b16 %v1100
      %v1142 = vunpack.c.l.b16 %v1101
      %v1143 = vunpack.c.h.b16 %v1101
      %v1144 = vunpack.c.l.b16 %v1102
      %v1145 = vunpack.c.h.b16 %v1102
      %v1146 = vunpack.c.l.b16 %v1103
      %v1147 = vunpack.c.h.b16 %v1103
      %v1148 = vunpack.c.l.b16 %v1104
      %v1149 = vunpack.c.h.b16 %v1104
      %v1150 = vunpack.c.l.b16 %v1105
      %v1151 = vunpack.c.h.b16 %v1105
      %v1152 = vunpack.c.l.b16 %v1106
      %v1153 = vunpack.c.h.b16 %v1106
      %v1154 = vunpack.c.l.b16 %v1107
      %v1155 = vunpack.c.h.b16 %v1107
      %v1156 = vpack.c.b16 %v1124, %v1124
      %v1157 = vpack.c.b16 %v1125, %v1125
      %v1158 = vpack.c.b16 %v1126, %v1126
      %v1159 = vpack.c.b16 %v1127, %v1127
      %v1160 = vpack.c.b16 %v1128, %v1128
      %v1161 = vpack.c.b16 %v1129, %v1129
      %v1162 = vpack.c.b16 %v1130, %v1130
      %v1163 = vpack.c.b16 %v1131, %v1131
      %v1164 = vpack.c.b16 %v1132, %v1132
      %v1165 = vpack.c.b16 %v1133, %v1133
      %v1166 = vpack.c.b16 %v1134, %v1134
      %v1167 = vpack.c.b16 %v1135, %v1135
      %v1168 = vpack.c.b16 %v1136, %v1136
      %v1169 = vpack.c.b16 %v1137, %v1137
      %v1170 = vpack.c.b16 %v1138, %v1138
      %v1171 = vpack.c.b16 %v1139, %v1139
      %v1172 = vpack.c.b16 %v1140, %v1140
      %v1173 = vpack.c.b16 %v1141, %v1141
      %v1174 = vpack.c.b16 %v1142, %v1142
      %v1175 = vpack.c.b16 %v1143, %v1143
      %v1176 = vpack.c.b16 %v1144, %v1144
      %v1177 = vpack.c.b16 %v1145, %v1145
      %v1178 = vpack.c.b16 %v1146, %v1146
      %v1179 = vpack.c.b16 %v1147, %v1147
      %v1180 = vpack.c.b16 %v1148, %v1148
      %v1181 = vpack.c.b16 %v1149, %v1149
      %v1182 = vpack.c.b16 %v1150, %v1150
      %v1183 = vpack.c.b16 %v1151, %v1151
      %v1184 = vpack.c.b16 %v1152, %v1152
      %v1185 = vpack.c.b16 %v1153, %v1153
      %v1186 = vpack.c.b16 %v1154, %v1154
      %v1187 = vpack.c.b16 %v1155, %v1155
      %vm1220 = vcmask 257024
      %1221 = vst.msk [vmem:[%s259] sm:$0xf] %vm1220, %v1156
      %1222 = vst.msk [vmem:[%s259 + $0x4] sm:$0xf] %vm1220, %v1157
      %1223 = vst.msk [vmem:[%s259 + $0x8] sm:$0xf] %vm1220, %v1158
      %1224 = vst.msk [vmem:[%s259 + $0xc] sm:$0xf] %vm1220, %v1159
      %1225 = vst.msk [vmem:[%s259 + $0x10] sm:$0xf] %vm1220, %v1160
      %1226 = vst.msk [vmem:[%s259 + $0x14] sm:$0xf] %vm1220, %v1161
      %1227 = vst.msk [vmem:[%s259 + $0x18] sm:$0xf] %vm1220, %v1162
      %1228 = vst.msk [vmem:[%s259 + $0x1c] sm:$0xf] %vm1220, %v1163
      %1229 = vst.msk [vmem:[%s259 + $0x20] sm:$0xf] %vm1220, %v1164
      %1230 = vst.msk [vmem:[%s259 + $0x24] sm:$0xf] %vm1220, %v1165
      %1231 = vst.msk [vmem:[%s259 + $0x28] sm:$0xf] %vm1220, %v1166
      %1232 = vst.msk [vmem:[%s259 + $0x2c] sm:$0xf] %vm1220, %v1167
      %1233 = vst.msk [vmem:[%s259 + $0x30] sm:$0xf] %vm1220, %v1168
      %1234 = vst.msk [vmem:[%s259 + $0x34] sm:$0xf] %vm1220, %v1169
      %1235 = vst.msk [vmem:[%s259 + $0x38] sm:$0xf] %vm1220, %v1170
      %1236 = vst.msk [vmem:[%s259 + $0x3c] sm:$0xf] %vm1220, %v1171
      %1237 = vst.msk [vmem:[%s259 + $0x40] sm:$0xf] %vm1220, %v1172
      %1238 = vst.msk [vmem:[%s259 + $0x44] sm:$0xf] %vm1220, %v1173
      %1239 = vst.msk [vmem:[%s259 + $0x48] sm:$0xf] %vm1220, %v1174
      %1240 = vst.msk [vmem:[%s259 + $0x4c] sm:$0xf] %vm1220, %v1175
      %1241 = vst.msk [vmem:[%s259 + $0x50] sm:$0xf] %vm1220, %v1176
      %1242 = vst.msk [vmem:[%s259 + $0x54] sm:$0xf] %vm1220, %v1177
      %1243 = vst.msk [vmem:[%s259 + $0x58] sm:$0xf] %vm1220, %v1178
      %1244 = vst.msk [vmem:[%s259 + $0x5c] sm:$0xf] %vm1220, %v1179
      %1245 = vst.msk [vmem:[%s259 + $0x60] sm:$0xf] %vm1220, %v1180
      %1246 = vst.msk [vmem:[%s259 + $0x64] sm:$0xf] %vm1220, %v1181
      %1247 = vst.msk [vmem:[%s259 + $0x68] sm:$0xf] %vm1220, %v1182
      %1248 = vst.msk [vmem:[%s259 + $0x6c] sm:$0xf] %vm1220, %v1183
      %1249 = vst.msk [vmem:[%s259 + $0x70] sm:$0xf] %vm1220, %v1184
      %1250 = vst.msk [vmem:[%s259 + $0x74] sm:$0xf] %vm1220, %v1185
      %1251 = vst.msk [vmem:[%s259 + $0x78] sm:$0xf] %vm1220, %v1186
      %1252 = vst.msk [vmem:[%s259 + $0x7c] sm:$0xf] %vm1220, %v1187
      %v1253 = vsel %vm721, %v966, 0.0
      %v1254 = vsel %vm721, %v969, 0.0
      %v1255 = vadd.f32 %v1253, %v1254
      %v1256 = vsel %vm721, %v974, 0.0
      %v1257 = vadd.f32 %v1255, %v1256
      %v1258 = vsel %vm721, %v977, 0.0
      %v1259 = vadd.f32 %v1257, %v1258
      %v1260 = vsel %vm721, %v982, 0.0
      %v1261 = vadd.f32 %v1259, %v1260
      %v1262 = vsel %vm721, %v985, 0.0
      %v1263 = vadd.f32 %v1261, %v1262
      %v1264 = vsel %vm721, %v990, 0.0
      %v1265 = vadd.f32 %v1263, %v1264
      %v1266 = vsel %vm721, %v993, 0.0
      %v1267 = vadd.f32 %v1265, %v1266
      %v1268 = vsel %vm721, %v998, 0.0
      %v1269 = vadd.f32 %v1267, %v1268
      %v1270 = vsel %vm721, %v1001, 0.0
      %v1271 = vadd.f32 %v1269, %v1270
      %v1272 = vsel %vm721, %v1006, 0.0
      %v1273 = vadd.f32 %v1271, %v1272
      %v1274 = vsel %vm721, %v1009, 0.0
      %v1275 = vadd.f32 %v1273, %v1274
      %v1276 = vsel %vm721, %v1014, 0.0
      %v1277 = vadd.f32 %v1275, %v1276
      %v1278 = vsel %vm721, %v1017, 0.0
      %v1279 = vadd.f32 %v1277, %v1278
      %v1280 = vsel %vm721, %v1022, 0.0
      %v1281 = vadd.f32 %v1279, %v1280
      %v1282 = vsel %vm721, %v1025, 0.0
      %v1283 = vadd.f32 %v1281, %v1282
      %v1284 = vsel %vm721, %v1030, 0.0
      %v1285 = vadd.f32 %v1283, %v1284
      %v1286 = vsel %vm721, %v1033, 0.0
      %v1287 = vadd.f32 %v1285, %v1286
      %v1288 = vsel %vm721, %v1038, 0.0
      %v1289 = vadd.f32 %v1287, %v1288
      %v1290 = vsel %vm721, %v1041, 0.0
      %v1291 = vadd.f32 %v1289, %v1290
      %v1292 = vsel %vm721, %v1046, 0.0
      %v1293 = vadd.f32 %v1291, %v1292
      %v1294 = vsel %vm721, %v1049, 0.0
      %v1295 = vadd.f32 %v1293, %v1294
      %v1296 = vsel %vm721, %v1054, 0.0
      %v1297 = vadd.f32 %v1295, %v1296
      %v1298 = vsel %vm721, %v1057, 0.0
      %v1299 = vadd.f32 %v1297, %v1298
      %v1300 = vsel %vm721, %v1062, 0.0
      %v1301 = vadd.f32 %v1299, %v1300
      %v1302 = vsel %vm721, %v1065, 0.0
      %v1303 = vadd.f32 %v1301, %v1302
      %v1304 = vsel %vm721, %v1070, 0.0
      %v1305 = vadd.f32 %v1303, %v1304
      %v1306 = vsel %vm721, %v1073, 0.0
      %v1307 = vadd.f32 %v1305, %v1306
      %v1308 = vsel %vm721, %v1078, 0.0
      %v1309 = vadd.f32 %v1307, %v1308
      %v1310 = vsel %vm721, %v1081, 0.0
      %v1311 = vadd.f32 %v1309, %v1310
      %v1312 = vsel %vm721, %v1086, 0.0
      %v1313 = vadd.f32 %v1311, %v1312
      %v1314 = vsel %vm721, %v1089, 0.0
      %v1315 = vadd.f32 %v1313, %v1314
      %v1316 = vrot.slane %v1315, 4
      %v1317 = vadd.f32 %v1315, %v1316
      %v1318 = vrot.slane %v1317, 2
      %v1319 = vadd.f32 %v1317, %v1318
      %v1320 = vrot.slane %v1319, 1
      %v1321 = vadd.f32 %v1319, %v1320
      %vm1322 = vcmask 253952
      %1323 = vst.msk [vmem:[%s264] sm:$0x1] %vm1322, %v1321
      %v1324 = vmul.f32 %v966, %v966
      %v1325 = vmul.f32 %v969, %v969
      %v1326 = vmul.f32 %v974, %v974
      %v1327 = vmul.f32 %v977, %v977
      %v1328 = vmul.f32 %v982, %v982
      %v1329 = vmul.f32 %v985, %v985
      %v1330 = vmul.f32 %v990, %v990
      %v1331 = vmul.f32 %v993, %v993
      %v1332 = vmul.f32 %v998, %v998
      %v1333 = vmul.f32 %v1001, %v1001
      %v1334 = vmul.f32 %v1006, %v1006
      %v1335 = vmul.f32 %v1009, %v1009
      %v1336 = vmul.f32 %v1014, %v1014
      %v1337 = vmul.f32 %v1017, %v1017
      %v1338 = vmul.f32 %v1022, %v1022
      %v1339 = vmul.f32 %v1025, %v1025
      %v1340 = vmul.f32 %v1030, %v1030
      %v1341 = vmul.f32 %v1033, %v1033
      %v1342 = vmul.f32 %v1038, %v1038
      %v1343 = vmul.f32 %v1041, %v1041
      %v1344 = vmul.f32 %v1046, %v1046
      %v1345 = vmul.f32 %v1049, %v1049
      %v1346 = vmul.f32 %v1054, %v1054
      %v1347 = vmul.f32 %v1057, %v1057
      %v1348 = vmul.f32 %v1062, %v1062
      %v1349 = vmul.f32 %v1065, %v1065
      %v1350 = vmul.f32 %v1070, %v1070
      %v1351 = vmul.f32 %v1073, %v1073
      %v1352 = vmul.f32 %v1078, %v1078
      %v1353 = vmul.f32 %v1081, %v1081
      %v1354 = vmul.f32 %v1086, %v1086
      %v1355 = vmul.f32 %v1089, %v1089
      %v1356 = vsel %vm721, %v1324, 0.0
      %v1357 = vsel %vm721, %v1325, 0.0
      %v1358 = vadd.f32 %v1356, %v1357
      %v1359 = vsel %vm721, %v1326, 0.0
      %v1360 = vadd.f32 %v1358, %v1359
      %v1361 = vsel %vm721, %v1327, 0.0
      %v1362 = vadd.f32 %v1360, %v1361
      %v1363 = vsel %vm721, %v1328, 0.0
      %v1364 = vadd.f32 %v1362, %v1363
      %v1365 = vsel %vm721, %v1329, 0.0
      %v1366 = vadd.f32 %v1364, %v1365
      %v1367 = vsel %vm721, %v1330, 0.0
      %v1368 = vadd.f32 %v1366, %v1367
      %v1369 = vsel %vm721, %v1331, 0.0
      %v1370 = vadd.f32 %v1368, %v1369
      %v1371 = vsel %vm721, %v1332, 0.0
      %v1372 = vadd.f32 %v1370, %v1371
      %v1373 = vsel %vm721, %v1333, 0.0
      %v1374 = vadd.f32 %v1372, %v1373
      %v1375 = vsel %vm721, %v1334, 0.0
      %v1376 = vadd.f32 %v1374, %v1375
      %v1377 = vsel %vm721, %v1335, 0.0
      %v1378 = vadd.f32 %v1376, %v1377
      %v1379 = vsel %vm721, %v1336, 0.0
      %v1380 = vadd.f32 %v1378, %v1379
      %v1381 = vsel %vm721, %v1337, 0.0
      %v1382 = vadd.f32 %v1380, %v1381
      %v1383 = vsel %vm721, %v1338, 0.0
      %v1384 = vadd.f32 %v1382, %v1383
      %v1385 = vsel %vm721, %v1339, 0.0
      %v1386 = vadd.f32 %v1384, %v1385
      %v1387 = vsel %vm721, %v1340, 0.0
      %v1388 = vadd.f32 %v1386, %v1387
      %v1389 = vsel %vm721, %v1341, 0.0
      %v1390 = vadd.f32 %v1388, %v1389
      %v1391 = vsel %vm721, %v1342, 0.0
      %v1392 = vadd.f32 %v1390, %v1391
      %v1393 = vsel %vm721, %v1343, 0.0
      %v1394 = vadd.f32 %v1392, %v1393
      %v1395 = vsel %vm721, %v1344, 0.0
      %v1396 = vadd.f32 %v1394, %v1395
      %v1397 = vsel %vm721, %v1345, 0.0
      %v1398 = vadd.f32 %v1396, %v1397
      %v1399 = vsel %vm721, %v1346, 0.0
      %v1400 = vadd.f32 %v1398, %v1399
      %v1401 = vsel %vm721, %v1347, 0.0
      %v1402 = vadd.f32 %v1400, %v1401
      %v1403 = vsel %vm721, %v1348, 0.0
      %v1404 = vadd.f32 %v1402, %v1403
      %v1405 = vsel %vm721, %v1349, 0.0
      %v1406 = vadd.f32 %v1404, %v1405
      %v1407 = vsel %vm721, %v1350, 0.0
      %v1408 = vadd.f32 %v1406, %v1407
      %v1409 = vsel %vm721, %v1351, 0.0
      %v1410 = vadd.f32 %v1408, %v1409
      %v1411 = vsel %vm721, %v1352, 0.0
      %v1412 = vadd.f32 %v1410, %v1411
      %v1413 = vsel %vm721, %v1353, 0.0
      %v1414 = vadd.f32 %v1412, %v1413
      %v1415 = vsel %vm721, %v1354, 0.0
      %v1416 = vadd.f32 %v1414, %v1415
      %v1417 = vsel %vm721, %v1355, 0.0
      %v1418 = vadd.f32 %v1416, %v1417
      %v1419 = vrot.slane %v1418, 4
      %v1420 = vadd.f32 %v1418, %v1419
      %v1421 = vrot.slane %v1420, 2
      %v1422 = vadd.f32 %v1420, %v1421
      %v1423 = vrot.slane %v1422, 1
      %v1424 = vadd.f32 %v1422, %v1423
      %1425 = vst.msk [vmem:[%s264 + $0x1] sm:$0x1] %vm1322, %v1424
      %s1426 = smul.u32 32, %s20
      %p1427 = scmp.lt.s32.totalorder %s1426, 63
      %s1428 = scalar_select %p1427, %s1426, 63
      %s1429 = smul.addr %s1428, 4
      %s1430 = scalar_lea.vmem %s3, %s1429
      %p1431 = scmp.lt.s32.totalorder %s20, 1
      %s1432 = scalar_select %p1431, %s20, 1
      %s1433 = smul.addr %s1432, 2
      %s1434 = scalar_lea.vmem %s4, %s1433
      // Predicated region
      $region33: #{_lambda_.11} parent=31 // pred_check
        %p1435 = pneg %p121
      $region34: #{_lambda_.11} parent=31 // pred_check_branch
        %1437 = sbr.rel (%p1435) target = $region36
      $region35: #{_lambda_.11} parent=31 // pred_region
        %s1438 = smul.u32 32, %s20
      $region36: #{_lambda_.11} parent=31 // pred_fallthru
        _
      // Predicated region
      $region37: #{_lambda_.11} parent=31 // pred_check
        %p1439 = pneg %p147
      $region38: #{_lambda_.11} parent=31 // pred_check_branch
        %1441 = sbr.rel (%p1439) target = $region40
      $region39: #{_lambda_.11} parent=31 // pred_region
        _
      $region40: #{_lambda_.11} parent=31 // pred_fallthru
        _
    $region32: #{_lambda_.11} parent=5 // pred_fallthru
      _
    %p1442 = scmp.le.s32.totalorder 2, %s11
    // Predicated region
    $region41: #{_lambda_.11} parent=5 // pred_check
      %p1443 = pneg %p1442
    $region42: #{_lambda_.11} parent=5 // pred_check_branch
      %1445 = sbr.rel (%p1443) target = $region44
    $region43: #{_lambda_.11} parent=5 // pred_region
      %s1446 = ssub.s32 %s11, 2
      // Predicated region
      $region45: #{_lambda_.11} parent=43 // pred_check
        %p1447 = pneg %p127
      $region46: #{_lambda_.11} parent=43 // pred_check_branch
        %1449 = sbr.rel (%p1447) target = $region48
      $region47: #{_lambda_.11} parent=43 // pred_region
        %s1450 = smul.u32 32, %s22
        %p1451 = scmp.lt.s32.totalorder %s1450, 63
        %s1452 = scalar_select %p1451, %s1450, 63
        %s1453 = smul.addr %s1452, 4
        %s1454 = scalar_lea.vmem %s3, %s1453
      $region48: #{_lambda_.11} parent=43 // pred_fallthru
        _
      // Predicated region
      $region49: #{_lambda_.11} parent=43 // pred_check
        %p1455 = pneg %p153
      $region50: #{_lambda_.11} parent=43 // pred_check_branch
        %1457 = sbr.rel (%p1455) target = $region52
      $region51: #{_lambda_.11} parent=43 // pred_region
        %p1458 = scmp.lt.s32.totalorder %s22, 1
        %s1459 = scalar_select %p1458, %s22, 1
        %s1460 = smul.addr %s1459, 2
        %s1461 = scalar_lea.vmem %s4, %s1460
      $region52: #{_lambda_.11} parent=43 // pred_fallthru
        _
    $region44: #{_lambda_.11} parent=5 // pred_fallthru
      _
  $region6: #{_lambda_.11} parent=0 // loop_footer
    %s15 = sadd.s32 1, %s11
  $region7: #{_lambda_.11} parent=0 // loop_footer_branch
    %10 = sbr.rel target = $region3
  $region8: #{_lambda_.11} parent=0 // loop_exit
    _

// kernel: _lambda_.12
$region0: #{_lambda_.12}
  #allocation0 [shape = 'u32[]', space=smem, size = 0x4, offset = 0x4, fixed_abs, tag = 'smem constant byte address 0x4 - core index']
  #allocation1 [shape = 'u32[144,128]{1,0:T(1,128)}', space=vmem, size = 0x12000, scoped, tag = 'internal scratch']
  %s0 = inlined_call_operand.vmem [shape: bf16[128,128], index: 0, kind: input, shape index: {}]
  %s1 = inlined_call_operand.vmem [shape: f32[2,128], index: 1, kind: input, shape index: {}]
  %s2 = inlined_call_operand.vmem [shape: bf16[128,128], index: 2, kind: output, shape index: {}]
  %s3 = sld [smem:[#allocation0]]
  $region18: #{_lambda_.12} parent=0
    _
  %s5 = ssub.s32 1, %s3
  %s6 = scalar_select 0, %s5, %s3
  // Predicated region
  $region2: #{_lambda_.12} parent=0 // pred_check
    _
  $region3: #{_lambda_.12} parent=0 // pred_check_branch
    %8 = sbr.rel (0) target = $region5
  $region4: #{_lambda_.12} parent=0 // pred_region
    _
  $region5: #{_lambda_.12} parent=0 // pred_fallthru
    _
  // Predicated region
  $region6: #{_lambda_.12} parent=0 // pred_check
    _
  $region7: #{_lambda_.12} parent=0 // pred_check_branch
    %10 = sbr.rel (0) target = $region9
  $region8: #{_lambda_.12} parent=0 // pred_region
    _
  $region9: #{_lambda_.12} parent=0 // pred_fallthru
    _
  %v11 = vld [vmem:[%s0] sm:$0xf]
  %v12 = vld [vmem:[%s0 + $0x4] sm:$0xf]
  %v13 = vld [vmem:[%s0 + $0x8] sm:$0xf]
  %v14 = vld [vmem:[%s0 + $0xc] sm:$0xf]
  %v15 = vld [vmem:[%s0 + $0x10] sm:$0xf]
  %v16 = vld [vmem:[%s0 + $0x14] sm:$0xf]
  %v17 = vld [vmem:[%s0 + $0x18] sm:$0xf]
  %v18 = vld [vmem:[%s0 + $0x1c] sm:$0xf]
  %v19 = vld [vmem:[%s0 + $0x20] sm:$0xf]
  %v20 = vld [vmem:[%s0 + $0x24] sm:$0xf]
  %v21 = vld [vmem:[%s0 + $0x28] sm:$0xf]
  %v22 = vld [vmem:[%s0 + $0x2c] sm:$0xf]
  %v23 = vld [vmem:[%s0 + $0x30] sm:$0xf]
  %v24 = vld [vmem:[%s0 + $0x34] sm:$0xf]
  %v25 = vld [vmem:[%s0 + $0x38] sm:$0xf]
  %v26 = vld [vmem:[%s0 + $0x3c] sm:$0xf]
  %v27 = vunpack.c.l.bf16 %v11
  %v28 = vunpack.c.l.bf16 %v12
  %v29 = vunpack.c.l.bf16 %v13
  %v30 = vunpack.c.l.bf16 %v14
  %v31 = vunpack.c.l.bf16 %v15
  %v32 = vunpack.c.l.bf16 %v16
  %v33 = vunpack.c.l.bf16 %v17
  %v34 = vunpack.c.l.bf16 %v18
  %v35 = vunpack.c.l.bf16 %v19
  %v36 = vunpack.c.l.bf16 %v20
  %v37 = vunpack.c.l.bf16 %v21
  %v38 = vunpack.c.l.bf16 %v22
  %v39 = vunpack.c.l.bf16 %v23
  %v40 = vunpack.c.l.bf16 %v24
  %v41 = vunpack.c.l.bf16 %v25
  %v42 = vunpack.c.l.bf16 %v26
  %v43 = vld [vmem:[%s1] sm:$0x1]
  %v44 = vlaneseq
  %v45 = vshrl.u32 %v44, 7
  %v46 = vsub.s32 0, %v45
  %v47 = vrot.slane %v43, %v46
  %v48 = vmul.f32 %v27, %v47
  %v49 = vmul.f32 %v28, %v47
  %v50 = vmul.f32 %v29, %v47
  %v51 = vmul.f32 %v30, %v47
  %v52 = vmul.f32 %v31, %v47
  %v53 = vmul.f32 %v32, %v47
  %v54 = vmul.f32 %v33, %v47
  %v55 = vmul.f32 %v34, %v47
  %v56 = vmul.f32 %v35, %v47
  %v57 = vmul.f32 %v36, %v47
  %v58 = vmul.f32 %v37, %v47
  %v59 = vmul.f32 %v38, %v47
  %v60 = vmul.f32 %v39, %v47
  %v61 = vmul.f32 %v40, %v47
  %v62 = vmul.f32 %v41, %v47
  %v63 = vmul.f32 %v42, %v47
  %v64 = vld [vmem:[%s1 + $0x1] sm:$0x1]
  %v65 = vlaneseq
  %v66 = vshrl.u32 %v65, 7
  %v67 = vsub.s32 0, %v66
  %v68 = vrot.slane %v64, %v67
  %v69 = vadd.f32 %v48, %v68
  %v70 = vadd.f32 %v49, %v68
  %v71 = vadd.f32 %v50, %v68
  %v72 = vadd.f32 %v51, %v68
  %v73 = vadd.f32 %v52, %v68
  %v74 = vadd.f32 %v53, %v68
  %v75 = vadd.f32 %v54, %v68
  %v76 = vadd.f32 %v55, %v68
  %v77 = vadd.f32 %v56, %v68
  %v78 = vadd.f32 %v57, %v68
  %v79 = vadd.f32 %v58, %v68
  %v80 = vadd.f32 %v59, %v68
  %v81 = vadd.f32 %v60, %v68
  %v82 = vadd.f32 %v61, %v68
  %v83 = vadd.f32 %v62, %v68
  %v84 = vadd.f32 %v63, %v68
  %v85 = vpack.c.bf16 %v70, %v69
  %v86 = vpack.c.bf16 %v72, %v71
  %v87 = vpack.c.bf16 %v74, %v73
  %v88 = vpack.c.bf16 %v76, %v75
  %v89 = vpack.c.bf16 %v78, %v77
  %v90 = vpack.c.bf16 %v80, %v79
  %v91 = vpack.c.bf16 %v82, %v81
  %v92 = vpack.c.bf16 %v84, %v83
  %v101 = vunpack.c.l.b16 %v85
  %v102 = vunpack.c.h.b16 %v85
  %v103 = vunpack.c.l.b16 %v86
  %v104 = vunpack.c.h.b16 %v86
  %v105 = vunpack.c.l.b16 %v87
  %v106 = vunpack.c.h.b16 %v87
  %v107 = vunpack.c.l.b16 %v88
  %v108 = vunpack.c.h.b16 %v88
  %v109 = vunpack.c.l.b16 %v89
  %v110 = vunpack.c.h.b16 %v89
  %v111 = vunpack.c.l.b16 %v90
  %v112 = vunpack.c.h.b16 %v90
  %v113 = vunpack.c.l.b16 %v91
  %v114 = vunpack.c.h.b16 %v91
  %v115 = vunpack.c.l.b16 %v92
  %v116 = vunpack.c.h.b16 %v92
  %v117 = vpack.c.b16 %v101, %v101
  %v118 = vpack.c.b16 %v102, %v102
  %v119 = vpack.c.b16 %v103, %v103
  %v120 = vpack.c.b16 %v104, %v104
  %v121 = vpack.c.b16 %v105, %v105
  %v122 = vpack.c.b16 %v106, %v106
  %v123 = vpack.c.b16 %v107, %v107
  %v124 = vpack.c.b16 %v108, %v108
  %v125 = vpack.c.b16 %v109, %v109
  %v126 = vpack.c.b16 %v110, %v110
  %v127 = vpack.c.b16 %v111, %v111
  %v128 = vpack.c.b16 %v112, %v112
  %v129 = vpack.c.b16 %v113, %v113
  %v130 = vpack.c.b16 %v114, %v114
  %v131 = vpack.c.b16 %v115, %v115
  %v132 = vpack.c.b16 %v116, %v116
  %149 = vst [vmem:[%s2] sm:$0xf] %v117
  %150 = vst [vmem:[%s2 + $0x4] sm:$0xf] %v118
  %151 = vst [vmem:[%s2 + $0x8] sm:$0xf] %v119
  %152 = vst [vmem:[%s2 + $0xc] sm:$0xf] %v120
  %153 = vst [vmem:[%s2 + $0x10] sm:$0xf] %v121
  %154 = vst [vmem:[%s2 + $0x14] sm:$0xf] %v122
  %155 = vst [vmem:[%s2 + $0x18] sm:$0xf] %v123
  %156 = vst [vmem:[%s2 + $0x1c] sm:$0xf] %v124
  %157 = vst [vmem:[%s2 + $0x20] sm:$0xf] %v125
  %158 = vst [vmem:[%s2 + $0x24] sm:$0xf] %v126
  %159 = vst [vmem:[%s2 + $0x28] sm:$0xf] %v127
  %160 = vst [vmem:[%s2 + $0x2c] sm:$0xf] %v128
  %161 = vst [vmem:[%s2 + $0x30] sm:$0xf] %v129
  %162 = vst [vmem:[%s2 + $0x34] sm:$0xf] %v130
  %163 = vst [vmem:[%s2 + $0x38] sm:$0xf] %v131
  %164 = vst [vmem:[%s2 + $0x3c] sm:$0xf] %v132
  // Predicated region
  $region10: #{_lambda_.12} parent=0 // pred_check
    _
  $region11: #{_lambda_.12} parent=0 // pred_check_branch
    %166 = sbr.rel (0) target = $region13
  $region12: #{_lambda_.12} parent=0 // pred_region
    _
  $region13: #{_lambda_.12} parent=0 // pred_fallthru
    _
  // Predicated region
  $region14: #{_lambda_.12} parent=0 // pred_check
    _
  $region15: #{_lambda_.12} parent=0 // pred_check_branch
    %168 = sbr.rel (0) target = $region17
  $region16: #{_lambda_.12} parent=0 // pred_region
    _
  $region17: #{_lambda_.12} parent=0 // pred_fallthru
    _

// kernel: _lambda_.13
$region0: #{_lambda_.13}
  #allocation0 [shape = 'u32[]', space=smem, size = 0x4, offset = 0x4, fixed_abs, tag = 'smem constant byte address 0x4 - core index']
  #allocation1 [shape = 'u32[144,128]{1,0:T(1,128)}', space=vmem, size = 0x12000, scoped, tag = 'internal scratch']
  %s0 = inlined_call_operand.vmem [shape: bf16[2048,144], index: 0, kind: input, shape index: {}]
  %s1 = inlined_call_operand.vmem [shape: bf16[144,12], index: 1, kind: input, shape index: {}]
  %s2 = inlined_call_operand.vmem [shape: f32[1,12], index: 2, kind: input, shape index: {}]
  %s3 = inlined_call_operand.vmem [shape: bf16[2048,12], index: 3, kind: output, shape index: {}]
  %s4 = sld [smem:[#allocation0]]
  $region45: #{_lambda_.13} parent=0
    _
  %s6 = ssub.s32 1, %s4
  %s7 = scalar_select 0, %s6, %s4
  loop: start=0, step=1, limit=4
  $region2: #{_lambda_.13} parent=0 // loop_pre_header
    _
  $region3: #{_lambda_.13} parent=0 // loop_header
    %s9 = sphi 0, %s13
    %p10 = scmp.ge.s32.totalorder %s9, 4
    %s16 = sphi 0, %s28
    %s17 = sphi 0, %s24
    %s18 = sphi 0, %s16
    %s19 = sphi 0, %s17
    %s20 = sphi 0, %s18
    %s21 = sphi 0, %s19
    %s33 = sphi 0, %s35
    %s36 = sphi 0, %s33
    %s37 = sphi 0, %s36
    %s53 = sphi 0, %s37
    %s59 = sphi 0, %s61
    %s62 = sphi 0, %s59
    %s63 = sphi 0, %s62
    %s79 = sphi 0, %s63
    %s83 = sphi 0, %s83
    %s85 = sphi 0, %s83
    %s86 = sphi 0, %s85
    %s100 = sphi 0, %s86
    %s106 = sphi 0, %s108
    %s109 = sphi 0, %s106
    %s110 = sphi 0, %s109
    %s126 = sphi 0, %s110
  $region4: #{_lambda_.13} parent=0 // loop_header_branch
    %12 = sbr.rel (%p10) target = $region8
  $region5: #{_lambda_.13} parent=0 // loop_body
    %s14 = ssub.s32 %s9, 1
    %s15 = ssub.s32 %s9, 2
    %s22 = sadd.s32 1, %s17
    %p23 = scmp.ge.s32.totalorder %s22, 1
    %s24 = scalar_select %p23, 0, %s22
    %s25 = sadd.s32 1, %s16
    %s26 = scalar_select %p23, %s25, %s16
    %p27 = scmp.ge.s32.totalorder %s26, 2
    %s28 = scalar_select %p27, 0, %s26
    %s29 = ssub.s32 %s16, %s28
    %s30 = ssub.s32 %s17, %s24
    %s31 = sor.u32 %s29, %s30
    %p32 = scmp.eq.s32.totalorder %s31, 0
    %s34 = sadd.s32 %s33, 1
    %s35 = scalar_select %p32, %s33, %s34
    %p38 = pneg %p32
    %p39 = scmp.eq.s32.totalorder %s9, 1
    %p40 = por %p38, %p39
    %p41 = scmp.ne.s32.totalorder %s33, %s36
    %p42 = scmp.eq.s32.totalorder %s9, 0
    %p43 = por %p41, %p42
    %p44 = scmp.ne.s32.totalorder %s33, %s36
    %p45 = scmp.eq.s32.totalorder %s14, 1
    %p46 = por %p44, %p45
    %p47 = scmp.ne.s32.totalorder %s36, %s37
    %p48 = scmp.eq.s32.totalorder %s14, 0
    %p49 = por %p47, %p48
    %p50 = scmp.ne.s32.totalorder %s36, %s37
    %p51 = scmp.eq.s32.totalorder %s15, 1
    %p52 = por %p50, %p51
    %p54 = scmp.ne.s32.totalorder %s37, %s53
    %p55 = scmp.eq.s32.totalorder %s15, 0
    %p56 = por %p54, %p55
    %s57 = ssub.s32 %s17, %s24
    %p58 = scmp.eq.s32.totalorder %s57, 0
    %s60 = sadd.s32 %s59, 1
    %s61 = scalar_select %p58, %s59, %s60
    %p64 = pneg %p58
    %p65 = scmp.eq.s32.totalorder %s9, 1
    %p66 = por %p64, %p65
    %p67 = scmp.ne.s32.totalorder %s59, %s62
    %p68 = scmp.eq.s32.totalorder %s9, 0
    %p69 = por %p67, %p68
    %p70 = scmp.ne.s32.totalorder %s59, %s62
    %p71 = scmp.eq.s32.totalorder %s14, 1
    %p72 = por %p70, %p71
    %p73 = scmp.ne.s32.totalorder %s62, %s63
    %p74 = scmp.eq.s32.totalorder %s14, 0
    %p75 = por %p73, %p74
    %p76 = scmp.ne.s32.totalorder %s62, %s63
    %p77 = scmp.eq.s32.totalorder %s15, 1
    %p78 = por %p76, %p77
    %p80 = scmp.ne.s32.totalorder %s63, %s79
    %p81 = scmp.eq.s32.totalorder %s15, 0
    %p82 = por %p80, %p81
    %s84 = sadd.s32 %s83, 1
    %p87 = scmp.eq.s32.totalorder %s9, 1
    %p88 = scmp.ne.s32.totalorder %s83, %s85
    %p89 = scmp.eq.s32.totalorder %s9, 0
    %p90 = por %p88, %p89
    %p91 = scmp.ne.s32.totalorder %s83, %s85
    %p92 = scmp.eq.s32.totalorder %s14, 1
    %p93 = por %p91, %p92
    %p94 = scmp.ne.s32.totalorder %s85, %s86
    %p95 = scmp.eq.s32.totalorder %s14, 0
    %p96 = por %p94, %p95
    %p97 = scmp.ne.s32.totalorder %s85, %s86
    %p98 = scmp.eq.s32.totalorder %s15, 1
    %p99 = por %p97, %p98
    %p101 = scmp.ne.s32.totalorder %s86, %s100
    %p102 = scmp.eq.s32.totalorder %s15, 0
    %p103 = por %p101, %p102
    %s104 = ssub.s32 %s16, %s28
    %p105 = scmp.eq.s32.totalorder %s104, 0
    %s107 = sadd.s32 %s106, 1
    %s108 = scalar_select %p105, %s106, %s107
    %p111 = pneg %p105
    %p112 = scmp.eq.s32.totalorder %s9, 1
    %p113 = por %p111, %p112
    %p114 = scmp.ne.s32.totalorder %s106, %s109
    %p115 = scmp.eq.s32.totalorder %s9, 0
    %p116 = por %p114, %p115
    %p117 = scmp.ne.s32.totalorder %s106, %s109
    %p118 = scmp.eq.s32.totalorder %s14, 1
    %p119 = por %p117, %p118
    %p120 = scmp.ne.s32.totalorder %s109, %s110
    %p121 = scmp.eq.s32.totalorder %s14, 0
    %p122 = por %p120, %p121
    %p123 = scmp.ne.s32.totalorder %s109, %s110
    %p124 = scmp.eq.s32.totalorder %s15, 1
    %p125 = por %p123, %p124
    %p127 = scmp.ne.s32.totalorder %s110, %s126
    %p128 = scmp.eq.s32.totalorder %s15, 0
    %p129 = por %p127, %p128
    %p130 = scmp.le.s32.totalorder 1, %s9
    %p131 = scmp.lt.s32.totalorder %s9, 3
    %p132 = pnand %p130, %p131
    %p133 = pneg %p132
    // Predicated region
    $region9: #{_lambda_.13} parent=5 // pred_check
      _
    $region10: #{_lambda_.13} parent=5 // pred_check_branch
      %135 = sbr.rel (%p132) target = $region12
    $region11: #{_lambda_.13} parent=5 // pred_region
      %s136 = ssub.s32 %s9, 1
      // Predicated region
      $region13: #{_lambda_.13} parent=11 // pred_check
        %p137 = pneg %p75
      $region14: #{_lambda_.13} parent=11 // pred_check_branch
        %139 = sbr.rel (%p137) target = $region16
      $region15: #{_lambda_.13} parent=11 // pred_region
        %s140 = smul.u32 18, %s19
        %p141 = scmp.lt.s32.totalorder %s140, 17
        %s142 = scalar_select %p141, %s140, 17
        %s143 = smul.addr %s142, 4
        %s144 = scalar_lea.vmem %s1, %s143
        %s145 = smul.u32 18, %s19
      $region16: #{_lambda_.13} parent=11 // pred_fallthru
        _
      // Predicated region
      $region17: #{_lambda_.13} parent=11 // pred_check
        %p146 = pneg %p96
      $region18: #{_lambda_.13} parent=11 // pred_check_branch
        %148 = sbr.rel (%p146) target = $region20
      $region19: #{_lambda_.13} parent=11 // pred_region
        _
      $region20: #{_lambda_.13} parent=11 // pred_fallthru
        _
    $region12: #{_lambda_.13} parent=5 // pred_fallthru
      _
    %p149 = scmp.lt.s32.totalorder %s9, 2
    // Predicated region
    $region21: #{_lambda_.13} parent=5 // pred_check
      %p150 = pneg %p149
    $region22: #{_lambda_.13} parent=5 // pred_check_branch
      %152 = sbr.rel (%p150) target = $region24
    $region23: #{_lambda_.13} parent=5 // pred_region
      // Predicated region
      $region25: #{_lambda_.13} parent=23 // pred_check
        %p153 = pneg %p43
      $region26: #{_lambda_.13} parent=23 // pred_check_branch
        %155 = sbr.rel (%p153) target = $region28
      $region27: #{_lambda_.13} parent=23 // pred_region
        %s156 = smul.u32 128, %s16
        %s157 = smul.u32 2, %s17
        %p158 = scmp.lt.s32.totalorder %s156, 255
        %s159 = scalar_select %p158, %s156, 255
        %p160 = scmp.lt.s32.totalorder %s157, 1
        %s161 = scalar_select %p160, %s157, 1
        %s162 = smul.addr %s159, 2
        %s163 = sadd.s32 %s161, %s162
        %s164 = smul.addr %s163, 4
        %s165 = scalar_lea.vmem %s0, %s164
        %s166 = smul.u32 128, %s16
        %s167 = smul.u32 2, %s17
      $region28: #{_lambda_.13} parent=23 // pred_fallthru
        _
    $region24: #{_lambda_.13} parent=5 // pred_fallthru
      _
    %p168 = scmp.le.s32.totalorder 1, %s9
    %p169 = scmp.lt.s32.totalorder %s9, 3
    %p170 = pnand %p168, %p169
    %p171 = pneg %p170
    // Predicated region
    $region29: #{_lambda_.13} parent=5 // pred_check
      _
    $region30: #{_lambda_.13} parent=5 // pred_check_branch
      %173 = sbr.rel (%p170) target = $region32
    $region31: #{_lambda_.13} parent=5 // pred_region
      %s174 = ssub.s32 %s9, 1
      %s175 = smul.u32 128, %s18
      %s176 = smul.u32 2, %s19
      %p177 = scmp.lt.s32.totalorder %s175, 255
      %s178 = scalar_select %p177, %s175, 255
      %p179 = scmp.lt.s32.totalorder %s176, 1
      %s180 = scalar_select %p179, %s176, 1
      %s181 = smul.addr %s178, 2
      %s182 = sadd.s32 %s180, %s181
      %s183 = smul.addr %s182, 4
      %s184 = scalar_lea.vmem %s0, %s183
      %p185 = pneg %p49
      %p186 = pneg %p46
      %s187 = smul.u32 18, %s19
      %p188 = scmp.lt.s32.totalorder %s187, 17
      %s189 = scalar_select %p188, %s187, 17
      %s190 = smul.addr %s189, 4
      %s191 = scalar_lea.vmem %s1, %s190
      %p192 = pneg %p75
      %p193 = pneg %p72
      %p194 = pneg %p96
      %p195 = pneg %p93
      %p196 = pneg %p122
      %p197 = pneg %p119
      %s198 = smul.u32 128, %s18
      %p199 = scmp.lt.s32.totalorder %s198, 255
      %s200 = scalar_select %p199, %s198, 255
      %s201 = smul.addr %s200, 4
      %s202 = scalar_lea.vmem %s3, %s201
      %s203 = smul.u32 128, %s18
      %s204 = smul.u32 2, %s19
      %p205 = scmp.lt.s32.totalorder %s203, 255
      %s206 = scalar_select %p205, %s203, 255
      %p207 = scmp.lt.s32.totalorder %s204, 1
      %s208 = scalar_select %p207, %s204, 1
      %s209 = smul.addr %s206, 2
      %s210 = sadd.s32 %s208, %s209
      %s211 = smul.addr %s210, 4
      %s212 = scalar_lea.vmem %s0, %s211
      %s213 = smul.u32 128, %s18
      %s214 = smul.u32 2, %s19
      %s215 = smul.u32 18, %s19
      %p216 = scmp.lt.s32.totalorder %s215, 17
      %s217 = scalar_select %p216, %s215, 17
      %s218 = smul.addr %s217, 4
      %s219 = scalar_lea.vmem %s1, %s218
      %s220 = smul.u32 18, %s19
      %s221 = smul.u32 128, %s18
      %p222 = scmp.lt.s32.totalorder %s221, 255
      %s223 = scalar_select %p222, %s221, 255
      %s224 = smul.addr %s223, 4
      %s225 = scalar_lea.vmem %s3, %s224
      %s226 = smul.u32 128, %s18
      %v228 = vld [vmem:[%s212] sm:$0xff]
      %v229 = vld [vmem:[%s212 + $0x8] sm:$0xff]
      %v230 = vld [vmem:[%s212 + $0x10] sm:$0xff]
      %v231 = vld [vmem:[%s212 + $0x18] sm:$0xff]
      %v232 = vld [vmem:[%s212 + $0x20] sm:$0xff]
      %v233 = vld [vmem:[%s212 + $0x28] sm:$0xff]
      %v234 = vld [vmem:[%s212 + $0x30] sm:$0xff]
      %v235 = vld [vmem:[%s212 + $0x38] sm:$0xff]
      %v236 = vld [vmem:[%s212 + $0x40] sm:$0xff]
      %v237 = vld [vmem:[%s212 + $0x48] sm:$0xff]
      %v238 = vld [vmem:[%s212 + $0x50] sm:$0xff]
      %v239 = vld [vmem:[%s212 + $0x58] sm:$0xff]
      %v240 = vld [vmem:[%s212 + $0x60] sm:$0xff]
      %v241 = vld [vmem:[%s212 + $0x68] sm:$0xff]
      %v242 = vld [vmem:[%s212 + $0x70] sm:$0xff]
      %v243 = vld [vmem:[%s212 + $0x78] sm:$0xff]
      %v244 = vld [vmem:[%s212 + $0x80] sm:$0xff]
      %v245 = vld [vmem:[%s212 + $0x88] sm:$0xff]
      %v246 = vld [vmem:[%s212 + $0x90] sm:$0xff]
      %v247 = vld [vmem:[%s212 + $0x98] sm:$0xff]
      %v248 = vld [vmem:[%s212 + $0xa0] sm:$0xff]
      %v249 = vld [vmem:[%s212 + $0xa8] sm:$0xff]
      %v250 = vld [vmem:[%s212 + $0xb0] sm:$0xff]
      %v251 = vld [vmem:[%s212 + $0xb8] sm:$0xff]
      %v252 = vld [vmem:[%s212 + $0xc0] sm:$0xff]
      %v253 = vld [vmem:[%s212 + $0xc8] sm:$0xff]
      %v254 = vld [vmem:[%s212 + $0xd0] sm:$0xff]
      %v255 = vld [vmem:[%s212 + $0xd8] sm:$0xff]
      %v256 = vld [vmem:[%s212 + $0xe0] sm:$0xff]
      %v257 = vld [vmem:[%s212 + $0xe8] sm:$0xff]
      %v258 = vld [vmem:[%s212 + $0xf0] sm:$0xff]
      %v259 = vld [vmem:[%s212 + $0xf8] sm:$0xff]
      %v260 = vld [vmem:[%s212 + $0x100] sm:$0xff]
      %v261 = vld [vmem:[%s212 + $0x108] sm:$0xff]
      %v262 = vld [vmem:[%s212 + $0x110] sm:$0xff]
      %v263 = vld [vmem:[%s212 + $0x118] sm:$0xff]
      %v264 = vld [vmem:[%s212 + $0x120] sm:$0xff]
      %v265 = vld [vmem:[%s212 + $0x128] sm:$0xff]
      %v266 = vld [vmem:[%s212 + $0x130] sm:$0xff]
      %v267 = vld [vmem:[%s212 + $0x138] sm:$0xff]
      %v268 = vld [vmem:[%s212 + $0x140] sm:$0xff]
      %v269 = vld [vmem:[%s212 + $0x148] sm:$0xff]
      %v270 = vld [vmem:[%s212 + $0x150] sm:$0xff]
      %v271 = vld [vmem:[%s212 + $0x158] sm:$0xff]
      %v272 = vld [vmem:[%s212 + $0x160] sm:$0xff]
      %v273 = vld [vmem:[%s212 + $0x168] sm:$0xff]
      %v274 = vld [vmem:[%s212 + $0x170] sm:$0xff]
      %v275 = vld [vmem:[%s212 + $0x178] sm:$0xff]
      %v276 = vld [vmem:[%s212 + $0x180] sm:$0xff]
      %v277 = vld [vmem:[%s212 + $0x188] sm:$0xff]
      %v278 = vld [vmem:[%s212 + $0x190] sm:$0xff]
      %v279 = vld [vmem:[%s212 + $0x198] sm:$0xff]
      %v280 = vld [vmem:[%s212 + $0x1a0] sm:$0xff]
      %v281 = vld [vmem:[%s212 + $0x1a8] sm:$0xff]
      %v282 = vld [vmem:[%s212 + $0x1b0] sm:$0xff]
      %v283 = vld [vmem:[%s212 + $0x1b8] sm:$0xff]
      %v284 = vld [vmem:[%s212 + $0x1c0] sm:$0xff]
      %v285 = vld [vmem:[%s212 + $0x1c8] sm:$0xff]
      %v286 = vld [vmem:[%s212 + $0x1d0] sm:$0xff]
      %v287 = vld [vmem:[%s212 + $0x1d8] sm:$0xff]
      %v288 = vld [vmem:[%s212 + $0x1e0] sm:$0xff]
      %v289 = vld [vmem:[%s212 + $0x1e8] sm:$0xff]
      %v290 = vld [vmem:[%s212 + $0x1f0] sm:$0xff]
      %v291 = vld [vmem:[%s212 + $0x1f8] sm:$0xff]
      %v292 = vld [vmem:[%s212 + $0x200] sm:$0xff]
      %v293 = vld [vmem:[%s212 + $0x208] sm:$0xff]
      %v294 = vld [vmem:[%s212 + $0x210] sm:$0xff]
      %v295 = vld [vmem:[%s212 + $0x218] sm:$0xff]
      %v296 = vld [vmem:[%s212 + $0x220] sm:$0xff]
      %v297 = vld [vmem:[%s212 + $0x228] sm:$0xff]
      %v298 = vld [vmem:[%s212 + $0x230] sm:$0xff]
      %v299 = vld [vmem:[%s212 + $0x238] sm:$0xff]
      %v300 = vld [vmem:[%s212 + $0x240] sm:$0xff]
      %v301 = vld [vmem:[%s212 + $0x248] sm:$0xff]
      %v302 = vld [vmem:[%s212 + $0x250] sm:$0xff]
      %v303 = vld [vmem:[%s212 + $0x258] sm:$0xff]
      %v304 = vld [vmem:[%s212 + $0x260] sm:$0xff]
      %v305 = vld [vmem:[%s212 + $0x268] sm:$0xff]
      %v306 = vld [vmem:[%s212 + $0x270] sm:$0xff]
      %v307 = vld [vmem:[%s212 + $0x278] sm:$0xff]
      %v308 = vld [vmem:[%s212 + $0x280] sm:$0xff]
      %v309 = vld [vmem:[%s212 + $0x288] sm:$0xff]
      %v310 = vld [vmem:[%s212 + $0x290] sm:$0xff]
      %v311 = vld [vmem:[%s212 + $0x298] sm:$0xff]
      %v312 = vld [vmem:[%s212 + $0x2a0] sm:$0xff]
      %v313 = vld [vmem:[%s212 + $0x2a8] sm:$0xff]
      %v314 = vld [vmem:[%s212 + $0x2b0] sm:$0xff]
      %v315 = vld [vmem:[%s212 + $0x2b8] sm:$0xff]
      %v316 = vld [vmem:[%s212 + $0x2c0] sm:$0xff]
      %v317 = vld [vmem:[%s212 + $0x2c8] sm:$0xff]
      %v318 = vld [vmem:[%s212 + $0x2d0] sm:$0xff]
      %v319 = vld [vmem:[%s212 + $0x2d8] sm:$0xff]
      %v320 = vld [vmem:[%s212 + $0x2e0] sm:$0xff]
      %v321 = vld [vmem:[%s212 + $0x2e8] sm:$0xff]
      %v322 = vld [vmem:[%s212 + $0x2f0] sm:$0xff]
      %v323 = vld [vmem:[%s212 + $0x2f8] sm:$0xff]
      %v324 = vld [vmem:[%s212 + $0x300] sm:$0xff]
      %v325 = vld [vmem:[%s212 + $0x308] sm:$0xff]
      %v326 = vld [vmem:[%s212 + $0x310] sm:$0xff]
      %v327 = vld [vmem:[%s212 + $0x318] sm:$0xff]
      %v328 = vld [vmem:[%s212 + $0x320] sm:$0xff]
      %v329 = vld [vmem:[%s212 + $0x328] sm:$0xff]
      %v330 = vld [vmem:[%s212 + $0x330] sm:$0xff]
      %v331 = vld [vmem:[%s212 + $0x338] sm:$0xff]
      %v332 = vld [vmem:[%s212 + $0x340] sm:$0xff]
      %v333 = vld [vmem:[%s212 + $0x348] sm:$0xff]
      %v334 = vld [vmem:[%s212 + $0x350] sm:$0xff]
      %v335 = vld [vmem:[%s212 + $0x358] sm:$0xff]
      %v336 = vld [vmem:[%s212 + $0x360] sm:$0xff]
      %v337 = vld [vmem:[%s212 + $0x368] sm:$0xff]
      %v338 = vld [vmem:[%s212 + $0x370] sm:$0xff]
      %v339 = vld [vmem:[%s212 + $0x378] sm:$0xff]
      %v340 = vld [vmem:[%s212 + $0x380] sm:$0xff]
      %v341 = vld [vmem:[%s212 + $0x388] sm:$0xff]
      %v342 = vld [vmem:[%s212 + $0x390] sm:$0xff]
      %v343 = vld [vmem:[%s212 + $0x398] sm:$0xff]
      %v344 = vld [vmem:[%s212 + $0x3a0] sm:$0xff]
      %v345 = vld [vmem:[%s212 + $0x3a8] sm:$0xff]
      %v346 = vld [vmem:[%s212 + $0x3b0] sm:$0xff]
      %v347 = vld [vmem:[%s212 + $0x3b8] sm:$0xff]
      %v348 = vld [vmem:[%s212 + $0x3c0] sm:$0xff]
      %v349 = vld [vmem:[%s212 + $0x3c8] sm:$0xff]
      %v350 = vld [vmem:[%s212 + $0x3d0] sm:$0xff]
      %v351 = vld [vmem:[%s212 + $0x3d8] sm:$0xff]
      %v352 = vld [vmem:[%s212 + $0x3e0] sm:$0xff]
      %v353 = vld [vmem:[%s212 + $0x3e8] sm:$0xff]
      %v354 = vld [vmem:[%s212 + $0x3f0] sm:$0xff]
      %v355 = vld [vmem:[%s212 + $0x3f8] sm:$0xff]
      %v356 = vld [vmem:[%s219] sm:$0xf]
      %v357 = vld [vmem:[%s219 + $0x4] sm:$0xf]
      %v358 = vld [vmem:[%s219 + $0x8] sm:$0xf]
      %v359 = vld [vmem:[%s219 + $0xc] sm:$0xf]
      %v360 = vld [vmem:[%s219 + $0x10] sm:$0xf]
      %v361 = vld [vmem:[%s219 + $0x14] sm:$0xf]
      %v362 = vld [vmem:[%s219 + $0x18] sm:$0xf]
      %v363 = vld [vmem:[%s219 + $0x1c] sm:$0xf]
      %v364 = vld [vmem:[%s219 + $0x20] sm:$0xf]
      %v365 = vld [vmem:[%s219 + $0x24] sm:$0xf]
      %v366 = vld [vmem:[%s219 + $0x28] sm:$0xf]
      %v367 = vld [vmem:[%s219 + $0x2c] sm:$0xf]
      %v368 = vld [vmem:[%s219 + $0x30] sm:$0xf]
      %v369 = vld [vmem:[%s219 + $0x34] sm:$0xf]
      %v370 = vld [vmem:[%s219 + $0x38] sm:$0xf]
      %v371 = vld [vmem:[%s219 + $0x3c] sm:$0xf]
      %v372 = vld [vmem:[%s219 + $0x40] sm:$0xf]
      %v373 = vld [vmem:[%s219 + $0x44] sm:$0xf]
      %v374 = vld [vmem:[%s2] sm:$0x1]
      %v376 = vlaneseq
      %v377 = vshrl.u32 %v376, 7
      %v378 = vsub.s32 0, %v377
      %v379 = vrot.slane %v374, %v378
      %v509 = vunpack.c.l.b16 %v228
      %v510 = vunpack.c.h.b16 %v228
      %v511 = vunpack.c.l.b16 %v229
      %v512 = vunpack.c.h.b16 %v229
      %v513 = vunpack.c.l.b16 %v230
      %v514 = vunpack.c.h.b16 %v230
      %v515 = vunpack.c.l.b16 %v231
      %v516 = vunpack.c.h.b16 %v231
      %v517 = vunpack.c.l.b16 %v232
      %v518 = vunpack.c.h.b16 %v232
      %v519 = vunpack.c.l.b16 %v233
      %v520 = vunpack.c.h.b16 %v233
      %v521 = vunpack.c.l.b16 %v234
      %v522 = vunpack.c.h.b16 %v234
      %v523 = vunpack.c.l.b16 %v235
      %v524 = vunpack.c.h.b16 %v235
      %v525 = vunpack.c.l.b16 %v236
      %v526 = vunpack.c.h.b16 %v236
      %v527 = vunpack.c.l.b16 %v237
      %v528 = vunpack.c.h.b16 %v237
      %v529 = vunpack.c.l.b16 %v238
      %v530 = vunpack.c.h.b16 %v238
      %v531 = vunpack.c.l.b16 %v239
      %v532 = vunpack.c.h.b16 %v239
      %v533 = vunpack.c.l.b16 %v240
      %v534 = vunpack.c.h.b16 %v240
      %v535 = vunpack.c.l.b16 %v241
      %v536 = vunpack.c.h.b16 %v241
      %v537 = vunpack.c.l.b16 %v242
      %v538 = vunpack.c.h.b16 %v242
      %v539 = vunpack.c.l.b16 %v243
      %v540 = vunpack.c.h.b16 %v243
      %v541 = vunpack.c.l.b16 %v244
      %v542 = vunpack.c.h.b16 %v244
      %v543 = vunpack.c.l.b16 %v245
      %v544 = vunpack.c.h.b16 %v245
      %v545 = vunpack.c.l.b16 %v246
      %v546 = vunpack.c.h.b16 %v246
      %v547 = vunpack.c.l.b16 %v247
      %v548 = vunpack.c.h.b16 %v247
      %v549 = vunpack.c.l.b16 %v248
      %v550 = vunpack.c.h.b16 %v248
      %v551 = vunpack.c.l.b16 %v249
      %v552 = vunpack.c.h.b16 %v249
      %v553 = vunpack.c.l.b16 %v250
      %v554 = vunpack.c.h.b16 %v250
      %v555 = vunpack.c.l.b16 %v251
      %v556 = vunpack.c.h.b16 %v251
      %v557 = vunpack.c.l.b16 %v252
      %v558 = vunpack.c.h.b16 %v252
      %v559 = vunpack.c.l.b16 %v253
      %v560 = vunpack.c.h.b16 %v253
      %v561 = vunpack.c.l.b16 %v254
      %v562 = vunpack.c.h.b16 %v254
      %v563 = vunpack.c.l.b16 %v255
      %v564 = vunpack.c.h.b16 %v255
      %v565 = vunpack.c.l.b16 %v256
      %v566 = vunpack.c.h.b16 %v256
      %v567 = vunpack.c.l.b16 %v257
      %v568 = vunpack.c.h.b16 %v257
      %v569 = vunpack.c.l.b16 %v258
      %v570 = vunpack.c.h.b16 %v258
      %v571 = vunpack.c.l.b16 %v259
      %v572 = vunpack.c.h.b16 %v259
      %v573 = vunpack.c.l.b16 %v260
      %v574 = vunpack.c.h.b16 %v260
      %v575 = vunpack.c.l.b16 %v261
      %v576 = vunpack.c.h.b16 %v261
      %v577 = vunpack.c.l.b16 %v262
      %v578 = vunpack.c.h.b16 %v262
      %v579 = vunpack.c.l.b16 %v263
      %v580 = vunpack.c.h.b16 %v263
      %v581 = vunpack.c.l.b16 %v264
      %v582 = vunpack.c.h.b16 %v264
      %v583 = vunpack.c.l.b16 %v265
      %v584 = vunpack.c.h.b16 %v265
      %v585 = vunpack.c.l.b16 %v266
      %v586 = vunpack.c.h.b16 %v266
      %v587 = vunpack.c.l.b16 %v267
      %v588 = vunpack.c.h.b16 %v267
      %v589 = vunpack.c.l.b16 %v268
      %v590 = vunpack.c.h.b16 %v268
      %v591 = vunpack.c.l.b16 %v269
      %v592 = vunpack.c.h.b16 %v269
      %v593 = vunpack.c.l.b16 %v270
      %v594 = vunpack.c.h.b16 %v270
      %v595 = vunpack.c.l.b16 %v271
      %v596 = vunpack.c.h.b16 %v271
      %v597 = vunpack.c.l.b16 %v272
      %v598 = vunpack.c.h.b16 %v272
      %v599 = vunpack.c.l.b16 %v273
      %v600 = vunpack.c.h.b16 %v273
      %v601 = vunpack.c.l.b16 %v274
      %v602 = vunpack.c.h.b16 %v274
      %v603 = vunpack.c.l.b16 %v275
      %v604 = vunpack.c.h.b16 %v275
      %v605 = vunpack.c.l.b16 %v276
      %v606 = vunpack.c.h.b16 %v276
      %v607 = vunpack.c.l.b16 %v277
      %v608 = vunpack.c.h.b16 %v277
      %v609 = vunpack.c.l.b16 %v278
      %v610 = vunpack.c.h.b16 %v278
      %v611 = vunpack.c.l.b16 %v279
      %v612 = vunpack.c.h.b16 %v279
      %v613 = vunpack.c.l.b16 %v280
      %v614 = vunpack.c.h.b16 %v280
      %v615 = vunpack.c.l.b16 %v281
      %v616 = vunpack.c.h.b16 %v281
      %v617 = vunpack.c.l.b16 %v282
      %v618 = vunpack.c.h.b16 %v282
      %v619 = vunpack.c.l.b16 %v283
      %v620 = vunpack.c.h.b16 %v283
      %v621 = vunpack.c.l.b16 %v284
      %v622 = vunpack.c.h.b16 %v284
      %v623 = vunpack.c.l.b16 %v285
      %v624 = vunpack.c.h.b16 %v285
      %v625 = vunpack.c.l.b16 %v286
      %v626 = vunpack.c.h.b16 %v286
      %v627 = vunpack.c.l.b16 %v287
      %v628 = vunpack.c.h.b16 %v287
      %v629 = vunpack.c.l.b16 %v288
      %v630 = vunpack.c.h.b16 %v288
      %v631 = vunpack.c.l.b16 %v289
      %v632 = vunpack.c.h.b16 %v289
      %v633 = vunpack.c.l.b16 %v290
      %v634 = vunpack.c.h.b16 %v290
      %v635 = vunpack.c.l.b16 %v291
      %v636 = vunpack.c.h.b16 %v291
      %v637 = vunpack.c.l.b16 %v292
      %v638 = vunpack.c.h.b16 %v292
      %v639 = vunpack.c.l.b16 %v293
      %v640 = vunpack.c.h.b16 %v293
      %v641 = vunpack.c.l.b16 %v294
      %v642 = vunpack.c.h.b16 %v294
      %v643 = vunpack.c.l.b16 %v295
      %v644 = vunpack.c.h.b16 %v295
      %v645 = vunpack.c.l.b16 %v296
      %v646 = vunpack.c.h.b16 %v296
      %v647 = vunpack.c.l.b16 %v297
      %v648 = vunpack.c.h.b16 %v297
      %v649 = vunpack.c.l.b16 %v298
      %v650 = vunpack.c.h.b16 %v298
      %v651 = vunpack.c.l.b16 %v299
      %v652 = vunpack.c.h.b16 %v299
      %v653 = vunpack.c.l.b16 %v300
      %v654 = vunpack.c.h.b16 %v300
      %v655 = vunpack.c.l.b16 %v301
      %v656 = vunpack.c.h.b16 %v301
      %v657 = vunpack.c.l.b16 %v302
      %v658 = vunpack.c.h.b16 %v302
      %v659 = vunpack.c.l.b16 %v303
      %v660 = vunpack.c.h.b16 %v303
      %v661 = vunpack.c.l.b16 %v304
      %v662 = vunpack.c.h.b16 %v304
      %v663 = vunpack.c.l.b16 %v305
      %v664 = vunpack.c.h.b16 %v305
      %v665 = vunpack.c.l.b16 %v306
      %v666 = vunpack.c.h.b16 %v306
      %v667 = vunpack.c.l.b16 %v307
      %v668 = vunpack.c.h.b16 %v307
      %v669 = vunpack.c.l.b16 %v308
      %v670 = vunpack.c.h.b16 %v308
      %v671 = vunpack.c.l.b16 %v309
      %v672 = vunpack.c.h.b16 %v309
      %v673 = vunpack.c.l.b16 %v310
      %v674 = vunpack.c.h.b16 %v310
      %v675 = vunpack.c.l.b16 %v311
      %v676 = vunpack.c.h.b16 %v311
      %v677 = vunpack.c.l.b16 %v312
      %v678 = vunpack.c.h.b16 %v312
      %v679 = vunpack.c.l.b16 %v313
      %v680 = vunpack.c.h.b16 %v313
      %v681 = vunpack.c.l.b16 %v314
      %v682 = vunpack.c.h.b16 %v314
      %v683 = vunpack.c.l.b16 %v315
      %v684 = vunpack.c.h.b16 %v315
      %v685 = vunpack.c.l.b16 %v316
      %v686 = vunpack.c.h.b16 %v316
      %v687 = vunpack.c.l.b16 %v317
      %v688 = vunpack.c.h.b16 %v317
      %v689 = vunpack.c.l.b16 %v318
      %v690 = vunpack.c.h.b16 %v318
      %v691 = vunpack.c.l.b16 %v319
      %v692 = vunpack.c.h.b16 %v319
      %v693 = vunpack.c.l.b16 %v320
      %v694 = vunpack.c.h.b16 %v320
      %v695 = vunpack.c.l.b16 %v321
      %v696 = vunpack.c.h.b16 %v321
      %v697 = vunpack.c.l.b16 %v322
      %v698 = vunpack.c.h.b16 %v322
      %v699 = vunpack.c.l.b16 %v323
      %v700 = vunpack.c.h.b16 %v323
      %v701 = vunpack.c.l.b16 %v324
      %v702 = vunpack.c.h.b16 %v324
      %v703 = vunpack.c.l.b16 %v325
      %v704 = vunpack.c.h.b16 %v325
      %v705 = vunpack.c.l.b16 %v326
      %v706 = vunpack.c.h.b16 %v326
      %v707 = vunpack.c.l.b16 %v327
      %v708 = vunpack.c.h.b16 %v327
      %v709 = vunpack.c.l.b16 %v328
      %v710 = vunpack.c.h.b16 %v328
      %v711 = vunpack.c.l.b16 %v329
      %v712 = vunpack.c.h.b16 %v329
      %v713 = vunpack.c.l.b16 %v330
      %v714 = vunpack.c.h.b16 %v330
      %v715 = vunpack.c.l.b16 %v331
      %v716 = vunpack.c.h.b16 %v331
      %v717 = vunpack.c.l.b16 %v332
      %v718 = vunpack.c.h.b16 %v332
      %v719 = vunpack.c.l.b16 %v333
      %v720 = vunpack.c.h.b16 %v333
      %v721 = vunpack.c.l.b16 %v334
      %v722 = vunpack.c.h.b16 %v334
      %v723 = vunpack.c.l.b16 %v335
      %v724 = vunpack.c.h.b16 %v335
      %v725 = vunpack.c.l.b16 %v336
      %v726 = vunpack.c.h.b16 %v336
      %v727 = vunpack.c.l.b16 %v337
      %v728 = vunpack.c.h.b16 %v337
      %v729 = vunpack.c.l.b16 %v338
      %v730 = vunpack.c.h.b16 %v338
      %v731 = vunpack.c.l.b16 %v339
      %v732 = vunpack.c.h.b16 %v339
      %v733 = vunpack.c.l.b16 %v340
      %v734 = vunpack.c.h.b16 %v340
      %v735 = vunpack.c.l.b16 %v341
      %v736 = vunpack.c.h.b16 %v341
      %v737 = vunpack.c.l.b16 %v342
      %v738 = vunpack.c.h.b16 %v342
      %v739 = vunpack.c.l.b16 %v343
      %v740 = vunpack.c.h.b16 %v343
      %v741 = vunpack.c.l.b16 %v344
      %v742 = vunpack.c.h.b16 %v344
      %v743 = vunpack.c.l.b16 %v345
      %v744 = vunpack.c.h.b16 %v345
      %v745 = vunpack.c.l.b16 %v346
      %v746 = vunpack.c.h.b16 %v346
      %v747 = vunpack.c.l.b16 %v347
      %v748 = vunpack.c.h.b16 %v347
      %v749 = vunpack.c.l.b16 %v348
      %v750 = vunpack.c.h.b16 %v348
      %v751 = vunpack.c.l.b16 %v349
      %v752 = vunpack.c.h.b16 %v349
      %v753 = vunpack.c.l.b16 %v350
      %v754 = vunpack.c.h.b16 %v350
      %v755 = vunpack.c.l.b16 %v351
      %v756 = vunpack.c.h.b16 %v351
      %v757 = vunpack.c.l.b16 %v352
      %v758 = vunpack.c.h.b16 %v352
      %v759 = vunpack.c.l.b16 %v353
      %v760 = vunpack.c.h.b16 %v353
      %v761 = vunpack.c.l.b16 %v354
      %v762 = vunpack.c.h.b16 %v354
      %v763 = vunpack.c.l.b16 %v355
      %v764 = vunpack.c.h.b16 %v355
      %v765 = vpack.c.b16 %v511, %v509
      %v766 = vpack.c.b16 %v512, %v510
      %v767 = vpack.c.b16 %v515, %v513
      %v768 = vpack.c.b16 %v516, %v514
      %v769 = vpack.c.b16 %v519, %v517
      %v770 = vpack.c.b16 %v520, %v518
      %v771 = vpack.c.b16 %v523, %v521
      %v772 = vpack.c.b16 %v524, %v522
      %v773 = vpack.c.b16 %v527, %v525
      %v774 = vpack.c.b16 %v528, %v526
      %v775 = vpack.c.b16 %v531, %v529
      %v776 = vpack.c.b16 %v532, %v530
      %v777 = vpack.c.b16 %v535, %v533
      %v778 = vpack.c.b16 %v536, %v534
      %v779 = vpack.c.b16 %v539, %v537
      %v780 = vpack.c.b16 %v540, %v538
      %v781 = vpack.c.b16 %v543, %v541
      %v782 = vpack.c.b16 %v544, %v542
      %v783 = vpack.c.b16 %v547, %v545
      %v784 = vpack.c.b16 %v548, %v546
      %v785 = vpack.c.b16 %v551, %v549
      %v786 = vpack.c.b16 %v552, %v550
      %v787 = vpack.c.b16 %v555, %v553
      %v788 = vpack.c.b16 %v556, %v554
      %v789 = vpack.c.b16 %v559, %v557
      %v790 = vpack.c.b16 %v560, %v558
      %v791 = vpack.c.b16 %v563, %v561
      %v792 = vpack.c.b16 %v564, %v562
      %v793 = vpack.c.b16 %v567, %v565
      %v794 = vpack.c.b16 %v568, %v566
      %v795 = vpack.c.b16 %v571, %v569
      %v796 = vpack.c.b16 %v572, %v570
      %v797 = vpack.c.b16 %v575, %v573
      %v798 = vpack.c.b16 %v576, %v574
      %v799 = vpack.c.b16 %v579, %v577
      %v800 = vpack.c.b16 %v580, %v578
      %v801 = vpack.c.b16 %v583, %v581
      %v802 = vpack.c.b16 %v584, %v582
      %v803 = vpack.c.b16 %v587, %v585
      %v804 = vpack.c.b16 %v588, %v586
      %v805 = vpack.c.b16 %v591, %v589
      %v806 = vpack.c.b16 %v592, %v590
      %v807 = vpack.c.b16 %v595, %v593
      %v808 = vpack.c.b16 %v596, %v594
      %v809 = vpack.c.b16 %v599, %v597
      %v810 = vpack.c.b16 %v600, %v598
      %v811 = vpack.c.b16 %v603, %v601
      %v812 = vpack.c.b16 %v604, %v602
      %v813 = vpack.c.b16 %v607, %v605
      %v814 = vpack.c.b16 %v608, %v606
      %v815 = vpack.c.b16 %v611, %v609
      %v816 = vpack.c.b16 %v612, %v610
      %v817 = vpack.c.b16 %v615, %v613
      %v818 = vpack.c.b16 %v616, %v614
      %v819 = vpack.c.b16 %v619, %v617
      %v820 = vpack.c.b16 %v620, %v618
      %v821 = vpack.c.b16 %v623, %v621
      %v822 = vpack.c.b16 %v624, %v622
      %v823 = vpack.c.b16 %v627, %v625
      %v824 = vpack.c.b16 %v628, %v626
      %v825 = vpack.c.b16 %v631, %v629
      %v826 = vpack.c.b16 %v632, %v630
      %v827 = vpack.c.b16 %v635, %v633
      %v828 = vpack.c.b16 %v636, %v634
      %v829 = vpack.c.b16 %v639, %v637
      %v830 = vpack.c.b16 %v640, %v638
      %v831 = vpack.c.b16 %v643, %v641
      %v832 = vpack.c.b16 %v644, %v642
      %v833 = vpack.c.b16 %v647, %v645
      %v834 = vpack.c.b16 %v648, %v646
      %v835 = vpack.c.b16 %v651, %v649
      %v836 = vpack.c.b16 %v652, %v650
      %v837 = vpack.c.b16 %v655, %v653
      %v838 = vpack.c.b16 %v656, %v654
      %v839 = vpack.c.b16 %v659, %v657
      %v840 = vpack.c.b16 %v660, %v658
      %v841 = vpack.c.b16 %v663, %v661
      %v842 = vpack.c.b16 %v664, %v662
      %v843 = vpack.c.b16 %v667, %v665
      %v844 = vpack.c.b16 %v668, %v666
      %v845 = vpack.c.b16 %v671, %v669
      %v846 = vpack.c.b16 %v672, %v670
      %v847 = vpack.c.b16 %v675, %v673
      %v848 = vpack.c.b16 %v676, %v674
      %v849 = vpack.c.b16 %v679, %v677
      %v850 = vpack.c.b16 %v680, %v678
      %v851 = vpack.c.b16 %v683, %v681
      %v852 = vpack.c.b16 %v684, %v682
      %v853 = vpack.c.b16 %v687, %v685
      %v854 = vpack.c.b16 %v688, %v686
      %v855 = vpack.c.b16 %v691, %v689
      %v856 = vpack.c.b16 %v692, %v690
      %v857 = vpack.c.b16 %v695, %v693
      %v858 = vpack.c.b16 %v696, %v694
      %v859 = vpack.c.b16 %v699, %v697
      %v860 = vpack.c.b16 %v700, %v698
      %v861 = vpack.c.b16 %v703, %v701
      %v862 = vpack.c.b16 %v704, %v702
      %v863 = vpack.c.b16 %v707, %v705
      %v864 = vpack.c.b16 %v708, %v706
      %v865 = vpack.c.b16 %v711, %v709
      %v866 = vpack.c.b16 %v712, %v710
      %v867 = vpack.c.b16 %v715, %v713
      %v868 = vpack.c.b16 %v716, %v714
      %v869 = vpack.c.b16 %v719, %v717
      %v870 = vpack.c.b16 %v720, %v718
      %v871 = vpack.c.b16 %v723, %v721
      %v872 = vpack.c.b16 %v724, %v722
      %v873 = vpack.c.b16 %v727, %v725
      %v874 = vpack.c.b16 %v728, %v726
      %v875 = vpack.c.b16 %v731, %v729
      %v876 = vpack.c.b16 %v732, %v730
      %v877 = vpack.c.b16 %v735, %v733
      %v878 = vpack.c.b16 %v736, %v734
      %v879 = vpack.c.b16 %v739, %v737
      %v880 = vpack.c.b16 %v740, %v738
      %v881 = vpack.c.b16 %v743, %v741
      %v882 = vpack.c.b16 %v744, %v742
      %v883 = vpack.c.b16 %v747, %v745
      %v884 = vpack.c.b16 %v748, %v746
      %v885 = vpack.c.b16 %v751, %v749
      %v886 = vpack.c.b16 %v752, %v750
      %v887 = vpack.c.b16 %v755, %v753
      %v888 = vpack.c.b16 %v756, %v754
      %v889 = vpack.c.b16 %v759, %v757
      %v890 = vpack.c.b16 %v760, %v758
      %v891 = vpack.c.b16 %v763, %v761
      %v892 = vpack.c.b16 %v764, %v762
      %v975 = vunpack.c.l.b16 %v356
      %v976 = vunpack.c.l.b16 %v357
      %v977 = vunpack.c.l.b16 %v358
      %v978 = vunpack.c.l.b16 %v359
      %v979 = vunpack.c.l.b16 %v360
      %v980 = vunpack.c.l.b16 %v361
      %v981 = vunpack.c.l.b16 %v362
      %v982 = vunpack.c.l.b16 %v363
      %v983 = vunpack.c.l.b16 %v364
      %v984 = vunpack.c.l.b16 %v365
      %v985 = vunpack.c.l.b16 %v366
      %v986 = vunpack.c.l.b16 %v367
      %v987 = vunpack.c.l.b16 %v368
      %v988 = vunpack.c.l.b16 %v369
      %v989 = vunpack.c.l.b16 %v370
      %v990 = vunpack.c.l.b16 %v371
      %v991 = vunpack.c.l.b16 %v372
      %v992 = vunpack.c.l.b16 %v373
      %v993 = vpack.c.b16 %v976, %v975
      %v994 = vpack.c.b16 %v978, %v977
      %v995 = vpack.c.b16 %v980, %v979
      %v996 = vpack.c.b16 %v982, %v981
      %v997 = vpack.c.b16 %v984, %v983
      %v998 = vpack.c.b16 %v986, %v985
      %v999 = vpack.c.b16 %v988, %v987
      %v1000 = vpack.c.b16 %v990, %v989
      %v1001 = vpack.c.b16 %v992, %v991
      %vm1011 = vcmask 130048
      %v1013 = vsel %vm1011, %v766, 0
      %v1016 = vsel %vm1011, %v768, 0
      %v1019 = vsel %vm1011, %v770, 0
      %v1022 = vsel %vm1011, %v772, 0
      %v1025 = vsel %vm1011, %v774, 0
      %v1028 = vsel %vm1011, %v776, 0
      %v1031 = vsel %vm1011, %v778, 0
      %v1034 = vsel %vm1011, %v780, 0
      %v1037 = vsel %vm1011, %v782, 0
      %v1040 = vsel %vm1011, %v784, 0
      %v1043 = vsel %vm1011, %v786, 0
      %v1046 = vsel %vm1011, %v788, 0
      %v1049 = vsel %vm1011, %v790, 0
      %v1052 = vsel %vm1011, %v792, 0
      %v1055 = vsel %vm1011, %v794, 0
      %v1058 = vsel %vm1011, %v796, 0
      %v1061 = vsel %vm1011, %v798, 0
      %v1064 = vsel %vm1011, %v800, 0
      %v1067 = vsel %vm1011, %v802, 0
      %v1070 = vsel %vm1011, %v804, 0
      %v1073 = vsel %vm1011, %v806, 0
      %v1076 = vsel %vm1011, %v808, 0
      %v1079 = vsel %vm1011, %v810, 0
      %v1082 = vsel %vm1011, %v812, 0
      %v1085 = vsel %vm1011, %v814, 0
      %v1088 = vsel %vm1011, %v816, 0
      %v1091 = vsel %vm1011, %v818, 0
      %v1094 = vsel %vm1011, %v820, 0
      %v1097 = vsel %vm1011, %v822, 0
      %v1100 = vsel %vm1011, %v824, 0
      %v1103 = vsel %vm1011, %v826, 0
      %v1106 = vsel %vm1011, %v828, 0
      %v1109 = vsel %vm1011, %v830, 0
      %v1112 = vsel %vm1011, %v832, 0
      %v1115 = vsel %vm1011, %v834, 0
      %v1118 = vsel %vm1011, %v836, 0
      %v1121 = vsel %vm1011, %v838, 0
      %v1124 = vsel %vm1011, %v840, 0
      %v1127 = vsel %vm1011, %v842, 0
      %v1130 = vsel %vm1011, %v844, 0
      %v1133 = vsel %vm1011, %v846, 0
      %v1136 = vsel %vm1011, %v848, 0
      %v1139 = vsel %vm1011, %v850, 0
      %v1142 = vsel %vm1011, %v852, 0
      %v1145 = vsel %vm1011, %v854, 0
      %v1148 = vsel %vm1011, %v856, 0
      %v1151 = vsel %vm1011, %v858, 0
      %v1154 = vsel %vm1011, %v860, 0
      %v1157 = vsel %vm1011, %v862, 0
      %v1160 = vsel %vm1011, %v864, 0
      %v1163 = vsel %vm1011, %v866, 0
      %v1166 = vsel %vm1011, %v868, 0
      %v1169 = vsel %vm1011, %v870, 0
      %v1172 = vsel %vm1011, %v872, 0
      %v1175 = vsel %vm1011, %v874, 0
      %v1178 = vsel %vm1011, %v876, 0
      %v1181 = vsel %vm1011, %v878, 0
      %v1184 = vsel %vm1011, %v880, 0
      %v1187 = vsel %vm1011, %v882, 0
      %v1190 = vsel %vm1011, %v884, 0
      %v1193 = vsel %vm1011, %v886, 0
      %v1196 = vsel %vm1011, %v888, 0
      %v1199 = vsel %vm1011, %v890, 0
      %v1202 = vsel %vm1011, %v892, 0
      %1204 = vmatprep.subr.bf16.mxu0 0
      %1205 = vmatpush1.bf16.msra.mxu0 %v1000
      %1206 = vmatprep.subr.bf16.mxu0 0
      %1207 = vmatpush1.bf16.msra.mxu0 %v999
      %1208 = vmatprep.subr.bf16.mxu0 0
      %1209 = vmatpush1.bf16.msra.mxu0 %v998
      %1210 = vmatprep.subr.bf16.mxu0 0
      %1211 = vmatpush1.bf16.msra.mxu0 %v997
      %1212 = vmatprep.subr.bf16.mxu0 0
      %1213 = vmatpush1.bf16.msra.mxu0 %v996
      %1214 = vmatprep.subr.bf16.mxu0 0
      %1215 = vmatpush1.bf16.msra.mxu0 %v995
      %1216 = vmatprep.subr.bf16.mxu0 0
      %1217 = vmatpush1.bf16.msra.mxu0 %v994
      %1218 = vmatprep.subr.bf16.mxu0 0
      %1219 = vmatpush1.bf16.msra.mxu0 %v993
      %1220 = vmatprep.subr.bf16.mxu0 0
      %1221 = vmatpush2.bf16.msra.mxu0 0
      %1222 = vmatprep.subr.bf16.mxu0 0
      %1223 = vmatpush2.bf16.msra.mxu0 0
      %1224 = vmatprep.subr.bf16.mxu0 0
      %1225 = vmatpush2.bf16.msra.mxu0 0
      %1226 = vmatprep.subr.bf16.mxu0 0
      %1227 = vmatpush2.bf16.msra.mxu0 0
      %1228 = vmatprep.subr.bf16.mxu0 0
      %1229 = vmatpush2.bf16.msra.mxu0 0
      %1230 = vmatprep.subr.bf16.mxu0 0
      %1231 = vmatpush2.bf16.msra.mxu0 0
      %1232 = vmatprep.subr.bf16.mxu0 0
      %1233 = vmatpush2.bf16.msra.mxu0 0
      %1234 = vmatprep.subr.bf16.mxu0 0
      %1235 = vmatpush2.bf16.msra.mxu0 %v1001
      %1236 = vmatprep.mubr.bf16.mxu0 %v1013
      %1237 = vmatmul.mubr.bf16.gmra.mxu0 %v765
      %v1238 = vpop.f32.mrf.mxu0
      %v1239 = vadd.f32 %v379, %v1238
      %v1240 = vpop.f32.mrf.mxu0
      %v1241 = vpop.f32.mrf.mxu0
      %v1242 = vadd.f32 %v379, %v1241
      %v1243 = vpop.f32.mrf.mxu0
      %1244 = vmatprep.mubr.bf16.mxu0 %v1016
      %1245 = vmatmul.mubr.bf16.gmra.mxu0 %v767
      %v1246 = vpop.f32.mrf.mxu0
      %v1247 = vadd.f32 %v379, %v1246
      %v1248 = vpop.f32.mrf.mxu0
      %v1249 = vpop.f32.mrf.mxu0
      %v1250 = vadd.f32 %v379, %v1249
      %v1251 = vpop.f32.mrf.mxu0
      %1252 = vmatprep.mubr.bf16.mxu0 %v1019
      %1253 = vmatmul.mubr.bf16.gmra.mxu0 %v769
      %v1254 = vpop.f32.mrf.mxu0
      %v1255 = vadd.f32 %v379, %v1254
      %v1256 = vpop.f32.mrf.mxu0
      %v1257 = vpop.f32.mrf.mxu0
      %v1258 = vadd.f32 %v379, %v1257
      %v1259 = vpop.f32.mrf.mxu0
      %1260 = vmatprep.mubr.bf16.mxu0 %v1022
      %1261 = vmatmul.mubr.bf16.gmra.mxu0 %v771
      %v1262 = vpop.f32.mrf.mxu0
      %v1263 = vadd.f32 %v379, %v1262
      %v1264 = vpop.f32.mrf.mxu0
      %v1265 = vpop.f32.mrf.mxu0
      %v1266 = vadd.f32 %v379, %v1265
      %v1267 = vpop.f32.mrf.mxu0
      %1268 = vmatprep.mubr.bf16.mxu0 %v1025
      %1269 = vmatmul.mubr.bf16.gmra.mxu0 %v773
      %v1270 = vpop.f32.mrf.mxu0
      %v1271 = vadd.f32 %v379, %v1270
      %v1272 = vpop.f32.mrf.mxu0
      %v1273 = vpop.f32.mrf.mxu0
      %v1274 = vadd.f32 %v379, %v1273
      %v1275 = vpop.f32.mrf.mxu0
      %1276 = vmatprep.mubr.bf16.mxu0 %v1028
      %1277 = vmatmul.mubr.bf16.gmra.mxu0 %v775
      %v1278 = vpop.f32.mrf.mxu0
      %v1279 = vadd.f32 %v379, %v1278
      %v1280 = vpop.f32.mrf.mxu0
      %v1281 = vpop.f32.mrf.mxu0
      %v1282 = vadd.f32 %v379, %v1281
      %v1283 = vpop.f32.mrf.mxu0
      %1284 = vmatprep.mubr.bf16.mxu0 %v1031
      %1285 = vmatmul.mubr.bf16.gmra.mxu0 %v777
      %v1286 = vpop.f32.mrf.mxu0
      %v1287 = vadd.f32 %v379, %v1286
      %v1288 = vpop.f32.mrf.mxu0
      %v1289 = vpop.f32.mrf.mxu0
      %v1290 = vadd.f32 %v379, %v1289
      %v1291 = vpop.f32.mrf.mxu0
      %1292 = vmatprep.mubr.bf16.mxu0 %v1034
      %1293 = vmatmul.mubr.bf16.gmra.mxu0 %v779
      %v1294 = vpop.f32.mrf.mxu0
      %v1295 = vadd.f32 %v379, %v1294
      %v1296 = vpop.f32.mrf.mxu0
      %v1297 = vpop.f32.mrf.mxu0
      %v1298 = vadd.f32 %v379, %v1297
      %v1299 = vpop.f32.mrf.mxu0
      %1300 = vmatprep.mubr.bf16.mxu0 %v1037
      %1301 = vmatmul.mubr.bf16.gmra.mxu0 %v781
      %v1302 = vpop.f32.mrf.mxu0
      %v1303 = vadd.f32 %v379, %v1302
      %v1304 = vpop.f32.mrf.mxu0
      %v1305 = vpop.f32.mrf.mxu0
      %v1306 = vadd.f32 %v379, %v1305
      %v1307 = vpop.f32.mrf.mxu0
      %1308 = vmatprep.mubr.bf16.mxu0 %v1040
      %1309 = vmatmul.mubr.bf16.gmra.mxu0 %v783
      %v1310 = vpop.f32.mrf.mxu0
      %v1311 = vadd.f32 %v379, %v1310
      %v1312 = vpop.f32.mrf.mxu0
      %v1313 = vpop.f32.mrf.mxu0
      %v1314 = vadd.f32 %v379, %v1313
      %v1315 = vpop.f32.mrf.mxu0
      %1316 = vmatprep.mubr.bf16.mxu0 %v1043
      %1317 = vmatmul.mubr.bf16.gmra.mxu0 %v785
      %v1318 = vpop.f32.mrf.mxu0
      %v1319 = vadd.f32 %v379, %v1318
      %v1320 = vpop.f32.mrf.mxu0
      %v1321 = vpop.f32.mrf.mxu0
      %v1322 = vadd.f32 %v379, %v1321
      %v1323 = vpop.f32.mrf.mxu0
      %1324 = vmatprep.mubr.bf16.mxu0 %v1046
      %1325 = vmatmul.mubr.bf16.gmra.mxu0 %v787
      %v1326 = vpop.f32.mrf.mxu0
      %v1327 = vadd.f32 %v379, %v1326
      %v1328 = vpop.f32.mrf.mxu0
      %v1329 = vpop.f32.mrf.mxu0
      %v1330 = vadd.f32 %v379, %v1329
      %v1331 = vpop.f32.mrf.mxu0
      %1332 = vmatprep.mubr.bf16.mxu0 %v1049
      %1333 = vmatmul.mubr.bf16.gmra.mxu0 %v789
      %v1334 = vpop.f32.mrf.mxu0
      %v1335 = vadd.f32 %v379, %v1334
      %v1336 = vpop.f32.mrf.mxu0
      %v1337 = vpop.f32.mrf.mxu0
      %v1338 = vadd.f32 %v379, %v1337
      %v1339 = vpop.f32.mrf.mxu0
      %1340 = vmatprep.mubr.bf16.mxu0 %v1052
      %1341 = vmatmul.mubr.bf16.gmra.mxu0 %v791
      %v1342 = vpop.f32.mrf.mxu0
      %v1343 = vadd.f32 %v379, %v1342
      %v1344 = vpop.f32.mrf.mxu0
      %v1345 = vpop.f32.mrf.mxu0
      %v1346 = vadd.f32 %v379, %v1345
      %v1347 = vpop.f32.mrf.mxu0
      %1348 = vmatprep.mubr.bf16.mxu0 %v1055
      %1349 = vmatmul.mubr.bf16.gmra.mxu0 %v793
      %v1350 = vpop.f32.mrf.mxu0
      %v1351 = vadd.f32 %v379, %v1350
      %v1352 = vpop.f32.mrf.mxu0
      %v1353 = vpop.f32.mrf.mxu0
      %v1354 = vadd.f32 %v379, %v1353
      %v1355 = vpop.f32.mrf.mxu0
      %1356 = vmatprep.mubr.bf16.mxu0 %v1058
      %1357 = vmatmul.mubr.bf16.gmra.mxu0 %v795
      %v1358 = vpop.f32.mrf.mxu0
      %v1359 = vadd.f32 %v379, %v1358
      %v1360 = vpop.f32.mrf.mxu0
      %v1361 = vpop.f32.mrf.mxu0
      %v1362 = vadd.f32 %v379, %v1361
      %v1363 = vpop.f32.mrf.mxu0
      %1364 = vmatprep.mubr.bf16.mxu0 %v1061
      %1365 = vmatmul.mubr.bf16.gmra.mxu0 %v797
      %v1366 = vpop.f32.mrf.mxu0
      %v1367 = vadd.f32 %v379, %v1366
      %v1368 = vpop.f32.mrf.mxu0
      %v1369 = vpop.f32.mrf.mxu0
      %v1370 = vadd.f32 %v379, %v1369
      %v1371 = vpop.f32.mrf.mxu0
      %1372 = vmatprep.mubr.bf16.mxu0 %v1064
      %1373 = vmatmul.mubr.bf16.gmra.mxu0 %v799
      %v1374 = vpop.f32.mrf.mxu0
      %v1375 = vadd.f32 %v379, %v1374
      %v1376 = vpop.f32.mrf.mxu0
      %v1377 = vpop.f32.mrf.mxu0
      %v1378 = vadd.f32 %v379, %v1377
      %v1379 = vpop.f32.mrf.mxu0
      %1380 = vmatprep.mubr.bf16.mxu0 %v1067
      %1381 = vmatmul.mubr.bf16.gmra.mxu0 %v801
      %v1382 = vpop.f32.mrf.mxu0
      %v1383 = vadd.f32 %v379, %v1382
      %v1384 = vpop.f32.mrf.mxu0
      %v1385 = vpop.f32.mrf.mxu0
      %v1386 = vadd.f32 %v379, %v1385
      %v1387 = vpop.f32.mrf.mxu0
      %1388 = vmatprep.mubr.bf16.mxu0 %v1070
      %1389 = vmatmul.mubr.bf16.gmra.mxu0 %v803
      %v1390 = vpop.f32.mrf.mxu0
      %v1391 = vadd.f32 %v379, %v1390
      %v1392 = vpop.f32.mrf.mxu0
      %v1393 = vpop.f32.mrf.mxu0
      %v1394 = vadd.f32 %v379, %v1393
      %v1395 = vpop.f32.mrf.mxu0
      %1396 = vmatprep.mubr.bf16.mxu0 %v1073
      %1397 = vmatmul.mubr.bf16.gmra.mxu0 %v805
      %v1398 = vpop.f32.mrf.mxu0
      %v1399 = vadd.f32 %v379, %v1398
      %v1400 = vpop.f32.mrf.mxu0
      %v1401 = vpop.f32.mrf.mxu0
      %v1402 = vadd.f32 %v379, %v1401
      %v1403 = vpop.f32.mrf.mxu0
      %1404 = vmatprep.mubr.bf16.mxu0 %v1076
      %1405 = vmatmul.mubr.bf16.gmra.mxu0 %v807
      %v1406 = vpop.f32.mrf.mxu0
      %v1407 = vadd.f32 %v379, %v1406
      %v1408 = vpop.f32.mrf.mxu0
      %v1409 = vpop.f32.mrf.mxu0
      %v1410 = vadd.f32 %v379, %v1409
      %v1411 = vpop.f32.mrf.mxu0
      %1412 = vmatprep.mubr.bf16.mxu0 %v1079
      %1413 = vmatmul.mubr.bf16.gmra.mxu0 %v809
      %v1414 = vpop.f32.mrf.mxu0
      %v1415 = vadd.f32 %v379, %v1414
      %v1416 = vpop.f32.mrf.mxu0
      %v1417 = vpop.f32.mrf.mxu0
      %v1418 = vadd.f32 %v379, %v1417
      %v1419 = vpop.f32.mrf.mxu0
      %1420 = vmatprep.mubr.bf16.mxu0 %v1082
      %1421 = vmatmul.mubr.bf16.gmra.mxu0 %v811
      %v1422 = vpop.f32.mrf.mxu0
      %v1423 = vadd.f32 %v379, %v1422
      %v1424 = vpop.f32.mrf.mxu0
      %v1425 = vpop.f32.mrf.mxu0
      %v1426 = vadd.f32 %v379, %v1425
      %v1427 = vpop.f32.mrf.mxu0
      %1428 = vmatprep.mubr.bf16.mxu0 %v1085
      %1429 = vmatmul.mubr.bf16.gmra.mxu0 %v813
      %v1430 = vpop.f32.mrf.mxu0
      %v1431 = vadd.f32 %v379, %v1430
      %v1432 = vpop.f32.mrf.mxu0
      %v1433 = vpop.f32.mrf.mxu0
      %v1434 = vadd.f32 %v379, %v1433
      %v1435 = vpop.f32.mrf.mxu0
      %1436 = vmatprep.mubr.bf16.mxu0 %v1088
      %1437 = vmatmul.mubr.bf16.gmra.mxu0 %v815
      %v1438 = vpop.f32.mrf.mxu0
      %v1439 = vadd.f32 %v379, %v1438
      %v1440 = vpop.f32.mrf.mxu0
      %v1441 = vpop.f32.mrf.mxu0
      %v1442 = vadd.f32 %v379, %v1441
      %v1443 = vpop.f32.mrf.mxu0
      %1444 = vmatprep.mubr.bf16.mxu0 %v1091
      %1445 = vmatmul.mubr.bf16.gmra.mxu0 %v817
      %v1446 = vpop.f32.mrf.mxu0
      %v1447 = vadd.f32 %v379, %v1446
      %v1448 = vpop.f32.mrf.mxu0
      %v1449 = vpop.f32.mrf.mxu0
      %v1450 = vadd.f32 %v379, %v1449
      %v1451 = vpop.f32.mrf.mxu0
      %1452 = vmatprep.mubr.bf16.mxu0 %v1094
      %1453 = vmatmul.mubr.bf16.gmra.mxu0 %v819
      %v1454 = vpop.f32.mrf.mxu0
      %v1455 = vadd.f32 %v379, %v1454
      %v1456 = vpop.f32.mrf.mxu0
      %v1457 = vpop.f32.mrf.mxu0
      %v1458 = vadd.f32 %v379, %v1457
      %v1459 = vpop.f32.mrf.mxu0
      %1460 = vmatprep.mubr.bf16.mxu0 %v1097
      %1461 = vmatmul.mubr.bf16.gmra.mxu0 %v821
      %v1462 = vpop.f32.mrf.mxu0
      %v1463 = vadd.f32 %v379, %v1462
      %v1464 = vpop.f32.mrf.mxu0
      %v1465 = vpop.f32.mrf.mxu0
      %v1466 = vadd.f32 %v379, %v1465
      %v1467 = vpop.f32.mrf.mxu0
      %1468 = vmatprep.mubr.bf16.mxu0 %v1100
      %1469 = vmatmul.mubr.bf16.gmra.mxu0 %v823
      %v1470 = vpop.f32.mrf.mxu0
      %v1471 = vadd.f32 %v379, %v1470
      %v1472 = vpop.f32.mrf.mxu0
      %v1473 = vpop.f32.mrf.mxu0
      %v1474 = vadd.f32 %v379, %v1473
      %v1475 = vpop.f32.mrf.mxu0
      %1476 = vmatprep.mubr.bf16.mxu0 %v1103
      %1477 = vmatmul.mubr.bf16.gmra.mxu0 %v825
      %v1478 = vpop.f32.mrf.mxu0
      %v1479 = vadd.f32 %v379, %v1478
      %v1480 = vpop.f32.mrf.mxu0
      %v1481 = vpop.f32.mrf.mxu0
      %v1482 = vadd.f32 %v379, %v1481
      %v1483 = vpop.f32.mrf.mxu0
      %1484 = vmatprep.mubr.bf16.mxu0 %v1106
      %1485 = vmatmul.mubr.bf16.gmra.mxu0 %v827
      %v1486 = vpop.f32.mrf.mxu0
      %v1487 = vadd.f32 %v379, %v1486
      %v1488 = vpop.f32.mrf.mxu0
      %v1489 = vpop.f32.mrf.mxu0
      %v1490 = vadd.f32 %v379, %v1489
      %v1491 = vpop.f32.mrf.mxu0
      %1492 = vmatprep.mubr.bf16.mxu0 %v1109
      %1493 = vmatmul.mubr.bf16.gmra.mxu0 %v829
      %v1494 = vpop.f32.mrf.mxu0
      %v1495 = vadd.f32 %v379, %v1494
      %v1496 = vpop.f32.mrf.mxu0
      %v1497 = vpop.f32.mrf.mxu0
      %v1498 = vadd.f32 %v379, %v1497
      %v1499 = vpop.f32.mrf.mxu0
      %1500 = vmatprep.mubr.bf16.mxu0 %v1112
      %1501 = vmatmul.mubr.bf16.gmra.mxu0 %v831
      %v1502 = vpop.f32.mrf.mxu0
      %v1503 = vadd.f32 %v379, %v1502
      %v1504 = vpop.f32.mrf.mxu0
      %v1505 = vpop.f32.mrf.mxu0
      %v1506 = vadd.f32 %v379, %v1505
      %v1507 = vpop.f32.mrf.mxu0
      %1508 = vmatprep.mubr.bf16.mxu0 %v1115
      %1509 = vmatmul.mubr.bf16.gmra.mxu0 %v833
      %v1510 = vpop.f32.mrf.mxu0
      %v1511 = vadd.f32 %v379, %v1510
      %v1512 = vpop.f32.mrf.mxu0
      %v1513 = vpop.f32.mrf.mxu0
      %v1514 = vadd.f32 %v379, %v1513
      %v1515 = vpop.f32.mrf.mxu0
      %1516 = vmatprep.mubr.bf16.mxu0 %v1118
      %1517 = vmatmul.mubr.bf16.gmra.mxu0 %v835
      %v1518 = vpop.f32.mrf.mxu0
      %v1519 = vadd.f32 %v379, %v1518
      %v1520 = vpop.f32.mrf.mxu0
      %v1521 = vpop.f32.mrf.mxu0
      %v1522 = vadd.f32 %v379, %v1521
      %v1523 = vpop.f32.mrf.mxu0
      %1524 = vmatprep.mubr.bf16.mxu0 %v1121
      %1525 = vmatmul.mubr.bf16.gmra.mxu0 %v837
      %v1526 = vpop.f32.mrf.mxu0
      %v1527 = vadd.f32 %v379, %v1526
      %v1528 = vpop.f32.mrf.mxu0
      %v1529 = vpop.f32.mrf.mxu0
      %v1530 = vadd.f32 %v379, %v1529
      %v1531 = vpop.f32.mrf.mxu0
      %1532 = vmatprep.mubr.bf16.mxu0 %v1124
      %1533 = vmatmul.mubr.bf16.gmra.mxu0 %v839
      %v1534 = vpop.f32.mrf.mxu0
      %v1535 = vadd.f32 %v379, %v1534
      %v1536 = vpop.f32.mrf.mxu0
      %v1537 = vpop.f32.mrf.mxu0
      %v1538 = vadd.f32 %v379, %v1537
      %v1539 = vpop.f32.mrf.mxu0
      %1540 = vmatprep.mubr.bf16.mxu0 %v1127
      %1541 = vmatmul.mubr.bf16.gmra.mxu0 %v841
      %v1542 = vpop.f32.mrf.mxu0
      %v1543 = vadd.f32 %v379, %v1542
      %v1544 = vpop.f32.mrf.mxu0
      %v1545 = vpop.f32.mrf.mxu0
      %v1546 = vadd.f32 %v379, %v1545
      %v1547 = vpop.f32.mrf.mxu0
      %1548 = vmatprep.mubr.bf16.mxu0 %v1130
      %1549 = vmatmul.mubr.bf16.gmra.mxu0 %v843
      %v1550 = vpop.f32.mrf.mxu0
      %v1551 = vadd.f32 %v379, %v1550
      %v1552 = vpop.f32.mrf.mxu0
      %v1553 = vpop.f32.mrf.mxu0
      %v1554 = vadd.f32 %v379, %v1553
      %v1555 = vpop.f32.mrf.mxu0
      %1556 = vmatprep.mubr.bf16.mxu0 %v1133
      %1557 = vmatmul.mubr.bf16.gmra.mxu0 %v845
      %v1558 = vpop.f32.mrf.mxu0
      %v1559 = vadd.f32 %v379, %v1558
      %v1560 = vpop.f32.mrf.mxu0
      %v1561 = vpop.f32.mrf.mxu0
      %v1562 = vadd.f32 %v379, %v1561
      %v1563 = vpop.f32.mrf.mxu0
      %1564 = vmatprep.mubr.bf16.mxu0 %v1136
      %1565 = vmatmul.mubr.bf16.gmra.mxu0 %v847
      %v1566 = vpop.f32.mrf.mxu0
      %v1567 = vadd.f32 %v379, %v1566
      %v1568 = vpop.f32.mrf.mxu0
      %v1569 = vpop.f32.mrf.mxu0
      %v1570 = vadd.f32 %v379, %v1569
      %v1571 = vpop.f32.mrf.mxu0
      %1572 = vmatprep.mubr.bf16.mxu0 %v1139
      %1573 = vmatmul.mubr.bf16.gmra.mxu0 %v849
      %v1574 = vpop.f32.mrf.mxu0
      %v1575 = vadd.f32 %v379, %v1574
      %v1576 = vpop.f32.mrf.mxu0
      %v1577 = vpop.f32.mrf.mxu0
      %v1578 = vadd.f32 %v379, %v1577
      %v1579 = vpop.f32.mrf.mxu0
      %1580 = vmatprep.mubr.bf16.mxu0 %v1142
      %1581 = vmatmul.mubr.bf16.gmra.mxu0 %v851
      %v1582 = vpop.f32.mrf.mxu0
      %v1583 = vadd.f32 %v379, %v1582
      %v1584 = vpop.f32.mrf.mxu0
      %v1585 = vpop.f32.mrf.mxu0
      %v1586 = vadd.f32 %v379, %v1585
      %v1587 = vpop.f32.mrf.mxu0
      %1588 = vmatprep.mubr.bf16.mxu0 %v1145
      %1589 = vmatmul.mubr.bf16.gmra.mxu0 %v853
      %v1590 = vpop.f32.mrf.mxu0
      %v1591 = vadd.f32 %v379, %v1590
      %v1592 = vpop.f32.mrf.mxu0
      %v1593 = vpop.f32.mrf.mxu0
      %v1594 = vadd.f32 %v379, %v1593
      %v1595 = vpop.f32.mrf.mxu0
      %1596 = vmatprep.mubr.bf16.mxu0 %v1148
      %1597 = vmatmul.mubr.bf16.gmra.mxu0 %v855
      %v1598 = vpop.f32.mrf.mxu0
      %v1599 = vadd.f32 %v379, %v1598
      %v1600 = vpop.f32.mrf.mxu0
      %v1601 = vpop.f32.mrf.mxu0
      %v1602 = vadd.f32 %v379, %v1601
      %v1603 = vpop.f32.mrf.mxu0
      %1604 = vmatprep.mubr.bf16.mxu0 %v1151
      %1605 = vmatmul.mubr.bf16.gmra.mxu0 %v857
      %v1606 = vpop.f32.mrf.mxu0
      %v1607 = vadd.f32 %v379, %v1606
      %v1608 = vpop.f32.mrf.mxu0
      %v1609 = vpop.f32.mrf.mxu0
      %v1610 = vadd.f32 %v379, %v1609
      %v1611 = vpop.f32.mrf.mxu0
      %1612 = vmatprep.mubr.bf16.mxu0 %v1154
      %1613 = vmatmul.mubr.bf16.gmra.mxu0 %v859
      %v1614 = vpop.f32.mrf.mxu0
      %v1615 = vadd.f32 %v379, %v1614
      %v1616 = vpop.f32.mrf.mxu0
      %v1617 = vpop.f32.mrf.mxu0
      %v1618 = vadd.f32 %v379, %v1617
      %v1619 = vpop.f32.mrf.mxu0
      %1620 = vmatprep.mubr.bf16.mxu0 %v1157
      %1621 = vmatmul.mubr.bf16.gmra.mxu0 %v861
      %v1622 = vpop.f32.mrf.mxu0
      %v1623 = vadd.f32 %v379, %v1622
      %v1624 = vpop.f32.mrf.mxu0
      %v1625 = vpop.f32.mrf.mxu0
      %v1626 = vadd.f32 %v379, %v1625
      %v1627 = vpop.f32.mrf.mxu0
      %1628 = vmatprep.mubr.bf16.mxu0 %v1160
      %1629 = vmatmul.mubr.bf16.gmra.mxu0 %v863
      %v1630 = vpop.f32.mrf.mxu0
      %v1631 = vadd.f32 %v379, %v1630
      %v1632 = vpop.f32.mrf.mxu0
      %v1633 = vpop.f32.mrf.mxu0
      %v1634 = vadd.f32 %v379, %v1633
      %v1635 = vpop.f32.mrf.mxu0
      %1636 = vmatprep.mubr.bf16.mxu0 %v1163
      %1637 = vmatmul.mubr.bf16.gmra.mxu0 %v865
      %v1638 = vpop.f32.mrf.mxu0
      %v1639 = vadd.f32 %v379, %v1638
      %v1640 = vpop.f32.mrf.mxu0
      %v1641 = vpop.f32.mrf.mxu0
      %v1642 = vadd.f32 %v379, %v1641
      %v1643 = vpop.f32.mrf.mxu0
      %1644 = vmatprep.mubr.bf16.mxu0 %v1166
      %1645 = vmatmul.mubr.bf16.gmra.mxu0 %v867
      %v1646 = vpop.f32.mrf.mxu0
      %v1647 = vadd.f32 %v379, %v1646
      %v1648 = vpop.f32.mrf.mxu0
      %v1649 = vpop.f32.mrf.mxu0
      %v1650 = vadd.f32 %v379, %v1649
      %v1651 = vpop.f32.mrf.mxu0
      %1652 = vmatprep.mubr.bf16.mxu0 %v1169
      %1653 = vmatmul.mubr.bf16.gmra.mxu0 %v869
      %v1654 = vpop.f32.mrf.mxu0
      %v1655 = vadd.f32 %v379, %v1654
      %v1656 = vpop.f32.mrf.mxu0
      %v1657 = vpop.f32.mrf.mxu0
      %v1658 = vadd.f32 %v379, %v1657
      %v1659 = vpop.f32.mrf.mxu0
      %1660 = vmatprep.mubr.bf16.mxu0 %v1172
      %1661 = vmatmul.mubr.bf16.gmra.mxu0 %v871
      %v1662 = vpop.f32.mrf.mxu0
      %v1663 = vadd.f32 %v379, %v1662
      %v1664 = vpop.f32.mrf.mxu0
      %v1665 = vpop.f32.mrf.mxu0
      %v1666 = vadd.f32 %v379, %v1665
      %v1667 = vpop.f32.mrf.mxu0
      %1668 = vmatprep.mubr.bf16.mxu0 %v1175
      %1669 = vmatmul.mubr.bf16.gmra.mxu0 %v873
      %v1670 = vpop.f32.mrf.mxu0
      %v1671 = vadd.f32 %v379, %v1670
      %v1672 = vpop.f32.mrf.mxu0
      %v1673 = vpop.f32.mrf.mxu0
      %v1674 = vadd.f32 %v379, %v1673
      %v1675 = vpop.f32.mrf.mxu0
      %1676 = vmatprep.mubr.bf16.mxu0 %v1178
      %1677 = vmatmul.mubr.bf16.gmra.mxu0 %v875
      %v1678 = vpop.f32.mrf.mxu0
      %v1679 = vadd.f32 %v379, %v1678
      %v1680 = vpop.f32.mrf.mxu0
      %v1681 = vpop.f32.mrf.mxu0
      %v1682 = vadd.f32 %v379, %v1681
      %v1683 = vpop.f32.mrf.mxu0
      %1684 = vmatprep.mubr.bf16.mxu0 %v1181
      %1685 = vmatmul.mubr.bf16.gmra.mxu0 %v877
      %v1686 = vpop.f32.mrf.mxu0
      %v1687 = vadd.f32 %v379, %v1686
      %v1688 = vpop.f32.mrf.mxu0
      %v1689 = vpop.f32.mrf.mxu0
      %v1690 = vadd.f32 %v379, %v1689
      %v1691 = vpop.f32.mrf.mxu0
      %1692 = vmatprep.mubr.bf16.mxu0 %v1184
      %1693 = vmatmul.mubr.bf16.gmra.mxu0 %v879
      %v1694 = vpop.f32.mrf.mxu0
      %v1695 = vadd.f32 %v379, %v1694
      %v1696 = vpop.f32.mrf.mxu0
      %v1697 = vpop.f32.mrf.mxu0
      %v1698 = vadd.f32 %v379, %v1697
      %v1699 = vpop.f32.mrf.mxu0
      %1700 = vmatprep.mubr.bf16.mxu0 %v1187
      %1701 = vmatmul.mubr.bf16.gmra.mxu0 %v881
      %v1702 = vpop.f32.mrf.mxu0
      %v1703 = vadd.f32 %v379, %v1702
      %v1704 = vpop.f32.mrf.mxu0
      %v1705 = vpop.f32.mrf.mxu0
      %v1706 = vadd.f32 %v379, %v1705
      %v1707 = vpop.f32.mrf.mxu0
      %1708 = vmatprep.mubr.bf16.mxu0 %v1190
      %1709 = vmatmul.mubr.bf16.gmra.mxu0 %v883
      %v1710 = vpop.f32.mrf.mxu0
      %v1711 = vadd.f32 %v379, %v1710
      %v1712 = vpop.f32.mrf.mxu0
      %v1713 = vpop.f32.mrf.mxu0
      %v1714 = vadd.f32 %v379, %v1713
      %v1715 = vpop.f32.mrf.mxu0
      %1716 = vmatprep.mubr.bf16.mxu0 %v1193
      %1717 = vmatmul.mubr.bf16.gmra.mxu0 %v885
      %v1718 = vpop.f32.mrf.mxu0
      %v1719 = vadd.f32 %v379, %v1718
      %v1720 = vpop.f32.mrf.mxu0
      %v1721 = vpop.f32.mrf.mxu0
      %v1722 = vadd.f32 %v379, %v1721
      %v1723 = vpop.f32.mrf.mxu0
      %1724 = vmatprep.mubr.bf16.mxu0 %v1196
      %1725 = vmatmul.mubr.bf16.gmra.mxu0 %v887
      %v1726 = vpop.f32.mrf.mxu0
      %v1727 = vadd.f32 %v379, %v1726
      %v1728 = vpop.f32.mrf.mxu0
      %v1729 = vpop.f32.mrf.mxu0
      %v1730 = vadd.f32 %v379, %v1729
      %v1731 = vpop.f32.mrf.mxu0
      %1732 = vmatprep.mubr.bf16.mxu0 %v1199
      %1733 = vmatmul.mubr.bf16.gmra.mxu0 %v889
      %v1734 = vpop.f32.mrf.mxu0
      %v1735 = vadd.f32 %v379, %v1734
      %v1736 = vpop.f32.mrf.mxu0
      %v1737 = vpop.f32.mrf.mxu0
      %v1738 = vadd.f32 %v379, %v1737
      %v1739 = vpop.f32.mrf.mxu0
      %1740 = vmatprep.mubr.bf16.mxu0 %v1202
      %1741 = vmatmul.mubr.bf16.gmra.mxu0 %v891
      %v1742 = vpop.f32.mrf.mxu0
      %v1743 = vadd.f32 %v379, %v1742
      %v1744 = vpop.f32.mrf.mxu0
      %v1745 = vpop.f32.mrf.mxu0
      %v1746 = vadd.f32 %v379, %v1745
      %v1747 = vpop.f32.mrf.mxu0
      %1748 = vdwg.mxu0
      %v1749 = vtanh.pop %v1239
      %v1750 = vtanh.pop %v1242
      %v1751 = vtanh.pop %v1247
      %v1752 = vtanh.pop %v1250
      %v1753 = vtanh.pop %v1255
      %v1754 = vtanh.pop %v1258
      %v1755 = vtanh.pop %v1263
      %v1756 = vtanh.pop %v1266
      %v1757 = vtanh.pop %v1271
      %v1758 = vtanh.pop %v1274
      %v1759 = vtanh.pop %v1279
      %v1760 = vtanh.pop %v1282
      %v1761 = vtanh.pop %v1287
      %v1762 = vtanh.pop %v1290
      %v1763 = vtanh.pop %v1295
      %v1764 = vtanh.pop %v1298
      %v1765 = vtanh.pop %v1303
      %v1766 = vtanh.pop %v1306
      %v1767 = vtanh.pop %v1311
      %v1768 = vtanh.pop %v1314
      %v1769 = vtanh.pop %v1319
      %v1770 = vtanh.pop %v1322
      %v1771 = vtanh.pop %v1327
      %v1772 = vtanh.pop %v1330
      %v1773 = vtanh.pop %v1335
      %v1774 = vtanh.pop %v1338
      %v1775 = vtanh.pop %v1343
      %v1776 = vtanh.pop %v1346
      %v1777 = vtanh.pop %v1351
      %v1778 = vtanh.pop %v1354
      %v1779 = vtanh.pop %v1359
      %v1780 = vtanh.pop %v1362
      %v1781 = vtanh.pop %v1367
      %v1782 = vtanh.pop %v1370
      %v1783 = vtanh.pop %v1375
      %v1784 = vtanh.pop %v1378
      %v1785 = vtanh.pop %v1383
      %v1786 = vtanh.pop %v1386
      %v1787 = vtanh.pop %v1391
      %v1788 = vtanh.pop %v1394
      %v1789 = vtanh.pop %v1399
      %v1790 = vtanh.pop %v1402
      %v1791 = vtanh.pop %v1407
      %v1792 = vtanh.pop %v1410
      %v1793 = vtanh.pop %v1415
      %v1794 = vtanh.pop %v1418
      %v1795 = vtanh.pop %v1423
      %v1796 = vtanh.pop %v1426
      %v1797 = vtanh.pop %v1431
      %v1798 = vtanh.pop %v1434
      %v1799 = vtanh.pop %v1439
      %v1800 = vtanh.pop %v1442
      %v1801 = vtanh.pop %v1447
      %v1802 = vtanh.pop %v1450
      %v1803 = vtanh.pop %v1455
      %v1804 = vtanh.pop %v1458
      %v1805 = vtanh.pop %v1463
      %v1806 = vtanh.pop %v1466
      %v1807 = vtanh.pop %v1471
      %v1808 = vtanh.pop %v1474
      %v1809 = vtanh.pop %v1479
      %v1810 = vtanh.pop %v1482
      %v1811 = vtanh.pop %v1487
      %v1812 = vtanh.pop %v1490
      %v1813 = vtanh.pop %v1495
      %v1814 = vtanh.pop %v1498
      %v1815 = vtanh.pop %v1503
      %v1816 = vtanh.pop %v1506
      %v1817 = vtanh.pop %v1511
      %v1818 = vtanh.pop %v1514
      %v1819 = vtanh.pop %v1519
      %v1820 = vtanh.pop %v1522
      %v1821 = vtanh.pop %v1527
      %v1822 = vtanh.pop %v1530
      %v1823 = vtanh.pop %v1535
      %v1824 = vtanh.pop %v1538
      %v1825 = vtanh.pop %v1543
      %v1826 = vtanh.pop %v1546
      %v1827 = vtanh.pop %v1551
      %v1828 = vtanh.pop %v1554
      %v1829 = vtanh.pop %v1559
      %v1830 = vtanh.pop %v1562
      %v1831 = vtanh.pop %v1567
      %v1832 = vtanh.pop %v1570
      %v1833 = vtanh.pop %v1575
      %v1834 = vtanh.pop %v1578
      %v1835 = vtanh.pop %v1583
      %v1836 = vtanh.pop %v1586
      %v1837 = vtanh.pop %v1591
      %v1838 = vtanh.pop %v1594
      %v1839 = vtanh.pop %v1599
      %v1840 = vtanh.pop %v1602
      %v1841 = vtanh.pop %v1607
      %v1842 = vtanh.pop %v1610
      %v1843 = vtanh.pop %v1615
      %v1844 = vtanh.pop %v1618
      %v1845 = vtanh.pop %v1623
      %v1846 = vtanh.pop %v1626
      %v1847 = vtanh.pop %v1631
      %v1848 = vtanh.pop %v1634
      %v1849 = vtanh.pop %v1639
      %v1850 = vtanh.pop %v1642
      %v1851 = vtanh.pop %v1647
      %v1852 = vtanh.pop %v1650
      %v1853 = vtanh.pop %v1655
      %v1854 = vtanh.pop %v1658
      %v1855 = vtanh.pop %v1663
      %v1856 = vtanh.pop %v1666
      %v1857 = vtanh.pop %v1671
      %v1858 = vtanh.pop %v1674
      %v1859 = vtanh.pop %v1679
      %v1860 = vtanh.pop %v1682
      %v1861 = vtanh.pop %v1687
      %v1862 = vtanh.pop %v1690
      %v1863 = vtanh.pop %v1695
      %v1864 = vtanh.pop %v1698
      %v1865 = vtanh.pop %v1703
      %v1866 = vtanh.pop %v1706
      %v1867 = vtanh.pop %v1711
      %v1868 = vtanh.pop %v1714
      %v1869 = vtanh.pop %v1719
      %v1870 = vtanh.pop %v1722
      %v1871 = vtanh.pop %v1727
      %v1872 = vtanh.pop %v1730
      %v1873 = vtanh.pop %v1735
      %v1874 = vtanh.pop %v1738
      %v1875 = vtanh.pop %v1743
      %v1876 = vtanh.pop %v1746
      %v1877 = vpack.c.bf16 %v1750, %v1749
      %v1878 = vpack.c.bf16 %v1752, %v1751
      %v1879 = vpack.c.bf16 %v1754, %v1753
      %v1880 = vpack.c.bf16 %v1756, %v1755
      %v1881 = vpack.c.bf16 %v1758, %v1757
      %v1882 = vpack.c.bf16 %v1760, %v1759
      %v1883 = vpack.c.bf16 %v1762, %v1761
      %v1884 = vpack.c.bf16 %v1764, %v1763
      %v1885 = vpack.c.bf16 %v1766, %v1765
      %v1886 = vpack.c.bf16 %v1768, %v1767
      %v1887 = vpack.c.bf16 %v1770, %v1769
      %v1888 = vpack.c.bf16 %v1772, %v1771
      %v1889 = vpack.c.bf16 %v1774, %v1773
      %v1890 = vpack.c.bf16 %v1776, %v1775
      %v1891 = vpack.c.bf16 %v1778, %v1777
      %v1892 = vpack.c.bf16 %v1780, %v1779
      %v1893 = vpack.c.bf16 %v1782, %v1781
      %v1894 = vpack.c.bf16 %v1784, %v1783
      %v1895 = vpack.c.bf16 %v1786, %v1785
      %v1896 = vpack.c.bf16 %v1788, %v1787
      %v1897 = vpack.c.bf16 %v1790, %v1789
      %v1898 = vpack.c.bf16 %v1792, %v1791
      %v1899 = vpack.c.bf16 %v1794, %v1793
      %v1900 = vpack.c.bf16 %v1796, %v1795
      %v1901 = vpack.c.bf16 %v1798, %v1797
      %v1902 = vpack.c.bf16 %v1800, %v1799
      %v1903 = vpack.c.bf16 %v1802, %v1801
      %v1904 = vpack.c.bf16 %v1804, %v1803
      %v1905 = vpack.c.bf16 %v1806, %v1805
      %v1906 = vpack.c.bf16 %v1808, %v1807
      %v1907 = vpack.c.bf16 %v1810, %v1809
      %v1908 = vpack.c.bf16 %v1812, %v1811
      %v1909 = vpack.c.bf16 %v1814, %v1813
      %v1910 = vpack.c.bf16 %v1816, %v1815
      %v1911 = vpack.c.bf16 %v1818, %v1817
      %v1912 = vpack.c.bf16 %v1820, %v1819
      %v1913 = vpack.c.bf16 %v1822, %v1821
      %v1914 = vpack.c.bf16 %v1824, %v1823
      %v1915 = vpack.c.bf16 %v1826, %v1825
      %v1916 = vpack.c.bf16 %v1828, %v1827
      %v1917 = vpack.c.bf16 %v1830, %v1829
      %v1918 = vpack.c.bf16 %v1832, %v1831
      %v1919 = vpack.c.bf16 %v1834, %v1833
      %v1920 = vpack.c.bf16 %v1836, %v1835
      %v1921 = vpack.c.bf16 %v1838, %v1837
      %v1922 = vpack.c.bf16 %v1840, %v1839
      %v1923 = vpack.c.bf16 %v1842, %v1841
      %v1924 = vpack.c.bf16 %v1844, %v1843
      %v1925 = vpack.c.bf16 %v1846, %v1845
      %v1926 = vpack.c.bf16 %v1848, %v1847
      %v1927 = vpack.c.bf16 %v1850, %v1849
      %v1928 = vpack.c.bf16 %v1852, %v1851
      %v1929 = vpack.c.bf16 %v1854, %v1853
      %v1930 = vpack.c.bf16 %v1856, %v1855
      %v1931 = vpack.c.bf16 %v1858, %v1857
      %v1932 = vpack.c.bf16 %v1860, %v1859
      %v1933 = vpack.c.bf16 %v1862, %v1861
      %v1934 = vpack.c.bf16 %v1864, %v1863
      %v1935 = vpack.c.bf16 %v1866, %v1865
      %v1936 = vpack.c.bf16 %v1868, %v1867
      %v1937 = vpack.c.bf16 %v1870, %v1869
      %v1938 = vpack.c.bf16 %v1872, %v1871
      %v1939 = vpack.c.bf16 %v1874, %v1873
      %v1940 = vpack.c.bf16 %v1876, %v1875
      %v2005 = vunpack.c.l.b16 %v1877
      %v2006 = vunpack.c.h.b16 %v1877
      %v2007 = vunpack.c.l.b16 %v1878
      %v2008 = vunpack.c.h.b16 %v1878
      %v2009 = vunpack.c.l.b16 %v1879
      %v2010 = vunpack.c.h.b16 %v1879
      %v2011 = vunpack.c.l.b16 %v1880
      %v2012 = vunpack.c.h.b16 %v1880
      %v2013 = vunpack.c.l.b16 %v1881
      %v2014 = vunpack.c.h.b16 %v1881
      %v2015 = vunpack.c.l.b16 %v1882
      %v2016 = vunpack.c.h.b16 %v1882
      %v2017 = vunpack.c.l.b16 %v1883
      %v2018 = vunpack.c.h.b16 %v1883
      %v2019 = vunpack.c.l.b16 %v1884
      %v2020 = vunpack.c.h.b16 %v1884
      %v2021 = vunpack.c.l.b16 %v1885
      %v2022 = vunpack.c.h.b16 %v1885
      %v2023 = vunpack.c.l.b16 %v1886
      %v2024 = vunpack.c.h.b16 %v1886
      %v2025 = vunpack.c.l.b16 %v1887
      %v2026 = vunpack.c.h.b16 %v1887
      %v2027 = vunpack.c.l.b16 %v1888
      %v2028 = vunpack.c.h.b16 %v1888
      %v2029 = vunpack.c.l.b16 %v1889
      %v2030 = vunpack.c.h.b16 %v1889
      %v2031 = vunpack.c.l.b16 %v1890
      %v2032 = vunpack.c.h.b16 %v1890
      %v2033 = vunpack.c.l.b16 %v1891
      %v2034 = vunpack.c.h.b16 %v1891
      %v2035 = vunpack.c.l.b16 %v1892
      %v2036 = vunpack.c.h.b16 %v1892
      %v2037 = vunpack.c.l.b16 %v1893
      %v2038 = vunpack.c.h.b16 %v1893
      %v2039 = vunpack.c.l.b16 %v1894
      %v2040 = vunpack.c.h.b16 %v1894
      %v2041 = vunpack.c.l.b16 %v1895
      %v2042 = vunpack.c.h.b16 %v1895
      %v2043 = vunpack.c.l.b16 %v1896
      %v2044 = vunpack.c.h.b16 %v1896
      %v2045 = vunpack.c.l.b16 %v1897
      %v2046 = vunpack.c.h.b16 %v1897
      %v2047 = vunpack.c.l.b16 %v1898
      %v2048 = vunpack.c.h.b16 %v1898
      %v2049 = vunpack.c.l.b16 %v1899
      %v2050 = vunpack.c.h.b16 %v1899
      %v2051 = vunpack.c.l.b16 %v1900
      %v2052 = vunpack.c.h.b16 %v1900
      %v2053 = vunpack.c.l.b16 %v1901
      %v2054 = vunpack.c.h.b16 %v1901
      %v2055 = vunpack.c.l.b16 %v1902
      %v2056 = vunpack.c.h.b16 %v1902
      %v2057 = vunpack.c.l.b16 %v1903
      %v2058 = vunpack.c.h.b16 %v1903
      %v2059 = vunpack.c.l.b16 %v1904
      %v2060 = vunpack.c.h.b16 %v1904
      %v2061 = vunpack.c.l.b16 %v1905
      %v2062 = vunpack.c.h.b16 %v1905
      %v2063 = vunpack.c.l.b16 %v1906
      %v2064 = vunpack.c.h.b16 %v1906
      %v2065 = vunpack.c.l.b16 %v1907
      %v2066 = vunpack.c.h.b16 %v1907
      %v2067 = vunpack.c.l.b16 %v1908
      %v2068 = vunpack.c.h.b16 %v1908
      %v2069 = vunpack.c.l.b16 %v1909
      %v2070 = vunpack.c.h.b16 %v1909
      %v2071 = vunpack.c.l.b16 %v1910
      %v2072 = vunpack.c.h.b16 %v1910
      %v2073 = vunpack.c.l.b16 %v1911
      %v2074 = vunpack.c.h.b16 %v1911
      %v2075 = vunpack.c.l.b16 %v1912
      %v2076 = vunpack.c.h.b16 %v1912
      %v2077 = vunpack.c.l.b16 %v1913
      %v2078 = vunpack.c.h.b16 %v1913
      %v2079 = vunpack.c.l.b16 %v1914
      %v2080 = vunpack.c.h.b16 %v1914
      %v2081 = vunpack.c.l.b16 %v1915
      %v2082 = vunpack.c.h.b16 %v1915
      %v2083 = vunpack.c.l.b16 %v1916
      %v2084 = vunpack.c.h.b16 %v1916
      %v2085 = vunpack.c.l.b16 %v1917
      %v2086 = vunpack.c.h.b16 %v1917
      %v2087 = vunpack.c.l.b16 %v1918
      %v2088 = vunpack.c.h.b16 %v1918
      %v2089 = vunpack.c.l.b16 %v1919
      %v2090 = vunpack.c.h.b16 %v1919
      %v2091 = vunpack.c.l.b16 %v1920
      %v2092 = vunpack.c.h.b16 %v1920
      %v2093 = vunpack.c.l.b16 %v1921
      %v2094 = vunpack.c.h.b16 %v1921
      %v2095 = vunpack.c.l.b16 %v1922
      %v2096 = vunpack.c.h.b16 %v1922
      %v2097 = vunpack.c.l.b16 %v1923
      %v2098 = vunpack.c.h.b16 %v1923
      %v2099 = vunpack.c.l.b16 %v1924
      %v2100 = vunpack.c.h.b16 %v1924
      %v2101 = vunpack.c.l.b16 %v1925
      %v2102 = vunpack.c.h.b16 %v1925
      %v2103 = vunpack.c.l.b16 %v1926
      %v2104 = vunpack.c.h.b16 %v1926
      %v2105 = vunpack.c.l.b16 %v1927
      %v2106 = vunpack.c.h.b16 %v1927
      %v2107 = vunpack.c.l.b16 %v1928
      %v2108 = vunpack.c.h.b16 %v1928
      %v2109 = vunpack.c.l.b16 %v1929
      %v2110 = vunpack.c.h.b16 %v1929
      %v2111 = vunpack.c.l.b16 %v1930
      %v2112 = vunpack.c.h.b16 %v1930
      %v2113 = vunpack.c.l.b16 %v1931
      %v2114 = vunpack.c.h.b16 %v1931
      %v2115 = vunpack.c.l.b16 %v1932
      %v2116 = vunpack.c.h.b16 %v1932
      %v2117 = vunpack.c.l.b16 %v1933
      %v2118 = vunpack.c.h.b16 %v1933
      %v2119 = vunpack.c.l.b16 %v1934
      %v2120 = vunpack.c.h.b16 %v1934
      %v2121 = vunpack.c.l.b16 %v1935
      %v2122 = vunpack.c.h.b16 %v1935
      %v2123 = vunpack.c.l.b16 %v1936
      %v2124 = vunpack.c.h.b16 %v1936
      %v2125 = vunpack.c.l.b16 %v1937
      %v2126 = vunpack.c.h.b16 %v1937
      %v2127 = vunpack.c.l.b16 %v1938
      %v2128 = vunpack.c.h.b16 %v1938
      %v2129 = vunpack.c.l.b16 %v1939
      %v2130 = vunpack.c.h.b16 %v1939
      %v2131 = vunpack.c.l.b16 %v1940
      %v2132 = vunpack.c.h.b16 %v1940
      %v2133 = vpack.c.b16 %v2005, %v2005
      %v2134 = vpack.c.b16 %v2006, %v2006
      %v2135 = vpack.c.b16 %v2007, %v2007
      %v2136 = vpack.c.b16 %v2008, %v2008
      %v2137 = vpack.c.b16 %v2009, %v2009
      %v2138 = vpack.c.b16 %v2010, %v2010
      %v2139 = vpack.c.b16 %v2011, %v2011
      %v2140 = vpack.c.b16 %v2012, %v2012
      %v2141 = vpack.c.b16 %v2013, %v2013
      %v2142 = vpack.c.b16 %v2014, %v2014
      %v2143 = vpack.c.b16 %v2015, %v2015
      %v2144 = vpack.c.b16 %v2016, %v2016
      %v2145 = vpack.c.b16 %v2017, %v2017
      %v2146 = vpack.c.b16 %v2018, %v2018
      %v2147 = vpack.c.b16 %v2019, %v2019
      %v2148 = vpack.c.b16 %v2020, %v2020
      %v2149 = vpack.c.b16 %v2021, %v2021
      %v2150 = vpack.c.b16 %v2022, %v2022
      %v2151 = vpack.c.b16 %v2023, %v2023
      %v2152 = vpack.c.b16 %v2024, %v2024
      %v2153 = vpack.c.b16 %v2025, %v2025
      %v2154 = vpack.c.b16 %v2026, %v2026
      %v2155 = vpack.c.b16 %v2027, %v2027
      %v2156 = vpack.c.b16 %v2028, %v2028
      %v2157 = vpack.c.b16 %v2029, %v2029
      %v2158 = vpack.c.b16 %v2030, %v2030
      %v2159 = vpack.c.b16 %v2031, %v2031
      %v2160 = vpack.c.b16 %v2032, %v2032
      %v2161 = vpack.c.b16 %v2033, %v2033
      %v2162 = vpack.c.b16 %v2034, %v2034
      %v2163 = vpack.c.b16 %v2035, %v2035
      %v2164 = vpack.c.b16 %v2036, %v2036
      %v2165 = vpack.c.b16 %v2037, %v2037
      %v2166 = vpack.c.b16 %v2038, %v2038
      %v2167 = vpack.c.b16 %v2039, %v2039
      %v2168 = vpack.c.b16 %v2040, %v2040
      %v2169 = vpack.c.b16 %v2041, %v2041
      %v2170 = vpack.c.b16 %v2042, %v2042
      %v2171 = vpack.c.b16 %v2043, %v2043
      %v2172 = vpack.c.b16 %v2044, %v2044
      %v2173 = vpack.c.b16 %v2045, %v2045
      %v2174 = vpack.c.b16 %v2046, %v2046
      %v2175 = vpack.c.b16 %v2047, %v2047
      %v2176 = vpack.c.b16 %v2048, %v2048
      %v2177 = vpack.c.b16 %v2049, %v2049
      %v2178 = vpack.c.b16 %v2050, %v2050
      %v2179 = vpack.c.b16 %v2051, %v2051
      %v2180 = vpack.c.b16 %v2052, %v2052
      %v2181 = vpack.c.b16 %v2053, %v2053
      %v2182 = vpack.c.b16 %v2054, %v2054
      %v2183 = vpack.c.b16 %v2055, %v2055
      %v2184 = vpack.c.b16 %v2056, %v2056
      %v2185 = vpack.c.b16 %v2057, %v2057
      %v2186 = vpack.c.b16 %v2058, %v2058
      %v2187 = vpack.c.b16 %v2059, %v2059
      %v2188 = vpack.c.b16 %v2060, %v2060
      %v2189 = vpack.c.b16 %v2061, %v2061
      %v2190 = vpack.c.b16 %v2062, %v2062
      %v2191 = vpack.c.b16 %v2063, %v2063
      %v2192 = vpack.c.b16 %v2064, %v2064
      %v2193 = vpack.c.b16 %v2065, %v2065
      %v2194 = vpack.c.b16 %v2066, %v2066
      %v2195 = vpack.c.b16 %v2067, %v2067
      %v2196 = vpack.c.b16 %v2068, %v2068
      %v2197 = vpack.c.b16 %v2069, %v2069
      %v2198 = vpack.c.b16 %v2070, %v2070
      %v2199 = vpack.c.b16 %v2071, %v2071
      %v2200 = vpack.c.b16 %v2072, %v2072
      %v2201 = vpack.c.b16 %v2073, %v2073
      %v2202 = vpack.c.b16 %v2074, %v2074
      %v2203 = vpack.c.b16 %v2075, %v2075
      %v2204 = vpack.c.b16 %v2076, %v2076
      %v2205 = vpack.c.b16 %v2077, %v2077
      %v2206 = vpack.c.b16 %v2078, %v2078
      %v2207 = vpack.c.b16 %v2079, %v2079
      %v2208 = vpack.c.b16 %v2080, %v2080
      %v2209 = vpack.c.b16 %v2081, %v2081
      %v2210 = vpack.c.b16 %v2082, %v2082
      %v2211 = vpack.c.b16 %v2083, %v2083
      %v2212 = vpack.c.b16 %v2084, %v2084
      %v2213 = vpack.c.b16 %v2085, %v2085
      %v2214 = vpack.c.b16 %v2086, %v2086
      %v2215 = vpack.c.b16 %v2087, %v2087
      %v2216 = vpack.c.b16 %v2088, %v2088
      %v2217 = vpack.c.b16 %v2089, %v2089
      %v2218 = vpack.c.b16 %v2090, %v2090
      %v2219 = vpack.c.b16 %v2091, %v2091
      %v2220 = vpack.c.b16 %v2092, %v2092
      %v2221 = vpack.c.b16 %v2093, %v2093
      %v2222 = vpack.c.b16 %v2094, %v2094
      %v2223 = vpack.c.b16 %v2095, %v2095
      %v2224 = vpack.c.b16 %v2096, %v2096
      %v2225 = vpack.c.b16 %v2097, %v2097
      %v2226 = vpack.c.b16 %v2098, %v2098
      %v2227 = vpack.c.b16 %v2099, %v2099
      %v2228 = vpack.c.b16 %v2100, %v2100
      %v2229 = vpack.c.b16 %v2101, %v2101
      %v2230 = vpack.c.b16 %v2102, %v2102
      %v2231 = vpack.c.b16 %v2103, %v2103
      %v2232 = vpack.c.b16 %v2104, %v2104
      %v2233 = vpack.c.b16 %v2105, %v2105
      %v2234 = vpack.c.b16 %v2106, %v2106
      %v2235 = vpack.c.b16 %v2107, %v2107
      %v2236 = vpack.c.b16 %v2108, %v2108
      %v2237 = vpack.c.b16 %v2109, %v2109
      %v2238 = vpack.c.b16 %v2110, %v2110
      %v2239 = vpack.c.b16 %v2111, %v2111
      %v2240 = vpack.c.b16 %v2112, %v2112
      %v2241 = vpack.c.b16 %v2113, %v2113
      %v2242 = vpack.c.b16 %v2114, %v2114
      %v2243 = vpack.c.b16 %v2115, %v2115
      %v2244 = vpack.c.b16 %v2116, %v2116
      %v2245 = vpack.c.b16 %v2117, %v2117
      %v2246 = vpack.c.b16 %v2118, %v2118
      %v2247 = vpack.c.b16 %v2119, %v2119
      %v2248 = vpack.c.b16 %v2120, %v2120
      %v2249 = vpack.c.b16 %v2121, %v2121
      %v2250 = vpack.c.b16 %v2122, %v2122
      %v2251 = vpack.c.b16 %v2123, %v2123
      %v2252 = vpack.c.b16 %v2124, %v2124
      %v2253 = vpack.c.b16 %v2125, %v2125
      %v2254 = vpack.c.b16 %v2126, %v2126
      %v2255 = vpack.c.b16 %v2127, %v2127
      %v2256 = vpack.c.b16 %v2128, %v2128
      %v2257 = vpack.c.b16 %v2129, %v2129
      %v2258 = vpack.c.b16 %v2130, %v2130
      %v2259 = vpack.c.b16 %v2131, %v2131
      %v2260 = vpack.c.b16 %v2132, %v2132
      %vm2389 = vcmask 93184
      %2390 = vst.msk [vmem:[%s225] sm:$0xf] %vm2389, %v2133
      %2391 = vst.msk [vmem:[%s225 + $0x4] sm:$0xf] %vm2389, %v2134
      %2392 = vst.msk [vmem:[%s225 + $0x8] sm:$0xf] %vm2389, %v2135
      %2393 = vst.msk [vmem:[%s225 + $0xc] sm:$0xf] %vm2389, %v2136
      %2394 = vst.msk [vmem:[%s225 + $0x10] sm:$0xf] %vm2389, %v2137
      %2395 = vst.msk [vmem:[%s225 + $0x14] sm:$0xf] %vm2389, %v2138
      %2396 = vst.msk [vmem:[%s225 + $0x18] sm:$0xf] %vm2389, %v2139
      %2397 = vst.msk [vmem:[%s225 + $0x1c] sm:$0xf] %vm2389, %v2140
      %2398 = vst.msk [vmem:[%s225 + $0x20] sm:$0xf] %vm2389, %v2141
      %2399 = vst.msk [vmem:[%s225 + $0x24] sm:$0xf] %vm2389, %v2142
      %2400 = vst.msk [vmem:[%s225 + $0x28] sm:$0xf] %vm2389, %v2143
      %2401 = vst.msk [vmem:[%s225 + $0x2c] sm:$0xf] %vm2389, %v2144
      %2402 = vst.msk [vmem:[%s225 + $0x30] sm:$0xf] %vm2389, %v2145
      %2403 = vst.msk [vmem:[%s225 + $0x34] sm:$0xf] %vm2389, %v2146
      %2404 = vst.msk [vmem:[%s225 + $0x38] sm:$0xf] %vm2389, %v2147
      %2405 = vst.msk [vmem:[%s225 + $0x3c] sm:$0xf] %vm2389, %v2148
      %2406 = vst.msk [vmem:[%s225 + $0x40] sm:$0xf] %vm2389, %v2149
      %2407 = vst.msk [vmem:[%s225 + $0x44] sm:$0xf] %vm2389, %v2150
      %2408 = vst.msk [vmem:[%s225 + $0x48] sm:$0xf] %vm2389, %v2151
      %2409 = vst.msk [vmem:[%s225 + $0x4c] sm:$0xf] %vm2389, %v2152
      %2410 = vst.msk [vmem:[%s225 + $0x50] sm:$0xf] %vm2389, %v2153
      %2411 = vst.msk [vmem:[%s225 + $0x54] sm:$0xf] %vm2389, %v2154
      %2412 = vst.msk [vmem:[%s225 + $0x58] sm:$0xf] %vm2389, %v2155
      %2413 = vst.msk [vmem:[%s225 + $0x5c] sm:$0xf] %vm2389, %v2156
      %2414 = vst.msk [vmem:[%s225 + $0x60] sm:$0xf] %vm2389, %v2157
      %2415 = vst.msk [vmem:[%s225 + $0x64] sm:$0xf] %vm2389, %v2158
      %2416 = vst.msk [vmem:[%s225 + $0x68] sm:$0xf] %vm2389, %v2159
      %2417 = vst.msk [vmem:[%s225 + $0x6c] sm:$0xf] %vm2389, %v2160
      %2418 = vst.msk [vmem:[%s225 + $0x70] sm:$0xf] %vm2389, %v2161
      %2419 = vst.msk [vmem:[%s225 + $0x74] sm:$0xf] %vm2389, %v2162
      %2420 = vst.msk [vmem:[%s225 + $0x78] sm:$0xf] %vm2389, %v2163
      %2421 = vst.msk [vmem:[%s225 + $0x7c] sm:$0xf] %vm2389, %v2164
      %2422 = vst.msk [vmem:[%s225 + $0x80] sm:$0xf] %vm2389, %v2165
      %2423 = vst.msk [vmem:[%s225 + $0x84] sm:$0xf] %vm2389, %v2166
      %2424 = vst.msk [vmem:[%s225 + $0x88] sm:$0xf] %vm2389, %v2167
      %2425 = vst.msk [vmem:[%s225 + $0x8c] sm:$0xf] %vm2389, %v2168
      %2426 = vst.msk [vmem:[%s225 + $0x90] sm:$0xf] %vm2389, %v2169
      %2427 = vst.msk [vmem:[%s225 + $0x94] sm:$0xf] %vm2389, %v2170
      %2428 = vst.msk [vmem:[%s225 + $0x98] sm:$0xf] %vm2389, %v2171
      %2429 = vst.msk [vmem:[%s225 + $0x9c] sm:$0xf] %vm2389, %v2172
      %2430 = vst.msk [vmem:[%s225 + $0xa0] sm:$0xf] %vm2389, %v2173
      %2431 = vst.msk [vmem:[%s225 + $0xa4] sm:$0xf] %vm2389, %v2174
      %2432 = vst.msk [vmem:[%s225 + $0xa8] sm:$0xf] %vm2389, %v2175
      %2433 = vst.msk [vmem:[%s225 + $0xac] sm:$0xf] %vm2389, %v2176
      %2434 = vst.msk [vmem:[%s225 + $0xb0] sm:$0xf] %vm2389, %v2177
      %2435 = vst.msk [vmem:[%s225 + $0xb4] sm:$0xf] %vm2389, %v2178
      %2436 = vst.msk [vmem:[%s225 + $0xb8] sm:$0xf] %vm2389, %v2179
      %2437 = vst.msk [vmem:[%s225 + $0xbc] sm:$0xf] %vm2389, %v2180
      %2438 = vst.msk [vmem:[%s225 + $0xc0] sm:$0xf] %vm2389, %v2181
      %2439 = vst.msk [vmem:[%s225 + $0xc4] sm:$0xf] %vm2389, %v2182
      %2440 = vst.msk [vmem:[%s225 + $0xc8] sm:$0xf] %vm2389, %v2183
      %2441 = vst.msk [vmem:[%s225 + $0xcc] sm:$0xf] %vm2389, %v2184
      %2442 = vst.msk [vmem:[%s225 + $0xd0] sm:$0xf] %vm2389, %v2185
      %2443 = vst.msk [vmem:[%s225 + $0xd4] sm:$0xf] %vm2389, %v2186
      %2444 = vst.msk [vmem:[%s225 + $0xd8] sm:$0xf] %vm2389, %v2187
      %2445 = vst.msk [vmem:[%s225 + $0xdc] sm:$0xf] %vm2389, %v2188
      %2446 = vst.msk [vmem:[%s225 + $0xe0] sm:$0xf] %vm2389, %v2189
      %2447 = vst.msk [vmem:[%s225 + $0xe4] sm:$0xf] %vm2389, %v2190
      %2448 = vst.msk [vmem:[%s225 + $0xe8] sm:$0xf] %vm2389, %v2191
      %2449 = vst.msk [vmem:[%s225 + $0xec] sm:$0xf] %vm2389, %v2192
      %2450 = vst.msk [vmem:[%s225 + $0xf0] sm:$0xf] %vm2389, %v2193
      %2451 = vst.msk [vmem:[%s225 + $0xf4] sm:$0xf] %vm2389, %v2194
      %2452 = vst.msk [vmem:[%s225 + $0xf8] sm:$0xf] %vm2389, %v2195
      %2453 = vst.msk [vmem:[%s225 + $0xfc] sm:$0xf] %vm2389, %v2196
      %2454 = vst.msk [vmem:[%s225 + $0x100] sm:$0xf] %vm2389, %v2197
      %2455 = vst.msk [vmem:[%s225 + $0x104] sm:$0xf] %vm2389, %v2198
      %2456 = vst.msk [vmem:[%s225 + $0x108] sm:$0xf] %vm2389, %v2199
      %2457 = vst.msk [vmem:[%s225 + $0x10c] sm:$0xf] %vm2389, %v2200
      %2458 = vst.msk [vmem:[%s225 + $0x110] sm:$0xf] %vm2389, %v2201
      %2459 = vst.msk [vmem:[%s225 + $0x114] sm:$0xf] %vm2389, %v2202
      %2460 = vst.msk [vmem:[%s225 + $0x118] sm:$0xf] %vm2389, %v2203
      %2461 = vst.msk [vmem:[%s225 + $0x11c] sm:$0xf] %vm2389, %v2204
      %2462 = vst.msk [vmem:[%s225 + $0x120] sm:$0xf] %vm2389, %v2205
      %2463 = vst.msk [vmem:[%s225 + $0x124] sm:$0xf] %vm2389, %v2206
      %2464 = vst.msk [vmem:[%s225 + $0x128] sm:$0xf] %vm2389, %v2207
      %2465 = vst.msk [vmem:[%s225 + $0x12c] sm:$0xf] %vm2389, %v2208
      %2466 = vst.msk [vmem:[%s225 + $0x130] sm:$0xf] %vm2389, %v2209
      %2467 = vst.msk [vmem:[%s225 + $0x134] sm:$0xf] %vm2389, %v2210
      %2468 = vst.msk [vmem:[%s225 + $0x138] sm:$0xf] %vm2389, %v2211
      %2469 = vst.msk [vmem:[%s225 + $0x13c] sm:$0xf] %vm2389, %v2212
      %2470 = vst.msk [vmem:[%s225 + $0x140] sm:$0xf] %vm2389, %v2213
      %2471 = vst.msk [vmem:[%s225 + $0x144] sm:$0xf] %vm2389, %v2214
      %2472 = vst.msk [vmem:[%s225 + $0x148] sm:$0xf] %vm2389, %v2215
      %2473 = vst.msk [vmem:[%s225 + $0x14c] sm:$0xf] %vm2389, %v2216
      %2474 = vst.msk [vmem:[%s225 + $0x150] sm:$0xf] %vm2389, %v2217
      %2475 = vst.msk [vmem:[%s225 + $0x154] sm:$0xf] %vm2389, %v2218
      %2476 = vst.msk [vmem:[%s225 + $0x158] sm:$0xf] %vm2389, %v2219
      %2477 = vst.msk [vmem:[%s225 + $0x15c] sm:$0xf] %vm2389, %v2220
      %2478 = vst.msk [vmem:[%s225 + $0x160] sm:$0xf] %vm2389, %v2221
      %2479 = vst.msk [vmem:[%s225 + $0x164] sm:$0xf] %vm2389, %v2222
      %2480 = vst.msk [vmem:[%s225 + $0x168] sm:$0xf] %vm2389, %v2223
      %2481 = vst.msk [vmem:[%s225 + $0x16c] sm:$0xf] %vm2389, %v2224
      %2482 = vst.msk [vmem:[%s225 + $0x170] sm:$0xf] %vm2389, %v2225
      %2483 = vst.msk [vmem:[%s225 + $0x174] sm:$0xf] %vm2389, %v2226
      %2484 = vst.msk [vmem:[%s225 + $0x178] sm:$0xf] %vm2389, %v2227
      %2485 = vst.msk [vmem:[%s225 + $0x17c] sm:$0xf] %vm2389, %v2228
      %2486 = vst.msk [vmem:[%s225 + $0x180] sm:$0xf] %vm2389, %v2229
      %2487 = vst.msk [vmem:[%s225 + $0x184] sm:$0xf] %vm2389, %v2230
      %2488 = vst.msk [vmem:[%s225 + $0x188] sm:$0xf] %vm2389, %v2231
      %2489 = vst.msk [vmem:[%s225 + $0x18c] sm:$0xf] %vm2389, %v2232
      %2490 = vst.msk [vmem:[%s225 + $0x190] sm:$0xf] %vm2389, %v2233
      %2491 = vst.msk [vmem:[%s225 + $0x194] sm:$0xf] %vm2389, %v2234
      %2492 = vst.msk [vmem:[%s225 + $0x198] sm:$0xf] %vm2389, %v2235
      %2493 = vst.msk [vmem:[%s225 + $0x19c] sm:$0xf] %vm2389, %v2236
      %2494 = vst.msk [vmem:[%s225 + $0x1a0] sm:$0xf] %vm2389, %v2237
      %2495 = vst.msk [vmem:[%s225 + $0x1a4] sm:$0xf] %vm2389, %v2238
      %2496 = vst.msk [vmem:[%s225 + $0x1a8] sm:$0xf] %vm2389, %v2239
      %2497 = vst.msk [vmem:[%s225 + $0x1ac] sm:$0xf] %vm2389, %v2240
      %2498 = vst.msk [vmem:[%s225 + $0x1b0] sm:$0xf] %vm2389, %v2241
      %2499 = vst.msk [vmem:[%s225 + $0x1b4] sm:$0xf] %vm2389, %v2242
      %2500 = vst.msk [vmem:[%s225 + $0x1b8] sm:$0xf] %vm2389, %v2243
      %2501 = vst.msk [vmem:[%s225 + $0x1bc] sm:$0xf] %vm2389, %v2244
      %2502 = vst.msk [vmem:[%s225 + $0x1c0] sm:$0xf] %vm2389, %v2245
      %2503 = vst.msk [vmem:[%s225 + $0x1c4] sm:$0xf] %vm2389, %v2246
      %2504 = vst.msk [vmem:[%s225 + $0x1c8] sm:$0xf] %vm2389, %v2247
      %2505 = vst.msk [vmem:[%s225 + $0x1cc] sm:$0xf] %vm2389, %v2248
      %2506 = vst.msk [vmem:[%s225 + $0x1d0] sm:$0xf] %vm2389, %v2249
      %2507 = vst.msk [vmem:[%s225 + $0x1d4] sm:$0xf] %vm2389, %v2250
      %2508 = vst.msk [vmem:[%s225 + $0x1d8] sm:$0xf] %vm2389, %v2251
      %2509 = vst.msk [vmem:[%s225 + $0x1dc] sm:$0xf] %vm2389, %v2252
      %2510 = vst.msk [vmem:[%s225 + $0x1e0] sm:$0xf] %vm2389, %v2253
      %2511 = vst.msk [vmem:[%s225 + $0x1e4] sm:$0xf] %vm2389, %v2254
      %2512 = vst.msk [vmem:[%s225 + $0x1e8] sm:$0xf] %vm2389, %v2255
      %2513 = vst.msk [vmem:[%s225 + $0x1ec] sm:$0xf] %vm2389, %v2256
      %2514 = vst.msk [vmem:[%s225 + $0x1f0] sm:$0xf] %vm2389, %v2257
      %2515 = vst.msk [vmem:[%s225 + $0x1f4] sm:$0xf] %vm2389, %v2258
      %2516 = vst.msk [vmem:[%s225 + $0x1f8] sm:$0xf] %vm2389, %v2259
      %2517 = vst.msk [vmem:[%s225 + $0x1fc] sm:$0xf] %vm2389, %v2260
      %s2518 = smul.u32 128, %s18
      %p2519 = scmp.lt.s32.totalorder %s2518, 255
      %s2520 = scalar_select %p2519, %s2518, 255
      %s2521 = smul.addr %s2520, 4
      %s2522 = scalar_lea.vmem %s3, %s2521
      // Predicated region
      $region33: #{_lambda_.13} parent=31 // pred_check
        %p2523 = pneg %p119
      $region34: #{_lambda_.13} parent=31 // pred_check_branch
        %2525 = sbr.rel (%p2523) target = $region36
      $region35: #{_lambda_.13} parent=31 // pred_region
        %s2526 = smul.u32 128, %s18
      $region36: #{_lambda_.13} parent=31 // pred_fallthru
        _
    $region32: #{_lambda_.13} parent=5 // pred_fallthru
      _
    %p2527 = scmp.le.s32.totalorder 2, %s9
    // Predicated region
    $region37: #{_lambda_.13} parent=5 // pred_check
      %p2528 = pneg %p2527
    $region38: #{_lambda_.13} parent=5 // pred_check_branch
      %2530 = sbr.rel (%p2528) target = $region40
    $region39: #{_lambda_.13} parent=5 // pred_region
      %s2531 = ssub.s32 %s9, 2
      // Predicated region
      $region41: #{_lambda_.13} parent=39 // pred_check
        %p2532 = pneg %p125
      $region42: #{_lambda_.13} parent=39 // pred_check_branch
        %2534 = sbr.rel (%p2532) target = $region44
      $region43: #{_lambda_.13} parent=39 // pred_region
        %s2535 = smul.u32 128, %s20
        %p2536 = scmp.lt.s32.totalorder %s2535, 255
        %s2537 = scalar_select %p2536, %s2535, 255
        %s2538 = smul.addr %s2537, 4
        %s2539 = scalar_lea.vmem %s3, %s2538
      $region44: #{_lambda_.13} parent=39 // pred_fallthru
        _
    $region40: #{_lambda_.13} parent=5 // pred_fallthru
      _
  $region6: #{_lambda_.13} parent=0 // loop_footer
    %s13 = sadd.s32 1, %s9
  $region7: #{_lambda_.13} parent=0 // loop_footer_branch
    %8 = sbr.rel target = $region3
  $region8: #{_lambda_.13} parent=0 // loop_exit
    _

</llo_original>
